<compile_context>
chip_gen: v7x
topology: tpu7x:2x2x1
jax: 0.10.0
libtpu: 0.0.40
codegen_flags: <defaults>
</compile_context>

<pallas_src>
import math

import jax
import jax.numpy as jnp
from jax.experimental import pallas as pl
from jax.experimental.pallas import tpu as pltpu


# ---------------------------------------------------------------------------
# Kernel
# ---------------------------------------------------------------------------
def _siren_kernel(x_ref, wt_ref, b_ref, o_ref):
    # x_ref : (tile_n, dim_in)   VMEM, pipelined over the row grid axis
    # wt_ref: (dim_in, tile_d)   VMEM, resident (constant index map) or dim_out-tiled
    # b_ref : (1, tile_d)        VMEM, resident
    # o_ref : (tile_n, tile_d)   VMEM, pipelined
    #
    # w0 is pre-folded:  sin(w0*(x W^T + b)) == sin(x (w0 W)^T + w0 b)
    acc = jnp.dot(x_ref[...], wt_ref[...], preferred_element_type=jnp.float32)
    o_ref[...] = jnp.sin(acc + b_ref[...]).astype(o_ref.dtype)


# ---------------------------------------------------------------------------
# VMEM budgeting / tile selection
# ---------------------------------------------------------------------------
def _round_up(v, m):
    return ((v + m - 1) // m) * m


def _vmem_budget_bytes():
    """Generation-aware VMEM budget (data) and scoped-VMEM limit."""
    cap = None
    try:
        cap = getattr(pltpu.get_tpu_info(), "vmem_capacity_bytes", None)
    except Exception:
        cap = None
    if not cap:
        cap = 64 * 1024 * 1024          # conservative default (v7x per-TensorCore)
    data_budget = int(cap * 0.70)       # ~90 MiB on v5e/v6e (128 MiB), ~45 MiB on v7x
    vmem_limit = int(cap * 0.85)        # headroom for Mosaic internal scratch
    return data_budget, vmem_limit


def _choose_tile_d(dim_in, dim_out_p, in_itemsize, budget):
    """Keep the whole (dim_in, dim_out_p) weight resident unless it would eat
    more than ~25% of the VMEM budget; otherwise tile dim_out (mult. of 128)."""
    w_bytes = dim_in * dim_out_p * in_itemsize
    if w_bytes <= budget // 4:
        return int(dim_out_p)
    tile_d = ((budget // 4) // max(dim_in * in_itemsize, 1)) // 128 * 128
    return int(min(max(tile_d, 128), dim_out_p))


def _choose_tile_n(n, dim_in, tile_d, in_itemsize, budget, w_copies):
    """Row tile: as big as fits the VMEM budget (double-buffered x/out tiles +
    `w_copies` copies of the resident W/bias), capped so large N still gets
    >= 4 grid steps (>= 2 per TensorCore on v7x)."""
    resident = w_copies * tile_d * (dim_in * in_itemsize + 4)     # W + bias buffers
    per_row = 2 * (dim_in * in_itemsize + tile_d * 4)             # 2x-buffered x + f32 out
    avail = max(budget - resident, per_row * 8)
    tile = min(avail // per_row, 8192)
    if n >= 1024:                        # only cap when N is large enough to matter
        tile = min(tile, max(8, (_round_up(n, 4) // 4) // 8 * 8))
    tile = max(8, (int(tile) // 8) * 8)  # sublane multiple
    return int(min(tile, _round_up(n, 8)))


# ---------------------------------------------------------------------------
# Parameter preparation (off the hot path)
# ---------------------------------------------------------------------------
def prepare_siren_params(weight, bias, w0=30.0, dtype=jnp.float32):
    """One-time parameter prep.

    weight: (dim_out, dim_in) in the PyTorch nn.Linear convention
    bias  : (dim_out,) or None
    Folds w0 into weight/bias, pre-transposes W, and pads dim_out up to a
    multiple of 128 so output stores are lane-dense full-width vst.
    Returns (wt, b2, dim_out):
        wt: (dim_in, dim_out_p) = (w0 * weight).T cast to `dtype`
        b2: (1, dim_out_p)      = w0 * bias, kept in f32 (f32 epilogue)
    dtype=jnp.bfloat16 enables the fast bf16 MXU / half-DMA path; SIREN with
    w0 folded in amplifies weight quantization error, so validate accuracy.
    (For best MXU utilisation keep dim_in a multiple of 8.)
    """
    dim_out, dim_in = weight.shape
    wt = (w0 * jnp.asarray(weight, jnp.float32)).T                 # (dim_in, dim_out)
    if bias is None:
        b = jnp.zeros((dim_out,), jnp.float32)
    else:
        b = w0 * jnp.asarray(bias, jnp.float32)
    dim_out_p = _round_up(dim_out, 128)
    if dim_out_p != dim_out:
        wt = jnp.pad(wt, ((0, 0), (0, dim_out_p - dim_out)))
        b = jnp.pad(b, (0, dim_out_p - dim_out))
    return wt.astype(dtype), b.reshape(1, dim_out_p), dim_out


# ---------------------------------------------------------------------------
# Forward
# ---------------------------------------------------------------------------
def _pallas_forward(x, wt, b2, tile_n, tile_d, grid_n, grid_d,
                    vmem_limit, single_buffer_resident):
    n, dim_in = x.shape
    dim_out_p = wt.shape[1]

    resident_kwargs = {}
    if single_buffer_resident:
        # Constant index_map => W / bias never change across the grid: 1 buffer.
        resident_kwargs = dict(pipeline_mode=pl.Buffered(1))

    in_specs = [
        pl.BlockSpec((tile_n, dim_in), lambda i, j: (i, 0)),                     # x rows
        pl.BlockSpec((dim_in, tile_d), lambda i, j: (0, j), **resident_kwargs),  # W^T
        pl.BlockSpec((1, tile_d), lambda i, j: (0, j), **resident_kwargs),       # bias
    ]
    out_specs = pl.BlockSpec((tile_n, tile_d), lambda i, j: (i, j))

    cost = pl.CostEstimate(
        flops=2 * n * dim_in * dim_out_p,
        transcendentals=n * dim_out_p,
        bytes_accessed=(x.size * x.dtype.itemsize
                        + wt.size * wt.dtype.itemsize
                        + b2.size * b2.dtype.itemsize
                        + n * dim_out_p * 4),
    )

    return pl.pallas_call(
        _siren_kernel,
        out_shape=jax.ShapeDtypeStruct((n, dim_out_p), jnp.float32),
        grid_spec=pl.GridSpec(
            grid=(grid_n, grid_d),
            in_specs=in_specs,
            out_specs=out_specs,
        ),
        compiler_params=pltpu.CompilerParams(
            dimension_semantics=("parallel", "parallel"),
            vmem_limit_bytes=vmem_limit,
        ),
        cost_estimate=cost,
    )(x, wt, b2)


def siren_apply(params, x, *, tile_n=None, tile_d=None):
    """y = sin(x @ wt + b) with (wt, b2, dim_out) from prepare_siren_params.

    x: (N, dim_in).  Returns (N, dim_out) float32.  The grid covers the
    *unpadded* N (no hot-path row padding / output slicing).
    """
    wt, b2, dim_out = params
    n, dim_in = x.shape
    assert wt.shape[0] == dim_in, (wt.shape, x.shape)
    dim_out_p = wt.shape[1]

    if x.dtype != wt.dtype:            # only triggers on an explicit bf16 opt-in
        x = x.astype(wt.dtype)
    in_itemsize = jnp.dtype(x.dtype).itemsize

    budget, vmem_limit = _vmem_budget_bytes()
    if tile_d is None:
        tile_d = _choose_tile_d(dim_in, dim_out_p, in_itemsize, budget)
    tile_d = int(tile_d)
    grid_d = int(pl.cdiv(dim_out_p, tile_d))
    single_buf = grid_d == 1           # W is truly resident only with a 1-step dim_out axis

    if tile_n is None:
        tile_n = _choose_tile_n(n, dim_in, tile_d, in_itemsize, budget,
                                w_copies=1 if single_buf else 2)
    tile_n = max(8, (int(tile_n) // 8) * 8)
    grid_n = int(pl.cdiv(n, tile_n))

    if single_buf:
        try:
            out = _pallas_forward(x, wt, b2, tile_n, tile_d, grid_n, grid_d,
                                  vmem_limit, single_buffer_resident=True)
        except Exception:
            # Fallback if pipeline_mode=pl.Buffered(1) is not supported here.
            out = _pallas_forward(x, wt, b2, tile_n, tile_d, grid_n, grid_d,
                                  vmem_limit, single_buffer_resident=False)
    else:
        out = _pallas_forward(x, wt, b2, tile_n, tile_d, grid_n, grid_d,
                              vmem_limit, single_buffer_resident=False)

    return out[:, :dim_out] if dim_out_p != dim_out else out


def siren_forward(x, weight, bias, w0=30.0, *, tile_n=None, tile_d=None):
    """Convenience wrapper matching the PyTorch module's forward signature.

    Prefer prepare_siren_params(...) once + siren_apply(...) per call so the
    transpose / w0-fold / lane padding are not redone every forward.
    """
    params = prepare_siren_params(weight, bias, w0)
    return siren_apply(params, x, tile_n=tile_n, tile_d=tile_d)


def siren_init_params(key, dim_in, dim_out, w0=30.0, c=6.0, is_first=False, use_bias=True):
    """Matches the PyTorch Siren.init_ semantics (PyTorch (dim_out, dim_in) layout)."""
    w_std = (1.0 / dim_in) if is_first else (math.sqrt(c / dim_in) / w0)
    kw, kb = jax.random.split(key)
    weight = jax.random.uniform(
        kw, (dim_out, dim_in), minval=-w_std, maxval=w_std, dtype=jnp.float32)
    bias = None
    if use_bias:
        bias = jax.random.uniform(
            kb, (dim_out,), minval=-w_std, maxval=w_std, dtype=jnp.float32)
    return weight, bias


# TODO(synk): a user-supplied non-Sine `activation` override from the PyTorch
# module is not implemented; this kernel hard-codes the default sin(w0 * .) path.

if __name__ == "__main__":
    key = jax.random.PRNGKey(0)
    k_x, k_h, k_o = jax.random.split(key, 3)

    # --- hidden layer: ragged N, multi-step row grid, lane-dense dim_out ----
    n, dim_in, dim_hidden, w0 = 1000, 32, 128, 30.0
    x = jax.random.normal(k_x, (n, dim_in), dtype=jnp.float32)
    w_h, b_h = siren_init_params(k_h, dim_in, dim_hidden, w0=w0, is_first=True)

    params_h = prepare_siren_params(w_h, b_h, w0)
    out_h = jax.block_until_ready(siren_apply(params_h, x, tile_n=256))  # 4 row steps, ragged last block
    ref_h = jnp.sin(w0 * (x @ w_h.T + b_h))
    assert out_h.shape == (n, dim_hidden)
    assert jnp.allclose(out_h, ref_h, atol=3e-5, rtol=3e-5), float(jnp.max(jnp.abs(out_h - ref_h)))

    # --- small output head: dim_out=3 padded to a lane-dense 128 internally --
    w_o, b_o = siren_init_params(k_o, dim_in, 3, w0=w0, is_first=False)
    params_o = prepare_siren_params(w_o, b_o, w0)
    out_o = jax.block_until_ready(siren_apply(params_o, x))
    ref_o = jnp.sin(w0 * (x @ w_o.T + b_o))
    assert out_o.shape == (n, 3)
    assert jnp.allclose(out_o, ref_o, atol=3e-5, rtol=3e-5), float(jnp.max(jnp.abs(out_o - ref_o)))

    # --- optional bf16 operand path (bf16 MXU / half DMA; f32 accumulation) --
    params_bf16 = prepare_siren_params(w_h, b_h, w0, dtype=jnp.bfloat16)
    out_bf16 = jax.block_until_ready(siren_apply(params_bf16, x, tile_n=256))
    assert out_bf16.shape == (n, dim_hidden)
    assert jnp.allclose(out_bf16, ref_h, atol=0.25), float(jnp.max(jnp.abs(out_bf16 - ref_h)))

    print("KERNEL_OK")
</pallas_src>

<mosaic_0001>
module attributes {stable_mosaic.version = 11 : i64} {
  func.func @_siren_kernel(%arg0: i32, %arg1: i32, %arg2: memref<256x32xf32, #tpu.memory_space<vmem>>, %arg3: memref<32x128xf32, #tpu.memory_space<vmem>>, %arg4: memref<1x128xf32, #tpu.memory_space<vmem>>, %arg5: memref<256x128xf32, #tpu.memory_space<vmem>>) attributes {dimension_semantics = [#tpu.dimension_semantics<parallel>, #tpu.dimension_semantics<parallel>], iteration_bounds = array<i64: 4, 1>, scalar_prefetch = 0 : i64, scratch_operands = 0 : i64, tpu.core_type = #tpu.core_type<tc>, window_params = [{transform_indices = @transform_0, window_bounds = array<i64: 256, 32>}, {pipeline_mode = #tpu.pipeline_mode<synchronous>, transform_indices = @transform_1, window_bounds = array<i64: 32, 128>}, {pipeline_mode = #tpu.pipeline_mode<synchronous>, transform_indices = @transform_2, window_bounds = array<i64: 1, 128>}, {transform_indices = @transform_3, window_bounds = array<i64: 256, 128>}]} {
    %c0 = arith.constant 0 : index
    %c0_0 = arith.constant 0 : index
    %0 = vector.load %arg2[%c0, %c0_0] : memref<256x32xf32, #tpu.memory_space<vmem>>, vector<256x32xf32>
    %c0_1 = arith.constant 0 : index
    %c0_2 = arith.constant 0 : index
    %1 = vector.load %arg3[%c0_1, %c0_2] : memref<32x128xf32, #tpu.memory_space<vmem>>, vector<32x128xf32>
    %cst = arith.constant dense<0.000000e+00> : vector<256x128xf32>
    %2 = tpu.matmul %0, %1, %cst {dimension_numbers = #tpu.dot_dimension_numbers<[1], [0], [0], [1], [0, 0, 1, 1], [], []>} : vector<256x32xf32>, vector<32x128xf32>, vector<256x128xf32> -> vector<256x128xf32>
    %c0_3 = arith.constant 0 : index
    %c0_4 = arith.constant 0 : index
    %3 = vector.load %arg4[%c0_3, %c0_4] : memref<1x128xf32, #tpu.memory_space<vmem>>, vector<1x128xf32>
    %4 = vector.broadcast %3 : vector<1x128xf32> to vector<256x128xf32>
    %5 = arith.addf %2, %4 : vector<256x128xf32>
    %6 = math.sin %5 : vector<256x128xf32>
    %c0_5 = arith.constant 0 : index
    %c0_6 = arith.constant 0 : index
    %7 = vector.load %arg5[%c0_5, %c0_6] : memref<256x128xf32, #tpu.memory_space<vmem>>, vector<256x128xf32>
    tpu.vector_store %arg5[%c0_5, %c0_6], %6 {strides = array<i32>} : memref<256x128xf32, #tpu.memory_space<vmem>>, vector<256x128xf32>,
    return
  }
  func.func @transform_0(%arg0: i32, %arg1: i32) -> (i32, i32) {
    %c0_i32 = arith.constant 0 : i32
    %c0_i32_0 = arith.constant 0 : i32
    return %arg0, %c0_i32 : i32, i32
  }
  func.func @transform_1(%arg0: i32, %arg1: i32) -> (i32, i32) {
    %c0_i32 = arith.constant 0 : i32
    %c0_i32_0 = arith.constant 0 : i32
    return %c0_i32, %arg1 : i32, i32
  }
  func.func @transform_2(%arg0: i32, %arg1: i32) -> (i32, i32) {
    %c0_i32 = arith.constant 0 : i32
    %c0_i32_0 = arith.constant 0 : i32
    return %c0_i32, %arg1 : i32, i32
  }
  func.func @transform_3(%arg0: i32, %arg1: i32) -> (i32, i32) {
    %c0_i32 = arith.constant 0 : i32
    return %arg0, %arg1 : i32, i32
  }
}

module attributes {stable_mosaic.version = 11 : i64} {
  func.func @_siren_kernel(%arg0: i32, %arg1: i32, %arg2: memref<256x32xf32, #tpu.memory_space<vmem>>, %arg3: memref<32x128xf32, #tpu.memory_space<vmem>>, %arg4: memref<1x128xf32, #tpu.memory_space<vmem>>, %arg5: memref<256x128xf32, #tpu.memory_space<vmem>>) attributes {dimension_semantics = [#tpu.dimension_semantics<parallel>, #tpu.dimension_semantics<parallel>], iteration_bounds = array<i64: 4, 1>, scalar_prefetch = 0 : i64, scratch_operands = 0 : i64, tpu.core_type = #tpu.core_type<tc>, window_params = [{transform_indices = @transform_0, window_bounds = array<i64: 256, 32>}, {transform_indices = @transform_1, window_bounds = array<i64: 32, 128>}, {transform_indices = @transform_2, window_bounds = array<i64: 1, 128>}, {transform_indices = @transform_3, window_bounds = array<i64: 256, 128>}]} {
    %c0 = arith.constant 0 : index
    %c0_0 = arith.constant 0 : index
    %0 = vector.load %arg2[%c0, %c0_0] : memref<256x32xf32, #tpu.memory_space<vmem>>, vector<256x32xf32>
    %c0_1 = arith.constant 0 : index
    %c0_2 = arith.constant 0 : index
    %1 = vector.load %arg3[%c0_1, %c0_2] : memref<32x128xf32, #tpu.memory_space<vmem>>, vector<32x128xf32>
    %cst = arith.constant dense<0.000000e+00> : vector<256x128xf32>
    %2 = tpu.matmul %0, %1, %cst {dimension_numbers = #tpu.dot_dimension_numbers<[1], [0], [0], [1], [0, 0, 1, 1], [], []>} : vector<256x32xf32>, vector<32x128xf32>, vector<256x128xf32> -> vector<256x128xf32>
    %c0_3 = arith.constant 0 : index
    %c0_4 = arith.constant 0 : index
    %3 = vector.load %arg4[%c0_3, %c0_4] : memref<1x128xf32, #tpu.memory_space<vmem>>, vector<1x128xf32>
    %4 = vector.broadcast %3 : vector<1x128xf32> to vector<256x128xf32>
    %5 = arith.addf %2, %4 : vector<256x128xf32>
    %6 = math.sin %5 : vector<256x128xf32>
    %c0_5 = arith.constant 0 : index
    %c0_6 = arith.constant 0 : index
    %7 = vector.load %arg5[%c0_5, %c0_6] : memref<256x128xf32, #tpu.memory_space<vmem>>, vector<256x128xf32>
    tpu.vector_store %arg5[%c0_5, %c0_6], %6 {strides = array<i32>} : memref<256x128xf32, #tpu.memory_space<vmem>>, vector<256x128xf32>,
    return
  }
  func.func @transform_0(%arg0: i32, %arg1: i32) -> (i32, i32) {
    %c0_i32 = arith.constant 0 : i32
    %c0_i32_0 = arith.constant 0 : i32
    return %arg0, %c0_i32 : i32, i32
  }
  func.func @transform_1(%arg0: i32, %arg1: i32) -> (i32, i32) {
    %c0_i32 = arith.constant 0 : i32
    %c0_i32_0 = arith.constant 0 : i32
    return %c0_i32, %arg1 : i32, i32
  }
  func.func @transform_2(%arg0: i32, %arg1: i32) -> (i32, i32) {
    %c0_i32 = arith.constant 0 : i32
    %c0_i32_0 = arith.constant 0 : i32
    return %c0_i32, %arg1 : i32, i32
  }
  func.func @transform_3(%arg0: i32, %arg1: i32) -> (i32, i32) {
    %c0_i32 = arith.constant 0 : i32
    return %arg0, %arg1 : i32, i32
  }
}

</mosaic_0001>

<llo_original>
// kernel: tpu_custom_call.1
$region0: #{tpu_custom_call.1}
  #allocation0 [shape = 'u32[]', space=smem, size = 0x4, offset = 0x4, fixed_abs, tag = 'smem constant byte address 0x4 - core index']
  #allocation1 [shape = 'u32[144,128]{1,0:T(1,128)}', space=vmem, size = 0x12000, scoped, tag = 'internal scratch']
  %s0 = inlined_call_operand.vmem [shape: f32[1000,32], index: 0, kind: input, shape index: {}]
  %s1 = inlined_call_operand.vmem [shape: f32[32,128], index: 1, kind: input, shape index: {}]
  %s2 = inlined_call_operand.vmem [shape: f32[1,128], index: 2, kind: input, shape index: {}]
  %s3 = inlined_call_operand.hbm [shape: f32[1000,128], index: 3, kind: output, shape index: {}]
  %s4 = sld [smem:[#allocation0]]
  $region45: #{tpu_custom_call.1} parent=0
    _
  %s6 = ssub.s32 1, %s4
  %s7 = scalar_select 0, %s6, %s4
  $region1: #{tpu_custom_call.1} parent=0
    #allocation2 [shape = 'u8[262144]{0}', space=vmem, size = 0x40000, scoped, tag = 'output window, operand 0']
    #allocation3 [shape = 's32[2]{0}', space=sflag, size = 0x8, scoped, tag = 'scoped memory for tpu_custom_call.1']
    %8 = vsyncpa [#allocation3], 0
    %s9 = scalar_lea.sflag [#allocation3], 1
    %10 = vsyncpa %s9, 0
    loop: start=0, step=1, limit=6
    $region2: #{tpu_custom_call.1} parent=1 // loop_pre_header
      _
    $region3: #{tpu_custom_call.1} parent=1 // loop_header
      %s12 = sphi 0, %s16
      %p13 = scmp.ge.s32.totalorder %s12, 6
      %s19 = sphi 0, %s31
      %s20 = sphi 0, %s27
      %s21 = sphi 0, %s19
      %s22 = sphi 0, %s20
      %s23 = sphi 0, %s21
      %s24 = sphi 0, %s22
      %s34 = sphi 0, %s36
      %s37 = sphi 0, %s34
      %s38 = sphi 0, %s37
      %s54 = sphi 0, %s38
      %s60 = sphi 0, %s62
      %s63 = sphi 0, %s60
      %s64 = sphi 0, %s63
      %s80 = sphi 0, %s64
      %s86 = sphi 0, %s88
      %s89 = sphi 0, %s86
      %s90 = sphi 0, %s89
      %s106 = sphi 0, %s90
      %s114 = sphi 0, %s116
      %s117 = sphi 0, %s114
      %s118 = sphi 0, %s117
      %s134 = sphi 0, %s118
    $region4: #{tpu_custom_call.1} parent=1 // loop_header_branch
      %15 = sbr.rel (%p13) target = $region8
    $region5: #{tpu_custom_call.1} parent=1 // loop_body
      %s17 = ssub.s32 %s12, 1
      %s18 = ssub.s32 %s12, 2
      %s25 = sadd.s32 1, %s20
      %p26 = scmp.ge.s32.totalorder %s25, 1
      %s27 = scalar_select %p26, 0, %s25
      %s28 = sadd.s32 1, %s19
      %s29 = scalar_select %p26, %s28, %s19
      %p30 = scmp.ge.s32.totalorder %s29, 4
      %s31 = scalar_select %p30, 0, %s29
      %s32 = ssub.s32 %s19, %s31
      %p33 = scmp.eq.s32.totalorder %s32, 0
      %s35 = sadd.s32 %s34, 1
      %s36 = scalar_select %p33, %s34, %s35
      %p39 = pneg %p33
      %p40 = scmp.eq.s32.totalorder %s12, 3
      %p41 = por %p39, %p40
      %p42 = scmp.ne.s32.totalorder %s34, %s37
      %p43 = scmp.eq.s32.totalorder %s12, 0
      %p44 = por %p42, %p43
      %p45 = scmp.ne.s32.totalorder %s34, %s37
      %p46 = scmp.eq.s32.totalorder %s17, 3
      %p47 = por %p45, %p46
      %p48 = scmp.ne.s32.totalorder %s37, %s38
      %p49 = scmp.eq.s32.totalorder %s17, 0
      %p50 = por %p48, %p49
      %p51 = scmp.ne.s32.totalorder %s37, %s38
      %p52 = scmp.eq.s32.totalorder %s18, 3
      %p53 = por %p51, %p52
      %p55 = scmp.ne.s32.totalorder %s38, %s54
      %p56 = scmp.eq.s32.totalorder %s18, 0
      %p57 = por %p55, %p56
      %s58 = ssub.s32 %s20, %s27
      %p59 = scmp.eq.s32.totalorder %s58, 0
      %s61 = sadd.s32 %s60, 1
      %s62 = scalar_select %p59, %s60, %s61
      %p65 = pneg %p59
      %p66 = scmp.eq.s32.totalorder %s12, 3
      %p67 = por %p65, %p66
      %p68 = scmp.ne.s32.totalorder %s60, %s63
      %p69 = scmp.eq.s32.totalorder %s12, 0
      %p70 = por %p68, %p69
      %p71 = scmp.ne.s32.totalorder %s60, %s63
      %p72 = scmp.eq.s32.totalorder %s17, 3
      %p73 = por %p71, %p72
      %p74 = scmp.ne.s32.totalorder %s63, %s64
      %p75 = scmp.eq.s32.totalorder %s17, 0
      %p76 = por %p74, %p75
      %p77 = scmp.ne.s32.totalorder %s63, %s64
      %p78 = scmp.eq.s32.totalorder %s18, 3
      %p79 = por %p77, %p78
      %p81 = scmp.ne.s32.totalorder %s64, %s80
      %p82 = scmp.eq.s32.totalorder %s18, 0
      %p83 = por %p81, %p82
      %s84 = ssub.s32 %s20, %s27
      %p85 = scmp.eq.s32.totalorder %s84, 0
      %s87 = sadd.s32 %s86, 1
      %s88 = scalar_select %p85, %s86, %s87
      %p91 = pneg %p85
      %p92 = scmp.eq.s32.totalorder %s12, 3
      %p93 = por %p91, %p92
      %p94 = scmp.ne.s32.totalorder %s86, %s89
      %p95 = scmp.eq.s32.totalorder %s12, 0
      %p96 = por %p94, %p95
      %p97 = scmp.ne.s32.totalorder %s86, %s89
      %p98 = scmp.eq.s32.totalorder %s17, 3
      %p99 = por %p97, %p98
      %p100 = scmp.ne.s32.totalorder %s89, %s90
      %p101 = scmp.eq.s32.totalorder %s17, 0
      %p102 = por %p100, %p101
      %p103 = scmp.ne.s32.totalorder %s89, %s90
      %p104 = scmp.eq.s32.totalorder %s18, 3
      %p105 = por %p103, %p104
      %p107 = scmp.ne.s32.totalorder %s90, %s106
      %p108 = scmp.eq.s32.totalorder %s18, 0
      %p109 = por %p107, %p108
      %s110 = ssub.s32 %s19, %s31
      %s111 = ssub.s32 %s20, %s27
      %s112 = sor.u32 %s110, %s111
      %p113 = scmp.eq.s32.totalorder %s112, 0
      %s115 = sadd.s32 %s114, 1
      %s116 = scalar_select %p113, %s114, %s115
      %p119 = pneg %p113
      %p120 = scmp.eq.s32.totalorder %s12, 3
      %p121 = por %p119, %p120
      %p122 = scmp.ne.s32.totalorder %s114, %s117
      %p123 = scmp.eq.s32.totalorder %s12, 0
      %p124 = por %p122, %p123
      %p125 = scmp.ne.s32.totalorder %s114, %s117
      %p126 = scmp.eq.s32.totalorder %s17, 3
      %p127 = por %p125, %p126
      %p128 = scmp.ne.s32.totalorder %s117, %s118
      %p129 = scmp.eq.s32.totalorder %s17, 0
      %p130 = por %p128, %p129
      %p131 = scmp.ne.s32.totalorder %s117, %s118
      %p132 = scmp.eq.s32.totalorder %s18, 3
      %p133 = por %p131, %p132
      %p135 = scmp.ne.s32.totalorder %s118, %s134
      %p136 = scmp.eq.s32.totalorder %s18, 0
      %p137 = por %p135, %p136
      %p138 = scmp.le.s32.totalorder 1, %s12
      %p139 = scmp.lt.s32.totalorder %s12, 5
      %p140 = pnand %p138, %p139
      %p141 = pneg %p140
      // Predicated region
      $region9: #{tpu_custom_call.1} parent=5 // pred_check
        _
      $region10: #{tpu_custom_call.1} parent=5 // pred_check_branch
        %143 = sbr.rel (%p140) target = $region12
      $region11: #{tpu_custom_call.1} parent=5 // pred_region
        %s144 = ssub.s32 %s12, 1
        // Predicated region
        $region13: #{tpu_custom_call.1} parent=11 // pred_check
          %p145 = pneg %p76
        $region14: #{tpu_custom_call.1} parent=11 // pred_check_branch
          %147 = sbr.rel (%p145) target = $region16
        $region15: #{tpu_custom_call.1} parent=11 // pred_region
          %p148 = scmp.lt.s32.totalorder %s22, 0
          %s149 = scalar_select %p148, %s22, 0
          %s150 = smul.addr %s149, 8
          %s151 = scalar_lea.vmem %s1, %s150
        $region16: #{tpu_custom_call.1} parent=11 // pred_fallthru
          _
        // Predicated region
        $region17: #{tpu_custom_call.1} parent=11 // pred_check
          %p152 = pneg %p102
        $region18: #{tpu_custom_call.1} parent=11 // pred_check_branch
          %154 = sbr.rel (%p152) target = $region20
        $region19: #{tpu_custom_call.1} parent=11 // pred_region
          %p155 = scmp.lt.s32.totalorder %s22, 0
          %s156 = scalar_select %p155, %s22, 0
          %s157 = scalar_lea.vmem %s2, %s156
        $region20: #{tpu_custom_call.1} parent=11 // pred_fallthru
          _
      $region12: #{tpu_custom_call.1} parent=5 // pred_fallthru
        _
      %p158 = scmp.lt.s32.totalorder %s12, 4
      // Predicated region
      $region21: #{tpu_custom_call.1} parent=5 // pred_check
        %p159 = pneg %p158
      $region22: #{tpu_custom_call.1} parent=5 // pred_check_branch
        %161 = sbr.rel (%p159) target = $region24
      $region23: #{tpu_custom_call.1} parent=5 // pred_region
        // Predicated region
        $region25: #{tpu_custom_call.1} parent=23 // pred_check
          %p162 = pneg %p44
        $region26: #{tpu_custom_call.1} parent=23 // pred_check_branch
          %164 = sbr.rel (%p162) target = $region28
        $region27: #{tpu_custom_call.1} parent=23 // pred_region
          %s165 = smul.u32 32, %s19
          %s166 = ssub.s32 125, %s165
          %p167 = scmp.lt.s32.totalorder %s166, 32
          %s168 = scalar_select %p167, %s166, 32
          %s169 = smul.u32 128, %s168
          %p170 = scmp.lt.s32.totalorder %s165, 124
          %s171 = scalar_select %p170, %s165, 124
          %s172 = smul.addr %s171, 8
          %s173 = scalar_lea.vmem %s0, %s172
          %s174 = smul.u32 32, %s19
          %s175 = ssub.s32 125, %s174
          %p176 = scmp.lt.s32.totalorder %s175, 32
          %s177 = scalar_select %p176, %s175, 32
          %s178 = smul.u32 128, %s177
        $region28: #{tpu_custom_call.1} parent=23 // pred_fallthru
          _
      $region24: #{tpu_custom_call.1} parent=5 // pred_fallthru
        _
      %p179 = scmp.le.s32.totalorder 1, %s12
      %p180 = scmp.lt.s32.totalorder %s12, 5
      %p181 = pnand %p179, %p180
      %p182 = pneg %p181
      // Predicated region
      $region29: #{tpu_custom_call.1} parent=5 // pred_check
        _
      $region30: #{tpu_custom_call.1} parent=5 // pred_check_branch
        %184 = sbr.rel (%p181) target = $region32
      $region31: #{tpu_custom_call.1} parent=5 // pred_region
        %s185 = ssub.s32 %s12, 1
        %s186 = smul.u32 32, %s21
        %s187 = ssub.s32 125, %s186
        %p188 = scmp.lt.s32.totalorder %s187, 32
        %s189 = scalar_select %p188, %s187, 32
        %s190 = smul.u32 128, %s189
        %p191 = scmp.lt.s32.totalorder %s186, 124
        %s192 = scalar_select %p191, %s186, 124
        %s193 = smul.addr %s192, 8
        %s194 = scalar_lea.vmem %s0, %s193
        %p195 = pneg %p50
        %p196 = pneg %p47
        %p197 = scmp.lt.s32.totalorder %s22, 0
        %s198 = scalar_select %p197, %s22, 0
        %s199 = smul.addr %s198, 8
        %s200 = scalar_lea.vmem %s1, %s199
        %p201 = pneg %p76
        %p202 = pneg %p73
        %p203 = scmp.lt.s32.totalorder %s22, 0
        %s204 = scalar_select %p203, %s22, 0
        %s205 = scalar_lea.vmem %s2, %s204
        %p206 = pneg %p102
        %p207 = pneg %p99
        %p208 = pneg %p130
        %p209 = pneg %p127
        %s210 = sand.u32 %s117, 1
        %s211 = scalar_lea.sflag [#allocation3], %s210
        %s212 = sand.u32 %s117, 1
        %s213 = smul.addr %s212, 256
        %s214 = scalar_lea.vmem [#allocation2], %s213
        %s215 = smul.u32 32, %s21
        %s216 = ssub.s32 125, %s215
        %p217 = scmp.lt.s32.totalorder %s216, 32
        %s218 = scalar_select %p217, %s216, 32
        %s219 = smul.u32 128, %s218
        %p220 = scmp.lt.s32.totalorder %s215, 124
        %s221 = scalar_select %p220, %s215, 124
        %s222 = smul.addr %s221, 8
        %s223 = scalar_lea.vmem %s0, %s222
        %s224 = smul.u32 32, %s21
        %s225 = ssub.s32 125, %s224
        %p226 = scmp.lt.s32.totalorder %s225, 32
        %s227 = scalar_select %p226, %s225, 32
        %s228 = smul.u32 128, %s227
        %p229 = scmp.lt.s32.totalorder %s22, 0
        %s230 = scalar_select %p229, %s22, 0
        %s231 = smul.addr %s230, 8
        %s232 = scalar_lea.vmem %s1, %s231
        %p233 = scmp.lt.s32.totalorder %s22, 0
        %s234 = scalar_select %p233, %s22, 0
        %s235 = scalar_lea.vmem %s2, %s234
        %s236 = smul.u32 32, %s21
        %s237 = ssub.s32 125, %s236
        %p238 = scmp.lt.s32.totalorder %s237, 32
        %s239 = scalar_select %p238, %s237, 32
        %s240 = smul.u32 128, %s239
        %v241 = vld [vmem:[%s223] sm:$0xff]
        %v242 = vld [vmem:[%s223 + $0x8] sm:$0xff]
        %v243 = vld [vmem:[%s223 + $0x10] sm:$0xff]
        %v244 = vld [vmem:[%s223 + $0x18] sm:$0xff]
        %v245 = vld [vmem:[%s223 + $0x20] sm:$0xff]
        %v246 = vld [vmem:[%s223 + $0x28] sm:$0xff]
        %v247 = vld [vmem:[%s223 + $0x30] sm:$0xff]
        %v248 = vld [vmem:[%s223 + $0x38] sm:$0xff]
        %v249 = vld [vmem:[%s223 + $0x40] sm:$0xff]
        %v250 = vld [vmem:[%s223 + $0x48] sm:$0xff]
        %v251 = vld [vmem:[%s223 + $0x50] sm:$0xff]
        %v252 = vld [vmem:[%s223 + $0x58] sm:$0xff]
        %v253 = vld [vmem:[%s223 + $0x60] sm:$0xff]
        %v254 = vld [vmem:[%s223 + $0x68] sm:$0xff]
        %v255 = vld [vmem:[%s223 + $0x70] sm:$0xff]
        %v256 = vld [vmem:[%s223 + $0x78] sm:$0xff]
        %v257 = vld [vmem:[%s223 + $0x80] sm:$0xff]
        %v258 = vld [vmem:[%s223 + $0x88] sm:$0xff]
        %v259 = vld [vmem:[%s223 + $0x90] sm:$0xff]
        %v260 = vld [vmem:[%s223 + $0x98] sm:$0xff]
        %v261 = vld [vmem:[%s223 + $0xa0] sm:$0xff]
        %v262 = vld [vmem:[%s223 + $0xa8] sm:$0xff]
        %v263 = vld [vmem:[%s223 + $0xb0] sm:$0xff]
        %v264 = vld [vmem:[%s223 + $0xb8] sm:$0xff]
        %v265 = vld [vmem:[%s223 + $0xc0] sm:$0xff]
        %v266 = vld [vmem:[%s223 + $0xc8] sm:$0xff]
        %v267 = vld [vmem:[%s223 + $0xd0] sm:$0xff]
        %v268 = vld [vmem:[%s223 + $0xd8] sm:$0xff]
        %v269 = vld [vmem:[%s223 + $0xe0] sm:$0xff]
        %v270 = vld [vmem:[%s223 + $0xe8] sm:$0xff]
        %v271 = vld [vmem:[%s223 + $0xf0] sm:$0xff]
        %v272 = vld [vmem:[%s223 + $0xf8] sm:$0xff]
        %v273 = vld [vmem:[%s232] sm:$0xff]
        %v274 = vld [vmem:[%s232 + $0x8] sm:$0xff]
        %v275 = vld [vmem:[%s232 + $0x10] sm:$0xff]
        %v276 = vld [vmem:[%s232 + $0x18] sm:$0xff]
        %v277 = vld [vmem:[%s235] sm:$0x1]
        %v279 = vlaneseq
        %v280 = vshrl.u32 %v279, 7
        %v281 = vsub.s32 0, %v280
        %v282 = vrot.slane %v277, %v281
        %vm284 = vcmask 261120
        %v286 = vsel %vm284, %v241, 0
        %v289 = vsel %vm284, %v242, 0
        %v292 = vsel %vm284, %v243, 0
        %v295 = vsel %vm284, %v244, 0
        %v298 = vsel %vm284, %v245, 0
        %v301 = vsel %vm284, %v246, 0
        %v304 = vsel %vm284, %v247, 0
        %v307 = vsel %vm284, %v248, 0
        %v310 = vsel %vm284, %v249, 0
        %v313 = vsel %vm284, %v250, 0
        %v316 = vsel %vm284, %v251, 0
        %v319 = vsel %vm284, %v252, 0
        %v322 = vsel %vm284, %v253, 0
        %v325 = vsel %vm284, %v254, 0
        %v328 = vsel %vm284, %v255, 0
        %v331 = vsel %vm284, %v256, 0
        %v334 = vsel %vm284, %v257, 0
        %v337 = vsel %vm284, %v258, 0
        %v340 = vsel %vm284, %v259, 0
        %v343 = vsel %vm284, %v260, 0
        %v346 = vsel %vm284, %v261, 0
        %v349 = vsel %vm284, %v262, 0
        %v352 = vsel %vm284, %v263, 0
        %v355 = vsel %vm284, %v264, 0
        %v358 = vsel %vm284, %v265, 0
        %v361 = vsel %vm284, %v266, 0
        %v364 = vsel %vm284, %v267, 0
        %v367 = vsel %vm284, %v268, 0
        %v370 = vsel %vm284, %v269, 0
        %v373 = vsel %vm284, %v270, 0
        %v376 = vsel %vm284, %v271, 0
        %v379 = vsel %vm284, %v272, 0
        %381 = vmatprep.subr.mxu0 0.0
        %382 = vmatpush1.msra.mxu0 %v273
        %383 = vmatprep.subr.mxu0 0.0
        %384 = vmatpush1.msra.mxu0 %v274
        %385 = vmatprep.subr.mxu0 0.0
        %386 = vmatpush1.msra.mxu0 %v275
        %387 = vmatprep.subr.mxu0 0.0
        %388 = vmatpush1.msra.mxu0 %v276
        %389 = vmatprep.subr.mxu0 0.0
        %390 = vmatpush1.msra.mxu0 0.0
        %391 = vmatprep.subr.mxu0 0.0
        %392 = vmatpush1.msra.mxu0 0.0
        %393 = vmatprep.subr.mxu0 0.0
        %394 = vmatpush1.msra.mxu0 0.0
        %395 = vmatprep.subr.mxu0 0.0
        %396 = vmatpush1.msra.mxu0 0.0
        %397 = vmatprep.subr.mxu0 0.0
        %398 = vmatpush1.msra.mxu0 0.0
        %399 = vmatprep.subr.mxu0 0.0
        %400 = vmatpush1.msra.mxu0 0.0
        %401 = vmatprep.subr.mxu0 0.0
        %402 = vmatpush1.msra.mxu0 0.0
        %403 = vmatprep.subr.mxu0 0.0
        %404 = vmatpush1.msra.mxu0 0.0
        %405 = vmatprep.subr.mxu0 0.0
        %406 = vmatpush1.msra.mxu0 0.0
        %407 = vmatprep.subr.mxu0 0.0
        %408 = vmatpush1.msra.mxu0 0.0
        %409 = vmatprep.subr.mxu0 0.0
        %410 = vmatpush1.msra.mxu0 0.0
        %411 = vmatprep.subr.mxu0 0.0
        %412 = vmatpush1.msra.mxu0 0.0
        %413 = vmatprep.subr.mxu0 0.0
        %414 = vmatpush1.msra.mxu0 0.0
        %415 = vmatprep.subr.mxu0 0.0
        %416 = vmatpush1.msra.mxu0 0.0
        %417 = vmatprep.subr.mxu0 0.0
        %418 = vmatpush1.msra.mxu0 0.0
        %419 = vmatprep.subr.mxu0 0.0
        %420 = vmatpush1.msra.mxu0 0.0
        %421 = vmatprep.subr.mxu0 0.0
        %422 = vmatpush1.msra.mxu0 0.0
        %423 = vmatprep.subr.mxu0 0.0
        %424 = vmatpush1.msra.mxu0 0.0
        %425 = vmatprep.subr.mxu0 0.0
        %426 = vmatpush1.msra.mxu0 0.0
        %427 = vmatprep.subr.mxu0 0.0
        %428 = vmatpush1.msra.mxu0 0.0
        %429 = vmatprep.subr.mxu0 0.0
        %430 = vmatpush1.msra.mxu0 0.0
        %431 = vmatprep.subr.mxu0 0.0
        %432 = vmatpush1.msra.mxu0 0.0
        %433 = vmatprep.subr.mxu0 0.0
        %434 = vmatpush1.msra.mxu0 0.0
        %435 = vmatprep.subr.mxu0 0.0
        %436 = vmatpush1.msra.mxu0 0.0
        %437 = vmatprep.subr.mxu0 0.0
        %438 = vmatpush1.msra.mxu0 0.0
        %439 = vmatprep.subr.mxu0 0.0
        %440 = vmatpush1.msra.mxu0 0.0
        %441 = vmatprep.subr.mxu0 0.0
        %442 = vmatpush1.msra.mxu0 0.0
        %443 = vmatprep.subr.mxu0 0.0
        %444 = vmatpush1.msra.mxu0 0.0
        %445 = vmatprep.mubr.f32.mxu0 0.0
        %446 = vmatmul.mubr.f32.gmra.mrb[0].mxu0 %v286
        %v447 = vpop.f32.mrb[0].mxu0
        %v448 = vadd.f32 %v282, %v447
        %v449 = vpop.f32.mrb[0].mxu0
        %450 = vmatprep.mubr.f32.mxu0 0.0
        %451 = vmatmul.mubr.f32.gmra.mrb[0].mxu0 %v289
        %v452 = vpop.f32.mrb[0].mxu0
        %v453 = vadd.f32 %v282, %v452
        %v454 = vpop.f32.mrb[0].mxu0
        %455 = vmatprep.mubr.f32.mxu0 0.0
        %456 = vmatmul.mubr.f32.gmra.mrb[0].mxu0 %v292
        %v457 = vpop.f32.mrb[0].mxu0
        %v458 = vadd.f32 %v282, %v457
        %v459 = vpop.f32.mrb[0].mxu0
        %460 = vmatprep.mubr.f32.mxu0 0.0
        %461 = vmatmul.mubr.f32.gmra.mrb[0].mxu0 %v295
        %v462 = vpop.f32.mrb[0].mxu0
        %v463 = vadd.f32 %v282, %v462
        %v464 = vpop.f32.mrb[0].mxu0
        %465 = vmatprep.mubr.f32.mxu0 0.0
        %466 = vmatmul.mubr.f32.gmra.mrb[0].mxu0 %v298
        %v467 = vpop.f32.mrb[0].mxu0
        %v468 = vadd.f32 %v282, %v467
        %v469 = vpop.f32.mrb[0].mxu0
        %470 = vmatprep.mubr.f32.mxu0 0.0
        %471 = vmatmul.mubr.f32.gmra.mrb[0].mxu0 %v301
        %v472 = vpop.f32.mrb[0].mxu0
        %v473 = vadd.f32 %v282, %v472
        %v474 = vpop.f32.mrb[0].mxu0
        %475 = vmatprep.mubr.f32.mxu0 0.0
        %476 = vmatmul.mubr.f32.gmra.mrb[0].mxu0 %v304
        %v477 = vpop.f32.mrb[0].mxu0
        %v478 = vadd.f32 %v282, %v477
        %v479 = vpop.f32.mrb[0].mxu0
        %480 = vmatprep.mubr.f32.mxu0 0.0
        %481 = vmatmul.mubr.f32.gmra.mrb[0].mxu0 %v307
        %v482 = vpop.f32.mrb[0].mxu0
        %v483 = vadd.f32 %v282, %v482
        %v484 = vpop.f32.mrb[0].mxu0
        %485 = vmatprep.mubr.f32.mxu0 0.0
        %486 = vmatmul.mubr.f32.gmra.mrb[0].mxu0 %v310
        %v487 = vpop.f32.mrb[0].mxu0
        %v488 = vadd.f32 %v282, %v487
        %v489 = vpop.f32.mrb[0].mxu0
        %490 = vmatprep.mubr.f32.mxu0 0.0
        %491 = vmatmul.mubr.f32.gmra.mrb[0].mxu0 %v313
        %v492 = vpop.f32.mrb[0].mxu0
        %v493 = vadd.f32 %v282, %v492
        %v494 = vpop.f32.mrb[0].mxu0
        %495 = vmatprep.mubr.f32.mxu0 0.0
        %496 = vmatmul.mubr.f32.gmra.mrb[0].mxu0 %v316
        %v497 = vpop.f32.mrb[0].mxu0
        %v498 = vadd.f32 %v282, %v497
        %v499 = vpop.f32.mrb[0].mxu0
        %500 = vmatprep.mubr.f32.mxu0 0.0
        %501 = vmatmul.mubr.f32.gmra.mrb[0].mxu0 %v319
        %v502 = vpop.f32.mrb[0].mxu0
        %v503 = vadd.f32 %v282, %v502
        %v504 = vpop.f32.mrb[0].mxu0
        %505 = vmatprep.mubr.f32.mxu0 0.0
        %506 = vmatmul.mubr.f32.gmra.mrb[0].mxu0 %v322
        %v507 = vpop.f32.mrb[0].mxu0
        %v508 = vadd.f32 %v282, %v507
        %v509 = vpop.f32.mrb[0].mxu0
        %510 = vmatprep.mubr.f32.mxu0 0.0
        %511 = vmatmul.mubr.f32.gmra.mrb[0].mxu0 %v325
        %v512 = vpop.f32.mrb[0].mxu0
        %v513 = vadd.f32 %v282, %v512
        %v514 = vpop.f32.mrb[0].mxu0
        %515 = vmatprep.mubr.f32.mxu0 0.0
        %516 = vmatmul.mubr.f32.gmra.mrb[0].mxu0 %v328
        %v517 = vpop.f32.mrb[0].mxu0
        %v518 = vadd.f32 %v282, %v517
        %v519 = vpop.f32.mrb[0].mxu0
        %520 = vmatprep.mubr.f32.mxu0 0.0
        %521 = vmatmul.mubr.f32.gmra.mrb[0].mxu0 %v331
        %v522 = vpop.f32.mrb[0].mxu0
        %v523 = vadd.f32 %v282, %v522
        %v524 = vpop.f32.mrb[0].mxu0
        %525 = vmatprep.mubr.f32.mxu0 0.0
        %526 = vmatmul.mubr.f32.gmra.mrb[0].mxu0 %v334
        %v527 = vpop.f32.mrb[0].mxu0
        %v528 = vadd.f32 %v282, %v527
        %v529 = vpop.f32.mrb[0].mxu0
        %530 = vmatprep.mubr.f32.mxu0 0.0
        %531 = vmatmul.mubr.f32.gmra.mrb[0].mxu0 %v337
        %v532 = vpop.f32.mrb[0].mxu0
        %v533 = vadd.f32 %v282, %v532
        %v534 = vpop.f32.mrb[0].mxu0
        %535 = vmatprep.mubr.f32.mxu0 0.0
        %536 = vmatmul.mubr.f32.gmra.mrb[0].mxu0 %v340
        %v537 = vpop.f32.mrb[0].mxu0
        %v538 = vadd.f32 %v282, %v537
        %v539 = vpop.f32.mrb[0].mxu0
        %540 = vmatprep.mubr.f32.mxu0 0.0
        %541 = vmatmul.mubr.f32.gmra.mrb[0].mxu0 %v343
        %v542 = vpop.f32.mrb[0].mxu0
        %v543 = vadd.f32 %v282, %v542
        %v544 = vpop.f32.mrb[0].mxu0
        %545 = vmatprep.mubr.f32.mxu0 0.0
        %546 = vmatmul.mubr.f32.gmra.mrb[0].mxu0 %v346
        %v547 = vpop.f32.mrb[0].mxu0
        %v548 = vadd.f32 %v282, %v547
        %v549 = vpop.f32.mrb[0].mxu0
        %550 = vmatprep.mubr.f32.mxu0 0.0
        %551 = vmatmul.mubr.f32.gmra.mrb[0].mxu0 %v349
        %v552 = vpop.f32.mrb[0].mxu0
        %v553 = vadd.f32 %v282, %v552
        %v554 = vpop.f32.mrb[0].mxu0
        %555 = vmatprep.mubr.f32.mxu0 0.0
        %556 = vmatmul.mubr.f32.gmra.mrb[0].mxu0 %v352
        %v557 = vpop.f32.mrb[0].mxu0
        %v558 = vadd.f32 %v282, %v557
        %v559 = vpop.f32.mrb[0].mxu0
        %560 = vmatprep.mubr.f32.mxu0 0.0
        %561 = vmatmul.mubr.f32.gmra.mrb[0].mxu0 %v355
        %v562 = vpop.f32.mrb[0].mxu0
        %v563 = vadd.f32 %v282, %v562
        %v564 = vpop.f32.mrb[0].mxu0
        %565 = vmatprep.mubr.f32.mxu0 0.0
        %566 = vmatmul.mubr.f32.gmra.mrb[0].mxu0 %v358
        %v567 = vpop.f32.mrb[0].mxu0
        %v568 = vadd.f32 %v282, %v567
        %v569 = vpop.f32.mrb[0].mxu0
        %570 = vmatprep.mubr.f32.mxu0 0.0
        %571 = vmatmul.mubr.f32.gmra.mrb[0].mxu0 %v361
        %v572 = vpop.f32.mrb[0].mxu0
        %v573 = vadd.f32 %v282, %v572
        %v574 = vpop.f32.mrb[0].mxu0
        %575 = vmatprep.mubr.f32.mxu0 0.0
        %576 = vmatmul.mubr.f32.gmra.mrb[0].mxu0 %v364
        %v577 = vpop.f32.mrb[0].mxu0
        %v578 = vadd.f32 %v282, %v577
        %v579 = vpop.f32.mrb[0].mxu0
        %580 = vmatprep.mubr.f32.mxu0 0.0
        %581 = vmatmul.mubr.f32.gmra.mrb[0].mxu0 %v367
        %v582 = vpop.f32.mrb[0].mxu0
        %v583 = vadd.f32 %v282, %v582
        %v584 = vpop.f32.mrb[0].mxu0
        %585 = vmatprep.mubr.f32.mxu0 0.0
        %586 = vmatmul.mubr.f32.gmra.mrb[0].mxu0 %v370
        %v587 = vpop.f32.mrb[0].mxu0
        %v588 = vadd.f32 %v282, %v587
        %v589 = vpop.f32.mrb[0].mxu0
        %590 = vmatprep.mubr.f32.mxu0 0.0
        %591 = vmatmul.mubr.f32.gmra.mrb[0].mxu0 %v373
        %v592 = vpop.f32.mrb[0].mxu0
        %v593 = vadd.f32 %v282, %v592
        %v594 = vpop.f32.mrb[0].mxu0
        %595 = vmatprep.mubr.f32.mxu0 0.0
        %596 = vmatmul.mubr.f32.gmra.mrb[0].mxu0 %v376
        %v597 = vpop.f32.mrb[0].mxu0
        %v598 = vadd.f32 %v282, %v597
        %v599 = vpop.f32.mrb[0].mxu0
        %600 = vmatprep.mubr.f32.mxu0 0.0
        %601 = vmatmul.mubr.f32.gmra.mrb[0].mxu0 %v379
        %v602 = vpop.f32.mrb[0].mxu0
        %v603 = vadd.f32 %v282, %v602
        %v604 = vpop.f32.mrb[0].mxu0
        %605 = vdwg.mxu0
        %v606 = vand.u32 2147483647, %v448
        %vm607 = vcmp.le.f32.partialorder %v606, 0.7853982
        %vm608 = vcmp.lt.s32.totalorder %v448, 0
        %v609 = vand.u32 %v448, 2139095040
        %v610 = vshrl.u32 %v609, 23
        %v611 = vsub.s32 %v610, 127
        %v612 = vand.u32 2147483647, %v448
        %v613 = vand.u32 %v612, 8388607
        %v614 = vor.u32 %v613, 8388608
        %v615 = vsub.s32 0, %v614
        %v616 = vadd.s32 %v611, 1
        %vm617 = vcmp.gt.s32.totalorder %v616, 0
        %v618 = vsel %vm617, %v616, 0
        %v619 = vshrl.u32 %v618, 5
        %v620 = vand.u32 %v618, 31
        %v621 = vsub.s32 32, %v620
        %v622 = vshrl.u32 683565275, %v621
        %v623 = vshll.u32 683565275, %v620
        %v624 = vshrl.u32 2475754826, %v621
        %v625 = vor.u32 %v623, %v624
        %v626 = vshll.u32 2475754826, %v620
        %v627 = vshrl.u32 2131351028, %v621
        %v628 = vor.u32 %v626, %v627
        %v629 = vshll.u32 2131351028, %v620
        %v630 = vshrl.u32 2102212464, %v621
        %v631 = vor.u32 %v629, %v630
        %v632 = vshll.u32 2102212464, %v620
        %v633 = vshrl.u32 920167782, %v621
        %v634 = vor.u32 %v632, %v633
        %v635 = vshll.u32 920167782, %v620
        %v636 = vshrl.u32 1326507024, %v621
        %v637 = vor.u32 %v635, %v636
        %vm638 = vcmp.lt.s32.totalorder %v619, 1
        %vm639 = vcmp.lt.s32.totalorder %v619, 2
        %vm640 = vcmp.lt.s32.totalorder %v619, 3
        %vm641 = vcmp.lt.s32.totalorder %v619, 4
        %v642 = vsel %vm638, %v622, %v625
        %v643 = vsel %vm641, %v631, 2102212464
        %v644 = vsel %vm640, %v628, %v643
        %v645 = vsel %vm639, %v642, %v644
        %v646 = vsel %vm638, %v625, %v628
        %v647 = vsel %vm641, %v634, 920167782
        %v648 = vsel %vm640, %v631, %v647
        %v649 = vsel %vm639, %v646, %v648
        %v650 = vsel %vm638, %v628, %v631
        %v651 = vsel %vm641, %v637, 1326507024
        %v652 = vsel %vm640, %v634, %v651
        %v653 = vsel %vm639, %v650, %v652
        %v654 = vshll.u32 %v614, 8
        %v655 = vmul.u32.u64.compose %v654, %v653
        %v656 = vextract.low.u32 %v655
        %v657 = vextract.high.u32 %v655
        %v658 = vmul.u32.u64.compose %v654, %v649
        %v659 = vextract.low.u32 %v658
        %v660 = vextract.high.u32 %v658
        %v661 = vmul.u32 %v654, %v645
        %v662 = vadd.s32 %v657, %v659
        %vm663 = vc.u32 %v657, %v659
        %v664 = vadd.s32 %v660, 1
        %v665 = vsel %vm663, %v664, %v660
        %v666 = vadd.s32 %v661, %v665
        %v667 = vadd.s32 %v666, 536870912
        %v668 = vshrl.u32 %v667, 30
        %v669 = vshll.u32 %v668, 30
        %v670 = vsub.s32 %v666, %v669
        %vm671 = vcmp.lt.s32.totalorder %v670, 0
        %v672 = vsub.s32 0, %v670
        %v673 = vsel %vm671, %v672, %v670
        %v674 = vclz %v673
        %v675 = vsub.s32 %v674, 2
        %vm676 = vcmp.gt.s32.totalorder 0, %v675
        %v677 = vsel %vm676, 0, %v675
        %v678 = vsub.s32 32, %v677
        %v679 = vshll.u32 %v670, %v677
        %v680 = vshrl.u32 %v662, %v678
        %v681 = vor.u32 %v679, %v680
        %v682 = vsub.s32 4294967266, %v677
        %v683 = vadd.s32 %v682, 127
        %v684 = vshll.u32 %v683, 23
        %v685 = vor.u32 4788187, %v684
        %v686 = vand.u32 2147483647, %v685
        %v688 = vcvt.s32.f32 %v681
        %v689 = vmul.f32 %v688, %v686
        %v690 = vxor.u32 %v689, 2147483648
        %v691 = vsel %vm608, %v690, %v689
        %v692 = vsub.s32 4, %v668
        %v693 = vsel %vm608, %v692, %v668
        %v694 = vsel %vm607, %v448, %v691
        %v695 = vsel %vm607, 0, %v693
        %v696 = vcosq.f32.pop %v694
        %v697 = vsinq.f32.pop %v694
        %vm698 = vweird.f32 %v448
        %v699 = vadd.s32 %v695, 3
        %v700 = vand.u32 %v699, 3
        %vm701 = vcmp.lt.s32.totalorder %v700, 2
        %vm702 = vcmp.eq.s32.totalorder %v700, 0
        %v703 = vxor.u32 %v697, 2147483648
        %v704 = vsel %vm702, %v696, %v703
        %vm705 = vcmp.eq.s32.totalorder %v700, 2
        %v706 = vxor.u32 %v696, 2147483648
        %v707 = vsel %vm705, %v706, %v697
        %v708 = vsel %vm701, %v704, %v707
        %v709 = vsel %vm698, nan, %v708
        %v710 = vand.u32 2147483647, %v453
        %vm711 = vcmp.le.f32.partialorder %v710, 0.7853982
        %vm712 = vcmp.lt.s32.totalorder %v453, 0
        %v713 = vand.u32 %v453, 2139095040
        %v714 = vshrl.u32 %v713, 23
        %v715 = vsub.s32 %v714, 127
        %v716 = vand.u32 2147483647, %v453
        %v717 = vand.u32 %v716, 8388607
        %v718 = vor.u32 %v717, 8388608
        %v719 = vsub.s32 0, %v718
        %v720 = vadd.s32 %v715, 1
        %vm721 = vcmp.gt.s32.totalorder %v720, 0
        %v722 = vsel %vm721, %v720, 0
        %v723 = vshrl.u32 %v722, 5
        %v724 = vand.u32 %v722, 31
        %v725 = vsub.s32 32, %v724
        %v726 = vshrl.u32 683565275, %v725
        %v727 = vshll.u32 683565275, %v724
        %v728 = vshrl.u32 2475754826, %v725
        %v729 = vor.u32 %v727, %v728
        %v730 = vshll.u32 2475754826, %v724
        %v731 = vshrl.u32 2131351028, %v725
        %v732 = vor.u32 %v730, %v731
        %v733 = vshll.u32 2131351028, %v724
        %v734 = vshrl.u32 2102212464, %v725
        %v735 = vor.u32 %v733, %v734
        %v736 = vshll.u32 2102212464, %v724
        %v737 = vshrl.u32 920167782, %v725
        %v738 = vor.u32 %v736, %v737
        %v739 = vshll.u32 920167782, %v724
        %v740 = vshrl.u32 1326507024, %v725
        %v741 = vor.u32 %v739, %v740
        %vm742 = vcmp.lt.s32.totalorder %v723, 1
        %vm743 = vcmp.lt.s32.totalorder %v723, 2
        %vm744 = vcmp.lt.s32.totalorder %v723, 3
        %vm745 = vcmp.lt.s32.totalorder %v723, 4
        %v746 = vsel %vm742, %v726, %v729
        %v747 = vsel %vm745, %v735, 2102212464
        %v748 = vsel %vm744, %v732, %v747
        %v749 = vsel %vm743, %v746, %v748
        %v750 = vsel %vm742, %v729, %v732
        %v751 = vsel %vm745, %v738, 920167782
        %v752 = vsel %vm744, %v735, %v751
        %v753 = vsel %vm743, %v750, %v752
        %v754 = vsel %vm742, %v732, %v735
        %v755 = vsel %vm745, %v741, 1326507024
        %v756 = vsel %vm744, %v738, %v755
        %v757 = vsel %vm743, %v754, %v756
        %v758 = vshll.u32 %v718, 8
        %v759 = vmul.u32.u64.compose %v758, %v757
        %v760 = vextract.low.u32 %v759
        %v761 = vextract.high.u32 %v759
        %v762 = vmul.u32.u64.compose %v758, %v753
        %v763 = vextract.low.u32 %v762
        %v764 = vextract.high.u32 %v762
        %v765 = vmul.u32 %v758, %v749
        %v766 = vadd.s32 %v761, %v763
        %vm767 = vc.u32 %v761, %v763
        %v768 = vadd.s32 %v764, 1
        %v769 = vsel %vm767, %v768, %v764
        %v770 = vadd.s32 %v765, %v769
        %v771 = vadd.s32 %v770, 536870912
        %v772 = vshrl.u32 %v771, 30
        %v773 = vshll.u32 %v772, 30
        %v774 = vsub.s32 %v770, %v773
        %vm775 = vcmp.lt.s32.totalorder %v774, 0
        %v776 = vsub.s32 0, %v774
        %v777 = vsel %vm775, %v776, %v774
        %v778 = vclz %v777
        %v779 = vsub.s32 %v778, 2
        %vm780 = vcmp.gt.s32.totalorder 0, %v779
        %v781 = vsel %vm780, 0, %v779
        %v782 = vsub.s32 32, %v781
        %v783 = vshll.u32 %v774, %v781
        %v784 = vshrl.u32 %v766, %v782
        %v785 = vor.u32 %v783, %v784
        %v786 = vsub.s32 4294967266, %v781
        %v787 = vadd.s32 %v786, 127
        %v788 = vshll.u32 %v787, 23
        %v789 = vor.u32 4788187, %v788
        %v790 = vand.u32 2147483647, %v789
        %v792 = vcvt.s32.f32 %v785
        %v793 = vmul.f32 %v792, %v790
        %v794 = vxor.u32 %v793, 2147483648
        %v795 = vsel %vm712, %v794, %v793
        %v796 = vsub.s32 4, %v772
        %v797 = vsel %vm712, %v796, %v772
        %v798 = vsel %vm711, %v453, %v795
        %v799 = vsel %vm711, 0, %v797
        %v800 = vcosq.f32.pop %v798
        %v801 = vsinq.f32.pop %v798
        %vm802 = vweird.f32 %v453
        %v803 = vadd.s32 %v799, 3
        %v804 = vand.u32 %v803, 3
        %vm805 = vcmp.lt.s32.totalorder %v804, 2
        %vm806 = vcmp.eq.s32.totalorder %v804, 0
        %v807 = vxor.u32 %v801, 2147483648
        %v808 = vsel %vm806, %v800, %v807
        %vm809 = vcmp.eq.s32.totalorder %v804, 2
        %v810 = vxor.u32 %v800, 2147483648
        %v811 = vsel %vm809, %v810, %v801
        %v812 = vsel %vm805, %v808, %v811
        %v813 = vsel %vm802, nan, %v812
        %v814 = vand.u32 2147483647, %v458
        %vm815 = vcmp.le.f32.partialorder %v814, 0.7853982
        %vm816 = vcmp.lt.s32.totalorder %v458, 0
        %v817 = vand.u32 %v458, 2139095040
        %v818 = vshrl.u32 %v817, 23
        %v819 = vsub.s32 %v818, 127
        %v820 = vand.u32 2147483647, %v458
        %v821 = vand.u32 %v820, 8388607
        %v822 = vor.u32 %v821, 8388608
        %v823 = vsub.s32 0, %v822
        %v824 = vadd.s32 %v819, 1
        %vm825 = vcmp.gt.s32.totalorder %v824, 0
        %v826 = vsel %vm825, %v824, 0
        %v827 = vshrl.u32 %v826, 5
        %v828 = vand.u32 %v826, 31
        %v829 = vsub.s32 32, %v828
        %v830 = vshrl.u32 683565275, %v829
        %v831 = vshll.u32 683565275, %v828
        %v832 = vshrl.u32 2475754826, %v829
        %v833 = vor.u32 %v831, %v832
        %v834 = vshll.u32 2475754826, %v828
        %v835 = vshrl.u32 2131351028, %v829
        %v836 = vor.u32 %v834, %v835
        %v837 = vshll.u32 2131351028, %v828
        %v838 = vshrl.u32 2102212464, %v829
        %v839 = vor.u32 %v837, %v838
        %v840 = vshll.u32 2102212464, %v828
        %v841 = vshrl.u32 920167782, %v829
        %v842 = vor.u32 %v840, %v841
        %v843 = vshll.u32 920167782, %v828
        %v844 = vshrl.u32 1326507024, %v829
        %v845 = vor.u32 %v843, %v844
        %vm846 = vcmp.lt.s32.totalorder %v827, 1
        %vm847 = vcmp.lt.s32.totalorder %v827, 2
        %vm848 = vcmp.lt.s32.totalorder %v827, 3
        %vm849 = vcmp.lt.s32.totalorder %v827, 4
        %v850 = vsel %vm846, %v830, %v833
        %v851 = vsel %vm849, %v839, 2102212464
        %v852 = vsel %vm848, %v836, %v851
        %v853 = vsel %vm847, %v850, %v852
        %v854 = vsel %vm846, %v833, %v836
        %v855 = vsel %vm849, %v842, 920167782
        %v856 = vsel %vm848, %v839, %v855
        %v857 = vsel %vm847, %v854, %v856
        %v858 = vsel %vm846, %v836, %v839
        %v859 = vsel %vm849, %v845, 1326507024
        %v860 = vsel %vm848, %v842, %v859
        %v861 = vsel %vm847, %v858, %v860
        %v862 = vshll.u32 %v822, 8
        %v863 = vmul.u32.u64.compose %v862, %v861
        %v864 = vextract.low.u32 %v863
        %v865 = vextract.high.u32 %v863
        %v866 = vmul.u32.u64.compose %v862, %v857
        %v867 = vextract.low.u32 %v866
        %v868 = vextract.high.u32 %v866
        %v869 = vmul.u32 %v862, %v853
        %v870 = vadd.s32 %v865, %v867
        %vm871 = vc.u32 %v865, %v867
        %v872 = vadd.s32 %v868, 1
        %v873 = vsel %vm871, %v872, %v868
        %v874 = vadd.s32 %v869, %v873
        %v875 = vadd.s32 %v874, 536870912
        %v876 = vshrl.u32 %v875, 30
        %v877 = vshll.u32 %v876, 30
        %v878 = vsub.s32 %v874, %v877
        %vm879 = vcmp.lt.s32.totalorder %v878, 0
        %v880 = vsub.s32 0, %v878
        %v881 = vsel %vm879, %v880, %v878
        %v882 = vclz %v881
        %v883 = vsub.s32 %v882, 2
        %vm884 = vcmp.gt.s32.totalorder 0, %v883
        %v885 = vsel %vm884, 0, %v883
        %v886 = vsub.s32 32, %v885
        %v887 = vshll.u32 %v878, %v885
        %v888 = vshrl.u32 %v870, %v886
        %v889 = vor.u32 %v887, %v888
        %v890 = vsub.s32 4294967266, %v885
        %v891 = vadd.s32 %v890, 127
        %v892 = vshll.u32 %v891, 23
        %v893 = vor.u32 4788187, %v892
        %v894 = vand.u32 2147483647, %v893
        %v896 = vcvt.s32.f32 %v889
        %v897 = vmul.f32 %v896, %v894
        %v898 = vxor.u32 %v897, 2147483648
        %v899 = vsel %vm816, %v898, %v897
        %v900 = vsub.s32 4, %v876
        %v901 = vsel %vm816, %v900, %v876
        %v902 = vsel %vm815, %v458, %v899
        %v903 = vsel %vm815, 0, %v901
        %v904 = vcosq.f32.pop %v902
        %v905 = vsinq.f32.pop %v902
        %vm906 = vweird.f32 %v458
        %v907 = vadd.s32 %v903, 3
        %v908 = vand.u32 %v907, 3
        %vm909 = vcmp.lt.s32.totalorder %v908, 2
        %vm910 = vcmp.eq.s32.totalorder %v908, 0
        %v911 = vxor.u32 %v905, 2147483648
        %v912 = vsel %vm910, %v904, %v911
        %vm913 = vcmp.eq.s32.totalorder %v908, 2
        %v914 = vxor.u32 %v904, 2147483648
        %v915 = vsel %vm913, %v914, %v905
        %v916 = vsel %vm909, %v912, %v915
        %v917 = vsel %vm906, nan, %v916
        %v918 = vand.u32 2147483647, %v463
        %vm919 = vcmp.le.f32.partialorder %v918, 0.7853982
        %vm920 = vcmp.lt.s32.totalorder %v463, 0
        %v921 = vand.u32 %v463, 2139095040
        %v922 = vshrl.u32 %v921, 23
        %v923 = vsub.s32 %v922, 127
        %v924 = vand.u32 2147483647, %v463
        %v925 = vand.u32 %v924, 8388607
        %v926 = vor.u32 %v925, 8388608
        %v927 = vsub.s32 0, %v926
        %v928 = vadd.s32 %v923, 1
        %vm929 = vcmp.gt.s32.totalorder %v928, 0
        %v930 = vsel %vm929, %v928, 0
        %v931 = vshrl.u32 %v930, 5
        %v932 = vand.u32 %v930, 31
        %v933 = vsub.s32 32, %v932
        %v934 = vshrl.u32 683565275, %v933
        %v935 = vshll.u32 683565275, %v932
        %v936 = vshrl.u32 2475754826, %v933
        %v937 = vor.u32 %v935, %v936
        %v938 = vshll.u32 2475754826, %v932
        %v939 = vshrl.u32 2131351028, %v933
        %v940 = vor.u32 %v938, %v939
        %v941 = vshll.u32 2131351028, %v932
        %v942 = vshrl.u32 2102212464, %v933
        %v943 = vor.u32 %v941, %v942
        %v944 = vshll.u32 2102212464, %v932
        %v945 = vshrl.u32 920167782, %v933
        %v946 = vor.u32 %v944, %v945
        %v947 = vshll.u32 920167782, %v932
        %v948 = vshrl.u32 1326507024, %v933
        %v949 = vor.u32 %v947, %v948
        %vm950 = vcmp.lt.s32.totalorder %v931, 1
        %vm951 = vcmp.lt.s32.totalorder %v931, 2
        %vm952 = vcmp.lt.s32.totalorder %v931, 3
        %vm953 = vcmp.lt.s32.totalorder %v931, 4
        %v954 = vsel %vm950, %v934, %v937
        %v955 = vsel %vm953, %v943, 2102212464
        %v956 = vsel %vm952, %v940, %v955
        %v957 = vsel %vm951, %v954, %v956
        %v958 = vsel %vm950, %v937, %v940
        %v959 = vsel %vm953, %v946, 920167782
        %v960 = vsel %vm952, %v943, %v959
        %v961 = vsel %vm951, %v958, %v960
        %v962 = vsel %vm950, %v940, %v943
        %v963 = vsel %vm953, %v949, 1326507024
        %v964 = vsel %vm952, %v946, %v963
        %v965 = vsel %vm951, %v962, %v964
        %v966 = vshll.u32 %v926, 8
        %v967 = vmul.u32.u64.compose %v966, %v965
        %v968 = vextract.low.u32 %v967
        %v969 = vextract.high.u32 %v967
        %v970 = vmul.u32.u64.compose %v966, %v961
        %v971 = vextract.low.u32 %v970
        %v972 = vextract.high.u32 %v970
        %v973 = vmul.u32 %v966, %v957
        %v974 = vadd.s32 %v969, %v971
        %vm975 = vc.u32 %v969, %v971
        %v976 = vadd.s32 %v972, 1
        %v977 = vsel %vm975, %v976, %v972
        %v978 = vadd.s32 %v973, %v977
        %v979 = vadd.s32 %v978, 536870912
        %v980 = vshrl.u32 %v979, 30
        %v981 = vshll.u32 %v980, 30
        %v982 = vsub.s32 %v978, %v981
        %vm983 = vcmp.lt.s32.totalorder %v982, 0
        %v984 = vsub.s32 0, %v982
        %v985 = vsel %vm983, %v984, %v982
        %v986 = vclz %v985
        %v987 = vsub.s32 %v986, 2
        %vm988 = vcmp.gt.s32.totalorder 0, %v987
        %v989 = vsel %vm988, 0, %v987
        %v990 = vsub.s32 32, %v989
        %v991 = vshll.u32 %v982, %v989
        %v992 = vshrl.u32 %v974, %v990
        %v993 = vor.u32 %v991, %v992
        %v994 = vsub.s32 4294967266, %v989
        %v995 = vadd.s32 %v994, 127
        %v996 = vshll.u32 %v995, 23
        %v997 = vor.u32 4788187, %v996
        %v998 = vand.u32 2147483647, %v997
        %v1000 = vcvt.s32.f32 %v993
        %v1001 = vmul.f32 %v1000, %v998
        %v1002 = vxor.u32 %v1001, 2147483648
        %v1003 = vsel %vm920, %v1002, %v1001
        %v1004 = vsub.s32 4, %v980
        %v1005 = vsel %vm920, %v1004, %v980
        %v1006 = vsel %vm919, %v463, %v1003
        %v1007 = vsel %vm919, 0, %v1005
        %v1008 = vcosq.f32.pop %v1006
        %v1009 = vsinq.f32.pop %v1006
        %vm1010 = vweird.f32 %v463
        %v1011 = vadd.s32 %v1007, 3
        %v1012 = vand.u32 %v1011, 3
        %vm1013 = vcmp.lt.s32.totalorder %v1012, 2
        %vm1014 = vcmp.eq.s32.totalorder %v1012, 0
        %v1015 = vxor.u32 %v1009, 2147483648
        %v1016 = vsel %vm1014, %v1008, %v1015
        %vm1017 = vcmp.eq.s32.totalorder %v1012, 2
        %v1018 = vxor.u32 %v1008, 2147483648
        %v1019 = vsel %vm1017, %v1018, %v1009
        %v1020 = vsel %vm1013, %v1016, %v1019
        %v1021 = vsel %vm1010, nan, %v1020
        %v1022 = vand.u32 2147483647, %v468
        %vm1023 = vcmp.le.f32.partialorder %v1022, 0.7853982
        %vm1024 = vcmp.lt.s32.totalorder %v468, 0
        %v1025 = vand.u32 %v468, 2139095040
        %v1026 = vshrl.u32 %v1025, 23
        %v1027 = vsub.s32 %v1026, 127
        %v1028 = vand.u32 2147483647, %v468
        %v1029 = vand.u32 %v1028, 8388607
        %v1030 = vor.u32 %v1029, 8388608
        %v1031 = vsub.s32 0, %v1030
        %v1032 = vadd.s32 %v1027, 1
        %vm1033 = vcmp.gt.s32.totalorder %v1032, 0
        %v1034 = vsel %vm1033, %v1032, 0
        %v1035 = vshrl.u32 %v1034, 5
        %v1036 = vand.u32 %v1034, 31
        %v1037 = vsub.s32 32, %v1036
        %v1038 = vshrl.u32 683565275, %v1037
        %v1039 = vshll.u32 683565275, %v1036
        %v1040 = vshrl.u32 2475754826, %v1037
        %v1041 = vor.u32 %v1039, %v1040
        %v1042 = vshll.u32 2475754826, %v1036
        %v1043 = vshrl.u32 2131351028, %v1037
        %v1044 = vor.u32 %v1042, %v1043
        %v1045 = vshll.u32 2131351028, %v1036
        %v1046 = vshrl.u32 2102212464, %v1037
        %v1047 = vor.u32 %v1045, %v1046
        %v1048 = vshll.u32 2102212464, %v1036
        %v1049 = vshrl.u32 920167782, %v1037
        %v1050 = vor.u32 %v1048, %v1049
        %v1051 = vshll.u32 920167782, %v1036
        %v1052 = vshrl.u32 1326507024, %v1037
        %v1053 = vor.u32 %v1051, %v1052
        %vm1054 = vcmp.lt.s32.totalorder %v1035, 1
        %vm1055 = vcmp.lt.s32.totalorder %v1035, 2
        %vm1056 = vcmp.lt.s32.totalorder %v1035, 3
        %vm1057 = vcmp.lt.s32.totalorder %v1035, 4
        %v1058 = vsel %vm1054, %v1038, %v1041
        %v1059 = vsel %vm1057, %v1047, 2102212464
        %v1060 = vsel %vm1056, %v1044, %v1059
        %v1061 = vsel %vm1055, %v1058, %v1060
        %v1062 = vsel %vm1054, %v1041, %v1044
        %v1063 = vsel %vm1057, %v1050, 920167782
        %v1064 = vsel %vm1056, %v1047, %v1063
        %v1065 = vsel %vm1055, %v1062, %v1064
        %v1066 = vsel %vm1054, %v1044, %v1047
        %v1067 = vsel %vm1057, %v1053, 1326507024
        %v1068 = vsel %vm1056, %v1050, %v1067
        %v1069 = vsel %vm1055, %v1066, %v1068
        %v1070 = vshll.u32 %v1030, 8
        %v1071 = vmul.u32.u64.compose %v1070, %v1069
        %v1072 = vextract.low.u32 %v1071
        %v1073 = vextract.high.u32 %v1071
        %v1074 = vmul.u32.u64.compose %v1070, %v1065
        %v1075 = vextract.low.u32 %v1074
        %v1076 = vextract.high.u32 %v1074
        %v1077 = vmul.u32 %v1070, %v1061
        %v1078 = vadd.s32 %v1073, %v1075
        %vm1079 = vc.u32 %v1073, %v1075
        %v1080 = vadd.s32 %v1076, 1
        %v1081 = vsel %vm1079, %v1080, %v1076
        %v1082 = vadd.s32 %v1077, %v1081
        %v1083 = vadd.s32 %v1082, 536870912
        %v1084 = vshrl.u32 %v1083, 30
        %v1085 = vshll.u32 %v1084, 30
        %v1086 = vsub.s32 %v1082, %v1085
        %vm1087 = vcmp.lt.s32.totalorder %v1086, 0
        %v1088 = vsub.s32 0, %v1086
        %v1089 = vsel %vm1087, %v1088, %v1086
        %v1090 = vclz %v1089
        %v1091 = vsub.s32 %v1090, 2
        %vm1092 = vcmp.gt.s32.totalorder 0, %v1091
        %v1093 = vsel %vm1092, 0, %v1091
        %v1094 = vsub.s32 32, %v1093
        %v1095 = vshll.u32 %v1086, %v1093
        %v1096 = vshrl.u32 %v1078, %v1094
        %v1097 = vor.u32 %v1095, %v1096
        %v1098 = vsub.s32 4294967266, %v1093
        %v1099 = vadd.s32 %v1098, 127
        %v1100 = vshll.u32 %v1099, 23
        %v1101 = vor.u32 4788187, %v1100
        %v1102 = vand.u32 2147483647, %v1101
        %v1104 = vcvt.s32.f32 %v1097
        %v1105 = vmul.f32 %v1104, %v1102
        %v1106 = vxor.u32 %v1105, 2147483648
        %v1107 = vsel %vm1024, %v1106, %v1105
        %v1108 = vsub.s32 4, %v1084
        %v1109 = vsel %vm1024, %v1108, %v1084
        %v1110 = vsel %vm1023, %v468, %v1107
        %v1111 = vsel %vm1023, 0, %v1109
        %v1112 = vcosq.f32.pop %v1110
        %v1113 = vsinq.f32.pop %v1110
        %vm1114 = vweird.f32 %v468
        %v1115 = vadd.s32 %v1111, 3
        %v1116 = vand.u32 %v1115, 3
        %vm1117 = vcmp.lt.s32.totalorder %v1116, 2
        %vm1118 = vcmp.eq.s32.totalorder %v1116, 0
        %v1119 = vxor.u32 %v1113, 2147483648
        %v1120 = vsel %vm1118, %v1112, %v1119
        %vm1121 = vcmp.eq.s32.totalorder %v1116, 2
        %v1122 = vxor.u32 %v1112, 2147483648
        %v1123 = vsel %vm1121, %v1122, %v1113
        %v1124 = vsel %vm1117, %v1120, %v1123
        %v1125 = vsel %vm1114, nan, %v1124
        %v1126 = vand.u32 2147483647, %v473
        %vm1127 = vcmp.le.f32.partialorder %v1126, 0.7853982
        %vm1128 = vcmp.lt.s32.totalorder %v473, 0
        %v1129 = vand.u32 %v473, 2139095040
        %v1130 = vshrl.u32 %v1129, 23
        %v1131 = vsub.s32 %v1130, 127
        %v1132 = vand.u32 2147483647, %v473
        %v1133 = vand.u32 %v1132, 8388607
        %v1134 = vor.u32 %v1133, 8388608
        %v1135 = vsub.s32 0, %v1134
        %v1136 = vadd.s32 %v1131, 1
        %vm1137 = vcmp.gt.s32.totalorder %v1136, 0
        %v1138 = vsel %vm1137, %v1136, 0
        %v1139 = vshrl.u32 %v1138, 5
        %v1140 = vand.u32 %v1138, 31
        %v1141 = vsub.s32 32, %v1140
        %v1142 = vshrl.u32 683565275, %v1141
        %v1143 = vshll.u32 683565275, %v1140
        %v1144 = vshrl.u32 2475754826, %v1141
        %v1145 = vor.u32 %v1143, %v1144
        %v1146 = vshll.u32 2475754826, %v1140
        %v1147 = vshrl.u32 2131351028, %v1141
        %v1148 = vor.u32 %v1146, %v1147
        %v1149 = vshll.u32 2131351028, %v1140
        %v1150 = vshrl.u32 2102212464, %v1141
        %v1151 = vor.u32 %v1149, %v1150
        %v1152 = vshll.u32 2102212464, %v1140
        %v1153 = vshrl.u32 920167782, %v1141
        %v1154 = vor.u32 %v1152, %v1153
        %v1155 = vshll.u32 920167782, %v1140
        %v1156 = vshrl.u32 1326507024, %v1141
        %v1157 = vor.u32 %v1155, %v1156
        %vm1158 = vcmp.lt.s32.totalorder %v1139, 1
        %vm1159 = vcmp.lt.s32.totalorder %v1139, 2
        %vm1160 = vcmp.lt.s32.totalorder %v1139, 3
        %vm1161 = vcmp.lt.s32.totalorder %v1139, 4
        %v1162 = vsel %vm1158, %v1142, %v1145
        %v1163 = vsel %vm1161, %v1151, 2102212464
        %v1164 = vsel %vm1160, %v1148, %v1163
        %v1165 = vsel %vm1159, %v1162, %v1164
        %v1166 = vsel %vm1158, %v1145, %v1148
        %v1167 = vsel %vm1161, %v1154, 920167782
        %v1168 = vsel %vm1160, %v1151, %v1167
        %v1169 = vsel %vm1159, %v1166, %v1168
        %v1170 = vsel %vm1158, %v1148, %v1151
        %v1171 = vsel %vm1161, %v1157, 1326507024
        %v1172 = vsel %vm1160, %v1154, %v1171
        %v1173 = vsel %vm1159, %v1170, %v1172
        %v1174 = vshll.u32 %v1134, 8
        %v1175 = vmul.u32.u64.compose %v1174, %v1173
        %v1176 = vextract.low.u32 %v1175
        %v1177 = vextract.high.u32 %v1175
        %v1178 = vmul.u32.u64.compose %v1174, %v1169
        %v1179 = vextract.low.u32 %v1178
        %v1180 = vextract.high.u32 %v1178
        %v1181 = vmul.u32 %v1174, %v1165
        %v1182 = vadd.s32 %v1177, %v1179
        %vm1183 = vc.u32 %v1177, %v1179
        %v1184 = vadd.s32 %v1180, 1
        %v1185 = vsel %vm1183, %v1184, %v1180
        %v1186 = vadd.s32 %v1181, %v1185
        %v1187 = vadd.s32 %v1186, 536870912
        %v1188 = vshrl.u32 %v1187, 30
        %v1189 = vshll.u32 %v1188, 30
        %v1190 = vsub.s32 %v1186, %v1189
        %vm1191 = vcmp.lt.s32.totalorder %v1190, 0
        %v1192 = vsub.s32 0, %v1190
        %v1193 = vsel %vm1191, %v1192, %v1190
        %v1194 = vclz %v1193
        %v1195 = vsub.s32 %v1194, 2
        %vm1196 = vcmp.gt.s32.totalorder 0, %v1195
        %v1197 = vsel %vm1196, 0, %v1195
        %v1198 = vsub.s32 32, %v1197
        %v1199 = vshll.u32 %v1190, %v1197
        %v1200 = vshrl.u32 %v1182, %v1198
        %v1201 = vor.u32 %v1199, %v1200
        %v1202 = vsub.s32 4294967266, %v1197
        %v1203 = vadd.s32 %v1202, 127
        %v1204 = vshll.u32 %v1203, 23
        %v1205 = vor.u32 4788187, %v1204
        %v1206 = vand.u32 2147483647, %v1205
        %v1208 = vcvt.s32.f32 %v1201
        %v1209 = vmul.f32 %v1208, %v1206
        %v1210 = vxor.u32 %v1209, 2147483648
        %v1211 = vsel %vm1128, %v1210, %v1209
        %v1212 = vsub.s32 4, %v1188
        %v1213 = vsel %vm1128, %v1212, %v1188
        %v1214 = vsel %vm1127, %v473, %v1211
        %v1215 = vsel %vm1127, 0, %v1213
        %v1216 = vcosq.f32.pop %v1214
        %v1217 = vsinq.f32.pop %v1214
        %vm1218 = vweird.f32 %v473
        %v1219 = vadd.s32 %v1215, 3
        %v1220 = vand.u32 %v1219, 3
        %vm1221 = vcmp.lt.s32.totalorder %v1220, 2
        %vm1222 = vcmp.eq.s32.totalorder %v1220, 0
        %v1223 = vxor.u32 %v1217, 2147483648
        %v1224 = vsel %vm1222, %v1216, %v1223
        %vm1225 = vcmp.eq.s32.totalorder %v1220, 2
        %v1226 = vxor.u32 %v1216, 2147483648
        %v1227 = vsel %vm1225, %v1226, %v1217
        %v1228 = vsel %vm1221, %v1224, %v1227
        %v1229 = vsel %vm1218, nan, %v1228
        %v1230 = vand.u32 2147483647, %v478
        %vm1231 = vcmp.le.f32.partialorder %v1230, 0.7853982
        %vm1232 = vcmp.lt.s32.totalorder %v478, 0
        %v1233 = vand.u32 %v478, 2139095040
        %v1234 = vshrl.u32 %v1233, 23
        %v1235 = vsub.s32 %v1234, 127
        %v1236 = vand.u32 2147483647, %v478
        %v1237 = vand.u32 %v1236, 8388607
        %v1238 = vor.u32 %v1237, 8388608
        %v1239 = vsub.s32 0, %v1238
        %v1240 = vadd.s32 %v1235, 1
        %vm1241 = vcmp.gt.s32.totalorder %v1240, 0
        %v1242 = vsel %vm1241, %v1240, 0
        %v1243 = vshrl.u32 %v1242, 5
        %v1244 = vand.u32 %v1242, 31
        %v1245 = vsub.s32 32, %v1244
        %v1246 = vshrl.u32 683565275, %v1245
        %v1247 = vshll.u32 683565275, %v1244
        %v1248 = vshrl.u32 2475754826, %v1245
        %v1249 = vor.u32 %v1247, %v1248
        %v1250 = vshll.u32 2475754826, %v1244
        %v1251 = vshrl.u32 2131351028, %v1245
        %v1252 = vor.u32 %v1250, %v1251
        %v1253 = vshll.u32 2131351028, %v1244
        %v1254 = vshrl.u32 2102212464, %v1245
        %v1255 = vor.u32 %v1253, %v1254
        %v1256 = vshll.u32 2102212464, %v1244
        %v1257 = vshrl.u32 920167782, %v1245
        %v1258 = vor.u32 %v1256, %v1257
        %v1259 = vshll.u32 920167782, %v1244
        %v1260 = vshrl.u32 1326507024, %v1245
        %v1261 = vor.u32 %v1259, %v1260
        %vm1262 = vcmp.lt.s32.totalorder %v1243, 1
        %vm1263 = vcmp.lt.s32.totalorder %v1243, 2
        %vm1264 = vcmp.lt.s32.totalorder %v1243, 3
        %vm1265 = vcmp.lt.s32.totalorder %v1243, 4
        %v1266 = vsel %vm1262, %v1246, %v1249
        %v1267 = vsel %vm1265, %v1255, 2102212464
        %v1268 = vsel %vm1264, %v1252, %v1267
        %v1269 = vsel %vm1263, %v1266, %v1268
        %v1270 = vsel %vm1262, %v1249, %v1252
        %v1271 = vsel %vm1265, %v1258, 920167782
        %v1272 = vsel %vm1264, %v1255, %v1271
        %v1273 = vsel %vm1263, %v1270, %v1272
        %v1274 = vsel %vm1262, %v1252, %v1255
        %v1275 = vsel %vm1265, %v1261, 1326507024
        %v1276 = vsel %vm1264, %v1258, %v1275
        %v1277 = vsel %vm1263, %v1274, %v1276
        %v1278 = vshll.u32 %v1238, 8
        %v1279 = vmul.u32.u64.compose %v1278, %v1277
        %v1280 = vextract.low.u32 %v1279
        %v1281 = vextract.high.u32 %v1279
        %v1282 = vmul.u32.u64.compose %v1278, %v1273
        %v1283 = vextract.low.u32 %v1282
        %v1284 = vextract.high.u32 %v1282
        %v1285 = vmul.u32 %v1278, %v1269
        %v1286 = vadd.s32 %v1281, %v1283
        %vm1287 = vc.u32 %v1281, %v1283
        %v1288 = vadd.s32 %v1284, 1
        %v1289 = vsel %vm1287, %v1288, %v1284
        %v1290 = vadd.s32 %v1285, %v1289
        %v1291 = vadd.s32 %v1290, 536870912
        %v1292 = vshrl.u32 %v1291, 30
        %v1293 = vshll.u32 %v1292, 30
        %v1294 = vsub.s32 %v1290, %v1293
        %vm1295 = vcmp.lt.s32.totalorder %v1294, 0
        %v1296 = vsub.s32 0, %v1294
        %v1297 = vsel %vm1295, %v1296, %v1294
        %v1298 = vclz %v1297
        %v1299 = vsub.s32 %v1298, 2
        %vm1300 = vcmp.gt.s32.totalorder 0, %v1299
        %v1301 = vsel %vm1300, 0, %v1299
        %v1302 = vsub.s32 32, %v1301
        %v1303 = vshll.u32 %v1294, %v1301
        %v1304 = vshrl.u32 %v1286, %v1302
        %v1305 = vor.u32 %v1303, %v1304
        %v1306 = vsub.s32 4294967266, %v1301
        %v1307 = vadd.s32 %v1306, 127
        %v1308 = vshll.u32 %v1307, 23
        %v1309 = vor.u32 4788187, %v1308
        %v1310 = vand.u32 2147483647, %v1309
        %v1312 = vcvt.s32.f32 %v1305
        %v1313 = vmul.f32 %v1312, %v1310
        %v1314 = vxor.u32 %v1313, 2147483648
        %v1315 = vsel %vm1232, %v1314, %v1313
        %v1316 = vsub.s32 4, %v1292
        %v1317 = vsel %vm1232, %v1316, %v1292
        %v1318 = vsel %vm1231, %v478, %v1315
        %v1319 = vsel %vm1231, 0, %v1317
        %v1320 = vcosq.f32.pop %v1318
        %v1321 = vsinq.f32.pop %v1318
        %vm1322 = vweird.f32 %v478
        %v1323 = vadd.s32 %v1319, 3
        %v1324 = vand.u32 %v1323, 3
        %vm1325 = vcmp.lt.s32.totalorder %v1324, 2
        %vm1326 = vcmp.eq.s32.totalorder %v1324, 0
        %v1327 = vxor.u32 %v1321, 2147483648
        %v1328 = vsel %vm1326, %v1320, %v1327
        %vm1329 = vcmp.eq.s32.totalorder %v1324, 2
        %v1330 = vxor.u32 %v1320, 2147483648
        %v1331 = vsel %vm1329, %v1330, %v1321
        %v1332 = vsel %vm1325, %v1328, %v1331
        %v1333 = vsel %vm1322, nan, %v1332
        %v1334 = vand.u32 2147483647, %v483
        %vm1335 = vcmp.le.f32.partialorder %v1334, 0.7853982
        %vm1336 = vcmp.lt.s32.totalorder %v483, 0
        %v1337 = vand.u32 %v483, 2139095040
        %v1338 = vshrl.u32 %v1337, 23
        %v1339 = vsub.s32 %v1338, 127
        %v1340 = vand.u32 2147483647, %v483
        %v1341 = vand.u32 %v1340, 8388607
        %v1342 = vor.u32 %v1341, 8388608
        %v1343 = vsub.s32 0, %v1342
        %v1344 = vadd.s32 %v1339, 1
        %vm1345 = vcmp.gt.s32.totalorder %v1344, 0
        %v1346 = vsel %vm1345, %v1344, 0
        %v1347 = vshrl.u32 %v1346, 5
        %v1348 = vand.u32 %v1346, 31
        %v1349 = vsub.s32 32, %v1348
        %v1350 = vshrl.u32 683565275, %v1349
        %v1351 = vshll.u32 683565275, %v1348
        %v1352 = vshrl.u32 2475754826, %v1349
        %v1353 = vor.u32 %v1351, %v1352
        %v1354 = vshll.u32 2475754826, %v1348
        %v1355 = vshrl.u32 2131351028, %v1349
        %v1356 = vor.u32 %v1354, %v1355
        %v1357 = vshll.u32 2131351028, %v1348
        %v1358 = vshrl.u32 2102212464, %v1349
        %v1359 = vor.u32 %v1357, %v1358
        %v1360 = vshll.u32 2102212464, %v1348
        %v1361 = vshrl.u32 920167782, %v1349
        %v1362 = vor.u32 %v1360, %v1361
        %v1363 = vshll.u32 920167782, %v1348
        %v1364 = vshrl.u32 1326507024, %v1349
        %v1365 = vor.u32 %v1363, %v1364
        %vm1366 = vcmp.lt.s32.totalorder %v1347, 1
        %vm1367 = vcmp.lt.s32.totalorder %v1347, 2
        %vm1368 = vcmp.lt.s32.totalorder %v1347, 3
        %vm1369 = vcmp.lt.s32.totalorder %v1347, 4
        %v1370 = vsel %vm1366, %v1350, %v1353
        %v1371 = vsel %vm1369, %v1359, 2102212464
        %v1372 = vsel %vm1368, %v1356, %v1371
        %v1373 = vsel %vm1367, %v1370, %v1372
        %v1374 = vsel %vm1366, %v1353, %v1356
        %v1375 = vsel %vm1369, %v1362, 920167782
        %v1376 = vsel %vm1368, %v1359, %v1375
        %v1377 = vsel %vm1367, %v1374, %v1376
        %v1378 = vsel %vm1366, %v1356, %v1359
        %v1379 = vsel %vm1369, %v1365, 1326507024
        %v1380 = vsel %vm1368, %v1362, %v1379
        %v1381 = vsel %vm1367, %v1378, %v1380
        %v1382 = vshll.u32 %v1342, 8
        %v1383 = vmul.u32.u64.compose %v1382, %v1381
        %v1384 = vextract.low.u32 %v1383
        %v1385 = vextract.high.u32 %v1383
        %v1386 = vmul.u32.u64.compose %v1382, %v1377
        %v1387 = vextract.low.u32 %v1386
        %v1388 = vextract.high.u32 %v1386
        %v1389 = vmul.u32 %v1382, %v1373
        %v1390 = vadd.s32 %v1385, %v1387
        %vm1391 = vc.u32 %v1385, %v1387
        %v1392 = vadd.s32 %v1388, 1
        %v1393 = vsel %vm1391, %v1392, %v1388
        %v1394 = vadd.s32 %v1389, %v1393
        %v1395 = vadd.s32 %v1394, 536870912
        %v1396 = vshrl.u32 %v1395, 30
        %v1397 = vshll.u32 %v1396, 30
        %v1398 = vsub.s32 %v1394, %v1397
        %vm1399 = vcmp.lt.s32.totalorder %v1398, 0
        %v1400 = vsub.s32 0, %v1398
        %v1401 = vsel %vm1399, %v1400, %v1398
        %v1402 = vclz %v1401
        %v1403 = vsub.s32 %v1402, 2
        %vm1404 = vcmp.gt.s32.totalorder 0, %v1403
        %v1405 = vsel %vm1404, 0, %v1403
        %v1406 = vsub.s32 32, %v1405
        %v1407 = vshll.u32 %v1398, %v1405
        %v1408 = vshrl.u32 %v1390, %v1406
        %v1409 = vor.u32 %v1407, %v1408
        %v1410 = vsub.s32 4294967266, %v1405
        %v1411 = vadd.s32 %v1410, 127
        %v1412 = vshll.u32 %v1411, 23
        %v1413 = vor.u32 4788187, %v1412
        %v1414 = vand.u32 2147483647, %v1413
        %v1416 = vcvt.s32.f32 %v1409
        %v1417 = vmul.f32 %v1416, %v1414
        %v1418 = vxor.u32 %v1417, 2147483648
        %v1419 = vsel %vm1336, %v1418, %v1417
        %v1420 = vsub.s32 4, %v1396
        %v1421 = vsel %vm1336, %v1420, %v1396
        %v1422 = vsel %vm1335, %v483, %v1419
        %v1423 = vsel %vm1335, 0, %v1421
        %v1424 = vcosq.f32.pop %v1422
        %v1425 = vsinq.f32.pop %v1422
        %vm1426 = vweird.f32 %v483
        %v1427 = vadd.s32 %v1423, 3
        %v1428 = vand.u32 %v1427, 3
        %vm1429 = vcmp.lt.s32.totalorder %v1428, 2
        %vm1430 = vcmp.eq.s32.totalorder %v1428, 0
        %v1431 = vxor.u32 %v1425, 2147483648
        %v1432 = vsel %vm1430, %v1424, %v1431
        %vm1433 = vcmp.eq.s32.totalorder %v1428, 2
        %v1434 = vxor.u32 %v1424, 2147483648
        %v1435 = vsel %vm1433, %v1434, %v1425
        %v1436 = vsel %vm1429, %v1432, %v1435
        %v1437 = vsel %vm1426, nan, %v1436
        %v1438 = vand.u32 2147483647, %v488
        %vm1439 = vcmp.le.f32.partialorder %v1438, 0.7853982
        %vm1440 = vcmp.lt.s32.totalorder %v488, 0
        %v1441 = vand.u32 %v488, 2139095040
        %v1442 = vshrl.u32 %v1441, 23
        %v1443 = vsub.s32 %v1442, 127
        %v1444 = vand.u32 2147483647, %v488
        %v1445 = vand.u32 %v1444, 8388607
        %v1446 = vor.u32 %v1445, 8388608
        %v1447 = vsub.s32 0, %v1446
        %v1448 = vadd.s32 %v1443, 1
        %vm1449 = vcmp.gt.s32.totalorder %v1448, 0
        %v1450 = vsel %vm1449, %v1448, 0
        %v1451 = vshrl.u32 %v1450, 5
        %v1452 = vand.u32 %v1450, 31
        %v1453 = vsub.s32 32, %v1452
        %v1454 = vshrl.u32 683565275, %v1453
        %v1455 = vshll.u32 683565275, %v1452
        %v1456 = vshrl.u32 2475754826, %v1453
        %v1457 = vor.u32 %v1455, %v1456
        %v1458 = vshll.u32 2475754826, %v1452
        %v1459 = vshrl.u32 2131351028, %v1453
        %v1460 = vor.u32 %v1458, %v1459
        %v1461 = vshll.u32 2131351028, %v1452
        %v1462 = vshrl.u32 2102212464, %v1453
        %v1463 = vor.u32 %v1461, %v1462
        %v1464 = vshll.u32 2102212464, %v1452
        %v1465 = vshrl.u32 920167782, %v1453
        %v1466 = vor.u32 %v1464, %v1465
        %v1467 = vshll.u32 920167782, %v1452
        %v1468 = vshrl.u32 1326507024, %v1453
        %v1469 = vor.u32 %v1467, %v1468
        %vm1470 = vcmp.lt.s32.totalorder %v1451, 1
        %vm1471 = vcmp.lt.s32.totalorder %v1451, 2
        %vm1472 = vcmp.lt.s32.totalorder %v1451, 3
        %vm1473 = vcmp.lt.s32.totalorder %v1451, 4
        %v1474 = vsel %vm1470, %v1454, %v1457
        %v1475 = vsel %vm1473, %v1463, 2102212464
        %v1476 = vsel %vm1472, %v1460, %v1475
        %v1477 = vsel %vm1471, %v1474, %v1476
        %v1478 = vsel %vm1470, %v1457, %v1460
        %v1479 = vsel %vm1473, %v1466, 920167782
        %v1480 = vsel %vm1472, %v1463, %v1479
        %v1481 = vsel %vm1471, %v1478, %v1480
        %v1482 = vsel %vm1470, %v1460, %v1463
        %v1483 = vsel %vm1473, %v1469, 1326507024
        %v1484 = vsel %vm1472, %v1466, %v1483
        %v1485 = vsel %vm1471, %v1482, %v1484
        %v1486 = vshll.u32 %v1446, 8
        %v1487 = vmul.u32.u64.compose %v1486, %v1485
        %v1488 = vextract.low.u32 %v1487
        %v1489 = vextract.high.u32 %v1487
        %v1490 = vmul.u32.u64.compose %v1486, %v1481
        %v1491 = vextract.low.u32 %v1490
        %v1492 = vextract.high.u32 %v1490
        %v1493 = vmul.u32 %v1486, %v1477
        %v1494 = vadd.s32 %v1489, %v1491
        %vm1495 = vc.u32 %v1489, %v1491
        %v1496 = vadd.s32 %v1492, 1
        %v1497 = vsel %vm1495, %v1496, %v1492
        %v1498 = vadd.s32 %v1493, %v1497
        %v1499 = vadd.s32 %v1498, 536870912
        %v1500 = vshrl.u32 %v1499, 30
        %v1501 = vshll.u32 %v1500, 30
        %v1502 = vsub.s32 %v1498, %v1501
        %vm1503 = vcmp.lt.s32.totalorder %v1502, 0
        %v1504 = vsub.s32 0, %v1502
        %v1505 = vsel %vm1503, %v1504, %v1502
        %v1506 = vclz %v1505
        %v1507 = vsub.s32 %v1506, 2
        %vm1508 = vcmp.gt.s32.totalorder 0, %v1507
        %v1509 = vsel %vm1508, 0, %v1507
        %v1510 = vsub.s32 32, %v1509
        %v1511 = vshll.u32 %v1502, %v1509
        %v1512 = vshrl.u32 %v1494, %v1510
        %v1513 = vor.u32 %v1511, %v1512
        %v1514 = vsub.s32 4294967266, %v1509
        %v1515 = vadd.s32 %v1514, 127
        %v1516 = vshll.u32 %v1515, 23
        %v1517 = vor.u32 4788187, %v1516
        %v1518 = vand.u32 2147483647, %v1517
        %v1520 = vcvt.s32.f32 %v1513
        %v1521 = vmul.f32 %v1520, %v1518
        %v1522 = vxor.u32 %v1521, 2147483648
        %v1523 = vsel %vm1440, %v1522, %v1521
        %v1524 = vsub.s32 4, %v1500
        %v1525 = vsel %vm1440, %v1524, %v1500
        %v1526 = vsel %vm1439, %v488, %v1523
        %v1527 = vsel %vm1439, 0, %v1525
        %v1528 = vcosq.f32.pop %v1526
        %v1529 = vsinq.f32.pop %v1526
        %vm1530 = vweird.f32 %v488
        %v1531 = vadd.s32 %v1527, 3
        %v1532 = vand.u32 %v1531, 3
        %vm1533 = vcmp.lt.s32.totalorder %v1532, 2
        %vm1534 = vcmp.eq.s32.totalorder %v1532, 0
        %v1535 = vxor.u32 %v1529, 2147483648
        %v1536 = vsel %vm1534, %v1528, %v1535
        %vm1537 = vcmp.eq.s32.totalorder %v1532, 2
        %v1538 = vxor.u32 %v1528, 2147483648
        %v1539 = vsel %vm1537, %v1538, %v1529
        %v1540 = vsel %vm1533, %v1536, %v1539
        %v1541 = vsel %vm1530, nan, %v1540
        %v1542 = vand.u32 2147483647, %v493
        %vm1543 = vcmp.le.f32.partialorder %v1542, 0.7853982
        %vm1544 = vcmp.lt.s32.totalorder %v493, 0
        %v1545 = vand.u32 %v493, 2139095040
        %v1546 = vshrl.u32 %v1545, 23
        %v1547 = vsub.s32 %v1546, 127
        %v1548 = vand.u32 2147483647, %v493
        %v1549 = vand.u32 %v1548, 8388607
        %v1550 = vor.u32 %v1549, 8388608
        %v1551 = vsub.s32 0, %v1550
        %v1552 = vadd.s32 %v1547, 1
        %vm1553 = vcmp.gt.s32.totalorder %v1552, 0
        %v1554 = vsel %vm1553, %v1552, 0
        %v1555 = vshrl.u32 %v1554, 5
        %v1556 = vand.u32 %v1554, 31
        %v1557 = vsub.s32 32, %v1556
        %v1558 = vshrl.u32 683565275, %v1557
        %v1559 = vshll.u32 683565275, %v1556
        %v1560 = vshrl.u32 2475754826, %v1557
        %v1561 = vor.u32 %v1559, %v1560
        %v1562 = vshll.u32 2475754826, %v1556
        %v1563 = vshrl.u32 2131351028, %v1557
        %v1564 = vor.u32 %v1562, %v1563
        %v1565 = vshll.u32 2131351028, %v1556
        %v1566 = vshrl.u32 2102212464, %v1557
        %v1567 = vor.u32 %v1565, %v1566
        %v1568 = vshll.u32 2102212464, %v1556
        %v1569 = vshrl.u32 920167782, %v1557
        %v1570 = vor.u32 %v1568, %v1569
        %v1571 = vshll.u32 920167782, %v1556
        %v1572 = vshrl.u32 1326507024, %v1557
        %v1573 = vor.u32 %v1571, %v1572
        %vm1574 = vcmp.lt.s32.totalorder %v1555, 1
        %vm1575 = vcmp.lt.s32.totalorder %v1555, 2
        %vm1576 = vcmp.lt.s32.totalorder %v1555, 3
        %vm1577 = vcmp.lt.s32.totalorder %v1555, 4
        %v1578 = vsel %vm1574, %v1558, %v1561
        %v1579 = vsel %vm1577, %v1567, 2102212464
        %v1580 = vsel %vm1576, %v1564, %v1579
        %v1581 = vsel %vm1575, %v1578, %v1580
        %v1582 = vsel %vm1574, %v1561, %v1564
        %v1583 = vsel %vm1577, %v1570, 920167782
        %v1584 = vsel %vm1576, %v1567, %v1583
        %v1585 = vsel %vm1575, %v1582, %v1584
        %v1586 = vsel %vm1574, %v1564, %v1567
        %v1587 = vsel %vm1577, %v1573, 1326507024
        %v1588 = vsel %vm1576, %v1570, %v1587
        %v1589 = vsel %vm1575, %v1586, %v1588
        %v1590 = vshll.u32 %v1550, 8
        %v1591 = vmul.u32.u64.compose %v1590, %v1589
        %v1592 = vextract.low.u32 %v1591
        %v1593 = vextract.high.u32 %v1591
        %v1594 = vmul.u32.u64.compose %v1590, %v1585
        %v1595 = vextract.low.u32 %v1594
        %v1596 = vextract.high.u32 %v1594
        %v1597 = vmul.u32 %v1590, %v1581
        %v1598 = vadd.s32 %v1593, %v1595
        %vm1599 = vc.u32 %v1593, %v1595
        %v1600 = vadd.s32 %v1596, 1
        %v1601 = vsel %vm1599, %v1600, %v1596
        %v1602 = vadd.s32 %v1597, %v1601
        %v1603 = vadd.s32 %v1602, 536870912
        %v1604 = vshrl.u32 %v1603, 30
        %v1605 = vshll.u32 %v1604, 30
        %v1606 = vsub.s32 %v1602, %v1605
        %vm1607 = vcmp.lt.s32.totalorder %v1606, 0
        %v1608 = vsub.s32 0, %v1606
        %v1609 = vsel %vm1607, %v1608, %v1606
        %v1610 = vclz %v1609
        %v1611 = vsub.s32 %v1610, 2
        %vm1612 = vcmp.gt.s32.totalorder 0, %v1611
        %v1613 = vsel %vm1612, 0, %v1611
        %v1614 = vsub.s32 32, %v1613
        %v1615 = vshll.u32 %v1606, %v1613
        %v1616 = vshrl.u32 %v1598, %v1614
        %v1617 = vor.u32 %v1615, %v1616
        %v1618 = vsub.s32 4294967266, %v1613
        %v1619 = vadd.s32 %v1618, 127
        %v1620 = vshll.u32 %v1619, 23
        %v1621 = vor.u32 4788187, %v1620
        %v1622 = vand.u32 2147483647, %v1621
        %v1624 = vcvt.s32.f32 %v1617
        %v1625 = vmul.f32 %v1624, %v1622
        %v1626 = vxor.u32 %v1625, 2147483648
        %v1627 = vsel %vm1544, %v1626, %v1625
        %v1628 = vsub.s32 4, %v1604
        %v1629 = vsel %vm1544, %v1628, %v1604
        %v1630 = vsel %vm1543, %v493, %v1627
        %v1631 = vsel %vm1543, 0, %v1629
        %v1632 = vcosq.f32.pop %v1630
        %v1633 = vsinq.f32.pop %v1630
        %vm1634 = vweird.f32 %v493
        %v1635 = vadd.s32 %v1631, 3
        %v1636 = vand.u32 %v1635, 3
        %vm1637 = vcmp.lt.s32.totalorder %v1636, 2
        %vm1638 = vcmp.eq.s32.totalorder %v1636, 0
        %v1639 = vxor.u32 %v1633, 2147483648
        %v1640 = vsel %vm1638, %v1632, %v1639
        %vm1641 = vcmp.eq.s32.totalorder %v1636, 2
        %v1642 = vxor.u32 %v1632, 2147483648
        %v1643 = vsel %vm1641, %v1642, %v1633
        %v1644 = vsel %vm1637, %v1640, %v1643
        %v1645 = vsel %vm1634, nan, %v1644
        %v1646 = vand.u32 2147483647, %v498
        %vm1647 = vcmp.le.f32.partialorder %v1646, 0.7853982
        %vm1648 = vcmp.lt.s32.totalorder %v498, 0
        %v1649 = vand.u32 %v498, 2139095040
        %v1650 = vshrl.u32 %v1649, 23
        %v1651 = vsub.s32 %v1650, 127
        %v1652 = vand.u32 2147483647, %v498
        %v1653 = vand.u32 %v1652, 8388607
        %v1654 = vor.u32 %v1653, 8388608
        %v1655 = vsub.s32 0, %v1654
        %v1656 = vadd.s32 %v1651, 1
        %vm1657 = vcmp.gt.s32.totalorder %v1656, 0
        %v1658 = vsel %vm1657, %v1656, 0
        %v1659 = vshrl.u32 %v1658, 5
        %v1660 = vand.u32 %v1658, 31
        %v1661 = vsub.s32 32, %v1660
        %v1662 = vshrl.u32 683565275, %v1661
        %v1663 = vshll.u32 683565275, %v1660
        %v1664 = vshrl.u32 2475754826, %v1661
        %v1665 = vor.u32 %v1663, %v1664
        %v1666 = vshll.u32 2475754826, %v1660
        %v1667 = vshrl.u32 2131351028, %v1661
        %v1668 = vor.u32 %v1666, %v1667
        %v1669 = vshll.u32 2131351028, %v1660
        %v1670 = vshrl.u32 2102212464, %v1661
        %v1671 = vor.u32 %v1669, %v1670
        %v1672 = vshll.u32 2102212464, %v1660
        %v1673 = vshrl.u32 920167782, %v1661
        %v1674 = vor.u32 %v1672, %v1673
        %v1675 = vshll.u32 920167782, %v1660
        %v1676 = vshrl.u32 1326507024, %v1661
        %v1677 = vor.u32 %v1675, %v1676
        %vm1678 = vcmp.lt.s32.totalorder %v1659, 1
        %vm1679 = vcmp.lt.s32.totalorder %v1659, 2
        %vm1680 = vcmp.lt.s32.totalorder %v1659, 3
        %vm1681 = vcmp.lt.s32.totalorder %v1659, 4
        %v1682 = vsel %vm1678, %v1662, %v1665
        %v1683 = vsel %vm1681, %v1671, 2102212464
        %v1684 = vsel %vm1680, %v1668, %v1683
        %v1685 = vsel %vm1679, %v1682, %v1684
        %v1686 = vsel %vm1678, %v1665, %v1668
        %v1687 = vsel %vm1681, %v1674, 920167782
        %v1688 = vsel %vm1680, %v1671, %v1687
        %v1689 = vsel %vm1679, %v1686, %v1688
        %v1690 = vsel %vm1678, %v1668, %v1671
        %v1691 = vsel %vm1681, %v1677, 1326507024
        %v1692 = vsel %vm1680, %v1674, %v1691
        %v1693 = vsel %vm1679, %v1690, %v1692
        %v1694 = vshll.u32 %v1654, 8
        %v1695 = vmul.u32.u64.compose %v1694, %v1693
        %v1696 = vextract.low.u32 %v1695
        %v1697 = vextract.high.u32 %v1695
        %v1698 = vmul.u32.u64.compose %v1694, %v1689
        %v1699 = vextract.low.u32 %v1698
        %v1700 = vextract.high.u32 %v1698
        %v1701 = vmul.u32 %v1694, %v1685
        %v1702 = vadd.s32 %v1697, %v1699
        %vm1703 = vc.u32 %v1697, %v1699
        %v1704 = vadd.s32 %v1700, 1
        %v1705 = vsel %vm1703, %v1704, %v1700
        %v1706 = vadd.s32 %v1701, %v1705
        %v1707 = vadd.s32 %v1706, 536870912
        %v1708 = vshrl.u32 %v1707, 30
        %v1709 = vshll.u32 %v1708, 30
        %v1710 = vsub.s32 %v1706, %v1709
        %vm1711 = vcmp.lt.s32.totalorder %v1710, 0
        %v1712 = vsub.s32 0, %v1710
        %v1713 = vsel %vm1711, %v1712, %v1710
        %v1714 = vclz %v1713
        %v1715 = vsub.s32 %v1714, 2
        %vm1716 = vcmp.gt.s32.totalorder 0, %v1715
        %v1717 = vsel %vm1716, 0, %v1715
        %v1718 = vsub.s32 32, %v1717
        %v1719 = vshll.u32 %v1710, %v1717
        %v1720 = vshrl.u32 %v1702, %v1718
        %v1721 = vor.u32 %v1719, %v1720
        %v1722 = vsub.s32 4294967266, %v1717
        %v1723 = vadd.s32 %v1722, 127
        %v1724 = vshll.u32 %v1723, 23
        %v1725 = vor.u32 4788187, %v1724
        %v1726 = vand.u32 2147483647, %v1725
        %v1728 = vcvt.s32.f32 %v1721
        %v1729 = vmul.f32 %v1728, %v1726
        %v1730 = vxor.u32 %v1729, 2147483648
        %v1731 = vsel %vm1648, %v1730, %v1729
        %v1732 = vsub.s32 4, %v1708
        %v1733 = vsel %vm1648, %v1732, %v1708
        %v1734 = vsel %vm1647, %v498, %v1731
        %v1735 = vsel %vm1647, 0, %v1733
        %v1736 = vcosq.f32.pop %v1734
        %v1737 = vsinq.f32.pop %v1734
        %vm1738 = vweird.f32 %v498
        %v1739 = vadd.s32 %v1735, 3
        %v1740 = vand.u32 %v1739, 3
        %vm1741 = vcmp.lt.s32.totalorder %v1740, 2
        %vm1742 = vcmp.eq.s32.totalorder %v1740, 0
        %v1743 = vxor.u32 %v1737, 2147483648
        %v1744 = vsel %vm1742, %v1736, %v1743
        %vm1745 = vcmp.eq.s32.totalorder %v1740, 2
        %v1746 = vxor.u32 %v1736, 2147483648
        %v1747 = vsel %vm1745, %v1746, %v1737
        %v1748 = vsel %vm1741, %v1744, %v1747
        %v1749 = vsel %vm1738, nan, %v1748
        %v1750 = vand.u32 2147483647, %v503
        %vm1751 = vcmp.le.f32.partialorder %v1750, 0.7853982
        %vm1752 = vcmp.lt.s32.totalorder %v503, 0
        %v1753 = vand.u32 %v503, 2139095040
        %v1754 = vshrl.u32 %v1753, 23
        %v1755 = vsub.s32 %v1754, 127
        %v1756 = vand.u32 2147483647, %v503
        %v1757 = vand.u32 %v1756, 8388607
        %v1758 = vor.u32 %v1757, 8388608
        %v1759 = vsub.s32 0, %v1758
        %v1760 = vadd.s32 %v1755, 1
        %vm1761 = vcmp.gt.s32.totalorder %v1760, 0
        %v1762 = vsel %vm1761, %v1760, 0
        %v1763 = vshrl.u32 %v1762, 5
        %v1764 = vand.u32 %v1762, 31
        %v1765 = vsub.s32 32, %v1764
        %v1766 = vshrl.u32 683565275, %v1765
        %v1767 = vshll.u32 683565275, %v1764
        %v1768 = vshrl.u32 2475754826, %v1765
        %v1769 = vor.u32 %v1767, %v1768
        %v1770 = vshll.u32 2475754826, %v1764
        %v1771 = vshrl.u32 2131351028, %v1765
        %v1772 = vor.u32 %v1770, %v1771
        %v1773 = vshll.u32 2131351028, %v1764
        %v1774 = vshrl.u32 2102212464, %v1765
        %v1775 = vor.u32 %v1773, %v1774
        %v1776 = vshll.u32 2102212464, %v1764
        %v1777 = vshrl.u32 920167782, %v1765
        %v1778 = vor.u32 %v1776, %v1777
        %v1779 = vshll.u32 920167782, %v1764
        %v1780 = vshrl.u32 1326507024, %v1765
        %v1781 = vor.u32 %v1779, %v1780
        %vm1782 = vcmp.lt.s32.totalorder %v1763, 1
        %vm1783 = vcmp.lt.s32.totalorder %v1763, 2
        %vm1784 = vcmp.lt.s32.totalorder %v1763, 3
        %vm1785 = vcmp.lt.s32.totalorder %v1763, 4
        %v1786 = vsel %vm1782, %v1766, %v1769
        %v1787 = vsel %vm1785, %v1775, 2102212464
        %v1788 = vsel %vm1784, %v1772, %v1787
        %v1789 = vsel %vm1783, %v1786, %v1788
        %v1790 = vsel %vm1782, %v1769, %v1772
        %v1791 = vsel %vm1785, %v1778, 920167782
        %v1792 = vsel %vm1784, %v1775, %v1791
        %v1793 = vsel %vm1783, %v1790, %v1792
        %v1794 = vsel %vm1782, %v1772, %v1775
        %v1795 = vsel %vm1785, %v1781, 1326507024
        %v1796 = vsel %vm1784, %v1778, %v1795
        %v1797 = vsel %vm1783, %v1794, %v1796
        %v1798 = vshll.u32 %v1758, 8
        %v1799 = vmul.u32.u64.compose %v1798, %v1797
        %v1800 = vextract.low.u32 %v1799
        %v1801 = vextract.high.u32 %v1799
        %v1802 = vmul.u32.u64.compose %v1798, %v1793
        %v1803 = vextract.low.u32 %v1802
        %v1804 = vextract.high.u32 %v1802
        %v1805 = vmul.u32 %v1798, %v1789
        %v1806 = vadd.s32 %v1801, %v1803
        %vm1807 = vc.u32 %v1801, %v1803
        %v1808 = vadd.s32 %v1804, 1
        %v1809 = vsel %vm1807, %v1808, %v1804
        %v1810 = vadd.s32 %v1805, %v1809
        %v1811 = vadd.s32 %v1810, 536870912
        %v1812 = vshrl.u32 %v1811, 30
        %v1813 = vshll.u32 %v1812, 30
        %v1814 = vsub.s32 %v1810, %v1813
        %vm1815 = vcmp.lt.s32.totalorder %v1814, 0
        %v1816 = vsub.s32 0, %v1814
        %v1817 = vsel %vm1815, %v1816, %v1814
        %v1818 = vclz %v1817
        %v1819 = vsub.s32 %v1818, 2
        %vm1820 = vcmp.gt.s32.totalorder 0, %v1819
        %v1821 = vsel %vm1820, 0, %v1819
        %v1822 = vsub.s32 32, %v1821
        %v1823 = vshll.u32 %v1814, %v1821
        %v1824 = vshrl.u32 %v1806, %v1822
        %v1825 = vor.u32 %v1823, %v1824
        %v1826 = vsub.s32 4294967266, %v1821
        %v1827 = vadd.s32 %v1826, 127
        %v1828 = vshll.u32 %v1827, 23
        %v1829 = vor.u32 4788187, %v1828
        %v1830 = vand.u32 2147483647, %v1829
        %v1832 = vcvt.s32.f32 %v1825
        %v1833 = vmul.f32 %v1832, %v1830
        %v1834 = vxor.u32 %v1833, 2147483648
        %v1835 = vsel %vm1752, %v1834, %v1833
        %v1836 = vsub.s32 4, %v1812
        %v1837 = vsel %vm1752, %v1836, %v1812
        %v1838 = vsel %vm1751, %v503, %v1835
        %v1839 = vsel %vm1751, 0, %v1837
        %v1840 = vcosq.f32.pop %v1838
        %v1841 = vsinq.f32.pop %v1838
        %vm1842 = vweird.f32 %v503
        %v1843 = vadd.s32 %v1839, 3
        %v1844 = vand.u32 %v1843, 3
        %vm1845 = vcmp.lt.s32.totalorder %v1844, 2
        %vm1846 = vcmp.eq.s32.totalorder %v1844, 0
        %v1847 = vxor.u32 %v1841, 2147483648
        %v1848 = vsel %vm1846, %v1840, %v1847
        %vm1849 = vcmp.eq.s32.totalorder %v1844, 2
        %v1850 = vxor.u32 %v1840, 2147483648
        %v1851 = vsel %vm1849, %v1850, %v1841
        %v1852 = vsel %vm1845, %v1848, %v1851
        %v1853 = vsel %vm1842, nan, %v1852
        %v1854 = vand.u32 2147483647, %v508
        %vm1855 = vcmp.le.f32.partialorder %v1854, 0.7853982
        %vm1856 = vcmp.lt.s32.totalorder %v508, 0
        %v1857 = vand.u32 %v508, 2139095040
        %v1858 = vshrl.u32 %v1857, 23
        %v1859 = vsub.s32 %v1858, 127
        %v1860 = vand.u32 2147483647, %v508
        %v1861 = vand.u32 %v1860, 8388607
        %v1862 = vor.u32 %v1861, 8388608
        %v1863 = vsub.s32 0, %v1862
        %v1864 = vadd.s32 %v1859, 1
        %vm1865 = vcmp.gt.s32.totalorder %v1864, 0
        %v1866 = vsel %vm1865, %v1864, 0
        %v1867 = vshrl.u32 %v1866, 5
        %v1868 = vand.u32 %v1866, 31
        %v1869 = vsub.s32 32, %v1868
        %v1870 = vshrl.u32 683565275, %v1869
        %v1871 = vshll.u32 683565275, %v1868
        %v1872 = vshrl.u32 2475754826, %v1869
        %v1873 = vor.u32 %v1871, %v1872
        %v1874 = vshll.u32 2475754826, %v1868
        %v1875 = vshrl.u32 2131351028, %v1869
        %v1876 = vor.u32 %v1874, %v1875
        %v1877 = vshll.u32 2131351028, %v1868
        %v1878 = vshrl.u32 2102212464, %v1869
        %v1879 = vor.u32 %v1877, %v1878
        %v1880 = vshll.u32 2102212464, %v1868
        %v1881 = vshrl.u32 920167782, %v1869
        %v1882 = vor.u32 %v1880, %v1881
        %v1883 = vshll.u32 920167782, %v1868
        %v1884 = vshrl.u32 1326507024, %v1869
        %v1885 = vor.u32 %v1883, %v1884
        %vm1886 = vcmp.lt.s32.totalorder %v1867, 1
        %vm1887 = vcmp.lt.s32.totalorder %v1867, 2
        %vm1888 = vcmp.lt.s32.totalorder %v1867, 3
        %vm1889 = vcmp.lt.s32.totalorder %v1867, 4
        %v1890 = vsel %vm1886, %v1870, %v1873
        %v1891 = vsel %vm1889, %v1879, 2102212464
        %v1892 = vsel %vm1888, %v1876, %v1891
        %v1893 = vsel %vm1887, %v1890, %v1892
        %v1894 = vsel %vm1886, %v1873, %v1876
        %v1895 = vsel %vm1889, %v1882, 920167782
        %v1896 = vsel %vm1888, %v1879, %v1895
        %v1897 = vsel %vm1887, %v1894, %v1896
        %v1898 = vsel %vm1886, %v1876, %v1879
        %v1899 = vsel %vm1889, %v1885, 1326507024
        %v1900 = vsel %vm1888, %v1882, %v1899
        %v1901 = vsel %vm1887, %v1898, %v1900
        %v1902 = vshll.u32 %v1862, 8
        %v1903 = vmul.u32.u64.compose %v1902, %v1901
        %v1904 = vextract.low.u32 %v1903
        %v1905 = vextract.high.u32 %v1903
        %v1906 = vmul.u32.u64.compose %v1902, %v1897
        %v1907 = vextract.low.u32 %v1906
        %v1908 = vextract.high.u32 %v1906
        %v1909 = vmul.u32 %v1902, %v1893
        %v1910 = vadd.s32 %v1905, %v1907
        %vm1911 = vc.u32 %v1905, %v1907
        %v1912 = vadd.s32 %v1908, 1
        %v1913 = vsel %vm1911, %v1912, %v1908
        %v1914 = vadd.s32 %v1909, %v1913
        %v1915 = vadd.s32 %v1914, 536870912
        %v1916 = vshrl.u32 %v1915, 30
        %v1917 = vshll.u32 %v1916, 30
        %v1918 = vsub.s32 %v1914, %v1917
        %vm1919 = vcmp.lt.s32.totalorder %v1918, 0
        %v1920 = vsub.s32 0, %v1918
        %v1921 = vsel %vm1919, %v1920, %v1918
        %v1922 = vclz %v1921
        %v1923 = vsub.s32 %v1922, 2
        %vm1924 = vcmp.gt.s32.totalorder 0, %v1923
        %v1925 = vsel %vm1924, 0, %v1923
        %v1926 = vsub.s32 32, %v1925
        %v1927 = vshll.u32 %v1918, %v1925
        %v1928 = vshrl.u32 %v1910, %v1926
        %v1929 = vor.u32 %v1927, %v1928
        %v1930 = vsub.s32 4294967266, %v1925
        %v1931 = vadd.s32 %v1930, 127
        %v1932 = vshll.u32 %v1931, 23
        %v1933 = vor.u32 4788187, %v1932
        %v1934 = vand.u32 2147483647, %v1933
        %v1936 = vcvt.s32.f32 %v1929
        %v1937 = vmul.f32 %v1936, %v1934
        %v1938 = vxor.u32 %v1937, 2147483648
        %v1939 = vsel %vm1856, %v1938, %v1937
        %v1940 = vsub.s32 4, %v1916
        %v1941 = vsel %vm1856, %v1940, %v1916
        %v1942 = vsel %vm1855, %v508, %v1939
        %v1943 = vsel %vm1855, 0, %v1941
        %v1944 = vcosq.f32.pop %v1942
        %v1945 = vsinq.f32.pop %v1942
        %vm1946 = vweird.f32 %v508
        %v1947 = vadd.s32 %v1943, 3
        %v1948 = vand.u32 %v1947, 3
        %vm1949 = vcmp.lt.s32.totalorder %v1948, 2
        %vm1950 = vcmp.eq.s32.totalorder %v1948, 0
        %v1951 = vxor.u32 %v1945, 2147483648
        %v1952 = vsel %vm1950, %v1944, %v1951
        %vm1953 = vcmp.eq.s32.totalorder %v1948, 2
        %v1954 = vxor.u32 %v1944, 2147483648
        %v1955 = vsel %vm1953, %v1954, %v1945
        %v1956 = vsel %vm1949, %v1952, %v1955
        %v1957 = vsel %vm1946, nan, %v1956
        %v1958 = vand.u32 2147483647, %v513
        %vm1959 = vcmp.le.f32.partialorder %v1958, 0.7853982
        %vm1960 = vcmp.lt.s32.totalorder %v513, 0
        %v1961 = vand.u32 %v513, 2139095040
        %v1962 = vshrl.u32 %v1961, 23
        %v1963 = vsub.s32 %v1962, 127
        %v1964 = vand.u32 2147483647, %v513
        %v1965 = vand.u32 %v1964, 8388607
        %v1966 = vor.u32 %v1965, 8388608
        %v1967 = vsub.s32 0, %v1966
        %v1968 = vadd.s32 %v1963, 1
        %vm1969 = vcmp.gt.s32.totalorder %v1968, 0
        %v1970 = vsel %vm1969, %v1968, 0
        %v1971 = vshrl.u32 %v1970, 5
        %v1972 = vand.u32 %v1970, 31
        %v1973 = vsub.s32 32, %v1972
        %v1974 = vshrl.u32 683565275, %v1973
        %v1975 = vshll.u32 683565275, %v1972
        %v1976 = vshrl.u32 2475754826, %v1973
        %v1977 = vor.u32 %v1975, %v1976
        %v1978 = vshll.u32 2475754826, %v1972
        %v1979 = vshrl.u32 2131351028, %v1973
        %v1980 = vor.u32 %v1978, %v1979
        %v1981 = vshll.u32 2131351028, %v1972
        %v1982 = vshrl.u32 2102212464, %v1973
        %v1983 = vor.u32 %v1981, %v1982
        %v1984 = vshll.u32 2102212464, %v1972
        %v1985 = vshrl.u32 920167782, %v1973
        %v1986 = vor.u32 %v1984, %v1985
        %v1987 = vshll.u32 920167782, %v1972
        %v1988 = vshrl.u32 1326507024, %v1973
        %v1989 = vor.u32 %v1987, %v1988
        %vm1990 = vcmp.lt.s32.totalorder %v1971, 1
        %vm1991 = vcmp.lt.s32.totalorder %v1971, 2
        %vm1992 = vcmp.lt.s32.totalorder %v1971, 3
        %vm1993 = vcmp.lt.s32.totalorder %v1971, 4
        %v1994 = vsel %vm1990, %v1974, %v1977
        %v1995 = vsel %vm1993, %v1983, 2102212464
        %v1996 = vsel %vm1992, %v1980, %v1995
        %v1997 = vsel %vm1991, %v1994, %v1996
        %v1998 = vsel %vm1990, %v1977, %v1980
        %v1999 = vsel %vm1993, %v1986, 920167782
        %v2000 = vsel %vm1992, %v1983, %v1999
        %v2001 = vsel %vm1991, %v1998, %v2000
        %v2002 = vsel %vm1990, %v1980, %v1983
        %v2003 = vsel %vm1993, %v1989, 1326507024
        %v2004 = vsel %vm1992, %v1986, %v2003
        %v2005 = vsel %vm1991, %v2002, %v2004
        %v2006 = vshll.u32 %v1966, 8
        %v2007 = vmul.u32.u64.compose %v2006, %v2005
        %v2008 = vextract.low.u32 %v2007
        %v2009 = vextract.high.u32 %v2007
        %v2010 = vmul.u32.u64.compose %v2006, %v2001
        %v2011 = vextract.low.u32 %v2010
        %v2012 = vextract.high.u32 %v2010
        %v2013 = vmul.u32 %v2006, %v1997
        %v2014 = vadd.s32 %v2009, %v2011
        %vm2015 = vc.u32 %v2009, %v2011
        %v2016 = vadd.s32 %v2012, 1
        %v2017 = vsel %vm2015, %v2016, %v2012
        %v2018 = vadd.s32 %v2013, %v2017
        %v2019 = vadd.s32 %v2018, 536870912
        %v2020 = vshrl.u32 %v2019, 30
        %v2021 = vshll.u32 %v2020, 30
        %v2022 = vsub.s32 %v2018, %v2021
        %vm2023 = vcmp.lt.s32.totalorder %v2022, 0
        %v2024 = vsub.s32 0, %v2022
        %v2025 = vsel %vm2023, %v2024, %v2022
        %v2026 = vclz %v2025
        %v2027 = vsub.s32 %v2026, 2
        %vm2028 = vcmp.gt.s32.totalorder 0, %v2027
        %v2029 = vsel %vm2028, 0, %v2027
        %v2030 = vsub.s32 32, %v2029
        %v2031 = vshll.u32 %v2022, %v2029
        %v2032 = vshrl.u32 %v2014, %v2030
        %v2033 = vor.u32 %v2031, %v2032
        %v2034 = vsub.s32 4294967266, %v2029
        %v2035 = vadd.s32 %v2034, 127
        %v2036 = vshll.u32 %v2035, 23
        %v2037 = vor.u32 4788187, %v2036
        %v2038 = vand.u32 2147483647, %v2037
        %v2040 = vcvt.s32.f32 %v2033
        %v2041 = vmul.f32 %v2040, %v2038
        %v2042 = vxor.u32 %v2041, 2147483648
        %v2043 = vsel %vm1960, %v2042, %v2041
        %v2044 = vsub.s32 4, %v2020
        %v2045 = vsel %vm1960, %v2044, %v2020
        %v2046 = vsel %vm1959, %v513, %v2043
        %v2047 = vsel %vm1959, 0, %v2045
        %v2048 = vcosq.f32.pop %v2046
        %v2049 = vsinq.f32.pop %v2046
        %vm2050 = vweird.f32 %v513
        %v2051 = vadd.s32 %v2047, 3
        %v2052 = vand.u32 %v2051, 3
        %vm2053 = vcmp.lt.s32.totalorder %v2052, 2
        %vm2054 = vcmp.eq.s32.totalorder %v2052, 0
        %v2055 = vxor.u32 %v2049, 2147483648
        %v2056 = vsel %vm2054, %v2048, %v2055
        %vm2057 = vcmp.eq.s32.totalorder %v2052, 2
        %v2058 = vxor.u32 %v2048, 2147483648
        %v2059 = vsel %vm2057, %v2058, %v2049
        %v2060 = vsel %vm2053, %v2056, %v2059
        %v2061 = vsel %vm2050, nan, %v2060
        %v2062 = vand.u32 2147483647, %v518
        %vm2063 = vcmp.le.f32.partialorder %v2062, 0.7853982
        %vm2064 = vcmp.lt.s32.totalorder %v518, 0
        %v2065 = vand.u32 %v518, 2139095040
        %v2066 = vshrl.u32 %v2065, 23
        %v2067 = vsub.s32 %v2066, 127
        %v2068 = vand.u32 2147483647, %v518
        %v2069 = vand.u32 %v2068, 8388607
        %v2070 = vor.u32 %v2069, 8388608
        %v2071 = vsub.s32 0, %v2070
        %v2072 = vadd.s32 %v2067, 1
        %vm2073 = vcmp.gt.s32.totalorder %v2072, 0
        %v2074 = vsel %vm2073, %v2072, 0
        %v2075 = vshrl.u32 %v2074, 5
        %v2076 = vand.u32 %v2074, 31
        %v2077 = vsub.s32 32, %v2076
        %v2078 = vshrl.u32 683565275, %v2077
        %v2079 = vshll.u32 683565275, %v2076
        %v2080 = vshrl.u32 2475754826, %v2077
        %v2081 = vor.u32 %v2079, %v2080
        %v2082 = vshll.u32 2475754826, %v2076
        %v2083 = vshrl.u32 2131351028, %v2077
        %v2084 = vor.u32 %v2082, %v2083
        %v2085 = vshll.u32 2131351028, %v2076
        %v2086 = vshrl.u32 2102212464, %v2077
        %v2087 = vor.u32 %v2085, %v2086
        %v2088 = vshll.u32 2102212464, %v2076
        %v2089 = vshrl.u32 920167782, %v2077
        %v2090 = vor.u32 %v2088, %v2089
        %v2091 = vshll.u32 920167782, %v2076
        %v2092 = vshrl.u32 1326507024, %v2077
        %v2093 = vor.u32 %v2091, %v2092
        %vm2094 = vcmp.lt.s32.totalorder %v2075, 1
        %vm2095 = vcmp.lt.s32.totalorder %v2075, 2
        %vm2096 = vcmp.lt.s32.totalorder %v2075, 3
        %vm2097 = vcmp.lt.s32.totalorder %v2075, 4
        %v2098 = vsel %vm2094, %v2078, %v2081
        %v2099 = vsel %vm2097, %v2087, 2102212464
        %v2100 = vsel %vm2096, %v2084, %v2099
        %v2101 = vsel %vm2095, %v2098, %v2100
        %v2102 = vsel %vm2094, %v2081, %v2084
        %v2103 = vsel %vm2097, %v2090, 920167782
        %v2104 = vsel %vm2096, %v2087, %v2103
        %v2105 = vsel %vm2095, %v2102, %v2104
        %v2106 = vsel %vm2094, %v2084, %v2087
        %v2107 = vsel %vm2097, %v2093, 1326507024
        %v2108 = vsel %vm2096, %v2090, %v2107
        %v2109 = vsel %vm2095, %v2106, %v2108
        %v2110 = vshll.u32 %v2070, 8
        %v2111 = vmul.u32.u64.compose %v2110, %v2109
        %v2112 = vextract.low.u32 %v2111
        %v2113 = vextract.high.u32 %v2111
        %v2114 = vmul.u32.u64.compose %v2110, %v2105
        %v2115 = vextract.low.u32 %v2114
        %v2116 = vextract.high.u32 %v2114
        %v2117 = vmul.u32 %v2110, %v2101
        %v2118 = vadd.s32 %v2113, %v2115
        %vm2119 = vc.u32 %v2113, %v2115
        %v2120 = vadd.s32 %v2116, 1
        %v2121 = vsel %vm2119, %v2120, %v2116
        %v2122 = vadd.s32 %v2117, %v2121
        %v2123 = vadd.s32 %v2122, 536870912
        %v2124 = vshrl.u32 %v2123, 30
        %v2125 = vshll.u32 %v2124, 30
        %v2126 = vsub.s32 %v2122, %v2125
        %vm2127 = vcmp.lt.s32.totalorder %v2126, 0
        %v2128 = vsub.s32 0, %v2126
        %v2129 = vsel %vm2127, %v2128, %v2126
        %v2130 = vclz %v2129
        %v2131 = vsub.s32 %v2130, 2
        %vm2132 = vcmp.gt.s32.totalorder 0, %v2131
        %v2133 = vsel %vm2132, 0, %v2131
        %v2134 = vsub.s32 32, %v2133
        %v2135 = vshll.u32 %v2126, %v2133
        %v2136 = vshrl.u32 %v2118, %v2134
        %v2137 = vor.u32 %v2135, %v2136
        %v2138 = vsub.s32 4294967266, %v2133
        %v2139 = vadd.s32 %v2138, 127
        %v2140 = vshll.u32 %v2139, 23
        %v2141 = vor.u32 4788187, %v2140
        %v2142 = vand.u32 2147483647, %v2141
        %v2144 = vcvt.s32.f32 %v2137
        %v2145 = vmul.f32 %v2144, %v2142
        %v2146 = vxor.u32 %v2145, 2147483648
        %v2147 = vsel %vm2064, %v2146, %v2145
        %v2148 = vsub.s32 4, %v2124
        %v2149 = vsel %vm2064, %v2148, %v2124
        %v2150 = vsel %vm2063, %v518, %v2147
        %v2151 = vsel %vm2063, 0, %v2149
        %v2152 = vcosq.f32.pop %v2150
        %v2153 = vsinq.f32.pop %v2150
        %vm2154 = vweird.f32 %v518
        %v2155 = vadd.s32 %v2151, 3
        %v2156 = vand.u32 %v2155, 3
        %vm2157 = vcmp.lt.s32.totalorder %v2156, 2
        %vm2158 = vcmp.eq.s32.totalorder %v2156, 0
        %v2159 = vxor.u32 %v2153, 2147483648
        %v2160 = vsel %vm2158, %v2152, %v2159
        %vm2161 = vcmp.eq.s32.totalorder %v2156, 2
        %v2162 = vxor.u32 %v2152, 2147483648
        %v2163 = vsel %vm2161, %v2162, %v2153
        %v2164 = vsel %vm2157, %v2160, %v2163
        %v2165 = vsel %vm2154, nan, %v2164
        %v2166 = vand.u32 2147483647, %v523
        %vm2167 = vcmp.le.f32.partialorder %v2166, 0.7853982
        %vm2168 = vcmp.lt.s32.totalorder %v523, 0
        %v2169 = vand.u32 %v523, 2139095040
        %v2170 = vshrl.u32 %v2169, 23
        %v2171 = vsub.s32 %v2170, 127
        %v2172 = vand.u32 2147483647, %v523
        %v2173 = vand.u32 %v2172, 8388607
        %v2174 = vor.u32 %v2173, 8388608
        %v2175 = vsub.s32 0, %v2174
        %v2176 = vadd.s32 %v2171, 1
        %vm2177 = vcmp.gt.s32.totalorder %v2176, 0
        %v2178 = vsel %vm2177, %v2176, 0
        %v2179 = vshrl.u32 %v2178, 5
        %v2180 = vand.u32 %v2178, 31
        %v2181 = vsub.s32 32, %v2180
        %v2182 = vshrl.u32 683565275, %v2181
        %v2183 = vshll.u32 683565275, %v2180
        %v2184 = vshrl.u32 2475754826, %v2181
        %v2185 = vor.u32 %v2183, %v2184
        %v2186 = vshll.u32 2475754826, %v2180
        %v2187 = vshrl.u32 2131351028, %v2181
        %v2188 = vor.u32 %v2186, %v2187
        %v2189 = vshll.u32 2131351028, %v2180
        %v2190 = vshrl.u32 2102212464, %v2181
        %v2191 = vor.u32 %v2189, %v2190
        %v2192 = vshll.u32 2102212464, %v2180
        %v2193 = vshrl.u32 920167782, %v2181
        %v2194 = vor.u32 %v2192, %v2193
        %v2195 = vshll.u32 920167782, %v2180
        %v2196 = vshrl.u32 1326507024, %v2181
        %v2197 = vor.u32 %v2195, %v2196
        %vm2198 = vcmp.lt.s32.totalorder %v2179, 1
        %vm2199 = vcmp.lt.s32.totalorder %v2179, 2
        %vm2200 = vcmp.lt.s32.totalorder %v2179, 3
        %vm2201 = vcmp.lt.s32.totalorder %v2179, 4
        %v2202 = vsel %vm2198, %v2182, %v2185
        %v2203 = vsel %vm2201, %v2191, 2102212464
        %v2204 = vsel %vm2200, %v2188, %v2203
        %v2205 = vsel %vm2199, %v2202, %v2204
        %v2206 = vsel %vm2198, %v2185, %v2188
        %v2207 = vsel %vm2201, %v2194, 920167782
        %v2208 = vsel %vm2200, %v2191, %v2207
        %v2209 = vsel %vm2199, %v2206, %v2208
        %v2210 = vsel %vm2198, %v2188, %v2191
        %v2211 = vsel %vm2201, %v2197, 1326507024
        %v2212 = vsel %vm2200, %v2194, %v2211
        %v2213 = vsel %vm2199, %v2210, %v2212
        %v2214 = vshll.u32 %v2174, 8
        %v2215 = vmul.u32.u64.compose %v2214, %v2213
        %v2216 = vextract.low.u32 %v2215
        %v2217 = vextract.high.u32 %v2215
        %v2218 = vmul.u32.u64.compose %v2214, %v2209
        %v2219 = vextract.low.u32 %v2218
        %v2220 = vextract.high.u32 %v2218
        %v2221 = vmul.u32 %v2214, %v2205
        %v2222 = vadd.s32 %v2217, %v2219
        %vm2223 = vc.u32 %v2217, %v2219
        %v2224 = vadd.s32 %v2220, 1
        %v2225 = vsel %vm2223, %v2224, %v2220
        %v2226 = vadd.s32 %v2221, %v2225
        %v2227 = vadd.s32 %v2226, 536870912
        %v2228 = vshrl.u32 %v2227, 30
        %v2229 = vshll.u32 %v2228, 30
        %v2230 = vsub.s32 %v2226, %v2229
        %vm2231 = vcmp.lt.s32.totalorder %v2230, 0
        %v2232 = vsub.s32 0, %v2230
        %v2233 = vsel %vm2231, %v2232, %v2230
        %v2234 = vclz %v2233
        %v2235 = vsub.s32 %v2234, 2
        %vm2236 = vcmp.gt.s32.totalorder 0, %v2235
        %v2237 = vsel %vm2236, 0, %v2235
        %v2238 = vsub.s32 32, %v2237
        %v2239 = vshll.u32 %v2230, %v2237
        %v2240 = vshrl.u32 %v2222, %v2238
        %v2241 = vor.u32 %v2239, %v2240
        %v2242 = vsub.s32 4294967266, %v2237
        %v2243 = vadd.s32 %v2242, 127
        %v2244 = vshll.u32 %v2243, 23
        %v2245 = vor.u32 4788187, %v2244
        %v2246 = vand.u32 2147483647, %v2245
        %v2248 = vcvt.s32.f32 %v2241
        %v2249 = vmul.f32 %v2248, %v2246
        %v2250 = vxor.u32 %v2249, 2147483648
        %v2251 = vsel %vm2168, %v2250, %v2249
        %v2252 = vsub.s32 4, %v2228
        %v2253 = vsel %vm2168, %v2252, %v2228
        %v2254 = vsel %vm2167, %v523, %v2251
        %v2255 = vsel %vm2167, 0, %v2253
        %v2256 = vcosq.f32.pop %v2254
        %v2257 = vsinq.f32.pop %v2254
        %vm2258 = vweird.f32 %v523
        %v2259 = vadd.s32 %v2255, 3
        %v2260 = vand.u32 %v2259, 3
        %vm2261 = vcmp.lt.s32.totalorder %v2260, 2
        %vm2262 = vcmp.eq.s32.totalorder %v2260, 0
        %v2263 = vxor.u32 %v2257, 2147483648
        %v2264 = vsel %vm2262, %v2256, %v2263
        %vm2265 = vcmp.eq.s32.totalorder %v2260, 2
        %v2266 = vxor.u32 %v2256, 2147483648
        %v2267 = vsel %vm2265, %v2266, %v2257
        %v2268 = vsel %vm2261, %v2264, %v2267
        %v2269 = vsel %vm2258, nan, %v2268
        %v2270 = vand.u32 2147483647, %v528
        %vm2271 = vcmp.le.f32.partialorder %v2270, 0.7853982
        %vm2272 = vcmp.lt.s32.totalorder %v528, 0
        %v2273 = vand.u32 %v528, 2139095040
        %v2274 = vshrl.u32 %v2273, 23
        %v2275 = vsub.s32 %v2274, 127
        %v2276 = vand.u32 2147483647, %v528
        %v2277 = vand.u32 %v2276, 8388607
        %v2278 = vor.u32 %v2277, 8388608
        %v2279 = vsub.s32 0, %v2278
        %v2280 = vadd.s32 %v2275, 1
        %vm2281 = vcmp.gt.s32.totalorder %v2280, 0
        %v2282 = vsel %vm2281, %v2280, 0
        %v2283 = vshrl.u32 %v2282, 5
        %v2284 = vand.u32 %v2282, 31
        %v2285 = vsub.s32 32, %v2284
        %v2286 = vshrl.u32 683565275, %v2285
        %v2287 = vshll.u32 683565275, %v2284
        %v2288 = vshrl.u32 2475754826, %v2285
        %v2289 = vor.u32 %v2287, %v2288
        %v2290 = vshll.u32 2475754826, %v2284
        %v2291 = vshrl.u32 2131351028, %v2285
        %v2292 = vor.u32 %v2290, %v2291
        %v2293 = vshll.u32 2131351028, %v2284
        %v2294 = vshrl.u32 2102212464, %v2285
        %v2295 = vor.u32 %v2293, %v2294
        %v2296 = vshll.u32 2102212464, %v2284
        %v2297 = vshrl.u32 920167782, %v2285
        %v2298 = vor.u32 %v2296, %v2297
        %v2299 = vshll.u32 920167782, %v2284
        %v2300 = vshrl.u32 1326507024, %v2285
        %v2301 = vor.u32 %v2299, %v2300
        %vm2302 = vcmp.lt.s32.totalorder %v2283, 1
        %vm2303 = vcmp.lt.s32.totalorder %v2283, 2
        %vm2304 = vcmp.lt.s32.totalorder %v2283, 3
        %vm2305 = vcmp.lt.s32.totalorder %v2283, 4
        %v2306 = vsel %vm2302, %v2286, %v2289
        %v2307 = vsel %vm2305, %v2295, 2102212464
        %v2308 = vsel %vm2304, %v2292, %v2307
        %v2309 = vsel %vm2303, %v2306, %v2308
        %v2310 = vsel %vm2302, %v2289, %v2292
        %v2311 = vsel %vm2305, %v2298, 920167782
        %v2312 = vsel %vm2304, %v2295, %v2311
        %v2313 = vsel %vm2303, %v2310, %v2312
        %v2314 = vsel %vm2302, %v2292, %v2295
        %v2315 = vsel %vm2305, %v2301, 1326507024
        %v2316 = vsel %vm2304, %v2298, %v2315
        %v2317 = vsel %vm2303, %v2314, %v2316
        %v2318 = vshll.u32 %v2278, 8
        %v2319 = vmul.u32.u64.compose %v2318, %v2317
        %v2320 = vextract.low.u32 %v2319
        %v2321 = vextract.high.u32 %v2319
        %v2322 = vmul.u32.u64.compose %v2318, %v2313
        %v2323 = vextract.low.u32 %v2322
        %v2324 = vextract.high.u32 %v2322
        %v2325 = vmul.u32 %v2318, %v2309
        %v2326 = vadd.s32 %v2321, %v2323
        %vm2327 = vc.u32 %v2321, %v2323
        %v2328 = vadd.s32 %v2324, 1
        %v2329 = vsel %vm2327, %v2328, %v2324
        %v2330 = vadd.s32 %v2325, %v2329
        %v2331 = vadd.s32 %v2330, 536870912
        %v2332 = vshrl.u32 %v2331, 30
        %v2333 = vshll.u32 %v2332, 30
        %v2334 = vsub.s32 %v2330, %v2333
        %vm2335 = vcmp.lt.s32.totalorder %v2334, 0
        %v2336 = vsub.s32 0, %v2334
        %v2337 = vsel %vm2335, %v2336, %v2334
        %v2338 = vclz %v2337
        %v2339 = vsub.s32 %v2338, 2
        %vm2340 = vcmp.gt.s32.totalorder 0, %v2339
        %v2341 = vsel %vm2340, 0, %v2339
        %v2342 = vsub.s32 32, %v2341
        %v2343 = vshll.u32 %v2334, %v2341
        %v2344 = vshrl.u32 %v2326, %v2342
        %v2345 = vor.u32 %v2343, %v2344
        %v2346 = vsub.s32 4294967266, %v2341
        %v2347 = vadd.s32 %v2346, 127
        %v2348 = vshll.u32 %v2347, 23
        %v2349 = vor.u32 4788187, %v2348
        %v2350 = vand.u32 2147483647, %v2349
        %v2352 = vcvt.s32.f32 %v2345
        %v2353 = vmul.f32 %v2352, %v2350
        %v2354 = vxor.u32 %v2353, 2147483648
        %v2355 = vsel %vm2272, %v2354, %v2353
        %v2356 = vsub.s32 4, %v2332
        %v2357 = vsel %vm2272, %v2356, %v2332
        %v2358 = vsel %vm2271, %v528, %v2355
        %v2359 = vsel %vm2271, 0, %v2357
        %v2360 = vcosq.f32.pop %v2358
        %v2361 = vsinq.f32.pop %v2358
        %vm2362 = vweird.f32 %v528
        %v2363 = vadd.s32 %v2359, 3
        %v2364 = vand.u32 %v2363, 3
        %vm2365 = vcmp.lt.s32.totalorder %v2364, 2
        %vm2366 = vcmp.eq.s32.totalorder %v2364, 0
        %v2367 = vxor.u32 %v2361, 2147483648
        %v2368 = vsel %vm2366, %v2360, %v2367
        %vm2369 = vcmp.eq.s32.totalorder %v2364, 2
        %v2370 = vxor.u32 %v2360, 2147483648
        %v2371 = vsel %vm2369, %v2370, %v2361
        %v2372 = vsel %vm2365, %v2368, %v2371
        %v2373 = vsel %vm2362, nan, %v2372
        %v2374 = vand.u32 2147483647, %v533
        %vm2375 = vcmp.le.f32.partialorder %v2374, 0.7853982
        %vm2376 = vcmp.lt.s32.totalorder %v533, 0
        %v2377 = vand.u32 %v533, 2139095040
        %v2378 = vshrl.u32 %v2377, 23
        %v2379 = vsub.s32 %v2378, 127
        %v2380 = vand.u32 2147483647, %v533
        %v2381 = vand.u32 %v2380, 8388607
        %v2382 = vor.u32 %v2381, 8388608
        %v2383 = vsub.s32 0, %v2382
        %v2384 = vadd.s32 %v2379, 1
        %vm2385 = vcmp.gt.s32.totalorder %v2384, 0
        %v2386 = vsel %vm2385, %v2384, 0
        %v2387 = vshrl.u32 %v2386, 5
        %v2388 = vand.u32 %v2386, 31
        %v2389 = vsub.s32 32, %v2388
        %v2390 = vshrl.u32 683565275, %v2389
        %v2391 = vshll.u32 683565275, %v2388
        %v2392 = vshrl.u32 2475754826, %v2389
        %v2393 = vor.u32 %v2391, %v2392
        %v2394 = vshll.u32 2475754826, %v2388
        %v2395 = vshrl.u32 2131351028, %v2389
        %v2396 = vor.u32 %v2394, %v2395
        %v2397 = vshll.u32 2131351028, %v2388
        %v2398 = vshrl.u32 2102212464, %v2389
        %v2399 = vor.u32 %v2397, %v2398
        %v2400 = vshll.u32 2102212464, %v2388
        %v2401 = vshrl.u32 920167782, %v2389
        %v2402 = vor.u32 %v2400, %v2401
        %v2403 = vshll.u32 920167782, %v2388
        %v2404 = vshrl.u32 1326507024, %v2389
        %v2405 = vor.u32 %v2403, %v2404
        %vm2406 = vcmp.lt.s32.totalorder %v2387, 1
        %vm2407 = vcmp.lt.s32.totalorder %v2387, 2
        %vm2408 = vcmp.lt.s32.totalorder %v2387, 3
        %vm2409 = vcmp.lt.s32.totalorder %v2387, 4
        %v2410 = vsel %vm2406, %v2390, %v2393
        %v2411 = vsel %vm2409, %v2399, 2102212464
        %v2412 = vsel %vm2408, %v2396, %v2411
        %v2413 = vsel %vm2407, %v2410, %v2412
        %v2414 = vsel %vm2406, %v2393, %v2396
        %v2415 = vsel %vm2409, %v2402, 920167782
        %v2416 = vsel %vm2408, %v2399, %v2415
        %v2417 = vsel %vm2407, %v2414, %v2416
        %v2418 = vsel %vm2406, %v2396, %v2399
        %v2419 = vsel %vm2409, %v2405, 1326507024
        %v2420 = vsel %vm2408, %v2402, %v2419
        %v2421 = vsel %vm2407, %v2418, %v2420
        %v2422 = vshll.u32 %v2382, 8
        %v2423 = vmul.u32.u64.compose %v2422, %v2421
        %v2424 = vextract.low.u32 %v2423
        %v2425 = vextract.high.u32 %v2423
        %v2426 = vmul.u32.u64.compose %v2422, %v2417
        %v2427 = vextract.low.u32 %v2426
        %v2428 = vextract.high.u32 %v2426
        %v2429 = vmul.u32 %v2422, %v2413
        %v2430 = vadd.s32 %v2425, %v2427
        %vm2431 = vc.u32 %v2425, %v2427
        %v2432 = vadd.s32 %v2428, 1
        %v2433 = vsel %vm2431, %v2432, %v2428
        %v2434 = vadd.s32 %v2429, %v2433
        %v2435 = vadd.s32 %v2434, 536870912
        %v2436 = vshrl.u32 %v2435, 30
        %v2437 = vshll.u32 %v2436, 30
        %v2438 = vsub.s32 %v2434, %v2437
        %vm2439 = vcmp.lt.s32.totalorder %v2438, 0
        %v2440 = vsub.s32 0, %v2438
        %v2441 = vsel %vm2439, %v2440, %v2438
        %v2442 = vclz %v2441
        %v2443 = vsub.s32 %v2442, 2
        %vm2444 = vcmp.gt.s32.totalorder 0, %v2443
        %v2445 = vsel %vm2444, 0, %v2443
        %v2446 = vsub.s32 32, %v2445
        %v2447 = vshll.u32 %v2438, %v2445
        %v2448 = vshrl.u32 %v2430, %v2446
        %v2449 = vor.u32 %v2447, %v2448
        %v2450 = vsub.s32 4294967266, %v2445
        %v2451 = vadd.s32 %v2450, 127
        %v2452 = vshll.u32 %v2451, 23
        %v2453 = vor.u32 4788187, %v2452
        %v2454 = vand.u32 2147483647, %v2453
        %v2456 = vcvt.s32.f32 %v2449
        %v2457 = vmul.f32 %v2456, %v2454
        %v2458 = vxor.u32 %v2457, 2147483648
        %v2459 = vsel %vm2376, %v2458, %v2457
        %v2460 = vsub.s32 4, %v2436
        %v2461 = vsel %vm2376, %v2460, %v2436
        %v2462 = vsel %vm2375, %v533, %v2459
        %v2463 = vsel %vm2375, 0, %v2461
        %v2464 = vcosq.f32.pop %v2462
        %v2465 = vsinq.f32.pop %v2462
        %vm2466 = vweird.f32 %v533
        %v2467 = vadd.s32 %v2463, 3
        %v2468 = vand.u32 %v2467, 3
        %vm2469 = vcmp.lt.s32.totalorder %v2468, 2
        %vm2470 = vcmp.eq.s32.totalorder %v2468, 0
        %v2471 = vxor.u32 %v2465, 2147483648
        %v2472 = vsel %vm2470, %v2464, %v2471
        %vm2473 = vcmp.eq.s32.totalorder %v2468, 2
        %v2474 = vxor.u32 %v2464, 2147483648
        %v2475 = vsel %vm2473, %v2474, %v2465
        %v2476 = vsel %vm2469, %v2472, %v2475
        %v2477 = vsel %vm2466, nan, %v2476
        %v2478 = vand.u32 2147483647, %v538
        %vm2479 = vcmp.le.f32.partialorder %v2478, 0.7853982
        %vm2480 = vcmp.lt.s32.totalorder %v538, 0
        %v2481 = vand.u32 %v538, 2139095040
        %v2482 = vshrl.u32 %v2481, 23
        %v2483 = vsub.s32 %v2482, 127
        %v2484 = vand.u32 2147483647, %v538
        %v2485 = vand.u32 %v2484, 8388607
        %v2486 = vor.u32 %v2485, 8388608
        %v2487 = vsub.s32 0, %v2486
        %v2488 = vadd.s32 %v2483, 1
        %vm2489 = vcmp.gt.s32.totalorder %v2488, 0
        %v2490 = vsel %vm2489, %v2488, 0
        %v2491 = vshrl.u32 %v2490, 5
        %v2492 = vand.u32 %v2490, 31
        %v2493 = vsub.s32 32, %v2492
        %v2494 = vshrl.u32 683565275, %v2493
        %v2495 = vshll.u32 683565275, %v2492
        %v2496 = vshrl.u32 2475754826, %v2493
        %v2497 = vor.u32 %v2495, %v2496
        %v2498 = vshll.u32 2475754826, %v2492
        %v2499 = vshrl.u32 2131351028, %v2493
        %v2500 = vor.u32 %v2498, %v2499
        %v2501 = vshll.u32 2131351028, %v2492
        %v2502 = vshrl.u32 2102212464, %v2493
        %v2503 = vor.u32 %v2501, %v2502
        %v2504 = vshll.u32 2102212464, %v2492
        %v2505 = vshrl.u32 920167782, %v2493
        %v2506 = vor.u32 %v2504, %v2505
        %v2507 = vshll.u32 920167782, %v2492
        %v2508 = vshrl.u32 1326507024, %v2493
        %v2509 = vor.u32 %v2507, %v2508
        %vm2510 = vcmp.lt.s32.totalorder %v2491, 1
        %vm2511 = vcmp.lt.s32.totalorder %v2491, 2
        %vm2512 = vcmp.lt.s32.totalorder %v2491, 3
        %vm2513 = vcmp.lt.s32.totalorder %v2491, 4
        %v2514 = vsel %vm2510, %v2494, %v2497
        %v2515 = vsel %vm2513, %v2503, 2102212464
        %v2516 = vsel %vm2512, %v2500, %v2515
        %v2517 = vsel %vm2511, %v2514, %v2516
        %v2518 = vsel %vm2510, %v2497, %v2500
        %v2519 = vsel %vm2513, %v2506, 920167782
        %v2520 = vsel %vm2512, %v2503, %v2519
        %v2521 = vsel %vm2511, %v2518, %v2520
        %v2522 = vsel %vm2510, %v2500, %v2503
        %v2523 = vsel %vm2513, %v2509, 1326507024
        %v2524 = vsel %vm2512, %v2506, %v2523
        %v2525 = vsel %vm2511, %v2522, %v2524
        %v2526 = vshll.u32 %v2486, 8
        %v2527 = vmul.u32.u64.compose %v2526, %v2525
        %v2528 = vextract.low.u32 %v2527
        %v2529 = vextract.high.u32 %v2527
        %v2530 = vmul.u32.u64.compose %v2526, %v2521
        %v2531 = vextract.low.u32 %v2530
        %v2532 = vextract.high.u32 %v2530
        %v2533 = vmul.u32 %v2526, %v2517
        %v2534 = vadd.s32 %v2529, %v2531
        %vm2535 = vc.u32 %v2529, %v2531
        %v2536 = vadd.s32 %v2532, 1
        %v2537 = vsel %vm2535, %v2536, %v2532
        %v2538 = vadd.s32 %v2533, %v2537
        %v2539 = vadd.s32 %v2538, 536870912
        %v2540 = vshrl.u32 %v2539, 30
        %v2541 = vshll.u32 %v2540, 30
        %v2542 = vsub.s32 %v2538, %v2541
        %vm2543 = vcmp.lt.s32.totalorder %v2542, 0
        %v2544 = vsub.s32 0, %v2542
        %v2545 = vsel %vm2543, %v2544, %v2542
        %v2546 = vclz %v2545
        %v2547 = vsub.s32 %v2546, 2
        %vm2548 = vcmp.gt.s32.totalorder 0, %v2547
        %v2549 = vsel %vm2548, 0, %v2547
        %v2550 = vsub.s32 32, %v2549
        %v2551 = vshll.u32 %v2542, %v2549
        %v2552 = vshrl.u32 %v2534, %v2550
        %v2553 = vor.u32 %v2551, %v2552
        %v2554 = vsub.s32 4294967266, %v2549
        %v2555 = vadd.s32 %v2554, 127
        %v2556 = vshll.u32 %v2555, 23
        %v2557 = vor.u32 4788187, %v2556
        %v2558 = vand.u32 2147483647, %v2557
        %v2560 = vcvt.s32.f32 %v2553
        %v2561 = vmul.f32 %v2560, %v2558
        %v2562 = vxor.u32 %v2561, 2147483648
        %v2563 = vsel %vm2480, %v2562, %v2561
        %v2564 = vsub.s32 4, %v2540
        %v2565 = vsel %vm2480, %v2564, %v2540
        %v2566 = vsel %vm2479, %v538, %v2563
        %v2567 = vsel %vm2479, 0, %v2565
        %v2568 = vcosq.f32.pop %v2566
        %v2569 = vsinq.f32.pop %v2566
        %vm2570 = vweird.f32 %v538
        %v2571 = vadd.s32 %v2567, 3
        %v2572 = vand.u32 %v2571, 3
        %vm2573 = vcmp.lt.s32.totalorder %v2572, 2
        %vm2574 = vcmp.eq.s32.totalorder %v2572, 0
        %v2575 = vxor.u32 %v2569, 2147483648
        %v2576 = vsel %vm2574, %v2568, %v2575
        %vm2577 = vcmp.eq.s32.totalorder %v2572, 2
        %v2578 = vxor.u32 %v2568, 2147483648
        %v2579 = vsel %vm2577, %v2578, %v2569
        %v2580 = vsel %vm2573, %v2576, %v2579
        %v2581 = vsel %vm2570, nan, %v2580
        %v2582 = vand.u32 2147483647, %v543
        %vm2583 = vcmp.le.f32.partialorder %v2582, 0.7853982
        %vm2584 = vcmp.lt.s32.totalorder %v543, 0
        %v2585 = vand.u32 %v543, 2139095040
        %v2586 = vshrl.u32 %v2585, 23
        %v2587 = vsub.s32 %v2586, 127
        %v2588 = vand.u32 2147483647, %v543
        %v2589 = vand.u32 %v2588, 8388607
        %v2590 = vor.u32 %v2589, 8388608
        %v2591 = vsub.s32 0, %v2590
        %v2592 = vadd.s32 %v2587, 1
        %vm2593 = vcmp.gt.s32.totalorder %v2592, 0
        %v2594 = vsel %vm2593, %v2592, 0
        %v2595 = vshrl.u32 %v2594, 5
        %v2596 = vand.u32 %v2594, 31
        %v2597 = vsub.s32 32, %v2596
        %v2598 = vshrl.u32 683565275, %v2597
        %v2599 = vshll.u32 683565275, %v2596
        %v2600 = vshrl.u32 2475754826, %v2597
        %v2601 = vor.u32 %v2599, %v2600
        %v2602 = vshll.u32 2475754826, %v2596
        %v2603 = vshrl.u32 2131351028, %v2597
        %v2604 = vor.u32 %v2602, %v2603
        %v2605 = vshll.u32 2131351028, %v2596
        %v2606 = vshrl.u32 2102212464, %v2597
        %v2607 = vor.u32 %v2605, %v2606
        %v2608 = vshll.u32 2102212464, %v2596
        %v2609 = vshrl.u32 920167782, %v2597
        %v2610 = vor.u32 %v2608, %v2609
        %v2611 = vshll.u32 920167782, %v2596
        %v2612 = vshrl.u32 1326507024, %v2597
        %v2613 = vor.u32 %v2611, %v2612
        %vm2614 = vcmp.lt.s32.totalorder %v2595, 1
        %vm2615 = vcmp.lt.s32.totalorder %v2595, 2
        %vm2616 = vcmp.lt.s32.totalorder %v2595, 3
        %vm2617 = vcmp.lt.s32.totalorder %v2595, 4
        %v2618 = vsel %vm2614, %v2598, %v2601
        %v2619 = vsel %vm2617, %v2607, 2102212464
        %v2620 = vsel %vm2616, %v2604, %v2619
        %v2621 = vsel %vm2615, %v2618, %v2620
        %v2622 = vsel %vm2614, %v2601, %v2604
        %v2623 = vsel %vm2617, %v2610, 920167782
        %v2624 = vsel %vm2616, %v2607, %v2623
        %v2625 = vsel %vm2615, %v2622, %v2624
        %v2626 = vsel %vm2614, %v2604, %v2607
        %v2627 = vsel %vm2617, %v2613, 1326507024
        %v2628 = vsel %vm2616, %v2610, %v2627
        %v2629 = vsel %vm2615, %v2626, %v2628
        %v2630 = vshll.u32 %v2590, 8
        %v2631 = vmul.u32.u64.compose %v2630, %v2629
        %v2632 = vextract.low.u32 %v2631
        %v2633 = vextract.high.u32 %v2631
        %v2634 = vmul.u32.u64.compose %v2630, %v2625
        %v2635 = vextract.low.u32 %v2634
        %v2636 = vextract.high.u32 %v2634
        %v2637 = vmul.u32 %v2630, %v2621
        %v2638 = vadd.s32 %v2633, %v2635
        %vm2639 = vc.u32 %v2633, %v2635
        %v2640 = vadd.s32 %v2636, 1
        %v2641 = vsel %vm2639, %v2640, %v2636
        %v2642 = vadd.s32 %v2637, %v2641
        %v2643 = vadd.s32 %v2642, 536870912
        %v2644 = vshrl.u32 %v2643, 30
        %v2645 = vshll.u32 %v2644, 30
        %v2646 = vsub.s32 %v2642, %v2645
        %vm2647 = vcmp.lt.s32.totalorder %v2646, 0
        %v2648 = vsub.s32 0, %v2646
        %v2649 = vsel %vm2647, %v2648, %v2646
        %v2650 = vclz %v2649
        %v2651 = vsub.s32 %v2650, 2
        %vm2652 = vcmp.gt.s32.totalorder 0, %v2651
        %v2653 = vsel %vm2652, 0, %v2651
        %v2654 = vsub.s32 32, %v2653
        %v2655 = vshll.u32 %v2646, %v2653
        %v2656 = vshrl.u32 %v2638, %v2654
        %v2657 = vor.u32 %v2655, %v2656
        %v2658 = vsub.s32 4294967266, %v2653
        %v2659 = vadd.s32 %v2658, 127
        %v2660 = vshll.u32 %v2659, 23
        %v2661 = vor.u32 4788187, %v2660
        %v2662 = vand.u32 2147483647, %v2661
        %v2664 = vcvt.s32.f32 %v2657
        %v2665 = vmul.f32 %v2664, %v2662
        %v2666 = vxor.u32 %v2665, 2147483648
        %v2667 = vsel %vm2584, %v2666, %v2665
        %v2668 = vsub.s32 4, %v2644
        %v2669 = vsel %vm2584, %v2668, %v2644
        %v2670 = vsel %vm2583, %v543, %v2667
        %v2671 = vsel %vm2583, 0, %v2669
        %v2672 = vcosq.f32.pop %v2670
        %v2673 = vsinq.f32.pop %v2670
        %vm2674 = vweird.f32 %v543
        %v2675 = vadd.s32 %v2671, 3
        %v2676 = vand.u32 %v2675, 3
        %vm2677 = vcmp.lt.s32.totalorder %v2676, 2
        %vm2678 = vcmp.eq.s32.totalorder %v2676, 0
        %v2679 = vxor.u32 %v2673, 2147483648
        %v2680 = vsel %vm2678, %v2672, %v2679
        %vm2681 = vcmp.eq.s32.totalorder %v2676, 2
        %v2682 = vxor.u32 %v2672, 2147483648
        %v2683 = vsel %vm2681, %v2682, %v2673
        %v2684 = vsel %vm2677, %v2680, %v2683
        %v2685 = vsel %vm2674, nan, %v2684
        %v2686 = vand.u32 2147483647, %v548
        %vm2687 = vcmp.le.f32.partialorder %v2686, 0.7853982
        %vm2688 = vcmp.lt.s32.totalorder %v548, 0
        %v2689 = vand.u32 %v548, 2139095040
        %v2690 = vshrl.u32 %v2689, 23
        %v2691 = vsub.s32 %v2690, 127
        %v2692 = vand.u32 2147483647, %v548
        %v2693 = vand.u32 %v2692, 8388607
        %v2694 = vor.u32 %v2693, 8388608
        %v2695 = vsub.s32 0, %v2694
        %v2696 = vadd.s32 %v2691, 1
        %vm2697 = vcmp.gt.s32.totalorder %v2696, 0
        %v2698 = vsel %vm2697, %v2696, 0
        %v2699 = vshrl.u32 %v2698, 5
        %v2700 = vand.u32 %v2698, 31
        %v2701 = vsub.s32 32, %v2700
        %v2702 = vshrl.u32 683565275, %v2701
        %v2703 = vshll.u32 683565275, %v2700
        %v2704 = vshrl.u32 2475754826, %v2701
        %v2705 = vor.u32 %v2703, %v2704
        %v2706 = vshll.u32 2475754826, %v2700
        %v2707 = vshrl.u32 2131351028, %v2701
        %v2708 = vor.u32 %v2706, %v2707
        %v2709 = vshll.u32 2131351028, %v2700
        %v2710 = vshrl.u32 2102212464, %v2701
        %v2711 = vor.u32 %v2709, %v2710
        %v2712 = vshll.u32 2102212464, %v2700
        %v2713 = vshrl.u32 920167782, %v2701
        %v2714 = vor.u32 %v2712, %v2713
        %v2715 = vshll.u32 920167782, %v2700
        %v2716 = vshrl.u32 1326507024, %v2701
        %v2717 = vor.u32 %v2715, %v2716
        %vm2718 = vcmp.lt.s32.totalorder %v2699, 1
        %vm2719 = vcmp.lt.s32.totalorder %v2699, 2
        %vm2720 = vcmp.lt.s32.totalorder %v2699, 3
        %vm2721 = vcmp.lt.s32.totalorder %v2699, 4
        %v2722 = vsel %vm2718, %v2702, %v2705
        %v2723 = vsel %vm2721, %v2711, 2102212464
        %v2724 = vsel %vm2720, %v2708, %v2723
        %v2725 = vsel %vm2719, %v2722, %v2724
        %v2726 = vsel %vm2718, %v2705, %v2708
        %v2727 = vsel %vm2721, %v2714, 920167782
        %v2728 = vsel %vm2720, %v2711, %v2727
        %v2729 = vsel %vm2719, %v2726, %v2728
        %v2730 = vsel %vm2718, %v2708, %v2711
        %v2731 = vsel %vm2721, %v2717, 1326507024
        %v2732 = vsel %vm2720, %v2714, %v2731
        %v2733 = vsel %vm2719, %v2730, %v2732
        %v2734 = vshll.u32 %v2694, 8
        %v2735 = vmul.u32.u64.compose %v2734, %v2733
        %v2736 = vextract.low.u32 %v2735
        %v2737 = vextract.high.u32 %v2735
        %v2738 = vmul.u32.u64.compose %v2734, %v2729
        %v2739 = vextract.low.u32 %v2738
        %v2740 = vextract.high.u32 %v2738
        %v2741 = vmul.u32 %v2734, %v2725
        %v2742 = vadd.s32 %v2737, %v2739
        %vm2743 = vc.u32 %v2737, %v2739
        %v2744 = vadd.s32 %v2740, 1
        %v2745 = vsel %vm2743, %v2744, %v2740
        %v2746 = vadd.s32 %v2741, %v2745
        %v2747 = vadd.s32 %v2746, 536870912
        %v2748 = vshrl.u32 %v2747, 30
        %v2749 = vshll.u32 %v2748, 30
        %v2750 = vsub.s32 %v2746, %v2749
        %vm2751 = vcmp.lt.s32.totalorder %v2750, 0
        %v2752 = vsub.s32 0, %v2750
        %v2753 = vsel %vm2751, %v2752, %v2750
        %v2754 = vclz %v2753
        %v2755 = vsub.s32 %v2754, 2
        %vm2756 = vcmp.gt.s32.totalorder 0, %v2755
        %v2757 = vsel %vm2756, 0, %v2755
        %v2758 = vsub.s32 32, %v2757
        %v2759 = vshll.u32 %v2750, %v2757
        %v2760 = vshrl.u32 %v2742, %v2758
        %v2761 = vor.u32 %v2759, %v2760
        %v2762 = vsub.s32 4294967266, %v2757
        %v2763 = vadd.s32 %v2762, 127
        %v2764 = vshll.u32 %v2763, 23
        %v2765 = vor.u32 4788187, %v2764
        %v2766 = vand.u32 2147483647, %v2765
        %v2768 = vcvt.s32.f32 %v2761
        %v2769 = vmul.f32 %v2768, %v2766
        %v2770 = vxor.u32 %v2769, 2147483648
        %v2771 = vsel %vm2688, %v2770, %v2769
        %v2772 = vsub.s32 4, %v2748
        %v2773 = vsel %vm2688, %v2772, %v2748
        %v2774 = vsel %vm2687, %v548, %v2771
        %v2775 = vsel %vm2687, 0, %v2773
        %v2776 = vcosq.f32.pop %v2774
        %v2777 = vsinq.f32.pop %v2774
        %vm2778 = vweird.f32 %v548
        %v2779 = vadd.s32 %v2775, 3
        %v2780 = vand.u32 %v2779, 3
        %vm2781 = vcmp.lt.s32.totalorder %v2780, 2
        %vm2782 = vcmp.eq.s32.totalorder %v2780, 0
        %v2783 = vxor.u32 %v2777, 2147483648
        %v2784 = vsel %vm2782, %v2776, %v2783
        %vm2785 = vcmp.eq.s32.totalorder %v2780, 2
        %v2786 = vxor.u32 %v2776, 2147483648
        %v2787 = vsel %vm2785, %v2786, %v2777
        %v2788 = vsel %vm2781, %v2784, %v2787
        %v2789 = vsel %vm2778, nan, %v2788
        %v2790 = vand.u32 2147483647, %v553
        %vm2791 = vcmp.le.f32.partialorder %v2790, 0.7853982
        %vm2792 = vcmp.lt.s32.totalorder %v553, 0
        %v2793 = vand.u32 %v553, 2139095040
        %v2794 = vshrl.u32 %v2793, 23
        %v2795 = vsub.s32 %v2794, 127
        %v2796 = vand.u32 2147483647, %v553
        %v2797 = vand.u32 %v2796, 8388607
        %v2798 = vor.u32 %v2797, 8388608
        %v2799 = vsub.s32 0, %v2798
        %v2800 = vadd.s32 %v2795, 1
        %vm2801 = vcmp.gt.s32.totalorder %v2800, 0
        %v2802 = vsel %vm2801, %v2800, 0
        %v2803 = vshrl.u32 %v2802, 5
        %v2804 = vand.u32 %v2802, 31
        %v2805 = vsub.s32 32, %v2804
        %v2806 = vshrl.u32 683565275, %v2805
        %v2807 = vshll.u32 683565275, %v2804
        %v2808 = vshrl.u32 2475754826, %v2805
        %v2809 = vor.u32 %v2807, %v2808
        %v2810 = vshll.u32 2475754826, %v2804
        %v2811 = vshrl.u32 2131351028, %v2805
        %v2812 = vor.u32 %v2810, %v2811
        %v2813 = vshll.u32 2131351028, %v2804
        %v2814 = vshrl.u32 2102212464, %v2805
        %v2815 = vor.u32 %v2813, %v2814
        %v2816 = vshll.u32 2102212464, %v2804
        %v2817 = vshrl.u32 920167782, %v2805
        %v2818 = vor.u32 %v2816, %v2817
        %v2819 = vshll.u32 920167782, %v2804
        %v2820 = vshrl.u32 1326507024, %v2805
        %v2821 = vor.u32 %v2819, %v2820
        %vm2822 = vcmp.lt.s32.totalorder %v2803, 1
        %vm2823 = vcmp.lt.s32.totalorder %v2803, 2
        %vm2824 = vcmp.lt.s32.totalorder %v2803, 3
        %vm2825 = vcmp.lt.s32.totalorder %v2803, 4
        %v2826 = vsel %vm2822, %v2806, %v2809
        %v2827 = vsel %vm2825, %v2815, 2102212464
        %v2828 = vsel %vm2824, %v2812, %v2827
        %v2829 = vsel %vm2823, %v2826, %v2828
        %v2830 = vsel %vm2822, %v2809, %v2812
        %v2831 = vsel %vm2825, %v2818, 920167782
        %v2832 = vsel %vm2824, %v2815, %v2831
        %v2833 = vsel %vm2823, %v2830, %v2832
        %v2834 = vsel %vm2822, %v2812, %v2815
        %v2835 = vsel %vm2825, %v2821, 1326507024
        %v2836 = vsel %vm2824, %v2818, %v2835
        %v2837 = vsel %vm2823, %v2834, %v2836
        %v2838 = vshll.u32 %v2798, 8
        %v2839 = vmul.u32.u64.compose %v2838, %v2837
        %v2840 = vextract.low.u32 %v2839
        %v2841 = vextract.high.u32 %v2839
        %v2842 = vmul.u32.u64.compose %v2838, %v2833
        %v2843 = vextract.low.u32 %v2842
        %v2844 = vextract.high.u32 %v2842
        %v2845 = vmul.u32 %v2838, %v2829
        %v2846 = vadd.s32 %v2841, %v2843
        %vm2847 = vc.u32 %v2841, %v2843
        %v2848 = vadd.s32 %v2844, 1
        %v2849 = vsel %vm2847, %v2848, %v2844
        %v2850 = vadd.s32 %v2845, %v2849
        %v2851 = vadd.s32 %v2850, 536870912
        %v2852 = vshrl.u32 %v2851, 30
        %v2853 = vshll.u32 %v2852, 30
        %v2854 = vsub.s32 %v2850, %v2853
        %vm2855 = vcmp.lt.s32.totalorder %v2854, 0
        %v2856 = vsub.s32 0, %v2854
        %v2857 = vsel %vm2855, %v2856, %v2854
        %v2858 = vclz %v2857
        %v2859 = vsub.s32 %v2858, 2
        %vm2860 = vcmp.gt.s32.totalorder 0, %v2859
        %v2861 = vsel %vm2860, 0, %v2859
        %v2862 = vsub.s32 32, %v2861
        %v2863 = vshll.u32 %v2854, %v2861
        %v2864 = vshrl.u32 %v2846, %v2862
        %v2865 = vor.u32 %v2863, %v2864
        %v2866 = vsub.s32 4294967266, %v2861
        %v2867 = vadd.s32 %v2866, 127
        %v2868 = vshll.u32 %v2867, 23
        %v2869 = vor.u32 4788187, %v2868
        %v2870 = vand.u32 2147483647, %v2869
        %v2872 = vcvt.s32.f32 %v2865
        %v2873 = vmul.f32 %v2872, %v2870
        %v2874 = vxor.u32 %v2873, 2147483648
        %v2875 = vsel %vm2792, %v2874, %v2873
        %v2876 = vsub.s32 4, %v2852
        %v2877 = vsel %vm2792, %v2876, %v2852
        %v2878 = vsel %vm2791, %v553, %v2875
        %v2879 = vsel %vm2791, 0, %v2877
        %v2880 = vcosq.f32.pop %v2878
        %v2881 = vsinq.f32.pop %v2878
        %vm2882 = vweird.f32 %v553
        %v2883 = vadd.s32 %v2879, 3
        %v2884 = vand.u32 %v2883, 3
        %vm2885 = vcmp.lt.s32.totalorder %v2884, 2
        %vm2886 = vcmp.eq.s32.totalorder %v2884, 0
        %v2887 = vxor.u32 %v2881, 2147483648
        %v2888 = vsel %vm2886, %v2880, %v2887
        %vm2889 = vcmp.eq.s32.totalorder %v2884, 2
        %v2890 = vxor.u32 %v2880, 2147483648
        %v2891 = vsel %vm2889, %v2890, %v2881
        %v2892 = vsel %vm2885, %v2888, %v2891
        %v2893 = vsel %vm2882, nan, %v2892
        %v2894 = vand.u32 2147483647, %v558
        %vm2895 = vcmp.le.f32.partialorder %v2894, 0.7853982
        %vm2896 = vcmp.lt.s32.totalorder %v558, 0
        %v2897 = vand.u32 %v558, 2139095040
        %v2898 = vshrl.u32 %v2897, 23
        %v2899 = vsub.s32 %v2898, 127
        %v2900 = vand.u32 2147483647, %v558
        %v2901 = vand.u32 %v2900, 8388607
        %v2902 = vor.u32 %v2901, 8388608
        %v2903 = vsub.s32 0, %v2902
        %v2904 = vadd.s32 %v2899, 1
        %vm2905 = vcmp.gt.s32.totalorder %v2904, 0
        %v2906 = vsel %vm2905, %v2904, 0
        %v2907 = vshrl.u32 %v2906, 5
        %v2908 = vand.u32 %v2906, 31
        %v2909 = vsub.s32 32, %v2908
        %v2910 = vshrl.u32 683565275, %v2909
        %v2911 = vshll.u32 683565275, %v2908
        %v2912 = vshrl.u32 2475754826, %v2909
        %v2913 = vor.u32 %v2911, %v2912
        %v2914 = vshll.u32 2475754826, %v2908
        %v2915 = vshrl.u32 2131351028, %v2909
        %v2916 = vor.u32 %v2914, %v2915
        %v2917 = vshll.u32 2131351028, %v2908
        %v2918 = vshrl.u32 2102212464, %v2909
        %v2919 = vor.u32 %v2917, %v2918
        %v2920 = vshll.u32 2102212464, %v2908
        %v2921 = vshrl.u32 920167782, %v2909
        %v2922 = vor.u32 %v2920, %v2921
        %v2923 = vshll.u32 920167782, %v2908
        %v2924 = vshrl.u32 1326507024, %v2909
        %v2925 = vor.u32 %v2923, %v2924
        %vm2926 = vcmp.lt.s32.totalorder %v2907, 1
        %vm2927 = vcmp.lt.s32.totalorder %v2907, 2
        %vm2928 = vcmp.lt.s32.totalorder %v2907, 3
        %vm2929 = vcmp.lt.s32.totalorder %v2907, 4
        %v2930 = vsel %vm2926, %v2910, %v2913
        %v2931 = vsel %vm2929, %v2919, 2102212464
        %v2932 = vsel %vm2928, %v2916, %v2931
        %v2933 = vsel %vm2927, %v2930, %v2932
        %v2934 = vsel %vm2926, %v2913, %v2916
        %v2935 = vsel %vm2929, %v2922, 920167782
        %v2936 = vsel %vm2928, %v2919, %v2935
        %v2937 = vsel %vm2927, %v2934, %v2936
        %v2938 = vsel %vm2926, %v2916, %v2919
        %v2939 = vsel %vm2929, %v2925, 1326507024
        %v2940 = vsel %vm2928, %v2922, %v2939
        %v2941 = vsel %vm2927, %v2938, %v2940
        %v2942 = vshll.u32 %v2902, 8
        %v2943 = vmul.u32.u64.compose %v2942, %v2941
        %v2944 = vextract.low.u32 %v2943
        %v2945 = vextract.high.u32 %v2943
        %v2946 = vmul.u32.u64.compose %v2942, %v2937
        %v2947 = vextract.low.u32 %v2946
        %v2948 = vextract.high.u32 %v2946
        %v2949 = vmul.u32 %v2942, %v2933
        %v2950 = vadd.s32 %v2945, %v2947
        %vm2951 = vc.u32 %v2945, %v2947
        %v2952 = vadd.s32 %v2948, 1
        %v2953 = vsel %vm2951, %v2952, %v2948
        %v2954 = vadd.s32 %v2949, %v2953
        %v2955 = vadd.s32 %v2954, 536870912
        %v2956 = vshrl.u32 %v2955, 30
        %v2957 = vshll.u32 %v2956, 30
        %v2958 = vsub.s32 %v2954, %v2957
        %vm2959 = vcmp.lt.s32.totalorder %v2958, 0
        %v2960 = vsub.s32 0, %v2958
        %v2961 = vsel %vm2959, %v2960, %v2958
        %v2962 = vclz %v2961
        %v2963 = vsub.s32 %v2962, 2
        %vm2964 = vcmp.gt.s32.totalorder 0, %v2963
        %v2965 = vsel %vm2964, 0, %v2963
        %v2966 = vsub.s32 32, %v2965
        %v2967 = vshll.u32 %v2958, %v2965
        %v2968 = vshrl.u32 %v2950, %v2966
        %v2969 = vor.u32 %v2967, %v2968
        %v2970 = vsub.s32 4294967266, %v2965
        %v2971 = vadd.s32 %v2970, 127
        %v2972 = vshll.u32 %v2971, 23
        %v2973 = vor.u32 4788187, %v2972
        %v2974 = vand.u32 2147483647, %v2973
        %v2976 = vcvt.s32.f32 %v2969
        %v2977 = vmul.f32 %v2976, %v2974
        %v2978 = vxor.u32 %v2977, 2147483648
        %v2979 = vsel %vm2896, %v2978, %v2977
        %v2980 = vsub.s32 4, %v2956
        %v2981 = vsel %vm2896, %v2980, %v2956
        %v2982 = vsel %vm2895, %v558, %v2979
        %v2983 = vsel %vm2895, 0, %v2981
        %v2984 = vcosq.f32.pop %v2982
        %v2985 = vsinq.f32.pop %v2982
        %vm2986 = vweird.f32 %v558
        %v2987 = vadd.s32 %v2983, 3
        %v2988 = vand.u32 %v2987, 3
        %vm2989 = vcmp.lt.s32.totalorder %v2988, 2
        %vm2990 = vcmp.eq.s32.totalorder %v2988, 0
        %v2991 = vxor.u32 %v2985, 2147483648
        %v2992 = vsel %vm2990, %v2984, %v2991
        %vm2993 = vcmp.eq.s32.totalorder %v2988, 2
        %v2994 = vxor.u32 %v2984, 2147483648
        %v2995 = vsel %vm2993, %v2994, %v2985
        %v2996 = vsel %vm2989, %v2992, %v2995
        %v2997 = vsel %vm2986, nan, %v2996
        %v2998 = vand.u32 2147483647, %v563
        %vm2999 = vcmp.le.f32.partialorder %v2998, 0.7853982
        %vm3000 = vcmp.lt.s32.totalorder %v563, 0
        %v3001 = vand.u32 %v563, 2139095040
        %v3002 = vshrl.u32 %v3001, 23
        %v3003 = vsub.s32 %v3002, 127
        %v3004 = vand.u32 2147483647, %v563
        %v3005 = vand.u32 %v3004, 8388607
        %v3006 = vor.u32 %v3005, 8388608
        %v3007 = vsub.s32 0, %v3006
        %v3008 = vadd.s32 %v3003, 1
        %vm3009 = vcmp.gt.s32.totalorder %v3008, 0
        %v3010 = vsel %vm3009, %v3008, 0
        %v3011 = vshrl.u32 %v3010, 5
        %v3012 = vand.u32 %v3010, 31
        %v3013 = vsub.s32 32, %v3012
        %v3014 = vshrl.u32 683565275, %v3013
        %v3015 = vshll.u32 683565275, %v3012
        %v3016 = vshrl.u32 2475754826, %v3013
        %v3017 = vor.u32 %v3015, %v3016
        %v3018 = vshll.u32 2475754826, %v3012
        %v3019 = vshrl.u32 2131351028, %v3013
        %v3020 = vor.u32 %v3018, %v3019
        %v3021 = vshll.u32 2131351028, %v3012
        %v3022 = vshrl.u32 2102212464, %v3013
        %v3023 = vor.u32 %v3021, %v3022
        %v3024 = vshll.u32 2102212464, %v3012
        %v3025 = vshrl.u32 920167782, %v3013
        %v3026 = vor.u32 %v3024, %v3025
        %v3027 = vshll.u32 920167782, %v3012
        %v3028 = vshrl.u32 1326507024, %v3013
        %v3029 = vor.u32 %v3027, %v3028
        %vm3030 = vcmp.lt.s32.totalorder %v3011, 1
        %vm3031 = vcmp.lt.s32.totalorder %v3011, 2
        %vm3032 = vcmp.lt.s32.totalorder %v3011, 3
        %vm3033 = vcmp.lt.s32.totalorder %v3011, 4
        %v3034 = vsel %vm3030, %v3014, %v3017
        %v3035 = vsel %vm3033, %v3023, 2102212464
        %v3036 = vsel %vm3032, %v3020, %v3035
        %v3037 = vsel %vm3031, %v3034, %v3036
        %v3038 = vsel %vm3030, %v3017, %v3020
        %v3039 = vsel %vm3033, %v3026, 920167782
        %v3040 = vsel %vm3032, %v3023, %v3039
        %v3041 = vsel %vm3031, %v3038, %v3040
        %v3042 = vsel %vm3030, %v3020, %v3023
        %v3043 = vsel %vm3033, %v3029, 1326507024
        %v3044 = vsel %vm3032, %v3026, %v3043
        %v3045 = vsel %vm3031, %v3042, %v3044
        %v3046 = vshll.u32 %v3006, 8
        %v3047 = vmul.u32.u64.compose %v3046, %v3045
        %v3048 = vextract.low.u32 %v3047
        %v3049 = vextract.high.u32 %v3047
        %v3050 = vmul.u32.u64.compose %v3046, %v3041
        %v3051 = vextract.low.u32 %v3050
        %v3052 = vextract.high.u32 %v3050
        %v3053 = vmul.u32 %v3046, %v3037
        %v3054 = vadd.s32 %v3049, %v3051
        %vm3055 = vc.u32 %v3049, %v3051
        %v3056 = vadd.s32 %v3052, 1
        %v3057 = vsel %vm3055, %v3056, %v3052
        %v3058 = vadd.s32 %v3053, %v3057
        %v3059 = vadd.s32 %v3058, 536870912
        %v3060 = vshrl.u32 %v3059, 30
        %v3061 = vshll.u32 %v3060, 30
        %v3062 = vsub.s32 %v3058, %v3061
        %vm3063 = vcmp.lt.s32.totalorder %v3062, 0
        %v3064 = vsub.s32 0, %v3062
        %v3065 = vsel %vm3063, %v3064, %v3062
        %v3066 = vclz %v3065
        %v3067 = vsub.s32 %v3066, 2
        %vm3068 = vcmp.gt.s32.totalorder 0, %v3067
        %v3069 = vsel %vm3068, 0, %v3067
        %v3070 = vsub.s32 32, %v3069
        %v3071 = vshll.u32 %v3062, %v3069
        %v3072 = vshrl.u32 %v3054, %v3070
        %v3073 = vor.u32 %v3071, %v3072
        %v3074 = vsub.s32 4294967266, %v3069
        %v3075 = vadd.s32 %v3074, 127
        %v3076 = vshll.u32 %v3075, 23
        %v3077 = vor.u32 4788187, %v3076
        %v3078 = vand.u32 2147483647, %v3077
        %v3080 = vcvt.s32.f32 %v3073
        %v3081 = vmul.f32 %v3080, %v3078
        %v3082 = vxor.u32 %v3081, 2147483648
        %v3083 = vsel %vm3000, %v3082, %v3081
        %v3084 = vsub.s32 4, %v3060
        %v3085 = vsel %vm3000, %v3084, %v3060
        %v3086 = vsel %vm2999, %v563, %v3083
        %v3087 = vsel %vm2999, 0, %v3085
        %v3088 = vcosq.f32.pop %v3086
        %v3089 = vsinq.f32.pop %v3086
        %vm3090 = vweird.f32 %v563
        %v3091 = vadd.s32 %v3087, 3
        %v3092 = vand.u32 %v3091, 3
        %vm3093 = vcmp.lt.s32.totalorder %v3092, 2
        %vm3094 = vcmp.eq.s32.totalorder %v3092, 0
        %v3095 = vxor.u32 %v3089, 2147483648
        %v3096 = vsel %vm3094, %v3088, %v3095
        %vm3097 = vcmp.eq.s32.totalorder %v3092, 2
        %v3098 = vxor.u32 %v3088, 2147483648
        %v3099 = vsel %vm3097, %v3098, %v3089
        %v3100 = vsel %vm3093, %v3096, %v3099
        %v3101 = vsel %vm3090, nan, %v3100
        %v3102 = vand.u32 2147483647, %v568
        %vm3103 = vcmp.le.f32.partialorder %v3102, 0.7853982
        %vm3104 = vcmp.lt.s32.totalorder %v568, 0
        %v3105 = vand.u32 %v568, 2139095040
        %v3106 = vshrl.u32 %v3105, 23
        %v3107 = vsub.s32 %v3106, 127
        %v3108 = vand.u32 2147483647, %v568
        %v3109 = vand.u32 %v3108, 8388607
        %v3110 = vor.u32 %v3109, 8388608
        %v3111 = vsub.s32 0, %v3110
        %v3112 = vadd.s32 %v3107, 1
        %vm3113 = vcmp.gt.s32.totalorder %v3112, 0
        %v3114 = vsel %vm3113, %v3112, 0
        %v3115 = vshrl.u32 %v3114, 5
        %v3116 = vand.u32 %v3114, 31
        %v3117 = vsub.s32 32, %v3116
        %v3118 = vshrl.u32 683565275, %v3117
        %v3119 = vshll.u32 683565275, %v3116
        %v3120 = vshrl.u32 2475754826, %v3117
        %v3121 = vor.u32 %v3119, %v3120
        %v3122 = vshll.u32 2475754826, %v3116
        %v3123 = vshrl.u32 2131351028, %v3117
        %v3124 = vor.u32 %v3122, %v3123
        %v3125 = vshll.u32 2131351028, %v3116
        %v3126 = vshrl.u32 2102212464, %v3117
        %v3127 = vor.u32 %v3125, %v3126
        %v3128 = vshll.u32 2102212464, %v3116
        %v3129 = vshrl.u32 920167782, %v3117
        %v3130 = vor.u32 %v3128, %v3129
        %v3131 = vshll.u32 920167782, %v3116
        %v3132 = vshrl.u32 1326507024, %v3117
        %v3133 = vor.u32 %v3131, %v3132
        %vm3134 = vcmp.lt.s32.totalorder %v3115, 1
        %vm3135 = vcmp.lt.s32.totalorder %v3115, 2
        %vm3136 = vcmp.lt.s32.totalorder %v3115, 3
        %vm3137 = vcmp.lt.s32.totalorder %v3115, 4
        %v3138 = vsel %vm3134, %v3118, %v3121
        %v3139 = vsel %vm3137, %v3127, 2102212464
        %v3140 = vsel %vm3136, %v3124, %v3139
        %v3141 = vsel %vm3135, %v3138, %v3140
        %v3142 = vsel %vm3134, %v3121, %v3124
        %v3143 = vsel %vm3137, %v3130, 920167782
        %v3144 = vsel %vm3136, %v3127, %v3143
        %v3145 = vsel %vm3135, %v3142, %v3144
        %v3146 = vsel %vm3134, %v3124, %v3127
        %v3147 = vsel %vm3137, %v3133, 1326507024
        %v3148 = vsel %vm3136, %v3130, %v3147
        %v3149 = vsel %vm3135, %v3146, %v3148
        %v3150 = vshll.u32 %v3110, 8
        %v3151 = vmul.u32.u64.compose %v3150, %v3149
        %v3152 = vextract.low.u32 %v3151
        %v3153 = vextract.high.u32 %v3151
        %v3154 = vmul.u32.u64.compose %v3150, %v3145
        %v3155 = vextract.low.u32 %v3154
        %v3156 = vextract.high.u32 %v3154
        %v3157 = vmul.u32 %v3150, %v3141
        %v3158 = vadd.s32 %v3153, %v3155
        %vm3159 = vc.u32 %v3153, %v3155
        %v3160 = vadd.s32 %v3156, 1
        %v3161 = vsel %vm3159, %v3160, %v3156
        %v3162 = vadd.s32 %v3157, %v3161
        %v3163 = vadd.s32 %v3162, 536870912
        %v3164 = vshrl.u32 %v3163, 30
        %v3165 = vshll.u32 %v3164, 30
        %v3166 = vsub.s32 %v3162, %v3165
        %vm3167 = vcmp.lt.s32.totalorder %v3166, 0
        %v3168 = vsub.s32 0, %v3166
        %v3169 = vsel %vm3167, %v3168, %v3166
        %v3170 = vclz %v3169
        %v3171 = vsub.s32 %v3170, 2
        %vm3172 = vcmp.gt.s32.totalorder 0, %v3171
        %v3173 = vsel %vm3172, 0, %v3171
        %v3174 = vsub.s32 32, %v3173
        %v3175 = vshll.u32 %v3166, %v3173
        %v3176 = vshrl.u32 %v3158, %v3174
        %v3177 = vor.u32 %v3175, %v3176
        %v3178 = vsub.s32 4294967266, %v3173
        %v3179 = vadd.s32 %v3178, 127
        %v3180 = vshll.u32 %v3179, 23
        %v3181 = vor.u32 4788187, %v3180
        %v3182 = vand.u32 2147483647, %v3181
        %v3184 = vcvt.s32.f32 %v3177
        %v3185 = vmul.f32 %v3184, %v3182
        %v3186 = vxor.u32 %v3185, 2147483648
        %v3187 = vsel %vm3104, %v3186, %v3185
        %v3188 = vsub.s32 4, %v3164
        %v3189 = vsel %vm3104, %v3188, %v3164
        %v3190 = vsel %vm3103, %v568, %v3187
        %v3191 = vsel %vm3103, 0, %v3189
        %v3192 = vcosq.f32.pop %v3190
        %v3193 = vsinq.f32.pop %v3190
        %vm3194 = vweird.f32 %v568
        %v3195 = vadd.s32 %v3191, 3
        %v3196 = vand.u32 %v3195, 3
        %vm3197 = vcmp.lt.s32.totalorder %v3196, 2
        %vm3198 = vcmp.eq.s32.totalorder %v3196, 0
        %v3199 = vxor.u32 %v3193, 2147483648
        %v3200 = vsel %vm3198, %v3192, %v3199
        %vm3201 = vcmp.eq.s32.totalorder %v3196, 2
        %v3202 = vxor.u32 %v3192, 2147483648
        %v3203 = vsel %vm3201, %v3202, %v3193
        %v3204 = vsel %vm3197, %v3200, %v3203
        %v3205 = vsel %vm3194, nan, %v3204
        %v3206 = vand.u32 2147483647, %v573
        %vm3207 = vcmp.le.f32.partialorder %v3206, 0.7853982
        %vm3208 = vcmp.lt.s32.totalorder %v573, 0
        %v3209 = vand.u32 %v573, 2139095040
        %v3210 = vshrl.u32 %v3209, 23
        %v3211 = vsub.s32 %v3210, 127
        %v3212 = vand.u32 2147483647, %v573
        %v3213 = vand.u32 %v3212, 8388607
        %v3214 = vor.u32 %v3213, 8388608
        %v3215 = vsub.s32 0, %v3214
        %v3216 = vadd.s32 %v3211, 1
        %vm3217 = vcmp.gt.s32.totalorder %v3216, 0
        %v3218 = vsel %vm3217, %v3216, 0
        %v3219 = vshrl.u32 %v3218, 5
        %v3220 = vand.u32 %v3218, 31
        %v3221 = vsub.s32 32, %v3220
        %v3222 = vshrl.u32 683565275, %v3221
        %v3223 = vshll.u32 683565275, %v3220
        %v3224 = vshrl.u32 2475754826, %v3221
        %v3225 = vor.u32 %v3223, %v3224
        %v3226 = vshll.u32 2475754826, %v3220
        %v3227 = vshrl.u32 2131351028, %v3221
        %v3228 = vor.u32 %v3226, %v3227
        %v3229 = vshll.u32 2131351028, %v3220
        %v3230 = vshrl.u32 2102212464, %v3221
        %v3231 = vor.u32 %v3229, %v3230
        %v3232 = vshll.u32 2102212464, %v3220
        %v3233 = vshrl.u32 920167782, %v3221
        %v3234 = vor.u32 %v3232, %v3233
        %v3235 = vshll.u32 920167782, %v3220
        %v3236 = vshrl.u32 1326507024, %v3221
        %v3237 = vor.u32 %v3235, %v3236
        %vm3238 = vcmp.lt.s32.totalorder %v3219, 1
        %vm3239 = vcmp.lt.s32.totalorder %v3219, 2
        %vm3240 = vcmp.lt.s32.totalorder %v3219, 3
        %vm3241 = vcmp.lt.s32.totalorder %v3219, 4
        %v3242 = vsel %vm3238, %v3222, %v3225
        %v3243 = vsel %vm3241, %v3231, 2102212464
        %v3244 = vsel %vm3240, %v3228, %v3243
        %v3245 = vsel %vm3239, %v3242, %v3244
        %v3246 = vsel %vm3238, %v3225, %v3228
        %v3247 = vsel %vm3241, %v3234, 920167782
        %v3248 = vsel %vm3240, %v3231, %v3247
        %v3249 = vsel %vm3239, %v3246, %v3248
        %v3250 = vsel %vm3238, %v3228, %v3231
        %v3251 = vsel %vm3241, %v3237, 1326507024
        %v3252 = vsel %vm3240, %v3234, %v3251
        %v3253 = vsel %vm3239, %v3250, %v3252
        %v3254 = vshll.u32 %v3214, 8
        %v3255 = vmul.u32.u64.compose %v3254, %v3253
        %v3256 = vextract.low.u32 %v3255
        %v3257 = vextract.high.u32 %v3255
        %v3258 = vmul.u32.u64.compose %v3254, %v3249
        %v3259 = vextract.low.u32 %v3258
        %v3260 = vextract.high.u32 %v3258
        %v3261 = vmul.u32 %v3254, %v3245
        %v3262 = vadd.s32 %v3257, %v3259
        %vm3263 = vc.u32 %v3257, %v3259
        %v3264 = vadd.s32 %v3260, 1
        %v3265 = vsel %vm3263, %v3264, %v3260
        %v3266 = vadd.s32 %v3261, %v3265
        %v3267 = vadd.s32 %v3266, 536870912
        %v3268 = vshrl.u32 %v3267, 30
        %v3269 = vshll.u32 %v3268, 30
        %v3270 = vsub.s32 %v3266, %v3269
        %vm3271 = vcmp.lt.s32.totalorder %v3270, 0
        %v3272 = vsub.s32 0, %v3270
        %v3273 = vsel %vm3271, %v3272, %v3270
        %v3274 = vclz %v3273
        %v3275 = vsub.s32 %v3274, 2
        %vm3276 = vcmp.gt.s32.totalorder 0, %v3275
        %v3277 = vsel %vm3276, 0, %v3275
        %v3278 = vsub.s32 32, %v3277
        %v3279 = vshll.u32 %v3270, %v3277
        %v3280 = vshrl.u32 %v3262, %v3278
        %v3281 = vor.u32 %v3279, %v3280
        %v3282 = vsub.s32 4294967266, %v3277
        %v3283 = vadd.s32 %v3282, 127
        %v3284 = vshll.u32 %v3283, 23
        %v3285 = vor.u32 4788187, %v3284
        %v3286 = vand.u32 2147483647, %v3285
        %v3288 = vcvt.s32.f32 %v3281
        %v3289 = vmul.f32 %v3288, %v3286
        %v3290 = vxor.u32 %v3289, 2147483648
        %v3291 = vsel %vm3208, %v3290, %v3289
        %v3292 = vsub.s32 4, %v3268
        %v3293 = vsel %vm3208, %v3292, %v3268
        %v3294 = vsel %vm3207, %v573, %v3291
        %v3295 = vsel %vm3207, 0, %v3293
        %v3296 = vcosq.f32.pop %v3294
        %v3297 = vsinq.f32.pop %v3294
        %vm3298 = vweird.f32 %v573
        %v3299 = vadd.s32 %v3295, 3
        %v3300 = vand.u32 %v3299, 3
        %vm3301 = vcmp.lt.s32.totalorder %v3300, 2
        %vm3302 = vcmp.eq.s32.totalorder %v3300, 0
        %v3303 = vxor.u32 %v3297, 2147483648
        %v3304 = vsel %vm3302, %v3296, %v3303
        %vm3305 = vcmp.eq.s32.totalorder %v3300, 2
        %v3306 = vxor.u32 %v3296, 2147483648
        %v3307 = vsel %vm3305, %v3306, %v3297
        %v3308 = vsel %vm3301, %v3304, %v3307
        %v3309 = vsel %vm3298, nan, %v3308
        %v3310 = vand.u32 2147483647, %v578
        %vm3311 = vcmp.le.f32.partialorder %v3310, 0.7853982
        %vm3312 = vcmp.lt.s32.totalorder %v578, 0
        %v3313 = vand.u32 %v578, 2139095040
        %v3314 = vshrl.u32 %v3313, 23
        %v3315 = vsub.s32 %v3314, 127
        %v3316 = vand.u32 2147483647, %v578
        %v3317 = vand.u32 %v3316, 8388607
        %v3318 = vor.u32 %v3317, 8388608
        %v3319 = vsub.s32 0, %v3318
        %v3320 = vadd.s32 %v3315, 1
        %vm3321 = vcmp.gt.s32.totalorder %v3320, 0
        %v3322 = vsel %vm3321, %v3320, 0
        %v3323 = vshrl.u32 %v3322, 5
        %v3324 = vand.u32 %v3322, 31
        %v3325 = vsub.s32 32, %v3324
        %v3326 = vshrl.u32 683565275, %v3325
        %v3327 = vshll.u32 683565275, %v3324
        %v3328 = vshrl.u32 2475754826, %v3325
        %v3329 = vor.u32 %v3327, %v3328
        %v3330 = vshll.u32 2475754826, %v3324
        %v3331 = vshrl.u32 2131351028, %v3325
        %v3332 = vor.u32 %v3330, %v3331
        %v3333 = vshll.u32 2131351028, %v3324
        %v3334 = vshrl.u32 2102212464, %v3325
        %v3335 = vor.u32 %v3333, %v3334
        %v3336 = vshll.u32 2102212464, %v3324
        %v3337 = vshrl.u32 920167782, %v3325
        %v3338 = vor.u32 %v3336, %v3337
        %v3339 = vshll.u32 920167782, %v3324
        %v3340 = vshrl.u32 1326507024, %v3325
        %v3341 = vor.u32 %v3339, %v3340
        %vm3342 = vcmp.lt.s32.totalorder %v3323, 1
        %vm3343 = vcmp.lt.s32.totalorder %v3323, 2
        %vm3344 = vcmp.lt.s32.totalorder %v3323, 3
        %vm3345 = vcmp.lt.s32.totalorder %v3323, 4
        %v3346 = vsel %vm3342, %v3326, %v3329
        %v3347 = vsel %vm3345, %v3335, 2102212464
        %v3348 = vsel %vm3344, %v3332, %v3347
        %v3349 = vsel %vm3343, %v3346, %v3348
        %v3350 = vsel %vm3342, %v3329, %v3332
        %v3351 = vsel %vm3345, %v3338, 920167782
        %v3352 = vsel %vm3344, %v3335, %v3351
        %v3353 = vsel %vm3343, %v3350, %v3352
        %v3354 = vsel %vm3342, %v3332, %v3335
        %v3355 = vsel %vm3345, %v3341, 1326507024
        %v3356 = vsel %vm3344, %v3338, %v3355
        %v3357 = vsel %vm3343, %v3354, %v3356
        %v3358 = vshll.u32 %v3318, 8
        %v3359 = vmul.u32.u64.compose %v3358, %v3357
        %v3360 = vextract.low.u32 %v3359
        %v3361 = vextract.high.u32 %v3359
        %v3362 = vmul.u32.u64.compose %v3358, %v3353
        %v3363 = vextract.low.u32 %v3362
        %v3364 = vextract.high.u32 %v3362
        %v3365 = vmul.u32 %v3358, %v3349
        %v3366 = vadd.s32 %v3361, %v3363
        %vm3367 = vc.u32 %v3361, %v3363
        %v3368 = vadd.s32 %v3364, 1
        %v3369 = vsel %vm3367, %v3368, %v3364
        %v3370 = vadd.s32 %v3365, %v3369
        %v3371 = vadd.s32 %v3370, 536870912
        %v3372 = vshrl.u32 %v3371, 30
        %v3373 = vshll.u32 %v3372, 30
        %v3374 = vsub.s32 %v3370, %v3373
        %vm3375 = vcmp.lt.s32.totalorder %v3374, 0
        %v3376 = vsub.s32 0, %v3374
        %v3377 = vsel %vm3375, %v3376, %v3374
        %v3378 = vclz %v3377
        %v3379 = vsub.s32 %v3378, 2
        %vm3380 = vcmp.gt.s32.totalorder 0, %v3379
        %v3381 = vsel %vm3380, 0, %v3379
        %v3382 = vsub.s32 32, %v3381
        %v3383 = vshll.u32 %v3374, %v3381
        %v3384 = vshrl.u32 %v3366, %v3382
        %v3385 = vor.u32 %v3383, %v3384
        %v3386 = vsub.s32 4294967266, %v3381
        %v3387 = vadd.s32 %v3386, 127
        %v3388 = vshll.u32 %v3387, 23
        %v3389 = vor.u32 4788187, %v3388
        %v3390 = vand.u32 2147483647, %v3389
        %v3392 = vcvt.s32.f32 %v3385
        %v3393 = vmul.f32 %v3392, %v3390
        %v3394 = vxor.u32 %v3393, 2147483648
        %v3395 = vsel %vm3312, %v3394, %v3393
        %v3396 = vsub.s32 4, %v3372
        %v3397 = vsel %vm3312, %v3396, %v3372
        %v3398 = vsel %vm3311, %v578, %v3395
        %v3399 = vsel %vm3311, 0, %v3397
        %v3400 = vcosq.f32.pop %v3398
        %v3401 = vsinq.f32.pop %v3398
        %vm3402 = vweird.f32 %v578
        %v3403 = vadd.s32 %v3399, 3
        %v3404 = vand.u32 %v3403, 3
        %vm3405 = vcmp.lt.s32.totalorder %v3404, 2
        %vm3406 = vcmp.eq.s32.totalorder %v3404, 0
        %v3407 = vxor.u32 %v3401, 2147483648
        %v3408 = vsel %vm3406, %v3400, %v3407
        %vm3409 = vcmp.eq.s32.totalorder %v3404, 2
        %v3410 = vxor.u32 %v3400, 2147483648
        %v3411 = vsel %vm3409, %v3410, %v3401
        %v3412 = vsel %vm3405, %v3408, %v3411
        %v3413 = vsel %vm3402, nan, %v3412
        %v3414 = vand.u32 2147483647, %v583
        %vm3415 = vcmp.le.f32.partialorder %v3414, 0.7853982
        %vm3416 = vcmp.lt.s32.totalorder %v583, 0
        %v3417 = vand.u32 %v583, 2139095040
        %v3418 = vshrl.u32 %v3417, 23
        %v3419 = vsub.s32 %v3418, 127
        %v3420 = vand.u32 2147483647, %v583
        %v3421 = vand.u32 %v3420, 8388607
        %v3422 = vor.u32 %v3421, 8388608
        %v3423 = vsub.s32 0, %v3422
        %v3424 = vadd.s32 %v3419, 1
        %vm3425 = vcmp.gt.s32.totalorder %v3424, 0
        %v3426 = vsel %vm3425, %v3424, 0
        %v3427 = vshrl.u32 %v3426, 5
        %v3428 = vand.u32 %v3426, 31
        %v3429 = vsub.s32 32, %v3428
        %v3430 = vshrl.u32 683565275, %v3429
        %v3431 = vshll.u32 683565275, %v3428
        %v3432 = vshrl.u32 2475754826, %v3429
        %v3433 = vor.u32 %v3431, %v3432
        %v3434 = vshll.u32 2475754826, %v3428
        %v3435 = vshrl.u32 2131351028, %v3429
        %v3436 = vor.u32 %v3434, %v3435
        %v3437 = vshll.u32 2131351028, %v3428
        %v3438 = vshrl.u32 2102212464, %v3429
        %v3439 = vor.u32 %v3437, %v3438
        %v3440 = vshll.u32 2102212464, %v3428
        %v3441 = vshrl.u32 920167782, %v3429
        %v3442 = vor.u32 %v3440, %v3441
        %v3443 = vshll.u32 920167782, %v3428
        %v3444 = vshrl.u32 1326507024, %v3429
        %v3445 = vor.u32 %v3443, %v3444
        %vm3446 = vcmp.lt.s32.totalorder %v3427, 1
        %vm3447 = vcmp.lt.s32.totalorder %v3427, 2
        %vm3448 = vcmp.lt.s32.totalorder %v3427, 3
        %vm3449 = vcmp.lt.s32.totalorder %v3427, 4
        %v3450 = vsel %vm3446, %v3430, %v3433
        %v3451 = vsel %vm3449, %v3439, 2102212464
        %v3452 = vsel %vm3448, %v3436, %v3451
        %v3453 = vsel %vm3447, %v3450, %v3452
        %v3454 = vsel %vm3446, %v3433, %v3436
        %v3455 = vsel %vm3449, %v3442, 920167782
        %v3456 = vsel %vm3448, %v3439, %v3455
        %v3457 = vsel %vm3447, %v3454, %v3456
        %v3458 = vsel %vm3446, %v3436, %v3439
        %v3459 = vsel %vm3449, %v3445, 1326507024
        %v3460 = vsel %vm3448, %v3442, %v3459
        %v3461 = vsel %vm3447, %v3458, %v3460
        %v3462 = vshll.u32 %v3422, 8
        %v3463 = vmul.u32.u64.compose %v3462, %v3461
        %v3464 = vextract.low.u32 %v3463
        %v3465 = vextract.high.u32 %v3463
        %v3466 = vmul.u32.u64.compose %v3462, %v3457
        %v3467 = vextract.low.u32 %v3466
        %v3468 = vextract.high.u32 %v3466
        %v3469 = vmul.u32 %v3462, %v3453
        %v3470 = vadd.s32 %v3465, %v3467
        %vm3471 = vc.u32 %v3465, %v3467
        %v3472 = vadd.s32 %v3468, 1
        %v3473 = vsel %vm3471, %v3472, %v3468
        %v3474 = vadd.s32 %v3469, %v3473
        %v3475 = vadd.s32 %v3474, 536870912
        %v3476 = vshrl.u32 %v3475, 30
        %v3477 = vshll.u32 %v3476, 30
        %v3478 = vsub.s32 %v3474, %v3477
        %vm3479 = vcmp.lt.s32.totalorder %v3478, 0
        %v3480 = vsub.s32 0, %v3478
        %v3481 = vsel %vm3479, %v3480, %v3478
        %v3482 = vclz %v3481
        %v3483 = vsub.s32 %v3482, 2
        %vm3484 = vcmp.gt.s32.totalorder 0, %v3483
        %v3485 = vsel %vm3484, 0, %v3483
        %v3486 = vsub.s32 32, %v3485
        %v3487 = vshll.u32 %v3478, %v3485
        %v3488 = vshrl.u32 %v3470, %v3486
        %v3489 = vor.u32 %v3487, %v3488
        %v3490 = vsub.s32 4294967266, %v3485
        %v3491 = vadd.s32 %v3490, 127
        %v3492 = vshll.u32 %v3491, 23
        %v3493 = vor.u32 4788187, %v3492
        %v3494 = vand.u32 2147483647, %v3493
        %v3496 = vcvt.s32.f32 %v3489
        %v3497 = vmul.f32 %v3496, %v3494
        %v3498 = vxor.u32 %v3497, 2147483648
        %v3499 = vsel %vm3416, %v3498, %v3497
        %v3500 = vsub.s32 4, %v3476
        %v3501 = vsel %vm3416, %v3500, %v3476
        %v3502 = vsel %vm3415, %v583, %v3499
        %v3503 = vsel %vm3415, 0, %v3501
        %v3504 = vcosq.f32.pop %v3502
        %v3505 = vsinq.f32.pop %v3502
        %vm3506 = vweird.f32 %v583
        %v3507 = vadd.s32 %v3503, 3
        %v3508 = vand.u32 %v3507, 3
        %vm3509 = vcmp.lt.s32.totalorder %v3508, 2
        %vm3510 = vcmp.eq.s32.totalorder %v3508, 0
        %v3511 = vxor.u32 %v3505, 2147483648
        %v3512 = vsel %vm3510, %v3504, %v3511
        %vm3513 = vcmp.eq.s32.totalorder %v3508, 2
        %v3514 = vxor.u32 %v3504, 2147483648
        %v3515 = vsel %vm3513, %v3514, %v3505
        %v3516 = vsel %vm3509, %v3512, %v3515
        %v3517 = vsel %vm3506, nan, %v3516
        %v3518 = vand.u32 2147483647, %v588
        %vm3519 = vcmp.le.f32.partialorder %v3518, 0.7853982
        %vm3520 = vcmp.lt.s32.totalorder %v588, 0
        %v3521 = vand.u32 %v588, 2139095040
        %v3522 = vshrl.u32 %v3521, 23
        %v3523 = vsub.s32 %v3522, 127
        %v3524 = vand.u32 2147483647, %v588
        %v3525 = vand.u32 %v3524, 8388607
        %v3526 = vor.u32 %v3525, 8388608
        %v3527 = vsub.s32 0, %v3526
        %v3528 = vadd.s32 %v3523, 1
        %vm3529 = vcmp.gt.s32.totalorder %v3528, 0
        %v3530 = vsel %vm3529, %v3528, 0
        %v3531 = vshrl.u32 %v3530, 5
        %v3532 = vand.u32 %v3530, 31
        %v3533 = vsub.s32 32, %v3532
        %v3534 = vshrl.u32 683565275, %v3533
        %v3535 = vshll.u32 683565275, %v3532
        %v3536 = vshrl.u32 2475754826, %v3533
        %v3537 = vor.u32 %v3535, %v3536
        %v3538 = vshll.u32 2475754826, %v3532
        %v3539 = vshrl.u32 2131351028, %v3533
        %v3540 = vor.u32 %v3538, %v3539
        %v3541 = vshll.u32 2131351028, %v3532
        %v3542 = vshrl.u32 2102212464, %v3533
        %v3543 = vor.u32 %v3541, %v3542
        %v3544 = vshll.u32 2102212464, %v3532
        %v3545 = vshrl.u32 920167782, %v3533
        %v3546 = vor.u32 %v3544, %v3545
        %v3547 = vshll.u32 920167782, %v3532
        %v3548 = vshrl.u32 1326507024, %v3533
        %v3549 = vor.u32 %v3547, %v3548
        %vm3550 = vcmp.lt.s32.totalorder %v3531, 1
        %vm3551 = vcmp.lt.s32.totalorder %v3531, 2
        %vm3552 = vcmp.lt.s32.totalorder %v3531, 3
        %vm3553 = vcmp.lt.s32.totalorder %v3531, 4
        %v3554 = vsel %vm3550, %v3534, %v3537
        %v3555 = vsel %vm3553, %v3543, 2102212464
        %v3556 = vsel %vm3552, %v3540, %v3555
        %v3557 = vsel %vm3551, %v3554, %v3556
        %v3558 = vsel %vm3550, %v3537, %v3540
        %v3559 = vsel %vm3553, %v3546, 920167782
        %v3560 = vsel %vm3552, %v3543, %v3559
        %v3561 = vsel %vm3551, %v3558, %v3560
        %v3562 = vsel %vm3550, %v3540, %v3543
        %v3563 = vsel %vm3553, %v3549, 1326507024
        %v3564 = vsel %vm3552, %v3546, %v3563
        %v3565 = vsel %vm3551, %v3562, %v3564
        %v3566 = vshll.u32 %v3526, 8
        %v3567 = vmul.u32.u64.compose %v3566, %v3565
        %v3568 = vextract.low.u32 %v3567
        %v3569 = vextract.high.u32 %v3567
        %v3570 = vmul.u32.u64.compose %v3566, %v3561
        %v3571 = vextract.low.u32 %v3570
        %v3572 = vextract.high.u32 %v3570
        %v3573 = vmul.u32 %v3566, %v3557
        %v3574 = vadd.s32 %v3569, %v3571
        %vm3575 = vc.u32 %v3569, %v3571
        %v3576 = vadd.s32 %v3572, 1
        %v3577 = vsel %vm3575, %v3576, %v3572
        %v3578 = vadd.s32 %v3573, %v3577
        %v3579 = vadd.s32 %v3578, 536870912
        %v3580 = vshrl.u32 %v3579, 30
        %v3581 = vshll.u32 %v3580, 30
        %v3582 = vsub.s32 %v3578, %v3581
        %vm3583 = vcmp.lt.s32.totalorder %v3582, 0
        %v3584 = vsub.s32 0, %v3582
        %v3585 = vsel %vm3583, %v3584, %v3582
        %v3586 = vclz %v3585
        %v3587 = vsub.s32 %v3586, 2
        %vm3588 = vcmp.gt.s32.totalorder 0, %v3587
        %v3589 = vsel %vm3588, 0, %v3587
        %v3590 = vsub.s32 32, %v3589
        %v3591 = vshll.u32 %v3582, %v3589
        %v3592 = vshrl.u32 %v3574, %v3590
        %v3593 = vor.u32 %v3591, %v3592
        %v3594 = vsub.s32 4294967266, %v3589
        %v3595 = vadd.s32 %v3594, 127
        %v3596 = vshll.u32 %v3595, 23
        %v3597 = vor.u32 4788187, %v3596
        %v3598 = vand.u32 2147483647, %v3597
        %v3600 = vcvt.s32.f32 %v3593
        %v3601 = vmul.f32 %v3600, %v3598
        %v3602 = vxor.u32 %v3601, 2147483648
        %v3603 = vsel %vm3520, %v3602, %v3601
        %v3604 = vsub.s32 4, %v3580
        %v3605 = vsel %vm3520, %v3604, %v3580
        %v3606 = vsel %vm3519, %v588, %v3603
        %v3607 = vsel %vm3519, 0, %v3605
        %v3608 = vcosq.f32.pop %v3606
        %v3609 = vsinq.f32.pop %v3606
        %vm3610 = vweird.f32 %v588
        %v3611 = vadd.s32 %v3607, 3
        %v3612 = vand.u32 %v3611, 3
        %vm3613 = vcmp.lt.s32.totalorder %v3612, 2
        %vm3614 = vcmp.eq.s32.totalorder %v3612, 0
        %v3615 = vxor.u32 %v3609, 2147483648
        %v3616 = vsel %vm3614, %v3608, %v3615
        %vm3617 = vcmp.eq.s32.totalorder %v3612, 2
        %v3618 = vxor.u32 %v3608, 2147483648
        %v3619 = vsel %vm3617, %v3618, %v3609
        %v3620 = vsel %vm3613, %v3616, %v3619
        %v3621 = vsel %vm3610, nan, %v3620
        %v3622 = vand.u32 2147483647, %v593
        %vm3623 = vcmp.le.f32.partialorder %v3622, 0.7853982
        %vm3624 = vcmp.lt.s32.totalorder %v593, 0
        %v3625 = vand.u32 %v593, 2139095040
        %v3626 = vshrl.u32 %v3625, 23
        %v3627 = vsub.s32 %v3626, 127
        %v3628 = vand.u32 2147483647, %v593
        %v3629 = vand.u32 %v3628, 8388607
        %v3630 = vor.u32 %v3629, 8388608
        %v3631 = vsub.s32 0, %v3630
        %v3632 = vadd.s32 %v3627, 1
        %vm3633 = vcmp.gt.s32.totalorder %v3632, 0
        %v3634 = vsel %vm3633, %v3632, 0
        %v3635 = vshrl.u32 %v3634, 5
        %v3636 = vand.u32 %v3634, 31
        %v3637 = vsub.s32 32, %v3636
        %v3638 = vshrl.u32 683565275, %v3637
        %v3639 = vshll.u32 683565275, %v3636
        %v3640 = vshrl.u32 2475754826, %v3637
        %v3641 = vor.u32 %v3639, %v3640
        %v3642 = vshll.u32 2475754826, %v3636
        %v3643 = vshrl.u32 2131351028, %v3637
        %v3644 = vor.u32 %v3642, %v3643
        %v3645 = vshll.u32 2131351028, %v3636
        %v3646 = vshrl.u32 2102212464, %v3637
        %v3647 = vor.u32 %v3645, %v3646
        %v3648 = vshll.u32 2102212464, %v3636
        %v3649 = vshrl.u32 920167782, %v3637
        %v3650 = vor.u32 %v3648, %v3649
        %v3651 = vshll.u32 920167782, %v3636
        %v3652 = vshrl.u32 1326507024, %v3637
        %v3653 = vor.u32 %v3651, %v3652
        %vm3654 = vcmp.lt.s32.totalorder %v3635, 1
        %vm3655 = vcmp.lt.s32.totalorder %v3635, 2
        %vm3656 = vcmp.lt.s32.totalorder %v3635, 3
        %vm3657 = vcmp.lt.s32.totalorder %v3635, 4
        %v3658 = vsel %vm3654, %v3638, %v3641
        %v3659 = vsel %vm3657, %v3647, 2102212464
        %v3660 = vsel %vm3656, %v3644, %v3659
        %v3661 = vsel %vm3655, %v3658, %v3660
        %v3662 = vsel %vm3654, %v3641, %v3644
        %v3663 = vsel %vm3657, %v3650, 920167782
        %v3664 = vsel %vm3656, %v3647, %v3663
        %v3665 = vsel %vm3655, %v3662, %v3664
        %v3666 = vsel %vm3654, %v3644, %v3647
        %v3667 = vsel %vm3657, %v3653, 1326507024
        %v3668 = vsel %vm3656, %v3650, %v3667
        %v3669 = vsel %vm3655, %v3666, %v3668
        %v3670 = vshll.u32 %v3630, 8
        %v3671 = vmul.u32.u64.compose %v3670, %v3669
        %v3672 = vextract.low.u32 %v3671
        %v3673 = vextract.high.u32 %v3671
        %v3674 = vmul.u32.u64.compose %v3670, %v3665
        %v3675 = vextract.low.u32 %v3674
        %v3676 = vextract.high.u32 %v3674
        %v3677 = vmul.u32 %v3670, %v3661
        %v3678 = vadd.s32 %v3673, %v3675
        %vm3679 = vc.u32 %v3673, %v3675
        %v3680 = vadd.s32 %v3676, 1
        %v3681 = vsel %vm3679, %v3680, %v3676
        %v3682 = vadd.s32 %v3677, %v3681
        %v3683 = vadd.s32 %v3682, 536870912
        %v3684 = vshrl.u32 %v3683, 30
        %v3685 = vshll.u32 %v3684, 30
        %v3686 = vsub.s32 %v3682, %v3685
        %vm3687 = vcmp.lt.s32.totalorder %v3686, 0
        %v3688 = vsub.s32 0, %v3686
        %v3689 = vsel %vm3687, %v3688, %v3686
        %v3690 = vclz %v3689
        %v3691 = vsub.s32 %v3690, 2
        %vm3692 = vcmp.gt.s32.totalorder 0, %v3691
        %v3693 = vsel %vm3692, 0, %v3691
        %v3694 = vsub.s32 32, %v3693
        %v3695 = vshll.u32 %v3686, %v3693
        %v3696 = vshrl.u32 %v3678, %v3694
        %v3697 = vor.u32 %v3695, %v3696
        %v3698 = vsub.s32 4294967266, %v3693
        %v3699 = vadd.s32 %v3698, 127
        %v3700 = vshll.u32 %v3699, 23
        %v3701 = vor.u32 4788187, %v3700
        %v3702 = vand.u32 2147483647, %v3701
        %v3704 = vcvt.s32.f32 %v3697
        %v3705 = vmul.f32 %v3704, %v3702
        %v3706 = vxor.u32 %v3705, 2147483648
        %v3707 = vsel %vm3624, %v3706, %v3705
        %v3708 = vsub.s32 4, %v3684
        %v3709 = vsel %vm3624, %v3708, %v3684
        %v3710 = vsel %vm3623, %v593, %v3707
        %v3711 = vsel %vm3623, 0, %v3709
        %v3712 = vcosq.f32.pop %v3710
        %v3713 = vsinq.f32.pop %v3710
        %vm3714 = vweird.f32 %v593
        %v3715 = vadd.s32 %v3711, 3
        %v3716 = vand.u32 %v3715, 3
        %vm3717 = vcmp.lt.s32.totalorder %v3716, 2
        %vm3718 = vcmp.eq.s32.totalorder %v3716, 0
        %v3719 = vxor.u32 %v3713, 2147483648
        %v3720 = vsel %vm3718, %v3712, %v3719
        %vm3721 = vcmp.eq.s32.totalorder %v3716, 2
        %v3722 = vxor.u32 %v3712, 2147483648
        %v3723 = vsel %vm3721, %v3722, %v3713
        %v3724 = vsel %vm3717, %v3720, %v3723
        %v3725 = vsel %vm3714, nan, %v3724
        %v3726 = vand.u32 2147483647, %v598
        %vm3727 = vcmp.le.f32.partialorder %v3726, 0.7853982
        %vm3728 = vcmp.lt.s32.totalorder %v598, 0
        %v3729 = vand.u32 %v598, 2139095040
        %v3730 = vshrl.u32 %v3729, 23
        %v3731 = vsub.s32 %v3730, 127
        %v3732 = vand.u32 2147483647, %v598
        %v3733 = vand.u32 %v3732, 8388607
        %v3734 = vor.u32 %v3733, 8388608
        %v3735 = vsub.s32 0, %v3734
        %v3736 = vadd.s32 %v3731, 1
        %vm3737 = vcmp.gt.s32.totalorder %v3736, 0
        %v3738 = vsel %vm3737, %v3736, 0
        %v3739 = vshrl.u32 %v3738, 5
        %v3740 = vand.u32 %v3738, 31
        %v3741 = vsub.s32 32, %v3740
        %v3742 = vshrl.u32 683565275, %v3741
        %v3743 = vshll.u32 683565275, %v3740
        %v3744 = vshrl.u32 2475754826, %v3741
        %v3745 = vor.u32 %v3743, %v3744
        %v3746 = vshll.u32 2475754826, %v3740
        %v3747 = vshrl.u32 2131351028, %v3741
        %v3748 = vor.u32 %v3746, %v3747
        %v3749 = vshll.u32 2131351028, %v3740
        %v3750 = vshrl.u32 2102212464, %v3741
        %v3751 = vor.u32 %v3749, %v3750
        %v3752 = vshll.u32 2102212464, %v3740
        %v3753 = vshrl.u32 920167782, %v3741
        %v3754 = vor.u32 %v3752, %v3753
        %v3755 = vshll.u32 920167782, %v3740
        %v3756 = vshrl.u32 1326507024, %v3741
        %v3757 = vor.u32 %v3755, %v3756
        %vm3758 = vcmp.lt.s32.totalorder %v3739, 1
        %vm3759 = vcmp.lt.s32.totalorder %v3739, 2
        %vm3760 = vcmp.lt.s32.totalorder %v3739, 3
        %vm3761 = vcmp.lt.s32.totalorder %v3739, 4
        %v3762 = vsel %vm3758, %v3742, %v3745
        %v3763 = vsel %vm3761, %v3751, 2102212464
        %v3764 = vsel %vm3760, %v3748, %v3763
        %v3765 = vsel %vm3759, %v3762, %v3764
        %v3766 = vsel %vm3758, %v3745, %v3748
        %v3767 = vsel %vm3761, %v3754, 920167782
        %v3768 = vsel %vm3760, %v3751, %v3767
        %v3769 = vsel %vm3759, %v3766, %v3768
        %v3770 = vsel %vm3758, %v3748, %v3751
        %v3771 = vsel %vm3761, %v3757, 1326507024
        %v3772 = vsel %vm3760, %v3754, %v3771
        %v3773 = vsel %vm3759, %v3770, %v3772
        %v3774 = vshll.u32 %v3734, 8
        %v3775 = vmul.u32.u64.compose %v3774, %v3773
        %v3776 = vextract.low.u32 %v3775
        %v3777 = vextract.high.u32 %v3775
        %v3778 = vmul.u32.u64.compose %v3774, %v3769
        %v3779 = vextract.low.u32 %v3778
        %v3780 = vextract.high.u32 %v3778
        %v3781 = vmul.u32 %v3774, %v3765
        %v3782 = vadd.s32 %v3777, %v3779
        %vm3783 = vc.u32 %v3777, %v3779
        %v3784 = vadd.s32 %v3780, 1
        %v3785 = vsel %vm3783, %v3784, %v3780
        %v3786 = vadd.s32 %v3781, %v3785
        %v3787 = vadd.s32 %v3786, 536870912
        %v3788 = vshrl.u32 %v3787, 30
        %v3789 = vshll.u32 %v3788, 30
        %v3790 = vsub.s32 %v3786, %v3789
        %vm3791 = vcmp.lt.s32.totalorder %v3790, 0
        %v3792 = vsub.s32 0, %v3790
        %v3793 = vsel %vm3791, %v3792, %v3790
        %v3794 = vclz %v3793
        %v3795 = vsub.s32 %v3794, 2
        %vm3796 = vcmp.gt.s32.totalorder 0, %v3795
        %v3797 = vsel %vm3796, 0, %v3795
        %v3798 = vsub.s32 32, %v3797
        %v3799 = vshll.u32 %v3790, %v3797
        %v3800 = vshrl.u32 %v3782, %v3798
        %v3801 = vor.u32 %v3799, %v3800
        %v3802 = vsub.s32 4294967266, %v3797
        %v3803 = vadd.s32 %v3802, 127
        %v3804 = vshll.u32 %v3803, 23
        %v3805 = vor.u32 4788187, %v3804
        %v3806 = vand.u32 2147483647, %v3805
        %v3808 = vcvt.s32.f32 %v3801
        %v3809 = vmul.f32 %v3808, %v3806
        %v3810 = vxor.u32 %v3809, 2147483648
        %v3811 = vsel %vm3728, %v3810, %v3809
        %v3812 = vsub.s32 4, %v3788
        %v3813 = vsel %vm3728, %v3812, %v3788
        %v3814 = vsel %vm3727, %v598, %v3811
        %v3815 = vsel %vm3727, 0, %v3813
        %v3816 = vcosq.f32.pop %v3814
        %v3817 = vsinq.f32.pop %v3814
        %vm3818 = vweird.f32 %v598
        %v3819 = vadd.s32 %v3815, 3
        %v3820 = vand.u32 %v3819, 3
        %vm3821 = vcmp.lt.s32.totalorder %v3820, 2
        %vm3822 = vcmp.eq.s32.totalorder %v3820, 0
        %v3823 = vxor.u32 %v3817, 2147483648
        %v3824 = vsel %vm3822, %v3816, %v3823
        %vm3825 = vcmp.eq.s32.totalorder %v3820, 2
        %v3826 = vxor.u32 %v3816, 2147483648
        %v3827 = vsel %vm3825, %v3826, %v3817
        %v3828 = vsel %vm3821, %v3824, %v3827
        %v3829 = vsel %vm3818, nan, %v3828
        %v3830 = vand.u32 2147483647, %v603
        %vm3831 = vcmp.le.f32.partialorder %v3830, 0.7853982
        %vm3832 = vcmp.lt.s32.totalorder %v603, 0
        %v3833 = vand.u32 %v603, 2139095040
        %v3834 = vshrl.u32 %v3833, 23
        %v3835 = vsub.s32 %v3834, 127
        %v3836 = vand.u32 2147483647, %v603
        %v3837 = vand.u32 %v3836, 8388607
        %v3838 = vor.u32 %v3837, 8388608
        %v3839 = vsub.s32 0, %v3838
        %v3840 = vadd.s32 %v3835, 1
        %vm3841 = vcmp.gt.s32.totalorder %v3840, 0
        %v3842 = vsel %vm3841, %v3840, 0
        %v3843 = vshrl.u32 %v3842, 5
        %v3844 = vand.u32 %v3842, 31
        %v3845 = vsub.s32 32, %v3844
        %v3846 = vshrl.u32 683565275, %v3845
        %v3847 = vshll.u32 683565275, %v3844
        %v3848 = vshrl.u32 2475754826, %v3845
        %v3849 = vor.u32 %v3847, %v3848
        %v3850 = vshll.u32 2475754826, %v3844
        %v3851 = vshrl.u32 2131351028, %v3845
        %v3852 = vor.u32 %v3850, %v3851
        %v3853 = vshll.u32 2131351028, %v3844
        %v3854 = vshrl.u32 2102212464, %v3845
        %v3855 = vor.u32 %v3853, %v3854
        %v3856 = vshll.u32 2102212464, %v3844
        %v3857 = vshrl.u32 920167782, %v3845
        %v3858 = vor.u32 %v3856, %v3857
        %v3859 = vshll.u32 920167782, %v3844
        %v3860 = vshrl.u32 1326507024, %v3845
        %v3861 = vor.u32 %v3859, %v3860
        %vm3862 = vcmp.lt.s32.totalorder %v3843, 1
        %vm3863 = vcmp.lt.s32.totalorder %v3843, 2
        %vm3864 = vcmp.lt.s32.totalorder %v3843, 3
        %vm3865 = vcmp.lt.s32.totalorder %v3843, 4
        %v3866 = vsel %vm3862, %v3846, %v3849
        %v3867 = vsel %vm3865, %v3855, 2102212464
        %v3868 = vsel %vm3864, %v3852, %v3867
        %v3869 = vsel %vm3863, %v3866, %v3868
        %v3870 = vsel %vm3862, %v3849, %v3852
        %v3871 = vsel %vm3865, %v3858, 920167782
        %v3872 = vsel %vm3864, %v3855, %v3871
        %v3873 = vsel %vm3863, %v3870, %v3872
        %v3874 = vsel %vm3862, %v3852, %v3855
        %v3875 = vsel %vm3865, %v3861, 1326507024
        %v3876 = vsel %vm3864, %v3858, %v3875
        %v3877 = vsel %vm3863, %v3874, %v3876
        %v3878 = vshll.u32 %v3838, 8
        %v3879 = vmul.u32.u64.compose %v3878, %v3877
        %v3880 = vextract.low.u32 %v3879
        %v3881 = vextract.high.u32 %v3879
        %v3882 = vmul.u32.u64.compose %v3878, %v3873
        %v3883 = vextract.low.u32 %v3882
        %v3884 = vextract.high.u32 %v3882
        %v3885 = vmul.u32 %v3878, %v3869
        %v3886 = vadd.s32 %v3881, %v3883
        %vm3887 = vc.u32 %v3881, %v3883
        %v3888 = vadd.s32 %v3884, 1
        %v3889 = vsel %vm3887, %v3888, %v3884
        %v3890 = vadd.s32 %v3885, %v3889
        %v3891 = vadd.s32 %v3890, 536870912
        %v3892 = vshrl.u32 %v3891, 30
        %v3893 = vshll.u32 %v3892, 30
        %v3894 = vsub.s32 %v3890, %v3893
        %vm3895 = vcmp.lt.s32.totalorder %v3894, 0
        %v3896 = vsub.s32 0, %v3894
        %v3897 = vsel %vm3895, %v3896, %v3894
        %v3898 = vclz %v3897
        %v3899 = vsub.s32 %v3898, 2
        %vm3900 = vcmp.gt.s32.totalorder 0, %v3899
        %v3901 = vsel %vm3900, 0, %v3899
        %v3902 = vsub.s32 32, %v3901
        %v3903 = vshll.u32 %v3894, %v3901
        %v3904 = vshrl.u32 %v3886, %v3902
        %v3905 = vor.u32 %v3903, %v3904
        %v3906 = vsub.s32 4294967266, %v3901
        %v3907 = vadd.s32 %v3906, 127
        %v3908 = vshll.u32 %v3907, 23
        %v3909 = vor.u32 4788187, %v3908
        %v3910 = vand.u32 2147483647, %v3909
        %v3912 = vcvt.s32.f32 %v3905
        %v3913 = vmul.f32 %v3912, %v3910
        %v3914 = vxor.u32 %v3913, 2147483648
        %v3915 = vsel %vm3832, %v3914, %v3913
        %v3916 = vsub.s32 4, %v3892
        %v3917 = vsel %vm3832, %v3916, %v3892
        %v3918 = vsel %vm3831, %v603, %v3915
        %v3919 = vsel %vm3831, 0, %v3917
        %v3920 = vcosq.f32.pop %v3918
        %v3921 = vsinq.f32.pop %v3918
        %vm3922 = vweird.f32 %v603
        %v3923 = vadd.s32 %v3919, 3
        %v3924 = vand.u32 %v3923, 3
        %vm3925 = vcmp.lt.s32.totalorder %v3924, 2
        %vm3926 = vcmp.eq.s32.totalorder %v3924, 0
        %v3927 = vxor.u32 %v3921, 2147483648
        %v3928 = vsel %vm3926, %v3920, %v3927
        %vm3929 = vcmp.eq.s32.totalorder %v3924, 2
        %v3930 = vxor.u32 %v3920, 2147483648
        %v3931 = vsel %vm3929, %v3930, %v3921
        %v3932 = vsel %vm3925, %v3928, %v3931
        %v3933 = vsel %vm3922, nan, %v3932
        %3934 = vst [vmem:[%s214] sm:$0xff] %v709
        %3935 = vst [vmem:[%s214 + $0x8] sm:$0xff] %v813
        %3936 = vst [vmem:[%s214 + $0x10] sm:$0xff] %v917
        %3937 = vst [vmem:[%s214 + $0x18] sm:$0xff] %v1021
        %3938 = vst [vmem:[%s214 + $0x20] sm:$0xff] %v1125
        %3939 = vst [vmem:[%s214 + $0x28] sm:$0xff] %v1229
        %3940 = vst [vmem:[%s214 + $0x30] sm:$0xff] %v1333
        %3941 = vst [vmem:[%s214 + $0x38] sm:$0xff] %v1437
        %3942 = vst [vmem:[%s214 + $0x40] sm:$0xff] %v1541
        %3943 = vst [vmem:[%s214 + $0x48] sm:$0xff] %v1645
        %3944 = vst [vmem:[%s214 + $0x50] sm:$0xff] %v1749
        %3945 = vst [vmem:[%s214 + $0x58] sm:$0xff] %v1853
        %3946 = vst [vmem:[%s214 + $0x60] sm:$0xff] %v1957
        %3947 = vst [vmem:[%s214 + $0x68] sm:$0xff] %v2061
        %3948 = vst [vmem:[%s214 + $0x70] sm:$0xff] %v2165
        %3949 = vst [vmem:[%s214 + $0x78] sm:$0xff] %v2269
        %3950 = vst [vmem:[%s214 + $0x80] sm:$0xff] %v2373
        %3951 = vst [vmem:[%s214 + $0x88] sm:$0xff] %v2477
        %3952 = vst [vmem:[%s214 + $0x90] sm:$0xff] %v2581
        %3953 = vst [vmem:[%s214 + $0x98] sm:$0xff] %v2685
        %3954 = vst [vmem:[%s214 + $0xa0] sm:$0xff] %v2789
        %3955 = vst [vmem:[%s214 + $0xa8] sm:$0xff] %v2893
        %3956 = vst [vmem:[%s214 + $0xb0] sm:$0xff] %v2997
        %3957 = vst [vmem:[%s214 + $0xb8] sm:$0xff] %v3101
        %3958 = vst [vmem:[%s214 + $0xc0] sm:$0xff] %v3205
        %3959 = vst [vmem:[%s214 + $0xc8] sm:$0xff] %v3309
        %3960 = vst [vmem:[%s214 + $0xd0] sm:$0xff] %v3413
        %3961 = vst [vmem:[%s214 + $0xd8] sm:$0xff] %v3517
        %3962 = vst [vmem:[%s214 + $0xe0] sm:$0xff] %v3621
        %3963 = vst [vmem:[%s214 + $0xe8] sm:$0xff] %v3725
        %3964 = vst [vmem:[%s214 + $0xf0] sm:$0xff] %v3829
        %3965 = vst [vmem:[%s214 + $0xf8] sm:$0xff] %v3933
        %s3966 = sand.u32 %s117, 1
        %s3967 = scalar_lea.sflag [#allocation3], %s3966
        %s3968 = sand.u32 %s117, 1
        %s3969 = smul.addr %s3968, 256
        %s3970 = scalar_lea.vmem [#allocation2], %s3969
        // Predicated region
        $region33: #{tpu_custom_call.1} parent=31 // pred_check
          %p3971 = pneg %p127
        $region34: #{tpu_custom_call.1} parent=31 // pred_check_branch
          %3973 = sbr.rel (%p3971) target = $region36
        $region35: #{tpu_custom_call.1} parent=31 // pred_region
          %s3974 = smul.u32 32, %s21
          %s3975 = ssub.s32 125, %s3974
          %p3976 = scmp.lt.s32.totalorder %s3975, 32
          %s3977 = scalar_select %p3976, %s3975, 32
          %s3978 = smul.u32 128, %s3977
          %s3980 = ssub.s32 4096, %s3978
          %3981 = vsyncadd %s3967, %s3980
          %p3982 = scmp.ne.s32.totalorder 0, %s3978
          %s3983 = sadd.s32 %s22, %s3974
          %s3984 = smul.addr %s3983, 128
          %s3985 = scalar_lea.hbm %s3, %s3984
          %s3986 = smul.u32 8, %s3977
          %s3987 = sshll.u32 %s3970, 4
          %s3988 = int_to_ptr.vmem [resolvable:$true] %s3987
          %s3989 = sshll.u32 %s3986, 4
          %3993 = dma.vmem_to_hbm [thread:$0]  (%p3982), %s3988, %s3989, %s3985, %s3967, 128, 128, 8
        $region36: #{tpu_custom_call.1} parent=31 // pred_fallthru
          _
      $region32: #{tpu_custom_call.1} parent=5 // pred_fallthru
        _
      %p3994 = scmp.le.s32.totalorder 2, %s12
      // Predicated region
      $region37: #{tpu_custom_call.1} parent=5 // pred_check
        %p3995 = pneg %p3994
      $region38: #{tpu_custom_call.1} parent=5 // pred_check_branch
        %3997 = sbr.rel (%p3995) target = $region40
      $region39: #{tpu_custom_call.1} parent=5 // pred_region
        %s3998 = ssub.s32 %s12, 2
        // Predicated region
        $region41: #{tpu_custom_call.1} parent=39 // pred_check
          %p3999 = pneg %p133
        $region42: #{tpu_custom_call.1} parent=39 // pred_check_branch
          %4001 = sbr.rel (%p3999) target = $region44
        $region43: #{tpu_custom_call.1} parent=39 // pred_region
          %s4002 = sand.u32 %s118, 1
          %s4003 = scalar_lea.sflag [#allocation3], %s4002
          %s4004 = sand.u32 %s118, 1
          %s4005 = smul.addr %s4004, 256
          %s4006 = scalar_lea.vmem [#allocation2], %s4005
          %4007 = dma.done %s4003, 4096
        $region44: #{tpu_custom_call.1} parent=39 // pred_fallthru
          _
      $region40: #{tpu_custom_call.1} parent=5 // pred_fallthru
        _
    $region6: #{tpu_custom_call.1} parent=1 // loop_footer
      %s16 = sadd.s32 1, %s12
    $region7: #{tpu_custom_call.1} parent=1 // loop_footer_branch
      %11 = sbr.rel target = $region3
    $region8: #{tpu_custom_call.1} parent=1 // loop_exit
      _
    %4008 = vsyncpa [#allocation3], 1
    %s4009 = scalar_lea.sflag [#allocation3], 1
    %4010 = vsyncpa %s4009, 1

// kernel: tpu_custom_call.1
$region0: #{tpu_custom_call.1}
  #allocation0 [shape = 'u32[]', space=smem, size = 0x4, offset = 0x4, fixed_abs, tag = 'smem constant byte address 0x4 - core index']
  #allocation1 [shape = 'u32[144,128]{1,0:T(1,128)}', space=vmem, size = 0x12000, scoped, tag = 'internal scratch']
  %s0 = inlined_call_operand.vmem [shape: f32[1000,32], index: 0, kind: input, shape index: {}]
  %s1 = inlined_call_operand.vmem [shape: f32[32,128], index: 1, kind: input, shape index: {}]
  %s2 = inlined_call_operand.vmem [shape: f32[1,128], index: 2, kind: input, shape index: {}]
  %s3 = inlined_call_operand.hbm [shape: f32[1000,128], index: 3, kind: output, shape index: {}]
  %s4 = sld [smem:[#allocation0]]
  $region45: #{tpu_custom_call.1} parent=0
    _
  %s6 = ssub.s32 1, %s4
  %s7 = scalar_select 0, %s6, %s4
  $region1: #{tpu_custom_call.1} parent=0
    #allocation2 [shape = 'u8[262144]{0}', space=vmem, size = 0x40000, scoped, tag = 'output window, operand 0']
    #allocation3 [shape = 's32[2]{0}', space=sflag, size = 0x8, scoped, tag = 'scoped memory for tpu_custom_call.1']
    %8 = vsyncpa [#allocation3], 0
    %s9 = scalar_lea.sflag [#allocation3], 1
    %10 = vsyncpa %s9, 0
    loop: start=0, step=1, limit=6
    $region2: #{tpu_custom_call.1} parent=1 // loop_pre_header
      _
    $region3: #{tpu_custom_call.1} parent=1 // loop_header
      %s12 = sphi 0, %s16
      %p13 = scmp.ge.s32.totalorder %s12, 6
      %s19 = sphi 0, %s31
      %s20 = sphi 0, %s27
      %s21 = sphi 0, %s19
      %s22 = sphi 0, %s20
      %s23 = sphi 0, %s21
      %s24 = sphi 0, %s22
      %s34 = sphi 0, %s36
      %s37 = sphi 0, %s34
      %s38 = sphi 0, %s37
      %s54 = sphi 0, %s38
      %s60 = sphi 0, %s62
      %s63 = sphi 0, %s60
      %s64 = sphi 0, %s63
      %s80 = sphi 0, %s64
      %s86 = sphi 0, %s88
      %s89 = sphi 0, %s86
      %s90 = sphi 0, %s89
      %s106 = sphi 0, %s90
      %s114 = sphi 0, %s116
      %s117 = sphi 0, %s114
      %s118 = sphi 0, %s117
      %s134 = sphi 0, %s118
    $region4: #{tpu_custom_call.1} parent=1 // loop_header_branch
      %15 = sbr.rel (%p13) target = $region8
    $region5: #{tpu_custom_call.1} parent=1 // loop_body
      %s17 = ssub.s32 %s12, 1
      %s18 = ssub.s32 %s12, 2
      %s25 = sadd.s32 1, %s20
      %p26 = scmp.ge.s32.totalorder %s25, 1
      %s27 = scalar_select %p26, 0, %s25
      %s28 = sadd.s32 1, %s19
      %s29 = scalar_select %p26, %s28, %s19
      %p30 = scmp.ge.s32.totalorder %s29, 4
      %s31 = scalar_select %p30, 0, %s29
      %s32 = ssub.s32 %s19, %s31
      %p33 = scmp.eq.s32.totalorder %s32, 0
      %s35 = sadd.s32 %s34, 1
      %s36 = scalar_select %p33, %s34, %s35
      %p39 = pneg %p33
      %p40 = scmp.eq.s32.totalorder %s12, 3
      %p41 = por %p39, %p40
      %p42 = scmp.ne.s32.totalorder %s34, %s37
      %p43 = scmp.eq.s32.totalorder %s12, 0
      %p44 = por %p42, %p43
      %p45 = scmp.ne.s32.totalorder %s34, %s37
      %p46 = scmp.eq.s32.totalorder %s17, 3
      %p47 = por %p45, %p46
      %p48 = scmp.ne.s32.totalorder %s37, %s38
      %p49 = scmp.eq.s32.totalorder %s17, 0
      %p50 = por %p48, %p49
      %p51 = scmp.ne.s32.totalorder %s37, %s38
      %p52 = scmp.eq.s32.totalorder %s18, 3
      %p53 = por %p51, %p52
      %p55 = scmp.ne.s32.totalorder %s38, %s54
      %p56 = scmp.eq.s32.totalorder %s18, 0
      %p57 = por %p55, %p56
      %s58 = ssub.s32 %s20, %s27
      %p59 = scmp.eq.s32.totalorder %s58, 0
      %s61 = sadd.s32 %s60, 1
      %s62 = scalar_select %p59, %s60, %s61
      %p65 = pneg %p59
      %p66 = scmp.eq.s32.totalorder %s12, 3
      %p67 = por %p65, %p66
      %p68 = scmp.ne.s32.totalorder %s60, %s63
      %p69 = scmp.eq.s32.totalorder %s12, 0
      %p70 = por %p68, %p69
      %p71 = scmp.ne.s32.totalorder %s60, %s63
      %p72 = scmp.eq.s32.totalorder %s17, 3
      %p73 = por %p71, %p72
      %p74 = scmp.ne.s32.totalorder %s63, %s64
      %p75 = scmp.eq.s32.totalorder %s17, 0
      %p76 = por %p74, %p75
      %p77 = scmp.ne.s32.totalorder %s63, %s64
      %p78 = scmp.eq.s32.totalorder %s18, 3
      %p79 = por %p77, %p78
      %p81 = scmp.ne.s32.totalorder %s64, %s80
      %p82 = scmp.eq.s32.totalorder %s18, 0
      %p83 = por %p81, %p82
      %s84 = ssub.s32 %s20, %s27
      %p85 = scmp.eq.s32.totalorder %s84, 0
      %s87 = sadd.s32 %s86, 1
      %s88 = scalar_select %p85, %s86, %s87
      %p91 = pneg %p85
      %p92 = scmp.eq.s32.totalorder %s12, 3
      %p93 = por %p91, %p92
      %p94 = scmp.ne.s32.totalorder %s86, %s89
      %p95 = scmp.eq.s32.totalorder %s12, 0
      %p96 = por %p94, %p95
      %p97 = scmp.ne.s32.totalorder %s86, %s89
      %p98 = scmp.eq.s32.totalorder %s17, 3
      %p99 = por %p97, %p98
      %p100 = scmp.ne.s32.totalorder %s89, %s90
      %p101 = scmp.eq.s32.totalorder %s17, 0
      %p102 = por %p100, %p101
      %p103 = scmp.ne.s32.totalorder %s89, %s90
      %p104 = scmp.eq.s32.totalorder %s18, 3
      %p105 = por %p103, %p104
      %p107 = scmp.ne.s32.totalorder %s90, %s106
      %p108 = scmp.eq.s32.totalorder %s18, 0
      %p109 = por %p107, %p108
      %s110 = ssub.s32 %s19, %s31
      %s111 = ssub.s32 %s20, %s27
      %s112 = sor.u32 %s110, %s111
      %p113 = scmp.eq.s32.totalorder %s112, 0
      %s115 = sadd.s32 %s114, 1
      %s116 = scalar_select %p113, %s114, %s115
      %p119 = pneg %p113
      %p120 = scmp.eq.s32.totalorder %s12, 3
      %p121 = por %p119, %p120
      %p122 = scmp.ne.s32.totalorder %s114, %s117
      %p123 = scmp.eq.s32.totalorder %s12, 0
      %p124 = por %p122, %p123
      %p125 = scmp.ne.s32.totalorder %s114, %s117
      %p126 = scmp.eq.s32.totalorder %s17, 3
      %p127 = por %p125, %p126
      %p128 = scmp.ne.s32.totalorder %s117, %s118
      %p129 = scmp.eq.s32.totalorder %s17, 0
      %p130 = por %p128, %p129
      %p131 = scmp.ne.s32.totalorder %s117, %s118
      %p132 = scmp.eq.s32.totalorder %s18, 3
      %p133 = por %p131, %p132
      %p135 = scmp.ne.s32.totalorder %s118, %s134
      %p136 = scmp.eq.s32.totalorder %s18, 0
      %p137 = por %p135, %p136
      %p138 = scmp.le.s32.totalorder 1, %s12
      %p139 = scmp.lt.s32.totalorder %s12, 5
      %p140 = pnand %p138, %p139
      %p141 = pneg %p140
      // Predicated region
      $region9: #{tpu_custom_call.1} parent=5 // pred_check
        _
      $region10: #{tpu_custom_call.1} parent=5 // pred_check_branch
        %143 = sbr.rel (%p140) target = $region12
      $region11: #{tpu_custom_call.1} parent=5 // pred_region
        %s144 = ssub.s32 %s12, 1
        // Predicated region
        $region13: #{tpu_custom_call.1} parent=11 // pred_check
          %p145 = pneg %p76
        $region14: #{tpu_custom_call.1} parent=11 // pred_check_branch
          %147 = sbr.rel (%p145) target = $region16
        $region15: #{tpu_custom_call.1} parent=11 // pred_region
          %p148 = scmp.lt.s32.totalorder %s22, 0
          %s149 = scalar_select %p148, %s22, 0
          %s150 = smul.addr %s149, 8
          %s151 = scalar_lea.vmem %s1, %s150
        $region16: #{tpu_custom_call.1} parent=11 // pred_fallthru
          _
        // Predicated region
        $region17: #{tpu_custom_call.1} parent=11 // pred_check
          %p152 = pneg %p102
        $region18: #{tpu_custom_call.1} parent=11 // pred_check_branch
          %154 = sbr.rel (%p152) target = $region20
        $region19: #{tpu_custom_call.1} parent=11 // pred_region
          %p155 = scmp.lt.s32.totalorder %s22, 0
          %s156 = scalar_select %p155, %s22, 0
          %s157 = scalar_lea.vmem %s2, %s156
        $region20: #{tpu_custom_call.1} parent=11 // pred_fallthru
          _
      $region12: #{tpu_custom_call.1} parent=5 // pred_fallthru
        _
      %p158 = scmp.lt.s32.totalorder %s12, 4
      // Predicated region
      $region21: #{tpu_custom_call.1} parent=5 // pred_check
        %p159 = pneg %p158
      $region22: #{tpu_custom_call.1} parent=5 // pred_check_branch
        %161 = sbr.rel (%p159) target = $region24
      $region23: #{tpu_custom_call.1} parent=5 // pred_region
        // Predicated region
        $region25: #{tpu_custom_call.1} parent=23 // pred_check
          %p162 = pneg %p44
        $region26: #{tpu_custom_call.1} parent=23 // pred_check_branch
          %164 = sbr.rel (%p162) target = $region28
        $region27: #{tpu_custom_call.1} parent=23 // pred_region
          %s165 = smul.u32 32, %s19
          %s166 = ssub.s32 125, %s165
          %p167 = scmp.lt.s32.totalorder %s166, 32
          %s168 = scalar_select %p167, %s166, 32
          %s169 = smul.u32 128, %s168
          %p170 = scmp.lt.s32.totalorder %s165, 124
          %s171 = scalar_select %p170, %s165, 124
          %s172 = smul.addr %s171, 8
          %s173 = scalar_lea.vmem %s0, %s172
          %s174 = smul.u32 32, %s19
          %s175 = ssub.s32 125, %s174
          %p176 = scmp.lt.s32.totalorder %s175, 32
          %s177 = scalar_select %p176, %s175, 32
          %s178 = smul.u32 128, %s177
        $region28: #{tpu_custom_call.1} parent=23 // pred_fallthru
          _
      $region24: #{tpu_custom_call.1} parent=5 // pred_fallthru
        _
      %p179 = scmp.le.s32.totalorder 1, %s12
      %p180 = scmp.lt.s32.totalorder %s12, 5
      %p181 = pnand %p179, %p180
      %p182 = pneg %p181
      // Predicated region
      $region29: #{tpu_custom_call.1} parent=5 // pred_check
        _
      $region30: #{tpu_custom_call.1} parent=5 // pred_check_branch
        %184 = sbr.rel (%p181) target = $region32
      $region31: #{tpu_custom_call.1} parent=5 // pred_region
        %s185 = ssub.s32 %s12, 1
        %s186 = smul.u32 32, %s21
        %s187 = ssub.s32 125, %s186
        %p188 = scmp.lt.s32.totalorder %s187, 32
        %s189 = scalar_select %p188, %s187, 32
        %s190 = smul.u32 128, %s189
        %p191 = scmp.lt.s32.totalorder %s186, 124
        %s192 = scalar_select %p191, %s186, 124
        %s193 = smul.addr %s192, 8
        %s194 = scalar_lea.vmem %s0, %s193
        %p195 = pneg %p50
        %p196 = pneg %p47
        %p197 = scmp.lt.s32.totalorder %s22, 0
        %s198 = scalar_select %p197, %s22, 0
        %s199 = smul.addr %s198, 8
        %s200 = scalar_lea.vmem %s1, %s199
        %p201 = pneg %p76
        %p202 = pneg %p73
        %p203 = scmp.lt.s32.totalorder %s22, 0
        %s204 = scalar_select %p203, %s22, 0
        %s205 = scalar_lea.vmem %s2, %s204
        %p206 = pneg %p102
        %p207 = pneg %p99
        %p208 = pneg %p130
        %p209 = pneg %p127
        %s210 = sand.u32 %s117, 1
        %s211 = scalar_lea.sflag [#allocation3], %s210
        %s212 = sand.u32 %s117, 1
        %s213 = smul.addr %s212, 256
        %s214 = scalar_lea.vmem [#allocation2], %s213
        %s215 = smul.u32 32, %s21
        %s216 = ssub.s32 125, %s215
        %p217 = scmp.lt.s32.totalorder %s216, 32
        %s218 = scalar_select %p217, %s216, 32
        %s219 = smul.u32 128, %s218
        %p220 = scmp.lt.s32.totalorder %s215, 124
        %s221 = scalar_select %p220, %s215, 124
        %s222 = smul.addr %s221, 8
        %s223 = scalar_lea.vmem %s0, %s222
        %s224 = smul.u32 32, %s21
        %s225 = ssub.s32 125, %s224
        %p226 = scmp.lt.s32.totalorder %s225, 32
        %s227 = scalar_select %p226, %s225, 32
        %s228 = smul.u32 128, %s227
        %p229 = scmp.lt.s32.totalorder %s22, 0
        %s230 = scalar_select %p229, %s22, 0
        %s231 = smul.addr %s230, 8
        %s232 = scalar_lea.vmem %s1, %s231
        %p233 = scmp.lt.s32.totalorder %s22, 0
        %s234 = scalar_select %p233, %s22, 0
        %s235 = scalar_lea.vmem %s2, %s234
        %s236 = smul.u32 32, %s21
        %s237 = ssub.s32 125, %s236
        %p238 = scmp.lt.s32.totalorder %s237, 32
        %s239 = scalar_select %p238, %s237, 32
        %s240 = smul.u32 128, %s239
        %v241 = vld [vmem:[%s223] sm:$0xff]
        %v242 = vld [vmem:[%s223 + $0x8] sm:$0xff]
        %v243 = vld [vmem:[%s223 + $0x10] sm:$0xff]
        %v244 = vld [vmem:[%s223 + $0x18] sm:$0xff]
        %v245 = vld [vmem:[%s223 + $0x20] sm:$0xff]
        %v246 = vld [vmem:[%s223 + $0x28] sm:$0xff]
        %v247 = vld [vmem:[%s223 + $0x30] sm:$0xff]
        %v248 = vld [vmem:[%s223 + $0x38] sm:$0xff]
        %v249 = vld [vmem:[%s223 + $0x40] sm:$0xff]
        %v250 = vld [vmem:[%s223 + $0x48] sm:$0xff]
        %v251 = vld [vmem:[%s223 + $0x50] sm:$0xff]
        %v252 = vld [vmem:[%s223 + $0x58] sm:$0xff]
        %v253 = vld [vmem:[%s223 + $0x60] sm:$0xff]
        %v254 = vld [vmem:[%s223 + $0x68] sm:$0xff]
        %v255 = vld [vmem:[%s223 + $0x70] sm:$0xff]
        %v256 = vld [vmem:[%s223 + $0x78] sm:$0xff]
        %v257 = vld [vmem:[%s223 + $0x80] sm:$0xff]
        %v258 = vld [vmem:[%s223 + $0x88] sm:$0xff]
        %v259 = vld [vmem:[%s223 + $0x90] sm:$0xff]
        %v260 = vld [vmem:[%s223 + $0x98] sm:$0xff]
        %v261 = vld [vmem:[%s223 + $0xa0] sm:$0xff]
        %v262 = vld [vmem:[%s223 + $0xa8] sm:$0xff]
        %v263 = vld [vmem:[%s223 + $0xb0] sm:$0xff]
        %v264 = vld [vmem:[%s223 + $0xb8] sm:$0xff]
        %v265 = vld [vmem:[%s223 + $0xc0] sm:$0xff]
        %v266 = vld [vmem:[%s223 + $0xc8] sm:$0xff]
        %v267 = vld [vmem:[%s223 + $0xd0] sm:$0xff]
        %v268 = vld [vmem:[%s223 + $0xd8] sm:$0xff]
        %v269 = vld [vmem:[%s223 + $0xe0] sm:$0xff]
        %v270 = vld [vmem:[%s223 + $0xe8] sm:$0xff]
        %v271 = vld [vmem:[%s223 + $0xf0] sm:$0xff]
        %v272 = vld [vmem:[%s223 + $0xf8] sm:$0xff]
        %v273 = vld [vmem:[%s232] sm:$0xff]
        %v274 = vld [vmem:[%s232 + $0x8] sm:$0xff]
        %v275 = vld [vmem:[%s232 + $0x10] sm:$0xff]
        %v276 = vld [vmem:[%s232 + $0x18] sm:$0xff]
        %v277 = vld [vmem:[%s235] sm:$0x1]
        %v279 = vlaneseq
        %v280 = vshrl.u32 %v279, 7
        %v281 = vsub.s32 0, %v280
        %v282 = vrot.slane %v277, %v281
        %vm284 = vcmask 261120
        %v286 = vsel %vm284, %v241, 0
        %v289 = vsel %vm284, %v242, 0
        %v292 = vsel %vm284, %v243, 0
        %v295 = vsel %vm284, %v244, 0
        %v298 = vsel %vm284, %v245, 0
        %v301 = vsel %vm284, %v246, 0
        %v304 = vsel %vm284, %v247, 0
        %v307 = vsel %vm284, %v248, 0
        %v310 = vsel %vm284, %v249, 0
        %v313 = vsel %vm284, %v250, 0
        %v316 = vsel %vm284, %v251, 0
        %v319 = vsel %vm284, %v252, 0
        %v322 = vsel %vm284, %v253, 0
        %v325 = vsel %vm284, %v254, 0
        %v328 = vsel %vm284, %v255, 0
        %v331 = vsel %vm284, %v256, 0
        %v334 = vsel %vm284, %v257, 0
        %v337 = vsel %vm284, %v258, 0
        %v340 = vsel %vm284, %v259, 0
        %v343 = vsel %vm284, %v260, 0
        %v346 = vsel %vm284, %v261, 0
        %v349 = vsel %vm284, %v262, 0
        %v352 = vsel %vm284, %v263, 0
        %v355 = vsel %vm284, %v264, 0
        %v358 = vsel %vm284, %v265, 0
        %v361 = vsel %vm284, %v266, 0
        %v364 = vsel %vm284, %v267, 0
        %v367 = vsel %vm284, %v268, 0
        %v370 = vsel %vm284, %v269, 0
        %v373 = vsel %vm284, %v270, 0
        %v376 = vsel %vm284, %v271, 0
        %v379 = vsel %vm284, %v272, 0
        %381 = vmatprep.subr.mxu0 0.0
        %382 = vmatpush1.msra.mxu0 %v273
        %383 = vmatprep.subr.mxu0 0.0
        %384 = vmatpush1.msra.mxu0 %v274
        %385 = vmatprep.subr.mxu0 0.0
        %386 = vmatpush1.msra.mxu0 %v275
        %387 = vmatprep.subr.mxu0 0.0
        %388 = vmatpush1.msra.mxu0 %v276
        %389 = vmatprep.subr.mxu0 0.0
        %390 = vmatpush1.msra.mxu0 0.0
        %391 = vmatprep.subr.mxu0 0.0
        %392 = vmatpush1.msra.mxu0 0.0
        %393 = vmatprep.subr.mxu0 0.0
        %394 = vmatpush1.msra.mxu0 0.0
        %395 = vmatprep.subr.mxu0 0.0
        %396 = vmatpush1.msra.mxu0 0.0
        %397 = vmatprep.subr.mxu0 0.0
        %398 = vmatpush1.msra.mxu0 0.0
        %399 = vmatprep.subr.mxu0 0.0
        %400 = vmatpush1.msra.mxu0 0.0
        %401 = vmatprep.subr.mxu0 0.0
        %402 = vmatpush1.msra.mxu0 0.0
        %403 = vmatprep.subr.mxu0 0.0
        %404 = vmatpush1.msra.mxu0 0.0
        %405 = vmatprep.subr.mxu0 0.0
        %406 = vmatpush1.msra.mxu0 0.0
        %407 = vmatprep.subr.mxu0 0.0
        %408 = vmatpush1.msra.mxu0 0.0
        %409 = vmatprep.subr.mxu0 0.0
        %410 = vmatpush1.msra.mxu0 0.0
        %411 = vmatprep.subr.mxu0 0.0
        %412 = vmatpush1.msra.mxu0 0.0
        %413 = vmatprep.subr.mxu0 0.0
        %414 = vmatpush1.msra.mxu0 0.0
        %415 = vmatprep.subr.mxu0 0.0
        %416 = vmatpush1.msra.mxu0 0.0
        %417 = vmatprep.subr.mxu0 0.0
        %418 = vmatpush1.msra.mxu0 0.0
        %419 = vmatprep.subr.mxu0 0.0
        %420 = vmatpush1.msra.mxu0 0.0
        %421 = vmatprep.subr.mxu0 0.0
        %422 = vmatpush1.msra.mxu0 0.0
        %423 = vmatprep.subr.mxu0 0.0
        %424 = vmatpush1.msra.mxu0 0.0
        %425 = vmatprep.subr.mxu0 0.0
        %426 = vmatpush1.msra.mxu0 0.0
        %427 = vmatprep.subr.mxu0 0.0
        %428 = vmatpush1.msra.mxu0 0.0
        %429 = vmatprep.subr.mxu0 0.0
        %430 = vmatpush1.msra.mxu0 0.0
        %431 = vmatprep.subr.mxu0 0.0
        %432 = vmatpush1.msra.mxu0 0.0
        %433 = vmatprep.subr.mxu0 0.0
        %434 = vmatpush1.msra.mxu0 0.0
        %435 = vmatprep.subr.mxu0 0.0
        %436 = vmatpush1.msra.mxu0 0.0
        %437 = vmatprep.subr.mxu0 0.0
        %438 = vmatpush1.msra.mxu0 0.0
        %439 = vmatprep.subr.mxu0 0.0
        %440 = vmatpush1.msra.mxu0 0.0
        %441 = vmatprep.subr.mxu0 0.0
        %442 = vmatpush1.msra.mxu0 0.0
        %443 = vmatprep.subr.mxu0 0.0
        %444 = vmatpush1.msra.mxu0 0.0
        %445 = vmatprep.mubr.f32.mxu0 0.0
        %446 = vmatmul.mubr.f32.gmra.mrb[0].mxu0 %v286
        %v447 = vpop.f32.mrb[0].mxu0
        %v448 = vadd.f32 %v282, %v447
        %v449 = vpop.f32.mrb[0].mxu0
        %450 = vmatprep.mubr.f32.mxu0 0.0
        %451 = vmatmul.mubr.f32.gmra.mrb[0].mxu0 %v289
        %v452 = vpop.f32.mrb[0].mxu0
        %v453 = vadd.f32 %v282, %v452
        %v454 = vpop.f32.mrb[0].mxu0
        %455 = vmatprep.mubr.f32.mxu0 0.0
        %456 = vmatmul.mubr.f32.gmra.mrb[0].mxu0 %v292
        %v457 = vpop.f32.mrb[0].mxu0
        %v458 = vadd.f32 %v282, %v457
        %v459 = vpop.f32.mrb[0].mxu0
        %460 = vmatprep.mubr.f32.mxu0 0.0
        %461 = vmatmul.mubr.f32.gmra.mrb[0].mxu0 %v295
        %v462 = vpop.f32.mrb[0].mxu0
        %v463 = vadd.f32 %v282, %v462
        %v464 = vpop.f32.mrb[0].mxu0
        %465 = vmatprep.mubr.f32.mxu0 0.0
        %466 = vmatmul.mubr.f32.gmra.mrb[0].mxu0 %v298
        %v467 = vpop.f32.mrb[0].mxu0
        %v468 = vadd.f32 %v282, %v467
        %v469 = vpop.f32.mrb[0].mxu0
        %470 = vmatprep.mubr.f32.mxu0 0.0
        %471 = vmatmul.mubr.f32.gmra.mrb[0].mxu0 %v301
        %v472 = vpop.f32.mrb[0].mxu0
        %v473 = vadd.f32 %v282, %v472
        %v474 = vpop.f32.mrb[0].mxu0
        %475 = vmatprep.mubr.f32.mxu0 0.0
        %476 = vmatmul.mubr.f32.gmra.mrb[0].mxu0 %v304
        %v477 = vpop.f32.mrb[0].mxu0
        %v478 = vadd.f32 %v282, %v477
        %v479 = vpop.f32.mrb[0].mxu0
        %480 = vmatprep.mubr.f32.mxu0 0.0
        %481 = vmatmul.mubr.f32.gmra.mrb[0].mxu0 %v307
        %v482 = vpop.f32.mrb[0].mxu0
        %v483 = vadd.f32 %v282, %v482
        %v484 = vpop.f32.mrb[0].mxu0
        %485 = vmatprep.mubr.f32.mxu0 0.0
        %486 = vmatmul.mubr.f32.gmra.mrb[0].mxu0 %v310
        %v487 = vpop.f32.mrb[0].mxu0
        %v488 = vadd.f32 %v282, %v487
        %v489 = vpop.f32.mrb[0].mxu0
        %490 = vmatprep.mubr.f32.mxu0 0.0
        %491 = vmatmul.mubr.f32.gmra.mrb[0].mxu0 %v313
        %v492 = vpop.f32.mrb[0].mxu0
        %v493 = vadd.f32 %v282, %v492
        %v494 = vpop.f32.mrb[0].mxu0
        %495 = vmatprep.mubr.f32.mxu0 0.0
        %496 = vmatmul.mubr.f32.gmra.mrb[0].mxu0 %v316
        %v497 = vpop.f32.mrb[0].mxu0
        %v498 = vadd.f32 %v282, %v497
        %v499 = vpop.f32.mrb[0].mxu0
        %500 = vmatprep.mubr.f32.mxu0 0.0
        %501 = vmatmul.mubr.f32.gmra.mrb[0].mxu0 %v319
        %v502 = vpop.f32.mrb[0].mxu0
        %v503 = vadd.f32 %v282, %v502
        %v504 = vpop.f32.mrb[0].mxu0
        %505 = vmatprep.mubr.f32.mxu0 0.0
        %506 = vmatmul.mubr.f32.gmra.mrb[0].mxu0 %v322
        %v507 = vpop.f32.mrb[0].mxu0
        %v508 = vadd.f32 %v282, %v507
        %v509 = vpop.f32.mrb[0].mxu0
        %510 = vmatprep.mubr.f32.mxu0 0.0
        %511 = vmatmul.mubr.f32.gmra.mrb[0].mxu0 %v325
        %v512 = vpop.f32.mrb[0].mxu0
        %v513 = vadd.f32 %v282, %v512
        %v514 = vpop.f32.mrb[0].mxu0
        %515 = vmatprep.mubr.f32.mxu0 0.0
        %516 = vmatmul.mubr.f32.gmra.mrb[0].mxu0 %v328
        %v517 = vpop.f32.mrb[0].mxu0
        %v518 = vadd.f32 %v282, %v517
        %v519 = vpop.f32.mrb[0].mxu0
        %520 = vmatprep.mubr.f32.mxu0 0.0
        %521 = vmatmul.mubr.f32.gmra.mrb[0].mxu0 %v331
        %v522 = vpop.f32.mrb[0].mxu0
        %v523 = vadd.f32 %v282, %v522
        %v524 = vpop.f32.mrb[0].mxu0
        %525 = vmatprep.mubr.f32.mxu0 0.0
        %526 = vmatmul.mubr.f32.gmra.mrb[0].mxu0 %v334
        %v527 = vpop.f32.mrb[0].mxu0
        %v528 = vadd.f32 %v282, %v527
        %v529 = vpop.f32.mrb[0].mxu0
        %530 = vmatprep.mubr.f32.mxu0 0.0
        %531 = vmatmul.mubr.f32.gmra.mrb[0].mxu0 %v337
        %v532 = vpop.f32.mrb[0].mxu0
        %v533 = vadd.f32 %v282, %v532
        %v534 = vpop.f32.mrb[0].mxu0
        %535 = vmatprep.mubr.f32.mxu0 0.0
        %536 = vmatmul.mubr.f32.gmra.mrb[0].mxu0 %v340
        %v537 = vpop.f32.mrb[0].mxu0
        %v538 = vadd.f32 %v282, %v537
        %v539 = vpop.f32.mrb[0].mxu0
        %540 = vmatprep.mubr.f32.mxu0 0.0
        %541 = vmatmul.mubr.f32.gmra.mrb[0].mxu0 %v343
        %v542 = vpop.f32.mrb[0].mxu0
        %v543 = vadd.f32 %v282, %v542
        %v544 = vpop.f32.mrb[0].mxu0
        %545 = vmatprep.mubr.f32.mxu0 0.0
        %546 = vmatmul.mubr.f32.gmra.mrb[0].mxu0 %v346
        %v547 = vpop.f32.mrb[0].mxu0
        %v548 = vadd.f32 %v282, %v547
        %v549 = vpop.f32.mrb[0].mxu0
        %550 = vmatprep.mubr.f32.mxu0 0.0
        %551 = vmatmul.mubr.f32.gmra.mrb[0].mxu0 %v349
        %v552 = vpop.f32.mrb[0].mxu0
        %v553 = vadd.f32 %v282, %v552
        %v554 = vpop.f32.mrb[0].mxu0
        %555 = vmatprep.mubr.f32.mxu0 0.0
        %556 = vmatmul.mubr.f32.gmra.mrb[0].mxu0 %v352
        %v557 = vpop.f32.mrb[0].mxu0
        %v558 = vadd.f32 %v282, %v557
        %v559 = vpop.f32.mrb[0].mxu0
        %560 = vmatprep.mubr.f32.mxu0 0.0
        %561 = vmatmul.mubr.f32.gmra.mrb[0].mxu0 %v355
        %v562 = vpop.f32.mrb[0].mxu0
        %v563 = vadd.f32 %v282, %v562
        %v564 = vpop.f32.mrb[0].mxu0
        %565 = vmatprep.mubr.f32.mxu0 0.0
        %566 = vmatmul.mubr.f32.gmra.mrb[0].mxu0 %v358
        %v567 = vpop.f32.mrb[0].mxu0
        %v568 = vadd.f32 %v282, %v567
        %v569 = vpop.f32.mrb[0].mxu0
        %570 = vmatprep.mubr.f32.mxu0 0.0
        %571 = vmatmul.mubr.f32.gmra.mrb[0].mxu0 %v361
        %v572 = vpop.f32.mrb[0].mxu0
        %v573 = vadd.f32 %v282, %v572
        %v574 = vpop.f32.mrb[0].mxu0
        %575 = vmatprep.mubr.f32.mxu0 0.0
        %576 = vmatmul.mubr.f32.gmra.mrb[0].mxu0 %v364
        %v577 = vpop.f32.mrb[0].mxu0
        %v578 = vadd.f32 %v282, %v577
        %v579 = vpop.f32.mrb[0].mxu0
        %580 = vmatprep.mubr.f32.mxu0 0.0
        %581 = vmatmul.mubr.f32.gmra.mrb[0].mxu0 %v367
        %v582 = vpop.f32.mrb[0].mxu0
        %v583 = vadd.f32 %v282, %v582
        %v584 = vpop.f32.mrb[0].mxu0
        %585 = vmatprep.mubr.f32.mxu0 0.0
        %586 = vmatmul.mubr.f32.gmra.mrb[0].mxu0 %v370
        %v587 = vpop.f32.mrb[0].mxu0
        %v588 = vadd.f32 %v282, %v587
        %v589 = vpop.f32.mrb[0].mxu0
        %590 = vmatprep.mubr.f32.mxu0 0.0
        %591 = vmatmul.mubr.f32.gmra.mrb[0].mxu0 %v373
        %v592 = vpop.f32.mrb[0].mxu0
        %v593 = vadd.f32 %v282, %v592
        %v594 = vpop.f32.mrb[0].mxu0
        %595 = vmatprep.mubr.f32.mxu0 0.0
        %596 = vmatmul.mubr.f32.gmra.mrb[0].mxu0 %v376
        %v597 = vpop.f32.mrb[0].mxu0
        %v598 = vadd.f32 %v282, %v597
        %v599 = vpop.f32.mrb[0].mxu0
        %600 = vmatprep.mubr.f32.mxu0 0.0
        %601 = vmatmul.mubr.f32.gmra.mrb[0].mxu0 %v379
        %v602 = vpop.f32.mrb[0].mxu0
        %v603 = vadd.f32 %v282, %v602
        %v604 = vpop.f32.mrb[0].mxu0
        %605 = vdwg.mxu0
        %v606 = vand.u32 2147483647, %v448
        %vm607 = vcmp.le.f32.partialorder %v606, 0.7853982
        %vm608 = vcmp.lt.s32.totalorder %v448, 0
        %v609 = vand.u32 %v448, 2139095040
        %v610 = vshrl.u32 %v609, 23
        %v611 = vsub.s32 %v610, 127
        %v612 = vand.u32 2147483647, %v448
        %v613 = vand.u32 %v612, 8388607
        %v614 = vor.u32 %v613, 8388608
        %v615 = vsub.s32 0, %v614
        %v616 = vadd.s32 %v611, 1
        %vm617 = vcmp.gt.s32.totalorder %v616, 0
        %v618 = vsel %vm617, %v616, 0
        %v619 = vshrl.u32 %v618, 5
        %v620 = vand.u32 %v618, 31
        %v621 = vsub.s32 32, %v620
        %v622 = vshrl.u32 683565275, %v621
        %v623 = vshll.u32 683565275, %v620
        %v624 = vshrl.u32 2475754826, %v621
        %v625 = vor.u32 %v623, %v624
        %v626 = vshll.u32 2475754826, %v620
        %v627 = vshrl.u32 2131351028, %v621
        %v628 = vor.u32 %v626, %v627
        %v629 = vshll.u32 2131351028, %v620
        %v630 = vshrl.u32 2102212464, %v621
        %v631 = vor.u32 %v629, %v630
        %v632 = vshll.u32 2102212464, %v620
        %v633 = vshrl.u32 920167782, %v621
        %v634 = vor.u32 %v632, %v633
        %v635 = vshll.u32 920167782, %v620
        %v636 = vshrl.u32 1326507024, %v621
        %v637 = vor.u32 %v635, %v636
        %vm638 = vcmp.lt.s32.totalorder %v619, 1
        %vm639 = vcmp.lt.s32.totalorder %v619, 2
        %vm640 = vcmp.lt.s32.totalorder %v619, 3
        %vm641 = vcmp.lt.s32.totalorder %v619, 4
        %v642 = vsel %vm638, %v622, %v625
        %v643 = vsel %vm641, %v631, 2102212464
        %v644 = vsel %vm640, %v628, %v643
        %v645 = vsel %vm639, %v642, %v644
        %v646 = vsel %vm638, %v625, %v628
        %v647 = vsel %vm641, %v634, 920167782
        %v648 = vsel %vm640, %v631, %v647
        %v649 = vsel %vm639, %v646, %v648
        %v650 = vsel %vm638, %v628, %v631
        %v651 = vsel %vm641, %v637, 1326507024
        %v652 = vsel %vm640, %v634, %v651
        %v653 = vsel %vm639, %v650, %v652
        %v654 = vshll.u32 %v614, 8
        %v655 = vmul.u32.u64.compose %v654, %v653
        %v656 = vextract.low.u32 %v655
        %v657 = vextract.high.u32 %v655
        %v658 = vmul.u32.u64.compose %v654, %v649
        %v659 = vextract.low.u32 %v658
        %v660 = vextract.high.u32 %v658
        %v661 = vmul.u32 %v654, %v645
        %v662 = vadd.s32 %v657, %v659
        %vm663 = vc.u32 %v657, %v659
        %v664 = vadd.s32 %v660, 1
        %v665 = vsel %vm663, %v664, %v660
        %v666 = vadd.s32 %v661, %v665
        %v667 = vadd.s32 %v666, 536870912
        %v668 = vshrl.u32 %v667, 30
        %v669 = vshll.u32 %v668, 30
        %v670 = vsub.s32 %v666, %v669
        %vm671 = vcmp.lt.s32.totalorder %v670, 0
        %v672 = vsub.s32 0, %v670
        %v673 = vsel %vm671, %v672, %v670
        %v674 = vclz %v673
        %v675 = vsub.s32 %v674, 2
        %vm676 = vcmp.gt.s32.totalorder 0, %v675
        %v677 = vsel %vm676, 0, %v675
        %v678 = vsub.s32 32, %v677
        %v679 = vshll.u32 %v670, %v677
        %v680 = vshrl.u32 %v662, %v678
        %v681 = vor.u32 %v679, %v680
        %v682 = vsub.s32 4294967266, %v677
        %v683 = vadd.s32 %v682, 127
        %v684 = vshll.u32 %v683, 23
        %v685 = vor.u32 4788187, %v684
        %v686 = vand.u32 2147483647, %v685
        %v688 = vcvt.s32.f32 %v681
        %v689 = vmul.f32 %v688, %v686
        %v690 = vxor.u32 %v689, 2147483648
        %v691 = vsel %vm608, %v690, %v689
        %v692 = vsub.s32 4, %v668
        %v693 = vsel %vm608, %v692, %v668
        %v694 = vsel %vm607, %v448, %v691
        %v695 = vsel %vm607, 0, %v693
        %v696 = vcosq.f32.pop %v694
        %v697 = vsinq.f32.pop %v694
        %vm698 = vweird.f32 %v448
        %v699 = vadd.s32 %v695, 3
        %v700 = vand.u32 %v699, 3
        %vm701 = vcmp.lt.s32.totalorder %v700, 2
        %vm702 = vcmp.eq.s32.totalorder %v700, 0
        %v703 = vxor.u32 %v697, 2147483648
        %v704 = vsel %vm702, %v696, %v703
        %vm705 = vcmp.eq.s32.totalorder %v700, 2
        %v706 = vxor.u32 %v696, 2147483648
        %v707 = vsel %vm705, %v706, %v697
        %v708 = vsel %vm701, %v704, %v707
        %v709 = vsel %vm698, nan, %v708
        %v710 = vand.u32 2147483647, %v453
        %vm711 = vcmp.le.f32.partialorder %v710, 0.7853982
        %vm712 = vcmp.lt.s32.totalorder %v453, 0
        %v713 = vand.u32 %v453, 2139095040
        %v714 = vshrl.u32 %v713, 23
        %v715 = vsub.s32 %v714, 127
        %v716 = vand.u32 2147483647, %v453
        %v717 = vand.u32 %v716, 8388607
        %v718 = vor.u32 %v717, 8388608
        %v719 = vsub.s32 0, %v718
        %v720 = vadd.s32 %v715, 1
        %vm721 = vcmp.gt.s32.totalorder %v720, 0
        %v722 = vsel %vm721, %v720, 0
        %v723 = vshrl.u32 %v722, 5
        %v724 = vand.u32 %v722, 31
        %v725 = vsub.s32 32, %v724
        %v726 = vshrl.u32 683565275, %v725
        %v727 = vshll.u32 683565275, %v724
        %v728 = vshrl.u32 2475754826, %v725
        %v729 = vor.u32 %v727, %v728
        %v730 = vshll.u32 2475754826, %v724
        %v731 = vshrl.u32 2131351028, %v725
        %v732 = vor.u32 %v730, %v731
        %v733 = vshll.u32 2131351028, %v724
        %v734 = vshrl.u32 2102212464, %v725
        %v735 = vor.u32 %v733, %v734
        %v736 = vshll.u32 2102212464, %v724
        %v737 = vshrl.u32 920167782, %v725
        %v738 = vor.u32 %v736, %v737
        %v739 = vshll.u32 920167782, %v724
        %v740 = vshrl.u32 1326507024, %v725
        %v741 = vor.u32 %v739, %v740
        %vm742 = vcmp.lt.s32.totalorder %v723, 1
        %vm743 = vcmp.lt.s32.totalorder %v723, 2
        %vm744 = vcmp.lt.s32.totalorder %v723, 3
        %vm745 = vcmp.lt.s32.totalorder %v723, 4
        %v746 = vsel %vm742, %v726, %v729
        %v747 = vsel %vm745, %v735, 2102212464
        %v748 = vsel %vm744, %v732, %v747
        %v749 = vsel %vm743, %v746, %v748
        %v750 = vsel %vm742, %v729, %v732
        %v751 = vsel %vm745, %v738, 920167782
        %v752 = vsel %vm744, %v735, %v751
        %v753 = vsel %vm743, %v750, %v752
        %v754 = vsel %vm742, %v732, %v735
        %v755 = vsel %vm745, %v741, 1326507024
        %v756 = vsel %vm744, %v738, %v755
        %v757 = vsel %vm743, %v754, %v756
        %v758 = vshll.u32 %v718, 8
        %v759 = vmul.u32.u64.compose %v758, %v757
        %v760 = vextract.low.u32 %v759
        %v761 = vextract.high.u32 %v759
        %v762 = vmul.u32.u64.compose %v758, %v753
        %v763 = vextract.low.u32 %v762
        %v764 = vextract.high.u32 %v762
        %v765 = vmul.u32 %v758, %v749
        %v766 = vadd.s32 %v761, %v763
        %vm767 = vc.u32 %v761, %v763
        %v768 = vadd.s32 %v764, 1
        %v769 = vsel %vm767, %v768, %v764
        %v770 = vadd.s32 %v765, %v769
        %v771 = vadd.s32 %v770, 536870912
        %v772 = vshrl.u32 %v771, 30
        %v773 = vshll.u32 %v772, 30
        %v774 = vsub.s32 %v770, %v773
        %vm775 = vcmp.lt.s32.totalorder %v774, 0
        %v776 = vsub.s32 0, %v774
        %v777 = vsel %vm775, %v776, %v774
        %v778 = vclz %v777
        %v779 = vsub.s32 %v778, 2
        %vm780 = vcmp.gt.s32.totalorder 0, %v779
        %v781 = vsel %vm780, 0, %v779
        %v782 = vsub.s32 32, %v781
        %v783 = vshll.u32 %v774, %v781
        %v784 = vshrl.u32 %v766, %v782
        %v785 = vor.u32 %v783, %v784
        %v786 = vsub.s32 4294967266, %v781
        %v787 = vadd.s32 %v786, 127
        %v788 = vshll.u32 %v787, 23
        %v789 = vor.u32 4788187, %v788
        %v790 = vand.u32 2147483647, %v789
        %v792 = vcvt.s32.f32 %v785
        %v793 = vmul.f32 %v792, %v790
        %v794 = vxor.u32 %v793, 2147483648
        %v795 = vsel %vm712, %v794, %v793
        %v796 = vsub.s32 4, %v772
        %v797 = vsel %vm712, %v796, %v772
        %v798 = vsel %vm711, %v453, %v795
        %v799 = vsel %vm711, 0, %v797
        %v800 = vcosq.f32.pop %v798
        %v801 = vsinq.f32.pop %v798
        %vm802 = vweird.f32 %v453
        %v803 = vadd.s32 %v799, 3
        %v804 = vand.u32 %v803, 3
        %vm805 = vcmp.lt.s32.totalorder %v804, 2
        %vm806 = vcmp.eq.s32.totalorder %v804, 0
        %v807 = vxor.u32 %v801, 2147483648
        %v808 = vsel %vm806, %v800, %v807
        %vm809 = vcmp.eq.s32.totalorder %v804, 2
        %v810 = vxor.u32 %v800, 2147483648
        %v811 = vsel %vm809, %v810, %v801
        %v812 = vsel %vm805, %v808, %v811
        %v813 = vsel %vm802, nan, %v812
        %v814 = vand.u32 2147483647, %v458
        %vm815 = vcmp.le.f32.partialorder %v814, 0.7853982
        %vm816 = vcmp.lt.s32.totalorder %v458, 0
        %v817 = vand.u32 %v458, 2139095040
        %v818 = vshrl.u32 %v817, 23
        %v819 = vsub.s32 %v818, 127
        %v820 = vand.u32 2147483647, %v458
        %v821 = vand.u32 %v820, 8388607
        %v822 = vor.u32 %v821, 8388608
        %v823 = vsub.s32 0, %v822
        %v824 = vadd.s32 %v819, 1
        %vm825 = vcmp.gt.s32.totalorder %v824, 0
        %v826 = vsel %vm825, %v824, 0
        %v827 = vshrl.u32 %v826, 5
        %v828 = vand.u32 %v826, 31
        %v829 = vsub.s32 32, %v828
        %v830 = vshrl.u32 683565275, %v829
        %v831 = vshll.u32 683565275, %v828
        %v832 = vshrl.u32 2475754826, %v829
        %v833 = vor.u32 %v831, %v832
        %v834 = vshll.u32 2475754826, %v828
        %v835 = vshrl.u32 2131351028, %v829
        %v836 = vor.u32 %v834, %v835
        %v837 = vshll.u32 2131351028, %v828
        %v838 = vshrl.u32 2102212464, %v829
        %v839 = vor.u32 %v837, %v838
        %v840 = vshll.u32 2102212464, %v828
        %v841 = vshrl.u32 920167782, %v829
        %v842 = vor.u32 %v840, %v841
        %v843 = vshll.u32 920167782, %v828
        %v844 = vshrl.u32 1326507024, %v829
        %v845 = vor.u32 %v843, %v844
        %vm846 = vcmp.lt.s32.totalorder %v827, 1
        %vm847 = vcmp.lt.s32.totalorder %v827, 2
        %vm848 = vcmp.lt.s32.totalorder %v827, 3
        %vm849 = vcmp.lt.s32.totalorder %v827, 4
        %v850 = vsel %vm846, %v830, %v833
        %v851 = vsel %vm849, %v839, 2102212464
        %v852 = vsel %vm848, %v836, %v851
        %v853 = vsel %vm847, %v850, %v852
        %v854 = vsel %vm846, %v833, %v836
        %v855 = vsel %vm849, %v842, 920167782
        %v856 = vsel %vm848, %v839, %v855
        %v857 = vsel %vm847, %v854, %v856
        %v858 = vsel %vm846, %v836, %v839
        %v859 = vsel %vm849, %v845, 1326507024
        %v860 = vsel %vm848, %v842, %v859
        %v861 = vsel %vm847, %v858, %v860
        %v862 = vshll.u32 %v822, 8
        %v863 = vmul.u32.u64.compose %v862, %v861
        %v864 = vextract.low.u32 %v863
        %v865 = vextract.high.u32 %v863
        %v866 = vmul.u32.u64.compose %v862, %v857
        %v867 = vextract.low.u32 %v866
        %v868 = vextract.high.u32 %v866
        %v869 = vmul.u32 %v862, %v853
        %v870 = vadd.s32 %v865, %v867
        %vm871 = vc.u32 %v865, %v867
        %v872 = vadd.s32 %v868, 1
        %v873 = vsel %vm871, %v872, %v868
        %v874 = vadd.s32 %v869, %v873
        %v875 = vadd.s32 %v874, 536870912
        %v876 = vshrl.u32 %v875, 30
        %v877 = vshll.u32 %v876, 30
        %v878 = vsub.s32 %v874, %v877
        %vm879 = vcmp.lt.s32.totalorder %v878, 0
        %v880 = vsub.s32 0, %v878
        %v881 = vsel %vm879, %v880, %v878
        %v882 = vclz %v881
        %v883 = vsub.s32 %v882, 2
        %vm884 = vcmp.gt.s32.totalorder 0, %v883
        %v885 = vsel %vm884, 0, %v883
        %v886 = vsub.s32 32, %v885
        %v887 = vshll.u32 %v878, %v885
        %v888 = vshrl.u32 %v870, %v886
        %v889 = vor.u32 %v887, %v888
        %v890 = vsub.s32 4294967266, %v885
        %v891 = vadd.s32 %v890, 127
        %v892 = vshll.u32 %v891, 23
        %v893 = vor.u32 4788187, %v892
        %v894 = vand.u32 2147483647, %v893
        %v896 = vcvt.s32.f32 %v889
        %v897 = vmul.f32 %v896, %v894
        %v898 = vxor.u32 %v897, 2147483648
        %v899 = vsel %vm816, %v898, %v897
        %v900 = vsub.s32 4, %v876
        %v901 = vsel %vm816, %v900, %v876
        %v902 = vsel %vm815, %v458, %v899
        %v903 = vsel %vm815, 0, %v901
        %v904 = vcosq.f32.pop %v902
        %v905 = vsinq.f32.pop %v902
        %vm906 = vweird.f32 %v458
        %v907 = vadd.s32 %v903, 3
        %v908 = vand.u32 %v907, 3
        %vm909 = vcmp.lt.s32.totalorder %v908, 2
        %vm910 = vcmp.eq.s32.totalorder %v908, 0
        %v911 = vxor.u32 %v905, 2147483648
        %v912 = vsel %vm910, %v904, %v911
        %vm913 = vcmp.eq.s32.totalorder %v908, 2
        %v914 = vxor.u32 %v904, 2147483648
        %v915 = vsel %vm913, %v914, %v905
        %v916 = vsel %vm909, %v912, %v915
        %v917 = vsel %vm906, nan, %v916
        %v918 = vand.u32 2147483647, %v463
        %vm919 = vcmp.le.f32.partialorder %v918, 0.7853982
        %vm920 = vcmp.lt.s32.totalorder %v463, 0
        %v921 = vand.u32 %v463, 2139095040
        %v922 = vshrl.u32 %v921, 23
        %v923 = vsub.s32 %v922, 127
        %v924 = vand.u32 2147483647, %v463
        %v925 = vand.u32 %v924, 8388607
        %v926 = vor.u32 %v925, 8388608
        %v927 = vsub.s32 0, %v926
        %v928 = vadd.s32 %v923, 1
        %vm929 = vcmp.gt.s32.totalorder %v928, 0
        %v930 = vsel %vm929, %v928, 0
        %v931 = vshrl.u32 %v930, 5
        %v932 = vand.u32 %v930, 31
        %v933 = vsub.s32 32, %v932
        %v934 = vshrl.u32 683565275, %v933
        %v935 = vshll.u32 683565275, %v932
        %v936 = vshrl.u32 2475754826, %v933
        %v937 = vor.u32 %v935, %v936
        %v938 = vshll.u32 2475754826, %v932
        %v939 = vshrl.u32 2131351028, %v933
        %v940 = vor.u32 %v938, %v939
        %v941 = vshll.u32 2131351028, %v932
        %v942 = vshrl.u32 2102212464, %v933
        %v943 = vor.u32 %v941, %v942
        %v944 = vshll.u32 2102212464, %v932
        %v945 = vshrl.u32 920167782, %v933
        %v946 = vor.u32 %v944, %v945
        %v947 = vshll.u32 920167782, %v932
        %v948 = vshrl.u32 1326507024, %v933
        %v949 = vor.u32 %v947, %v948
        %vm950 = vcmp.lt.s32.totalorder %v931, 1
        %vm951 = vcmp.lt.s32.totalorder %v931, 2
        %vm952 = vcmp.lt.s32.totalorder %v931, 3
        %vm953 = vcmp.lt.s32.totalorder %v931, 4
        %v954 = vsel %vm950, %v934, %v937
        %v955 = vsel %vm953, %v943, 2102212464
        %v956 = vsel %vm952, %v940, %v955
        %v957 = vsel %vm951, %v954, %v956
        %v958 = vsel %vm950, %v937, %v940
        %v959 = vsel %vm953, %v946, 920167782
        %v960 = vsel %vm952, %v943, %v959
        %v961 = vsel %vm951, %v958, %v960
        %v962 = vsel %vm950, %v940, %v943
        %v963 = vsel %vm953, %v949, 1326507024
        %v964 = vsel %vm952, %v946, %v963
        %v965 = vsel %vm951, %v962, %v964
        %v966 = vshll.u32 %v926, 8
        %v967 = vmul.u32.u64.compose %v966, %v965
        %v968 = vextract.low.u32 %v967
        %v969 = vextract.high.u32 %v967
        %v970 = vmul.u32.u64.compose %v966, %v961
        %v971 = vextract.low.u32 %v970
        %v972 = vextract.high.u32 %v970
        %v973 = vmul.u32 %v966, %v957
        %v974 = vadd.s32 %v969, %v971
        %vm975 = vc.u32 %v969, %v971
        %v976 = vadd.s32 %v972, 1
        %v977 = vsel %vm975, %v976, %v972
        %v978 = vadd.s32 %v973, %v977
        %v979 = vadd.s32 %v978, 536870912
        %v980 = vshrl.u32 %v979, 30
        %v981 = vshll.u32 %v980, 30
        %v982 = vsub.s32 %v978, %v981
        %vm983 = vcmp.lt.s32.totalorder %v982, 0
        %v984 = vsub.s32 0, %v982
        %v985 = vsel %vm983, %v984, %v982
        %v986 = vclz %v985
        %v987 = vsub.s32 %v986, 2
        %vm988 = vcmp.gt.s32.totalorder 0, %v987
        %v989 = vsel %vm988, 0, %v987
        %v990 = vsub.s32 32, %v989
        %v991 = vshll.u32 %v982, %v989
        %v992 = vshrl.u32 %v974, %v990
        %v993 = vor.u32 %v991, %v992
        %v994 = vsub.s32 4294967266, %v989
        %v995 = vadd.s32 %v994, 127
        %v996 = vshll.u32 %v995, 23
        %v997 = vor.u32 4788187, %v996
        %v998 = vand.u32 2147483647, %v997
        %v1000 = vcvt.s32.f32 %v993
        %v1001 = vmul.f32 %v1000, %v998
        %v1002 = vxor.u32 %v1001, 2147483648
        %v1003 = vsel %vm920, %v1002, %v1001
        %v1004 = vsub.s32 4, %v980
        %v1005 = vsel %vm920, %v1004, %v980
        %v1006 = vsel %vm919, %v463, %v1003
        %v1007 = vsel %vm919, 0, %v1005
        %v1008 = vcosq.f32.pop %v1006
        %v1009 = vsinq.f32.pop %v1006
        %vm1010 = vweird.f32 %v463
        %v1011 = vadd.s32 %v1007, 3
        %v1012 = vand.u32 %v1011, 3
        %vm1013 = vcmp.lt.s32.totalorder %v1012, 2
        %vm1014 = vcmp.eq.s32.totalorder %v1012, 0
        %v1015 = vxor.u32 %v1009, 2147483648
        %v1016 = vsel %vm1014, %v1008, %v1015
        %vm1017 = vcmp.eq.s32.totalorder %v1012, 2
        %v1018 = vxor.u32 %v1008, 2147483648
        %v1019 = vsel %vm1017, %v1018, %v1009
        %v1020 = vsel %vm1013, %v1016, %v1019
        %v1021 = vsel %vm1010, nan, %v1020
        %v1022 = vand.u32 2147483647, %v468
        %vm1023 = vcmp.le.f32.partialorder %v1022, 0.7853982
        %vm1024 = vcmp.lt.s32.totalorder %v468, 0
        %v1025 = vand.u32 %v468, 2139095040
        %v1026 = vshrl.u32 %v1025, 23
        %v1027 = vsub.s32 %v1026, 127
        %v1028 = vand.u32 2147483647, %v468
        %v1029 = vand.u32 %v1028, 8388607
        %v1030 = vor.u32 %v1029, 8388608
        %v1031 = vsub.s32 0, %v1030
        %v1032 = vadd.s32 %v1027, 1
        %vm1033 = vcmp.gt.s32.totalorder %v1032, 0
        %v1034 = vsel %vm1033, %v1032, 0
        %v1035 = vshrl.u32 %v1034, 5
        %v1036 = vand.u32 %v1034, 31
        %v1037 = vsub.s32 32, %v1036
        %v1038 = vshrl.u32 683565275, %v1037
        %v1039 = vshll.u32 683565275, %v1036
        %v1040 = vshrl.u32 2475754826, %v1037
        %v1041 = vor.u32 %v1039, %v1040
        %v1042 = vshll.u32 2475754826, %v1036
        %v1043 = vshrl.u32 2131351028, %v1037
        %v1044 = vor.u32 %v1042, %v1043
        %v1045 = vshll.u32 2131351028, %v1036
        %v1046 = vshrl.u32 2102212464, %v1037
        %v1047 = vor.u32 %v1045, %v1046
        %v1048 = vshll.u32 2102212464, %v1036
        %v1049 = vshrl.u32 920167782, %v1037
        %v1050 = vor.u32 %v1048, %v1049
        %v1051 = vshll.u32 920167782, %v1036
        %v1052 = vshrl.u32 1326507024, %v1037
        %v1053 = vor.u32 %v1051, %v1052
        %vm1054 = vcmp.lt.s32.totalorder %v1035, 1
        %vm1055 = vcmp.lt.s32.totalorder %v1035, 2
        %vm1056 = vcmp.lt.s32.totalorder %v1035, 3
        %vm1057 = vcmp.lt.s32.totalorder %v1035, 4
        %v1058 = vsel %vm1054, %v1038, %v1041
        %v1059 = vsel %vm1057, %v1047, 2102212464
        %v1060 = vsel %vm1056, %v1044, %v1059
        %v1061 = vsel %vm1055, %v1058, %v1060
        %v1062 = vsel %vm1054, %v1041, %v1044
        %v1063 = vsel %vm1057, %v1050, 920167782
        %v1064 = vsel %vm1056, %v1047, %v1063
        %v1065 = vsel %vm1055, %v1062, %v1064
        %v1066 = vsel %vm1054, %v1044, %v1047
        %v1067 = vsel %vm1057, %v1053, 1326507024
        %v1068 = vsel %vm1056, %v1050, %v1067
        %v1069 = vsel %vm1055, %v1066, %v1068
        %v1070 = vshll.u32 %v1030, 8
        %v1071 = vmul.u32.u64.compose %v1070, %v1069
        %v1072 = vextract.low.u32 %v1071
        %v1073 = vextract.high.u32 %v1071
        %v1074 = vmul.u32.u64.compose %v1070, %v1065
        %v1075 = vextract.low.u32 %v1074
        %v1076 = vextract.high.u32 %v1074
        %v1077 = vmul.u32 %v1070, %v1061
        %v1078 = vadd.s32 %v1073, %v1075
        %vm1079 = vc.u32 %v1073, %v1075
        %v1080 = vadd.s32 %v1076, 1
        %v1081 = vsel %vm1079, %v1080, %v1076
        %v1082 = vadd.s32 %v1077, %v1081
        %v1083 = vadd.s32 %v1082, 536870912
        %v1084 = vshrl.u32 %v1083, 30
        %v1085 = vshll.u32 %v1084, 30
        %v1086 = vsub.s32 %v1082, %v1085
        %vm1087 = vcmp.lt.s32.totalorder %v1086, 0
        %v1088 = vsub.s32 0, %v1086
        %v1089 = vsel %vm1087, %v1088, %v1086
        %v1090 = vclz %v1089
        %v1091 = vsub.s32 %v1090, 2
        %vm1092 = vcmp.gt.s32.totalorder 0, %v1091
        %v1093 = vsel %vm1092, 0, %v1091
        %v1094 = vsub.s32 32, %v1093
        %v1095 = vshll.u32 %v1086, %v1093
        %v1096 = vshrl.u32 %v1078, %v1094
        %v1097 = vor.u32 %v1095, %v1096
        %v1098 = vsub.s32 4294967266, %v1093
        %v1099 = vadd.s32 %v1098, 127
        %v1100 = vshll.u32 %v1099, 23
        %v1101 = vor.u32 4788187, %v1100
        %v1102 = vand.u32 2147483647, %v1101
        %v1104 = vcvt.s32.f32 %v1097
        %v1105 = vmul.f32 %v1104, %v1102
        %v1106 = vxor.u32 %v1105, 2147483648
        %v1107 = vsel %vm1024, %v1106, %v1105
        %v1108 = vsub.s32 4, %v1084
        %v1109 = vsel %vm1024, %v1108, %v1084
        %v1110 = vsel %vm1023, %v468, %v1107
        %v1111 = vsel %vm1023, 0, %v1109
        %v1112 = vcosq.f32.pop %v1110
        %v1113 = vsinq.f32.pop %v1110
        %vm1114 = vweird.f32 %v468
        %v1115 = vadd.s32 %v1111, 3
        %v1116 = vand.u32 %v1115, 3
        %vm1117 = vcmp.lt.s32.totalorder %v1116, 2
        %vm1118 = vcmp.eq.s32.totalorder %v1116, 0
        %v1119 = vxor.u32 %v1113, 2147483648
        %v1120 = vsel %vm1118, %v1112, %v1119
        %vm1121 = vcmp.eq.s32.totalorder %v1116, 2
        %v1122 = vxor.u32 %v1112, 2147483648
        %v1123 = vsel %vm1121, %v1122, %v1113
        %v1124 = vsel %vm1117, %v1120, %v1123
        %v1125 = vsel %vm1114, nan, %v1124
        %v1126 = vand.u32 2147483647, %v473
        %vm1127 = vcmp.le.f32.partialorder %v1126, 0.7853982
        %vm1128 = vcmp.lt.s32.totalorder %v473, 0
        %v1129 = vand.u32 %v473, 2139095040
        %v1130 = vshrl.u32 %v1129, 23
        %v1131 = vsub.s32 %v1130, 127
        %v1132 = vand.u32 2147483647, %v473
        %v1133 = vand.u32 %v1132, 8388607
        %v1134 = vor.u32 %v1133, 8388608
        %v1135 = vsub.s32 0, %v1134
        %v1136 = vadd.s32 %v1131, 1
        %vm1137 = vcmp.gt.s32.totalorder %v1136, 0
        %v1138 = vsel %vm1137, %v1136, 0
        %v1139 = vshrl.u32 %v1138, 5
        %v1140 = vand.u32 %v1138, 31
        %v1141 = vsub.s32 32, %v1140
        %v1142 = vshrl.u32 683565275, %v1141
        %v1143 = vshll.u32 683565275, %v1140
        %v1144 = vshrl.u32 2475754826, %v1141
        %v1145 = vor.u32 %v1143, %v1144
        %v1146 = vshll.u32 2475754826, %v1140
        %v1147 = vshrl.u32 2131351028, %v1141
        %v1148 = vor.u32 %v1146, %v1147
        %v1149 = vshll.u32 2131351028, %v1140
        %v1150 = vshrl.u32 2102212464, %v1141
        %v1151 = vor.u32 %v1149, %v1150
        %v1152 = vshll.u32 2102212464, %v1140
        %v1153 = vshrl.u32 920167782, %v1141
        %v1154 = vor.u32 %v1152, %v1153
        %v1155 = vshll.u32 920167782, %v1140
        %v1156 = vshrl.u32 1326507024, %v1141
        %v1157 = vor.u32 %v1155, %v1156
        %vm1158 = vcmp.lt.s32.totalorder %v1139, 1
        %vm1159 = vcmp.lt.s32.totalorder %v1139, 2
        %vm1160 = vcmp.lt.s32.totalorder %v1139, 3
        %vm1161 = vcmp.lt.s32.totalorder %v1139, 4
        %v1162 = vsel %vm1158, %v1142, %v1145
        %v1163 = vsel %vm1161, %v1151, 2102212464
        %v1164 = vsel %vm1160, %v1148, %v1163
        %v1165 = vsel %vm1159, %v1162, %v1164
        %v1166 = vsel %vm1158, %v1145, %v1148
        %v1167 = vsel %vm1161, %v1154, 920167782
        %v1168 = vsel %vm1160, %v1151, %v1167
        %v1169 = vsel %vm1159, %v1166, %v1168
        %v1170 = vsel %vm1158, %v1148, %v1151
        %v1171 = vsel %vm1161, %v1157, 1326507024
        %v1172 = vsel %vm1160, %v1154, %v1171
        %v1173 = vsel %vm1159, %v1170, %v1172
        %v1174 = vshll.u32 %v1134, 8
        %v1175 = vmul.u32.u64.compose %v1174, %v1173
        %v1176 = vextract.low.u32 %v1175
        %v1177 = vextract.high.u32 %v1175
        %v1178 = vmul.u32.u64.compose %v1174, %v1169
        %v1179 = vextract.low.u32 %v1178
        %v1180 = vextract.high.u32 %v1178
        %v1181 = vmul.u32 %v1174, %v1165
        %v1182 = vadd.s32 %v1177, %v1179
        %vm1183 = vc.u32 %v1177, %v1179
        %v1184 = vadd.s32 %v1180, 1
        %v1185 = vsel %vm1183, %v1184, %v1180
        %v1186 = vadd.s32 %v1181, %v1185
        %v1187 = vadd.s32 %v1186, 536870912
        %v1188 = vshrl.u32 %v1187, 30
        %v1189 = vshll.u32 %v1188, 30
        %v1190 = vsub.s32 %v1186, %v1189
        %vm1191 = vcmp.lt.s32.totalorder %v1190, 0
        %v1192 = vsub.s32 0, %v1190
        %v1193 = vsel %vm1191, %v1192, %v1190
        %v1194 = vclz %v1193
        %v1195 = vsub.s32 %v1194, 2
        %vm1196 = vcmp.gt.s32.totalorder 0, %v1195
        %v1197 = vsel %vm1196, 0, %v1195
        %v1198 = vsub.s32 32, %v1197
        %v1199 = vshll.u32 %v1190, %v1197
        %v1200 = vshrl.u32 %v1182, %v1198
        %v1201 = vor.u32 %v1199, %v1200
        %v1202 = vsub.s32 4294967266, %v1197
        %v1203 = vadd.s32 %v1202, 127
        %v1204 = vshll.u32 %v1203, 23
        %v1205 = vor.u32 4788187, %v1204
        %v1206 = vand.u32 2147483647, %v1205
        %v1208 = vcvt.s32.f32 %v1201
        %v1209 = vmul.f32 %v1208, %v1206
        %v1210 = vxor.u32 %v1209, 2147483648
        %v1211 = vsel %vm1128, %v1210, %v1209
        %v1212 = vsub.s32 4, %v1188
        %v1213 = vsel %vm1128, %v1212, %v1188
        %v1214 = vsel %vm1127, %v473, %v1211
        %v1215 = vsel %vm1127, 0, %v1213
        %v1216 = vcosq.f32.pop %v1214
        %v1217 = vsinq.f32.pop %v1214
        %vm1218 = vweird.f32 %v473
        %v1219 = vadd.s32 %v1215, 3
        %v1220 = vand.u32 %v1219, 3
        %vm1221 = vcmp.lt.s32.totalorder %v1220, 2
        %vm1222 = vcmp.eq.s32.totalorder %v1220, 0
        %v1223 = vxor.u32 %v1217, 2147483648
        %v1224 = vsel %vm1222, %v1216, %v1223
        %vm1225 = vcmp.eq.s32.totalorder %v1220, 2
        %v1226 = vxor.u32 %v1216, 2147483648
        %v1227 = vsel %vm1225, %v1226, %v1217
        %v1228 = vsel %vm1221, %v1224, %v1227
        %v1229 = vsel %vm1218, nan, %v1228
        %v1230 = vand.u32 2147483647, %v478
        %vm1231 = vcmp.le.f32.partialorder %v1230, 0.7853982
        %vm1232 = vcmp.lt.s32.totalorder %v478, 0
        %v1233 = vand.u32 %v478, 2139095040
        %v1234 = vshrl.u32 %v1233, 23
        %v1235 = vsub.s32 %v1234, 127
        %v1236 = vand.u32 2147483647, %v478
        %v1237 = vand.u32 %v1236, 8388607
        %v1238 = vor.u32 %v1237, 8388608
        %v1239 = vsub.s32 0, %v1238
        %v1240 = vadd.s32 %v1235, 1
        %vm1241 = vcmp.gt.s32.totalorder %v1240, 0
        %v1242 = vsel %vm1241, %v1240, 0
        %v1243 = vshrl.u32 %v1242, 5
        %v1244 = vand.u32 %v1242, 31
        %v1245 = vsub.s32 32, %v1244
        %v1246 = vshrl.u32 683565275, %v1245
        %v1247 = vshll.u32 683565275, %v1244
        %v1248 = vshrl.u32 2475754826, %v1245
        %v1249 = vor.u32 %v1247, %v1248
        %v1250 = vshll.u32 2475754826, %v1244
        %v1251 = vshrl.u32 2131351028, %v1245
        %v1252 = vor.u32 %v1250, %v1251
        %v1253 = vshll.u32 2131351028, %v1244
        %v1254 = vshrl.u32 2102212464, %v1245
        %v1255 = vor.u32 %v1253, %v1254
        %v1256 = vshll.u32 2102212464, %v1244
        %v1257 = vshrl.u32 920167782, %v1245
        %v1258 = vor.u32 %v1256, %v1257
        %v1259 = vshll.u32 920167782, %v1244
        %v1260 = vshrl.u32 1326507024, %v1245
        %v1261 = vor.u32 %v1259, %v1260
        %vm1262 = vcmp.lt.s32.totalorder %v1243, 1
        %vm1263 = vcmp.lt.s32.totalorder %v1243, 2
        %vm1264 = vcmp.lt.s32.totalorder %v1243, 3
        %vm1265 = vcmp.lt.s32.totalorder %v1243, 4
        %v1266 = vsel %vm1262, %v1246, %v1249
        %v1267 = vsel %vm1265, %v1255, 2102212464
        %v1268 = vsel %vm1264, %v1252, %v1267
        %v1269 = vsel %vm1263, %v1266, %v1268
        %v1270 = vsel %vm1262, %v1249, %v1252
        %v1271 = vsel %vm1265, %v1258, 920167782
        %v1272 = vsel %vm1264, %v1255, %v1271
        %v1273 = vsel %vm1263, %v1270, %v1272
        %v1274 = vsel %vm1262, %v1252, %v1255
        %v1275 = vsel %vm1265, %v1261, 1326507024
        %v1276 = vsel %vm1264, %v1258, %v1275
        %v1277 = vsel %vm1263, %v1274, %v1276
        %v1278 = vshll.u32 %v1238, 8
        %v1279 = vmul.u32.u64.compose %v1278, %v1277
        %v1280 = vextract.low.u32 %v1279
        %v1281 = vextract.high.u32 %v1279
        %v1282 = vmul.u32.u64.compose %v1278, %v1273
        %v1283 = vextract.low.u32 %v1282
        %v1284 = vextract.high.u32 %v1282
        %v1285 = vmul.u32 %v1278, %v1269
        %v1286 = vadd.s32 %v1281, %v1283
        %vm1287 = vc.u32 %v1281, %v1283
        %v1288 = vadd.s32 %v1284, 1
        %v1289 = vsel %vm1287, %v1288, %v1284
        %v1290 = vadd.s32 %v1285, %v1289
        %v1291 = vadd.s32 %v1290, 536870912
        %v1292 = vshrl.u32 %v1291, 30
        %v1293 = vshll.u32 %v1292, 30
        %v1294 = vsub.s32 %v1290, %v1293
        %vm1295 = vcmp.lt.s32.totalorder %v1294, 0
        %v1296 = vsub.s32 0, %v1294
        %v1297 = vsel %vm1295, %v1296, %v1294
        %v1298 = vclz %v1297
        %v1299 = vsub.s32 %v1298, 2
        %vm1300 = vcmp.gt.s32.totalorder 0, %v1299
        %v1301 = vsel %vm1300, 0, %v1299
        %v1302 = vsub.s32 32, %v1301
        %v1303 = vshll.u32 %v1294, %v1301
        %v1304 = vshrl.u32 %v1286, %v1302
        %v1305 = vor.u32 %v1303, %v1304
        %v1306 = vsub.s32 4294967266, %v1301
        %v1307 = vadd.s32 %v1306, 127
        %v1308 = vshll.u32 %v1307, 23
        %v1309 = vor.u32 4788187, %v1308
        %v1310 = vand.u32 2147483647, %v1309
        %v1312 = vcvt.s32.f32 %v1305
        %v1313 = vmul.f32 %v1312, %v1310
        %v1314 = vxor.u32 %v1313, 2147483648
        %v1315 = vsel %vm1232, %v1314, %v1313
        %v1316 = vsub.s32 4, %v1292
        %v1317 = vsel %vm1232, %v1316, %v1292
        %v1318 = vsel %vm1231, %v478, %v1315
        %v1319 = vsel %vm1231, 0, %v1317
        %v1320 = vcosq.f32.pop %v1318
        %v1321 = vsinq.f32.pop %v1318
        %vm1322 = vweird.f32 %v478
        %v1323 = vadd.s32 %v1319, 3
        %v1324 = vand.u32 %v1323, 3
        %vm1325 = vcmp.lt.s32.totalorder %v1324, 2
        %vm1326 = vcmp.eq.s32.totalorder %v1324, 0
        %v1327 = vxor.u32 %v1321, 2147483648
        %v1328 = vsel %vm1326, %v1320, %v1327
        %vm1329 = vcmp.eq.s32.totalorder %v1324, 2
        %v1330 = vxor.u32 %v1320, 2147483648
        %v1331 = vsel %vm1329, %v1330, %v1321
        %v1332 = vsel %vm1325, %v1328, %v1331
        %v1333 = vsel %vm1322, nan, %v1332
        %v1334 = vand.u32 2147483647, %v483
        %vm1335 = vcmp.le.f32.partialorder %v1334, 0.7853982
        %vm1336 = vcmp.lt.s32.totalorder %v483, 0
        %v1337 = vand.u32 %v483, 2139095040
        %v1338 = vshrl.u32 %v1337, 23
        %v1339 = vsub.s32 %v1338, 127
        %v1340 = vand.u32 2147483647, %v483
        %v1341 = vand.u32 %v1340, 8388607
        %v1342 = vor.u32 %v1341, 8388608
        %v1343 = vsub.s32 0, %v1342
        %v1344 = vadd.s32 %v1339, 1
        %vm1345 = vcmp.gt.s32.totalorder %v1344, 0
        %v1346 = vsel %vm1345, %v1344, 0
        %v1347 = vshrl.u32 %v1346, 5
        %v1348 = vand.u32 %v1346, 31
        %v1349 = vsub.s32 32, %v1348
        %v1350 = vshrl.u32 683565275, %v1349
        %v1351 = vshll.u32 683565275, %v1348
        %v1352 = vshrl.u32 2475754826, %v1349
        %v1353 = vor.u32 %v1351, %v1352
        %v1354 = vshll.u32 2475754826, %v1348
        %v1355 = vshrl.u32 2131351028, %v1349
        %v1356 = vor.u32 %v1354, %v1355
        %v1357 = vshll.u32 2131351028, %v1348
        %v1358 = vshrl.u32 2102212464, %v1349
        %v1359 = vor.u32 %v1357, %v1358
        %v1360 = vshll.u32 2102212464, %v1348
        %v1361 = vshrl.u32 920167782, %v1349
        %v1362 = vor.u32 %v1360, %v1361
        %v1363 = vshll.u32 920167782, %v1348
        %v1364 = vshrl.u32 1326507024, %v1349
        %v1365 = vor.u32 %v1363, %v1364
        %vm1366 = vcmp.lt.s32.totalorder %v1347, 1
        %vm1367 = vcmp.lt.s32.totalorder %v1347, 2
        %vm1368 = vcmp.lt.s32.totalorder %v1347, 3
        %vm1369 = vcmp.lt.s32.totalorder %v1347, 4
        %v1370 = vsel %vm1366, %v1350, %v1353
        %v1371 = vsel %vm1369, %v1359, 2102212464
        %v1372 = vsel %vm1368, %v1356, %v1371
        %v1373 = vsel %vm1367, %v1370, %v1372
        %v1374 = vsel %vm1366, %v1353, %v1356
        %v1375 = vsel %vm1369, %v1362, 920167782
        %v1376 = vsel %vm1368, %v1359, %v1375
        %v1377 = vsel %vm1367, %v1374, %v1376
        %v1378 = vsel %vm1366, %v1356, %v1359
        %v1379 = vsel %vm1369, %v1365, 1326507024
        %v1380 = vsel %vm1368, %v1362, %v1379
        %v1381 = vsel %vm1367, %v1378, %v1380
        %v1382 = vshll.u32 %v1342, 8
        %v1383 = vmul.u32.u64.compose %v1382, %v1381
        %v1384 = vextract.low.u32 %v1383
        %v1385 = vextract.high.u32 %v1383
        %v1386 = vmul.u32.u64.compose %v1382, %v1377
        %v1387 = vextract.low.u32 %v1386
        %v1388 = vextract.high.u32 %v1386
        %v1389 = vmul.u32 %v1382, %v1373
        %v1390 = vadd.s32 %v1385, %v1387
        %vm1391 = vc.u32 %v1385, %v1387
        %v1392 = vadd.s32 %v1388, 1
        %v1393 = vsel %vm1391, %v1392, %v1388
        %v1394 = vadd.s32 %v1389, %v1393
        %v1395 = vadd.s32 %v1394, 536870912
        %v1396 = vshrl.u32 %v1395, 30
        %v1397 = vshll.u32 %v1396, 30
        %v1398 = vsub.s32 %v1394, %v1397
        %vm1399 = vcmp.lt.s32.totalorder %v1398, 0
        %v1400 = vsub.s32 0, %v1398
        %v1401 = vsel %vm1399, %v1400, %v1398
        %v1402 = vclz %v1401
        %v1403 = vsub.s32 %v1402, 2
        %vm1404 = vcmp.gt.s32.totalorder 0, %v1403
        %v1405 = vsel %vm1404, 0, %v1403
        %v1406 = vsub.s32 32, %v1405
        %v1407 = vshll.u32 %v1398, %v1405
        %v1408 = vshrl.u32 %v1390, %v1406
        %v1409 = vor.u32 %v1407, %v1408
        %v1410 = vsub.s32 4294967266, %v1405
        %v1411 = vadd.s32 %v1410, 127
        %v1412 = vshll.u32 %v1411, 23
        %v1413 = vor.u32 4788187, %v1412
        %v1414 = vand.u32 2147483647, %v1413
        %v1416 = vcvt.s32.f32 %v1409
        %v1417 = vmul.f32 %v1416, %v1414
        %v1418 = vxor.u32 %v1417, 2147483648
        %v1419 = vsel %vm1336, %v1418, %v1417
        %v1420 = vsub.s32 4, %v1396
        %v1421 = vsel %vm1336, %v1420, %v1396
        %v1422 = vsel %vm1335, %v483, %v1419
        %v1423 = vsel %vm1335, 0, %v1421
        %v1424 = vcosq.f32.pop %v1422
        %v1425 = vsinq.f32.pop %v1422
        %vm1426 = vweird.f32 %v483
        %v1427 = vadd.s32 %v1423, 3
        %v1428 = vand.u32 %v1427, 3
        %vm1429 = vcmp.lt.s32.totalorder %v1428, 2
        %vm1430 = vcmp.eq.s32.totalorder %v1428, 0
        %v1431 = vxor.u32 %v1425, 2147483648
        %v1432 = vsel %vm1430, %v1424, %v1431
        %vm1433 = vcmp.eq.s32.totalorder %v1428, 2
        %v1434 = vxor.u32 %v1424, 2147483648
        %v1435 = vsel %vm1433, %v1434, %v1425
        %v1436 = vsel %vm1429, %v1432, %v1435
        %v1437 = vsel %vm1426, nan, %v1436
        %v1438 = vand.u32 2147483647, %v488
        %vm1439 = vcmp.le.f32.partialorder %v1438, 0.7853982
        %vm1440 = vcmp.lt.s32.totalorder %v488, 0
        %v1441 = vand.u32 %v488, 2139095040
        %v1442 = vshrl.u32 %v1441, 23
        %v1443 = vsub.s32 %v1442, 127
        %v1444 = vand.u32 2147483647, %v488
        %v1445 = vand.u32 %v1444, 8388607
        %v1446 = vor.u32 %v1445, 8388608
        %v1447 = vsub.s32 0, %v1446
        %v1448 = vadd.s32 %v1443, 1
        %vm1449 = vcmp.gt.s32.totalorder %v1448, 0
        %v1450 = vsel %vm1449, %v1448, 0
        %v1451 = vshrl.u32 %v1450, 5
        %v1452 = vand.u32 %v1450, 31
        %v1453 = vsub.s32 32, %v1452
        %v1454 = vshrl.u32 683565275, %v1453
        %v1455 = vshll.u32 683565275, %v1452
        %v1456 = vshrl.u32 2475754826, %v1453
        %v1457 = vor.u32 %v1455, %v1456
        %v1458 = vshll.u32 2475754826, %v1452
        %v1459 = vshrl.u32 2131351028, %v1453
        %v1460 = vor.u32 %v1458, %v1459
        %v1461 = vshll.u32 2131351028, %v1452
        %v1462 = vshrl.u32 2102212464, %v1453
        %v1463 = vor.u32 %v1461, %v1462
        %v1464 = vshll.u32 2102212464, %v1452
        %v1465 = vshrl.u32 920167782, %v1453
        %v1466 = vor.u32 %v1464, %v1465
        %v1467 = vshll.u32 920167782, %v1452
        %v1468 = vshrl.u32 1326507024, %v1453
        %v1469 = vor.u32 %v1467, %v1468
        %vm1470 = vcmp.lt.s32.totalorder %v1451, 1
        %vm1471 = vcmp.lt.s32.totalorder %v1451, 2
        %vm1472 = vcmp.lt.s32.totalorder %v1451, 3
        %vm1473 = vcmp.lt.s32.totalorder %v1451, 4
        %v1474 = vsel %vm1470, %v1454, %v1457
        %v1475 = vsel %vm1473, %v1463, 2102212464
        %v1476 = vsel %vm1472, %v1460, %v1475
        %v1477 = vsel %vm1471, %v1474, %v1476
        %v1478 = vsel %vm1470, %v1457, %v1460
        %v1479 = vsel %vm1473, %v1466, 920167782
        %v1480 = vsel %vm1472, %v1463, %v1479
        %v1481 = vsel %vm1471, %v1478, %v1480
        %v1482 = vsel %vm1470, %v1460, %v1463
        %v1483 = vsel %vm1473, %v1469, 1326507024
        %v1484 = vsel %vm1472, %v1466, %v1483
        %v1485 = vsel %vm1471, %v1482, %v1484
        %v1486 = vshll.u32 %v1446, 8
        %v1487 = vmul.u32.u64.compose %v1486, %v1485
        %v1488 = vextract.low.u32 %v1487
        %v1489 = vextract.high.u32 %v1487
        %v1490 = vmul.u32.u64.compose %v1486, %v1481
        %v1491 = vextract.low.u32 %v1490
        %v1492 = vextract.high.u32 %v1490
        %v1493 = vmul.u32 %v1486, %v1477
        %v1494 = vadd.s32 %v1489, %v1491
        %vm1495 = vc.u32 %v1489, %v1491
        %v1496 = vadd.s32 %v1492, 1
        %v1497 = vsel %vm1495, %v1496, %v1492
        %v1498 = vadd.s32 %v1493, %v1497
        %v1499 = vadd.s32 %v1498, 536870912
        %v1500 = vshrl.u32 %v1499, 30
        %v1501 = vshll.u32 %v1500, 30
        %v1502 = vsub.s32 %v1498, %v1501
        %vm1503 = vcmp.lt.s32.totalorder %v1502, 0
        %v1504 = vsub.s32 0, %v1502
        %v1505 = vsel %vm1503, %v1504, %v1502
        %v1506 = vclz %v1505
        %v1507 = vsub.s32 %v1506, 2
        %vm1508 = vcmp.gt.s32.totalorder 0, %v1507
        %v1509 = vsel %vm1508, 0, %v1507
        %v1510 = vsub.s32 32, %v1509
        %v1511 = vshll.u32 %v1502, %v1509
        %v1512 = vshrl.u32 %v1494, %v1510
        %v1513 = vor.u32 %v1511, %v1512
        %v1514 = vsub.s32 4294967266, %v1509
        %v1515 = vadd.s32 %v1514, 127
        %v1516 = vshll.u32 %v1515, 23
        %v1517 = vor.u32 4788187, %v1516
        %v1518 = vand.u32 2147483647, %v1517
        %v1520 = vcvt.s32.f32 %v1513
        %v1521 = vmul.f32 %v1520, %v1518
        %v1522 = vxor.u32 %v1521, 2147483648
        %v1523 = vsel %vm1440, %v1522, %v1521
        %v1524 = vsub.s32 4, %v1500
        %v1525 = vsel %vm1440, %v1524, %v1500
        %v1526 = vsel %vm1439, %v488, %v1523
        %v1527 = vsel %vm1439, 0, %v1525
        %v1528 = vcosq.f32.pop %v1526
        %v1529 = vsinq.f32.pop %v1526
        %vm1530 = vweird.f32 %v488
        %v1531 = vadd.s32 %v1527, 3
        %v1532 = vand.u32 %v1531, 3
        %vm1533 = vcmp.lt.s32.totalorder %v1532, 2
        %vm1534 = vcmp.eq.s32.totalorder %v1532, 0
        %v1535 = vxor.u32 %v1529, 2147483648
        %v1536 = vsel %vm1534, %v1528, %v1535
        %vm1537 = vcmp.eq.s32.totalorder %v1532, 2
        %v1538 = vxor.u32 %v1528, 2147483648
        %v1539 = vsel %vm1537, %v1538, %v1529
        %v1540 = vsel %vm1533, %v1536, %v1539
        %v1541 = vsel %vm1530, nan, %v1540
        %v1542 = vand.u32 2147483647, %v493
        %vm1543 = vcmp.le.f32.partialorder %v1542, 0.7853982
        %vm1544 = vcmp.lt.s32.totalorder %v493, 0
        %v1545 = vand.u32 %v493, 2139095040
        %v1546 = vshrl.u32 %v1545, 23
        %v1547 = vsub.s32 %v1546, 127
        %v1548 = vand.u32 2147483647, %v493
        %v1549 = vand.u32 %v1548, 8388607
        %v1550 = vor.u32 %v1549, 8388608
        %v1551 = vsub.s32 0, %v1550
        %v1552 = vadd.s32 %v1547, 1
        %vm1553 = vcmp.gt.s32.totalorder %v1552, 0
        %v1554 = vsel %vm1553, %v1552, 0
        %v1555 = vshrl.u32 %v1554, 5
        %v1556 = vand.u32 %v1554, 31
        %v1557 = vsub.s32 32, %v1556
        %v1558 = vshrl.u32 683565275, %v1557
        %v1559 = vshll.u32 683565275, %v1556
        %v1560 = vshrl.u32 2475754826, %v1557
        %v1561 = vor.u32 %v1559, %v1560
        %v1562 = vshll.u32 2475754826, %v1556
        %v1563 = vshrl.u32 2131351028, %v1557
        %v1564 = vor.u32 %v1562, %v1563
        %v1565 = vshll.u32 2131351028, %v1556
        %v1566 = vshrl.u32 2102212464, %v1557
        %v1567 = vor.u32 %v1565, %v1566
        %v1568 = vshll.u32 2102212464, %v1556
        %v1569 = vshrl.u32 920167782, %v1557
        %v1570 = vor.u32 %v1568, %v1569
        %v1571 = vshll.u32 920167782, %v1556
        %v1572 = vshrl.u32 1326507024, %v1557
        %v1573 = vor.u32 %v1571, %v1572
        %vm1574 = vcmp.lt.s32.totalorder %v1555, 1
        %vm1575 = vcmp.lt.s32.totalorder %v1555, 2
        %vm1576 = vcmp.lt.s32.totalorder %v1555, 3
        %vm1577 = vcmp.lt.s32.totalorder %v1555, 4
        %v1578 = vsel %vm1574, %v1558, %v1561
        %v1579 = vsel %vm1577, %v1567, 2102212464
        %v1580 = vsel %vm1576, %v1564, %v1579
        %v1581 = vsel %vm1575, %v1578, %v1580
        %v1582 = vsel %vm1574, %v1561, %v1564
        %v1583 = vsel %vm1577, %v1570, 920167782
        %v1584 = vsel %vm1576, %v1567, %v1583
        %v1585 = vsel %vm1575, %v1582, %v1584
        %v1586 = vsel %vm1574, %v1564, %v1567
        %v1587 = vsel %vm1577, %v1573, 1326507024
        %v1588 = vsel %vm1576, %v1570, %v1587
        %v1589 = vsel %vm1575, %v1586, %v1588
        %v1590 = vshll.u32 %v1550, 8
        %v1591 = vmul.u32.u64.compose %v1590, %v1589
        %v1592 = vextract.low.u32 %v1591
        %v1593 = vextract.high.u32 %v1591
        %v1594 = vmul.u32.u64.compose %v1590, %v1585
        %v1595 = vextract.low.u32 %v1594
        %v1596 = vextract.high.u32 %v1594
        %v1597 = vmul.u32 %v1590, %v1581
        %v1598 = vadd.s32 %v1593, %v1595
        %vm1599 = vc.u32 %v1593, %v1595
        %v1600 = vadd.s32 %v1596, 1
        %v1601 = vsel %vm1599, %v1600, %v1596
        %v1602 = vadd.s32 %v1597, %v1601
        %v1603 = vadd.s32 %v1602, 536870912
        %v1604 = vshrl.u32 %v1603, 30
        %v1605 = vshll.u32 %v1604, 30
        %v1606 = vsub.s32 %v1602, %v1605
        %vm1607 = vcmp.lt.s32.totalorder %v1606, 0
        %v1608 = vsub.s32 0, %v1606
        %v1609 = vsel %vm1607, %v1608, %v1606
        %v1610 = vclz %v1609
        %v1611 = vsub.s32 %v1610, 2
        %vm1612 = vcmp.gt.s32.totalorder 0, %v1611
        %v1613 = vsel %vm1612, 0, %v1611
        %v1614 = vsub.s32 32, %v1613
        %v1615 = vshll.u32 %v1606, %v1613
        %v1616 = vshrl.u32 %v1598, %v1614
        %v1617 = vor.u32 %v1615, %v1616
        %v1618 = vsub.s32 4294967266, %v1613
        %v1619 = vadd.s32 %v1618, 127
        %v1620 = vshll.u32 %v1619, 23
        %v1621 = vor.u32 4788187, %v1620
        %v1622 = vand.u32 2147483647, %v1621
        %v1624 = vcvt.s32.f32 %v1617
        %v1625 = vmul.f32 %v1624, %v1622
        %v1626 = vxor.u32 %v1625, 2147483648
        %v1627 = vsel %vm1544, %v1626, %v1625
        %v1628 = vsub.s32 4, %v1604
        %v1629 = vsel %vm1544, %v1628, %v1604
        %v1630 = vsel %vm1543, %v493, %v1627
        %v1631 = vsel %vm1543, 0, %v1629
        %v1632 = vcosq.f32.pop %v1630
        %v1633 = vsinq.f32.pop %v1630
        %vm1634 = vweird.f32 %v493
        %v1635 = vadd.s32 %v1631, 3
        %v1636 = vand.u32 %v1635, 3
        %vm1637 = vcmp.lt.s32.totalorder %v1636, 2
        %vm1638 = vcmp.eq.s32.totalorder %v1636, 0
        %v1639 = vxor.u32 %v1633, 2147483648
        %v1640 = vsel %vm1638, %v1632, %v1639
        %vm1641 = vcmp.eq.s32.totalorder %v1636, 2
        %v1642 = vxor.u32 %v1632, 2147483648
        %v1643 = vsel %vm1641, %v1642, %v1633
        %v1644 = vsel %vm1637, %v1640, %v1643
        %v1645 = vsel %vm1634, nan, %v1644
        %v1646 = vand.u32 2147483647, %v498
        %vm1647 = vcmp.le.f32.partialorder %v1646, 0.7853982
        %vm1648 = vcmp.lt.s32.totalorder %v498, 0
        %v1649 = vand.u32 %v498, 2139095040
        %v1650 = vshrl.u32 %v1649, 23
        %v1651 = vsub.s32 %v1650, 127
        %v1652 = vand.u32 2147483647, %v498
        %v1653 = vand.u32 %v1652, 8388607
        %v1654 = vor.u32 %v1653, 8388608
        %v1655 = vsub.s32 0, %v1654
        %v1656 = vadd.s32 %v1651, 1
        %vm1657 = vcmp.gt.s32.totalorder %v1656, 0
        %v1658 = vsel %vm1657, %v1656, 0
        %v1659 = vshrl.u32 %v1658, 5
        %v1660 = vand.u32 %v1658, 31
        %v1661 = vsub.s32 32, %v1660
        %v1662 = vshrl.u32 683565275, %v1661
        %v1663 = vshll.u32 683565275, %v1660
        %v1664 = vshrl.u32 2475754826, %v1661
        %v1665 = vor.u32 %v1663, %v1664
        %v1666 = vshll.u32 2475754826, %v1660
        %v1667 = vshrl.u32 2131351028, %v1661
        %v1668 = vor.u32 %v1666, %v1667
        %v1669 = vshll.u32 2131351028, %v1660
        %v1670 = vshrl.u32 2102212464, %v1661
        %v1671 = vor.u32 %v1669, %v1670
        %v1672 = vshll.u32 2102212464, %v1660
        %v1673 = vshrl.u32 920167782, %v1661
        %v1674 = vor.u32 %v1672, %v1673
        %v1675 = vshll.u32 920167782, %v1660
        %v1676 = vshrl.u32 1326507024, %v1661
        %v1677 = vor.u32 %v1675, %v1676
        %vm1678 = vcmp.lt.s32.totalorder %v1659, 1
        %vm1679 = vcmp.lt.s32.totalorder %v1659, 2
        %vm1680 = vcmp.lt.s32.totalorder %v1659, 3
        %vm1681 = vcmp.lt.s32.totalorder %v1659, 4
        %v1682 = vsel %vm1678, %v1662, %v1665
        %v1683 = vsel %vm1681, %v1671, 2102212464
        %v1684 = vsel %vm1680, %v1668, %v1683
        %v1685 = vsel %vm1679, %v1682, %v1684
        %v1686 = vsel %vm1678, %v1665, %v1668
        %v1687 = vsel %vm1681, %v1674, 920167782
        %v1688 = vsel %vm1680, %v1671, %v1687
        %v1689 = vsel %vm1679, %v1686, %v1688
        %v1690 = vsel %vm1678, %v1668, %v1671
        %v1691 = vsel %vm1681, %v1677, 1326507024
        %v1692 = vsel %vm1680, %v1674, %v1691
        %v1693 = vsel %vm1679, %v1690, %v1692
        %v1694 = vshll.u32 %v1654, 8
        %v1695 = vmul.u32.u64.compose %v1694, %v1693
        %v1696 = vextract.low.u32 %v1695
        %v1697 = vextract.high.u32 %v1695
        %v1698 = vmul.u32.u64.compose %v1694, %v1689
        %v1699 = vextract.low.u32 %v1698
        %v1700 = vextract.high.u32 %v1698
        %v1701 = vmul.u32 %v1694, %v1685
        %v1702 = vadd.s32 %v1697, %v1699
        %vm1703 = vc.u32 %v1697, %v1699
        %v1704 = vadd.s32 %v1700, 1
        %v1705 = vsel %vm1703, %v1704, %v1700
        %v1706 = vadd.s32 %v1701, %v1705
        %v1707 = vadd.s32 %v1706, 536870912
        %v1708 = vshrl.u32 %v1707, 30
        %v1709 = vshll.u32 %v1708, 30
        %v1710 = vsub.s32 %v1706, %v1709
        %vm1711 = vcmp.lt.s32.totalorder %v1710, 0
        %v1712 = vsub.s32 0, %v1710
        %v1713 = vsel %vm1711, %v1712, %v1710
        %v1714 = vclz %v1713
        %v1715 = vsub.s32 %v1714, 2
        %vm1716 = vcmp.gt.s32.totalorder 0, %v1715
        %v1717 = vsel %vm1716, 0, %v1715
        %v1718 = vsub.s32 32, %v1717
        %v1719 = vshll.u32 %v1710, %v1717
        %v1720 = vshrl.u32 %v1702, %v1718
        %v1721 = vor.u32 %v1719, %v1720
        %v1722 = vsub.s32 4294967266, %v1717
        %v1723 = vadd.s32 %v1722, 127
        %v1724 = vshll.u32 %v1723, 23
        %v1725 = vor.u32 4788187, %v1724
        %v1726 = vand.u32 2147483647, %v1725
        %v1728 = vcvt.s32.f32 %v1721
        %v1729 = vmul.f32 %v1728, %v1726
        %v1730 = vxor.u32 %v1729, 2147483648
        %v1731 = vsel %vm1648, %v1730, %v1729
        %v1732 = vsub.s32 4, %v1708
        %v1733 = vsel %vm1648, %v1732, %v1708
        %v1734 = vsel %vm1647, %v498, %v1731
        %v1735 = vsel %vm1647, 0, %v1733
        %v1736 = vcosq.f32.pop %v1734
        %v1737 = vsinq.f32.pop %v1734
        %vm1738 = vweird.f32 %v498
        %v1739 = vadd.s32 %v1735, 3
        %v1740 = vand.u32 %v1739, 3
        %vm1741 = vcmp.lt.s32.totalorder %v1740, 2
        %vm1742 = vcmp.eq.s32.totalorder %v1740, 0
        %v1743 = vxor.u32 %v1737, 2147483648
        %v1744 = vsel %vm1742, %v1736, %v1743
        %vm1745 = vcmp.eq.s32.totalorder %v1740, 2
        %v1746 = vxor.u32 %v1736, 2147483648
        %v1747 = vsel %vm1745, %v1746, %v1737
        %v1748 = vsel %vm1741, %v1744, %v1747
        %v1749 = vsel %vm1738, nan, %v1748
        %v1750 = vand.u32 2147483647, %v503
        %vm1751 = vcmp.le.f32.partialorder %v1750, 0.7853982
        %vm1752 = vcmp.lt.s32.totalorder %v503, 0
        %v1753 = vand.u32 %v503, 2139095040
        %v1754 = vshrl.u32 %v1753, 23
        %v1755 = vsub.s32 %v1754, 127
        %v1756 = vand.u32 2147483647, %v503
        %v1757 = vand.u32 %v1756, 8388607
        %v1758 = vor.u32 %v1757, 8388608
        %v1759 = vsub.s32 0, %v1758
        %v1760 = vadd.s32 %v1755, 1
        %vm1761 = vcmp.gt.s32.totalorder %v1760, 0
        %v1762 = vsel %vm1761, %v1760, 0
        %v1763 = vshrl.u32 %v1762, 5
        %v1764 = vand.u32 %v1762, 31
        %v1765 = vsub.s32 32, %v1764
        %v1766 = vshrl.u32 683565275, %v1765
        %v1767 = vshll.u32 683565275, %v1764
        %v1768 = vshrl.u32 2475754826, %v1765
        %v1769 = vor.u32 %v1767, %v1768
        %v1770 = vshll.u32 2475754826, %v1764
        %v1771 = vshrl.u32 2131351028, %v1765
        %v1772 = vor.u32 %v1770, %v1771
        %v1773 = vshll.u32 2131351028, %v1764
        %v1774 = vshrl.u32 2102212464, %v1765
        %v1775 = vor.u32 %v1773, %v1774
        %v1776 = vshll.u32 2102212464, %v1764
        %v1777 = vshrl.u32 920167782, %v1765
        %v1778 = vor.u32 %v1776, %v1777
        %v1779 = vshll.u32 920167782, %v1764
        %v1780 = vshrl.u32 1326507024, %v1765
        %v1781 = vor.u32 %v1779, %v1780
        %vm1782 = vcmp.lt.s32.totalorder %v1763, 1
        %vm1783 = vcmp.lt.s32.totalorder %v1763, 2
        %vm1784 = vcmp.lt.s32.totalorder %v1763, 3
        %vm1785 = vcmp.lt.s32.totalorder %v1763, 4
        %v1786 = vsel %vm1782, %v1766, %v1769
        %v1787 = vsel %vm1785, %v1775, 2102212464
        %v1788 = vsel %vm1784, %v1772, %v1787
        %v1789 = vsel %vm1783, %v1786, %v1788
        %v1790 = vsel %vm1782, %v1769, %v1772
        %v1791 = vsel %vm1785, %v1778, 920167782
        %v1792 = vsel %vm1784, %v1775, %v1791
        %v1793 = vsel %vm1783, %v1790, %v1792
        %v1794 = vsel %vm1782, %v1772, %v1775
        %v1795 = vsel %vm1785, %v1781, 1326507024
        %v1796 = vsel %vm1784, %v1778, %v1795
        %v1797 = vsel %vm1783, %v1794, %v1796
        %v1798 = vshll.u32 %v1758, 8
        %v1799 = vmul.u32.u64.compose %v1798, %v1797
        %v1800 = vextract.low.u32 %v1799
        %v1801 = vextract.high.u32 %v1799
        %v1802 = vmul.u32.u64.compose %v1798, %v1793
        %v1803 = vextract.low.u32 %v1802
        %v1804 = vextract.high.u32 %v1802
        %v1805 = vmul.u32 %v1798, %v1789
        %v1806 = vadd.s32 %v1801, %v1803
        %vm1807 = vc.u32 %v1801, %v1803
        %v1808 = vadd.s32 %v1804, 1
        %v1809 = vsel %vm1807, %v1808, %v1804
        %v1810 = vadd.s32 %v1805, %v1809
        %v1811 = vadd.s32 %v1810, 536870912
        %v1812 = vshrl.u32 %v1811, 30
        %v1813 = vshll.u32 %v1812, 30
        %v1814 = vsub.s32 %v1810, %v1813
        %vm1815 = vcmp.lt.s32.totalorder %v1814, 0
        %v1816 = vsub.s32 0, %v1814
        %v1817 = vsel %vm1815, %v1816, %v1814
        %v1818 = vclz %v1817
        %v1819 = vsub.s32 %v1818, 2
        %vm1820 = vcmp.gt.s32.totalorder 0, %v1819
        %v1821 = vsel %vm1820, 0, %v1819
        %v1822 = vsub.s32 32, %v1821
        %v1823 = vshll.u32 %v1814, %v1821
        %v1824 = vshrl.u32 %v1806, %v1822
        %v1825 = vor.u32 %v1823, %v1824
        %v1826 = vsub.s32 4294967266, %v1821
        %v1827 = vadd.s32 %v1826, 127
        %v1828 = vshll.u32 %v1827, 23
        %v1829 = vor.u32 4788187, %v1828
        %v1830 = vand.u32 2147483647, %v1829
        %v1832 = vcvt.s32.f32 %v1825
        %v1833 = vmul.f32 %v1832, %v1830
        %v1834 = vxor.u32 %v1833, 2147483648
        %v1835 = vsel %vm1752, %v1834, %v1833
        %v1836 = vsub.s32 4, %v1812
        %v1837 = vsel %vm1752, %v1836, %v1812
        %v1838 = vsel %vm1751, %v503, %v1835
        %v1839 = vsel %vm1751, 0, %v1837
        %v1840 = vcosq.f32.pop %v1838
        %v1841 = vsinq.f32.pop %v1838
        %vm1842 = vweird.f32 %v503
        %v1843 = vadd.s32 %v1839, 3
        %v1844 = vand.u32 %v1843, 3
        %vm1845 = vcmp.lt.s32.totalorder %v1844, 2
        %vm1846 = vcmp.eq.s32.totalorder %v1844, 0
        %v1847 = vxor.u32 %v1841, 2147483648
        %v1848 = vsel %vm1846, %v1840, %v1847
        %vm1849 = vcmp.eq.s32.totalorder %v1844, 2
        %v1850 = vxor.u32 %v1840, 2147483648
        %v1851 = vsel %vm1849, %v1850, %v1841
        %v1852 = vsel %vm1845, %v1848, %v1851
        %v1853 = vsel %vm1842, nan, %v1852
        %v1854 = vand.u32 2147483647, %v508
        %vm1855 = vcmp.le.f32.partialorder %v1854, 0.7853982
        %vm1856 = vcmp.lt.s32.totalorder %v508, 0
        %v1857 = vand.u32 %v508, 2139095040
        %v1858 = vshrl.u32 %v1857, 23
        %v1859 = vsub.s32 %v1858, 127
        %v1860 = vand.u32 2147483647, %v508
        %v1861 = vand.u32 %v1860, 8388607
        %v1862 = vor.u32 %v1861, 8388608
        %v1863 = vsub.s32 0, %v1862
        %v1864 = vadd.s32 %v1859, 1
        %vm1865 = vcmp.gt.s32.totalorder %v1864, 0
        %v1866 = vsel %vm1865, %v1864, 0
        %v1867 = vshrl.u32 %v1866, 5
        %v1868 = vand.u32 %v1866, 31
        %v1869 = vsub.s32 32, %v1868
        %v1870 = vshrl.u32 683565275, %v1869
        %v1871 = vshll.u32 683565275, %v1868
        %v1872 = vshrl.u32 2475754826, %v1869
        %v1873 = vor.u32 %v1871, %v1872
        %v1874 = vshll.u32 2475754826, %v1868
        %v1875 = vshrl.u32 2131351028, %v1869
        %v1876 = vor.u32 %v1874, %v1875
        %v1877 = vshll.u32 2131351028, %v1868
        %v1878 = vshrl.u32 2102212464, %v1869
        %v1879 = vor.u32 %v1877, %v1878
        %v1880 = vshll.u32 2102212464, %v1868
        %v1881 = vshrl.u32 920167782, %v1869
        %v1882 = vor.u32 %v1880, %v1881
        %v1883 = vshll.u32 920167782, %v1868
        %v1884 = vshrl.u32 1326507024, %v1869
        %v1885 = vor.u32 %v1883, %v1884
        %vm1886 = vcmp.lt.s32.totalorder %v1867, 1
        %vm1887 = vcmp.lt.s32.totalorder %v1867, 2
        %vm1888 = vcmp.lt.s32.totalorder %v1867, 3
        %vm1889 = vcmp.lt.s32.totalorder %v1867, 4
        %v1890 = vsel %vm1886, %v1870, %v1873
        %v1891 = vsel %vm1889, %v1879, 2102212464
        %v1892 = vsel %vm1888, %v1876, %v1891
        %v1893 = vsel %vm1887, %v1890, %v1892
        %v1894 = vsel %vm1886, %v1873, %v1876
        %v1895 = vsel %vm1889, %v1882, 920167782
        %v1896 = vsel %vm1888, %v1879, %v1895
        %v1897 = vsel %vm1887, %v1894, %v1896
        %v1898 = vsel %vm1886, %v1876, %v1879
        %v1899 = vsel %vm1889, %v1885, 1326507024
        %v1900 = vsel %vm1888, %v1882, %v1899
        %v1901 = vsel %vm1887, %v1898, %v1900
        %v1902 = vshll.u32 %v1862, 8
        %v1903 = vmul.u32.u64.compose %v1902, %v1901
        %v1904 = vextract.low.u32 %v1903
        %v1905 = vextract.high.u32 %v1903
        %v1906 = vmul.u32.u64.compose %v1902, %v1897
        %v1907 = vextract.low.u32 %v1906
        %v1908 = vextract.high.u32 %v1906
        %v1909 = vmul.u32 %v1902, %v1893
        %v1910 = vadd.s32 %v1905, %v1907
        %vm1911 = vc.u32 %v1905, %v1907
        %v1912 = vadd.s32 %v1908, 1
        %v1913 = vsel %vm1911, %v1912, %v1908
        %v1914 = vadd.s32 %v1909, %v1913
        %v1915 = vadd.s32 %v1914, 536870912
        %v1916 = vshrl.u32 %v1915, 30
        %v1917 = vshll.u32 %v1916, 30
        %v1918 = vsub.s32 %v1914, %v1917
        %vm1919 = vcmp.lt.s32.totalorder %v1918, 0
        %v1920 = vsub.s32 0, %v1918
        %v1921 = vsel %vm1919, %v1920, %v1918
        %v1922 = vclz %v1921
        %v1923 = vsub.s32 %v1922, 2
        %vm1924 = vcmp.gt.s32.totalorder 0, %v1923
        %v1925 = vsel %vm1924, 0, %v1923
        %v1926 = vsub.s32 32, %v1925
        %v1927 = vshll.u32 %v1918, %v1925
        %v1928 = vshrl.u32 %v1910, %v1926
        %v1929 = vor.u32 %v1927, %v1928
        %v1930 = vsub.s32 4294967266, %v1925
        %v1931 = vadd.s32 %v1930, 127
        %v1932 = vshll.u32 %v1931, 23
        %v1933 = vor.u32 4788187, %v1932
        %v1934 = vand.u32 2147483647, %v1933
        %v1936 = vcvt.s32.f32 %v1929
        %v1937 = vmul.f32 %v1936, %v1934
        %v1938 = vxor.u32 %v1937, 2147483648
        %v1939 = vsel %vm1856, %v1938, %v1937
        %v1940 = vsub.s32 4, %v1916
        %v1941 = vsel %vm1856, %v1940, %v1916
        %v1942 = vsel %vm1855, %v508, %v1939
        %v1943 = vsel %vm1855, 0, %v1941
        %v1944 = vcosq.f32.pop %v1942
        %v1945 = vsinq.f32.pop %v1942
        %vm1946 = vweird.f32 %v508
        %v1947 = vadd.s32 %v1943, 3
        %v1948 = vand.u32 %v1947, 3
        %vm1949 = vcmp.lt.s32.totalorder %v1948, 2
        %vm1950 = vcmp.eq.s32.totalorder %v1948, 0
        %v1951 = vxor.u32 %v1945, 2147483648
        %v1952 = vsel %vm1950, %v1944, %v1951
        %vm1953 = vcmp.eq.s32.totalorder %v1948, 2
        %v1954 = vxor.u32 %v1944, 2147483648
        %v1955 = vsel %vm1953, %v1954, %v1945
        %v1956 = vsel %vm1949, %v1952, %v1955
        %v1957 = vsel %vm1946, nan, %v1956
        %v1958 = vand.u32 2147483647, %v513
        %vm1959 = vcmp.le.f32.partialorder %v1958, 0.7853982
        %vm1960 = vcmp.lt.s32.totalorder %v513, 0
        %v1961 = vand.u32 %v513, 2139095040
        %v1962 = vshrl.u32 %v1961, 23
        %v1963 = vsub.s32 %v1962, 127
        %v1964 = vand.u32 2147483647, %v513
        %v1965 = vand.u32 %v1964, 8388607
        %v1966 = vor.u32 %v1965, 8388608
        %v1967 = vsub.s32 0, %v1966
        %v1968 = vadd.s32 %v1963, 1
        %vm1969 = vcmp.gt.s32.totalorder %v1968, 0
        %v1970 = vsel %vm1969, %v1968, 0
        %v1971 = vshrl.u32 %v1970, 5
        %v1972 = vand.u32 %v1970, 31
        %v1973 = vsub.s32 32, %v1972
        %v1974 = vshrl.u32 683565275, %v1973
        %v1975 = vshll.u32 683565275, %v1972
        %v1976 = vshrl.u32 2475754826, %v1973
        %v1977 = vor.u32 %v1975, %v1976
        %v1978 = vshll.u32 2475754826, %v1972
        %v1979 = vshrl.u32 2131351028, %v1973
        %v1980 = vor.u32 %v1978, %v1979
        %v1981 = vshll.u32 2131351028, %v1972
        %v1982 = vshrl.u32 2102212464, %v1973
        %v1983 = vor.u32 %v1981, %v1982
        %v1984 = vshll.u32 2102212464, %v1972
        %v1985 = vshrl.u32 920167782, %v1973
        %v1986 = vor.u32 %v1984, %v1985
        %v1987 = vshll.u32 920167782, %v1972
        %v1988 = vshrl.u32 1326507024, %v1973
        %v1989 = vor.u32 %v1987, %v1988
        %vm1990 = vcmp.lt.s32.totalorder %v1971, 1
        %vm1991 = vcmp.lt.s32.totalorder %v1971, 2
        %vm1992 = vcmp.lt.s32.totalorder %v1971, 3
        %vm1993 = vcmp.lt.s32.totalorder %v1971, 4
        %v1994 = vsel %vm1990, %v1974, %v1977
        %v1995 = vsel %vm1993, %v1983, 2102212464
        %v1996 = vsel %vm1992, %v1980, %v1995
        %v1997 = vsel %vm1991, %v1994, %v1996
        %v1998 = vsel %vm1990, %v1977, %v1980
        %v1999 = vsel %vm1993, %v1986, 920167782
        %v2000 = vsel %vm1992, %v1983, %v1999
        %v2001 = vsel %vm1991, %v1998, %v2000
        %v2002 = vsel %vm1990, %v1980, %v1983
        %v2003 = vsel %vm1993, %v1989, 1326507024
        %v2004 = vsel %vm1992, %v1986, %v2003
        %v2005 = vsel %vm1991, %v2002, %v2004
        %v2006 = vshll.u32 %v1966, 8
        %v2007 = vmul.u32.u64.compose %v2006, %v2005
        %v2008 = vextract.low.u32 %v2007
        %v2009 = vextract.high.u32 %v2007
        %v2010 = vmul.u32.u64.compose %v2006, %v2001
        %v2011 = vextract.low.u32 %v2010
        %v2012 = vextract.high.u32 %v2010
        %v2013 = vmul.u32 %v2006, %v1997
        %v2014 = vadd.s32 %v2009, %v2011
        %vm2015 = vc.u32 %v2009, %v2011
        %v2016 = vadd.s32 %v2012, 1
        %v2017 = vsel %vm2015, %v2016, %v2012
        %v2018 = vadd.s32 %v2013, %v2017
        %v2019 = vadd.s32 %v2018, 536870912
        %v2020 = vshrl.u32 %v2019, 30
        %v2021 = vshll.u32 %v2020, 30
        %v2022 = vsub.s32 %v2018, %v2021
        %vm2023 = vcmp.lt.s32.totalorder %v2022, 0
        %v2024 = vsub.s32 0, %v2022
        %v2025 = vsel %vm2023, %v2024, %v2022
        %v2026 = vclz %v2025
        %v2027 = vsub.s32 %v2026, 2
        %vm2028 = vcmp.gt.s32.totalorder 0, %v2027
        %v2029 = vsel %vm2028, 0, %v2027
        %v2030 = vsub.s32 32, %v2029
        %v2031 = vshll.u32 %v2022, %v2029
        %v2032 = vshrl.u32 %v2014, %v2030
        %v2033 = vor.u32 %v2031, %v2032
        %v2034 = vsub.s32 4294967266, %v2029
        %v2035 = vadd.s32 %v2034, 127
        %v2036 = vshll.u32 %v2035, 23
        %v2037 = vor.u32 4788187, %v2036
        %v2038 = vand.u32 2147483647, %v2037
        %v2040 = vcvt.s32.f32 %v2033
        %v2041 = vmul.f32 %v2040, %v2038
        %v2042 = vxor.u32 %v2041, 2147483648
        %v2043 = vsel %vm1960, %v2042, %v2041
        %v2044 = vsub.s32 4, %v2020
        %v2045 = vsel %vm1960, %v2044, %v2020
        %v2046 = vsel %vm1959, %v513, %v2043
        %v2047 = vsel %vm1959, 0, %v2045
        %v2048 = vcosq.f32.pop %v2046
        %v2049 = vsinq.f32.pop %v2046
        %vm2050 = vweird.f32 %v513
        %v2051 = vadd.s32 %v2047, 3
        %v2052 = vand.u32 %v2051, 3
        %vm2053 = vcmp.lt.s32.totalorder %v2052, 2
        %vm2054 = vcmp.eq.s32.totalorder %v2052, 0
        %v2055 = vxor.u32 %v2049, 2147483648
        %v2056 = vsel %vm2054, %v2048, %v2055
        %vm2057 = vcmp.eq.s32.totalorder %v2052, 2
        %v2058 = vxor.u32 %v2048, 2147483648
        %v2059 = vsel %vm2057, %v2058, %v2049
        %v2060 = vsel %vm2053, %v2056, %v2059
        %v2061 = vsel %vm2050, nan, %v2060
        %v2062 = vand.u32 2147483647, %v518
        %vm2063 = vcmp.le.f32.partialorder %v2062, 0.7853982
        %vm2064 = vcmp.lt.s32.totalorder %v518, 0
        %v2065 = vand.u32 %v518, 2139095040
        %v2066 = vshrl.u32 %v2065, 23
        %v2067 = vsub.s32 %v2066, 127
        %v2068 = vand.u32 2147483647, %v518
        %v2069 = vand.u32 %v2068, 8388607
        %v2070 = vor.u32 %v2069, 8388608
        %v2071 = vsub.s32 0, %v2070
        %v2072 = vadd.s32 %v2067, 1
        %vm2073 = vcmp.gt.s32.totalorder %v2072, 0
        %v2074 = vsel %vm2073, %v2072, 0
        %v2075 = vshrl.u32 %v2074, 5
        %v2076 = vand.u32 %v2074, 31
        %v2077 = vsub.s32 32, %v2076
        %v2078 = vshrl.u32 683565275, %v2077
        %v2079 = vshll.u32 683565275, %v2076
        %v2080 = vshrl.u32 2475754826, %v2077
        %v2081 = vor.u32 %v2079, %v2080
        %v2082 = vshll.u32 2475754826, %v2076
        %v2083 = vshrl.u32 2131351028, %v2077
        %v2084 = vor.u32 %v2082, %v2083
        %v2085 = vshll.u32 2131351028, %v2076
        %v2086 = vshrl.u32 2102212464, %v2077
        %v2087 = vor.u32 %v2085, %v2086
        %v2088 = vshll.u32 2102212464, %v2076
        %v2089 = vshrl.u32 920167782, %v2077
        %v2090 = vor.u32 %v2088, %v2089
        %v2091 = vshll.u32 920167782, %v2076
        %v2092 = vshrl.u32 1326507024, %v2077
        %v2093 = vor.u32 %v2091, %v2092
        %vm2094 = vcmp.lt.s32.totalorder %v2075, 1
        %vm2095 = vcmp.lt.s32.totalorder %v2075, 2
        %vm2096 = vcmp.lt.s32.totalorder %v2075, 3
        %vm2097 = vcmp.lt.s32.totalorder %v2075, 4
        %v2098 = vsel %vm2094, %v2078, %v2081
        %v2099 = vsel %vm2097, %v2087, 2102212464
        %v2100 = vsel %vm2096, %v2084, %v2099
        %v2101 = vsel %vm2095, %v2098, %v2100
        %v2102 = vsel %vm2094, %v2081, %v2084
        %v2103 = vsel %vm2097, %v2090, 920167782
        %v2104 = vsel %vm2096, %v2087, %v2103
        %v2105 = vsel %vm2095, %v2102, %v2104
        %v2106 = vsel %vm2094, %v2084, %v2087
        %v2107 = vsel %vm2097, %v2093, 1326507024
        %v2108 = vsel %vm2096, %v2090, %v2107
        %v2109 = vsel %vm2095, %v2106, %v2108
        %v2110 = vshll.u32 %v2070, 8
        %v2111 = vmul.u32.u64.compose %v2110, %v2109
        %v2112 = vextract.low.u32 %v2111
        %v2113 = vextract.high.u32 %v2111
        %v2114 = vmul.u32.u64.compose %v2110, %v2105
        %v2115 = vextract.low.u32 %v2114
        %v2116 = vextract.high.u32 %v2114
        %v2117 = vmul.u32 %v2110, %v2101
        %v2118 = vadd.s32 %v2113, %v2115
        %vm2119 = vc.u32 %v2113, %v2115
        %v2120 = vadd.s32 %v2116, 1
        %v2121 = vsel %vm2119, %v2120, %v2116
        %v2122 = vadd.s32 %v2117, %v2121
        %v2123 = vadd.s32 %v2122, 536870912
        %v2124 = vshrl.u32 %v2123, 30
        %v2125 = vshll.u32 %v2124, 30
        %v2126 = vsub.s32 %v2122, %v2125
        %vm2127 = vcmp.lt.s32.totalorder %v2126, 0
        %v2128 = vsub.s32 0, %v2126
        %v2129 = vsel %vm2127, %v2128, %v2126
        %v2130 = vclz %v2129
        %v2131 = vsub.s32 %v2130, 2
        %vm2132 = vcmp.gt.s32.totalorder 0, %v2131
        %v2133 = vsel %vm2132, 0, %v2131
        %v2134 = vsub.s32 32, %v2133
        %v2135 = vshll.u32 %v2126, %v2133
        %v2136 = vshrl.u32 %v2118, %v2134
        %v2137 = vor.u32 %v2135, %v2136
        %v2138 = vsub.s32 4294967266, %v2133
        %v2139 = vadd.s32 %v2138, 127
        %v2140 = vshll.u32 %v2139, 23
        %v2141 = vor.u32 4788187, %v2140
        %v2142 = vand.u32 2147483647, %v2141
        %v2144 = vcvt.s32.f32 %v2137
        %v2145 = vmul.f32 %v2144, %v2142
        %v2146 = vxor.u32 %v2145, 2147483648
        %v2147 = vsel %vm2064, %v2146, %v2145
        %v2148 = vsub.s32 4, %v2124
        %v2149 = vsel %vm2064, %v2148, %v2124
        %v2150 = vsel %vm2063, %v518, %v2147
        %v2151 = vsel %vm2063, 0, %v2149
        %v2152 = vcosq.f32.pop %v2150
        %v2153 = vsinq.f32.pop %v2150
        %vm2154 = vweird.f32 %v518
        %v2155 = vadd.s32 %v2151, 3
        %v2156 = vand.u32 %v2155, 3
        %vm2157 = vcmp.lt.s32.totalorder %v2156, 2
        %vm2158 = vcmp.eq.s32.totalorder %v2156, 0
        %v2159 = vxor.u32 %v2153, 2147483648
        %v2160 = vsel %vm2158, %v2152, %v2159
        %vm2161 = vcmp.eq.s32.totalorder %v2156, 2
        %v2162 = vxor.u32 %v2152, 2147483648
        %v2163 = vsel %vm2161, %v2162, %v2153
        %v2164 = vsel %vm2157, %v2160, %v2163
        %v2165 = vsel %vm2154, nan, %v2164
        %v2166 = vand.u32 2147483647, %v523
        %vm2167 = vcmp.le.f32.partialorder %v2166, 0.7853982
        %vm2168 = vcmp.lt.s32.totalorder %v523, 0
        %v2169 = vand.u32 %v523, 2139095040
        %v2170 = vshrl.u32 %v2169, 23
        %v2171 = vsub.s32 %v2170, 127
        %v2172 = vand.u32 2147483647, %v523
        %v2173 = vand.u32 %v2172, 8388607
        %v2174 = vor.u32 %v2173, 8388608
        %v2175 = vsub.s32 0, %v2174
        %v2176 = vadd.s32 %v2171, 1
        %vm2177 = vcmp.gt.s32.totalorder %v2176, 0
        %v2178 = vsel %vm2177, %v2176, 0
        %v2179 = vshrl.u32 %v2178, 5
        %v2180 = vand.u32 %v2178, 31
        %v2181 = vsub.s32 32, %v2180
        %v2182 = vshrl.u32 683565275, %v2181
        %v2183 = vshll.u32 683565275, %v2180
        %v2184 = vshrl.u32 2475754826, %v2181
        %v2185 = vor.u32 %v2183, %v2184
        %v2186 = vshll.u32 2475754826, %v2180
        %v2187 = vshrl.u32 2131351028, %v2181
        %v2188 = vor.u32 %v2186, %v2187
        %v2189 = vshll.u32 2131351028, %v2180
        %v2190 = vshrl.u32 2102212464, %v2181
        %v2191 = vor.u32 %v2189, %v2190
        %v2192 = vshll.u32 2102212464, %v2180
        %v2193 = vshrl.u32 920167782, %v2181
        %v2194 = vor.u32 %v2192, %v2193
        %v2195 = vshll.u32 920167782, %v2180
        %v2196 = vshrl.u32 1326507024, %v2181
        %v2197 = vor.u32 %v2195, %v2196
        %vm2198 = vcmp.lt.s32.totalorder %v2179, 1
        %vm2199 = vcmp.lt.s32.totalorder %v2179, 2
        %vm2200 = vcmp.lt.s32.totalorder %v2179, 3
        %vm2201 = vcmp.lt.s32.totalorder %v2179, 4
        %v2202 = vsel %vm2198, %v2182, %v2185
        %v2203 = vsel %vm2201, %v2191, 2102212464
        %v2204 = vsel %vm2200, %v2188, %v2203
        %v2205 = vsel %vm2199, %v2202, %v2204
        %v2206 = vsel %vm2198, %v2185, %v2188
        %v2207 = vsel %vm2201, %v2194, 920167782
        %v2208 = vsel %vm2200, %v2191, %v2207
        %v2209 = vsel %vm2199, %v2206, %v2208
        %v2210 = vsel %vm2198, %v2188, %v2191
        %v2211 = vsel %vm2201, %v2197, 1326507024
        %v2212 = vsel %vm2200, %v2194, %v2211
        %v2213 = vsel %vm2199, %v2210, %v2212
        %v2214 = vshll.u32 %v2174, 8
        %v2215 = vmul.u32.u64.compose %v2214, %v2213
        %v2216 = vextract.low.u32 %v2215
        %v2217 = vextract.high.u32 %v2215
        %v2218 = vmul.u32.u64.compose %v2214, %v2209
        %v2219 = vextract.low.u32 %v2218
        %v2220 = vextract.high.u32 %v2218
        %v2221 = vmul.u32 %v2214, %v2205
        %v2222 = vadd.s32 %v2217, %v2219
        %vm2223 = vc.u32 %v2217, %v2219
        %v2224 = vadd.s32 %v2220, 1
        %v2225 = vsel %vm2223, %v2224, %v2220
        %v2226 = vadd.s32 %v2221, %v2225
        %v2227 = vadd.s32 %v2226, 536870912
        %v2228 = vshrl.u32 %v2227, 30
        %v2229 = vshll.u32 %v2228, 30
        %v2230 = vsub.s32 %v2226, %v2229
        %vm2231 = vcmp.lt.s32.totalorder %v2230, 0
        %v2232 = vsub.s32 0, %v2230
        %v2233 = vsel %vm2231, %v2232, %v2230
        %v2234 = vclz %v2233
        %v2235 = vsub.s32 %v2234, 2
        %vm2236 = vcmp.gt.s32.totalorder 0, %v2235
        %v2237 = vsel %vm2236, 0, %v2235
        %v2238 = vsub.s32 32, %v2237
        %v2239 = vshll.u32 %v2230, %v2237
        %v2240 = vshrl.u32 %v2222, %v2238
        %v2241 = vor.u32 %v2239, %v2240
        %v2242 = vsub.s32 4294967266, %v2237
        %v2243 = vadd.s32 %v2242, 127
        %v2244 = vshll.u32 %v2243, 23
        %v2245 = vor.u32 4788187, %v2244
        %v2246 = vand.u32 2147483647, %v2245
        %v2248 = vcvt.s32.f32 %v2241
        %v2249 = vmul.f32 %v2248, %v2246
        %v2250 = vxor.u32 %v2249, 2147483648
        %v2251 = vsel %vm2168, %v2250, %v2249
        %v2252 = vsub.s32 4, %v2228
        %v2253 = vsel %vm2168, %v2252, %v2228
        %v2254 = vsel %vm2167, %v523, %v2251
        %v2255 = vsel %vm2167, 0, %v2253
        %v2256 = vcosq.f32.pop %v2254
        %v2257 = vsinq.f32.pop %v2254
        %vm2258 = vweird.f32 %v523
        %v2259 = vadd.s32 %v2255, 3
        %v2260 = vand.u32 %v2259, 3
        %vm2261 = vcmp.lt.s32.totalorder %v2260, 2
        %vm2262 = vcmp.eq.s32.totalorder %v2260, 0
        %v2263 = vxor.u32 %v2257, 2147483648
        %v2264 = vsel %vm2262, %v2256, %v2263
        %vm2265 = vcmp.eq.s32.totalorder %v2260, 2
        %v2266 = vxor.u32 %v2256, 2147483648
        %v2267 = vsel %vm2265, %v2266, %v2257
        %v2268 = vsel %vm2261, %v2264, %v2267
        %v2269 = vsel %vm2258, nan, %v2268
        %v2270 = vand.u32 2147483647, %v528
        %vm2271 = vcmp.le.f32.partialorder %v2270, 0.7853982
        %vm2272 = vcmp.lt.s32.totalorder %v528, 0
        %v2273 = vand.u32 %v528, 2139095040
        %v2274 = vshrl.u32 %v2273, 23
        %v2275 = vsub.s32 %v2274, 127
        %v2276 = vand.u32 2147483647, %v528
        %v2277 = vand.u32 %v2276, 8388607
        %v2278 = vor.u32 %v2277, 8388608
        %v2279 = vsub.s32 0, %v2278
        %v2280 = vadd.s32 %v2275, 1
        %vm2281 = vcmp.gt.s32.totalorder %v2280, 0
        %v2282 = vsel %vm2281, %v2280, 0
        %v2283 = vshrl.u32 %v2282, 5
        %v2284 = vand.u32 %v2282, 31
        %v2285 = vsub.s32 32, %v2284
        %v2286 = vshrl.u32 683565275, %v2285
        %v2287 = vshll.u32 683565275, %v2284
        %v2288 = vshrl.u32 2475754826, %v2285
        %v2289 = vor.u32 %v2287, %v2288
        %v2290 = vshll.u32 2475754826, %v2284
        %v2291 = vshrl.u32 2131351028, %v2285
        %v2292 = vor.u32 %v2290, %v2291
        %v2293 = vshll.u32 2131351028, %v2284
        %v2294 = vshrl.u32 2102212464, %v2285
        %v2295 = vor.u32 %v2293, %v2294
        %v2296 = vshll.u32 2102212464, %v2284
        %v2297 = vshrl.u32 920167782, %v2285
        %v2298 = vor.u32 %v2296, %v2297
        %v2299 = vshll.u32 920167782, %v2284
        %v2300 = vshrl.u32 1326507024, %v2285
        %v2301 = vor.u32 %v2299, %v2300
        %vm2302 = vcmp.lt.s32.totalorder %v2283, 1
        %vm2303 = vcmp.lt.s32.totalorder %v2283, 2
        %vm2304 = vcmp.lt.s32.totalorder %v2283, 3
        %vm2305 = vcmp.lt.s32.totalorder %v2283, 4
        %v2306 = vsel %vm2302, %v2286, %v2289
        %v2307 = vsel %vm2305, %v2295, 2102212464
        %v2308 = vsel %vm2304, %v2292, %v2307
        %v2309 = vsel %vm2303, %v2306, %v2308
        %v2310 = vsel %vm2302, %v2289, %v2292
        %v2311 = vsel %vm2305, %v2298, 920167782
        %v2312 = vsel %vm2304, %v2295, %v2311
        %v2313 = vsel %vm2303, %v2310, %v2312
        %v2314 = vsel %vm2302, %v2292, %v2295
        %v2315 = vsel %vm2305, %v2301, 1326507024
        %v2316 = vsel %vm2304, %v2298, %v2315
        %v2317 = vsel %vm2303, %v2314, %v2316
        %v2318 = vshll.u32 %v2278, 8
        %v2319 = vmul.u32.u64.compose %v2318, %v2317
        %v2320 = vextract.low.u32 %v2319
        %v2321 = vextract.high.u32 %v2319
        %v2322 = vmul.u32.u64.compose %v2318, %v2313
        %v2323 = vextract.low.u32 %v2322
        %v2324 = vextract.high.u32 %v2322
        %v2325 = vmul.u32 %v2318, %v2309
        %v2326 = vadd.s32 %v2321, %v2323
        %vm2327 = vc.u32 %v2321, %v2323
        %v2328 = vadd.s32 %v2324, 1
        %v2329 = vsel %vm2327, %v2328, %v2324
        %v2330 = vadd.s32 %v2325, %v2329
        %v2331 = vadd.s32 %v2330, 536870912
        %v2332 = vshrl.u32 %v2331, 30
        %v2333 = vshll.u32 %v2332, 30
        %v2334 = vsub.s32 %v2330, %v2333
        %vm2335 = vcmp.lt.s32.totalorder %v2334, 0
        %v2336 = vsub.s32 0, %v2334
        %v2337 = vsel %vm2335, %v2336, %v2334
        %v2338 = vclz %v2337
        %v2339 = vsub.s32 %v2338, 2
        %vm2340 = vcmp.gt.s32.totalorder 0, %v2339
        %v2341 = vsel %vm2340, 0, %v2339
        %v2342 = vsub.s32 32, %v2341
        %v2343 = vshll.u32 %v2334, %v2341
        %v2344 = vshrl.u32 %v2326, %v2342
        %v2345 = vor.u32 %v2343, %v2344
        %v2346 = vsub.s32 4294967266, %v2341
        %v2347 = vadd.s32 %v2346, 127
        %v2348 = vshll.u32 %v2347, 23
        %v2349 = vor.u32 4788187, %v2348
        %v2350 = vand.u32 2147483647, %v2349
        %v2352 = vcvt.s32.f32 %v2345
        %v2353 = vmul.f32 %v2352, %v2350
        %v2354 = vxor.u32 %v2353, 2147483648
        %v2355 = vsel %vm2272, %v2354, %v2353
        %v2356 = vsub.s32 4, %v2332
        %v2357 = vsel %vm2272, %v2356, %v2332
        %v2358 = vsel %vm2271, %v528, %v2355
        %v2359 = vsel %vm2271, 0, %v2357
        %v2360 = vcosq.f32.pop %v2358
        %v2361 = vsinq.f32.pop %v2358
        %vm2362 = vweird.f32 %v528
        %v2363 = vadd.s32 %v2359, 3
        %v2364 = vand.u32 %v2363, 3
        %vm2365 = vcmp.lt.s32.totalorder %v2364, 2
        %vm2366 = vcmp.eq.s32.totalorder %v2364, 0
        %v2367 = vxor.u32 %v2361, 2147483648
        %v2368 = vsel %vm2366, %v2360, %v2367
        %vm2369 = vcmp.eq.s32.totalorder %v2364, 2
        %v2370 = vxor.u32 %v2360, 2147483648
        %v2371 = vsel %vm2369, %v2370, %v2361
        %v2372 = vsel %vm2365, %v2368, %v2371
        %v2373 = vsel %vm2362, nan, %v2372
        %v2374 = vand.u32 2147483647, %v533
        %vm2375 = vcmp.le.f32.partialorder %v2374, 0.7853982
        %vm2376 = vcmp.lt.s32.totalorder %v533, 0
        %v2377 = vand.u32 %v533, 2139095040
        %v2378 = vshrl.u32 %v2377, 23
        %v2379 = vsub.s32 %v2378, 127
        %v2380 = vand.u32 2147483647, %v533
        %v2381 = vand.u32 %v2380, 8388607
        %v2382 = vor.u32 %v2381, 8388608
        %v2383 = vsub.s32 0, %v2382
        %v2384 = vadd.s32 %v2379, 1
        %vm2385 = vcmp.gt.s32.totalorder %v2384, 0
        %v2386 = vsel %vm2385, %v2384, 0
        %v2387 = vshrl.u32 %v2386, 5
        %v2388 = vand.u32 %v2386, 31
        %v2389 = vsub.s32 32, %v2388
        %v2390 = vshrl.u32 683565275, %v2389
        %v2391 = vshll.u32 683565275, %v2388
        %v2392 = vshrl.u32 2475754826, %v2389
        %v2393 = vor.u32 %v2391, %v2392
        %v2394 = vshll.u32 2475754826, %v2388
        %v2395 = vshrl.u32 2131351028, %v2389
        %v2396 = vor.u32 %v2394, %v2395
        %v2397 = vshll.u32 2131351028, %v2388
        %v2398 = vshrl.u32 2102212464, %v2389
        %v2399 = vor.u32 %v2397, %v2398
        %v2400 = vshll.u32 2102212464, %v2388
        %v2401 = vshrl.u32 920167782, %v2389
        %v2402 = vor.u32 %v2400, %v2401
        %v2403 = vshll.u32 920167782, %v2388
        %v2404 = vshrl.u32 1326507024, %v2389
        %v2405 = vor.u32 %v2403, %v2404
        %vm2406 = vcmp.lt.s32.totalorder %v2387, 1
        %vm2407 = vcmp.lt.s32.totalorder %v2387, 2
        %vm2408 = vcmp.lt.s32.totalorder %v2387, 3
        %vm2409 = vcmp.lt.s32.totalorder %v2387, 4
        %v2410 = vsel %vm2406, %v2390, %v2393
        %v2411 = vsel %vm2409, %v2399, 2102212464
        %v2412 = vsel %vm2408, %v2396, %v2411
        %v2413 = vsel %vm2407, %v2410, %v2412
        %v2414 = vsel %vm2406, %v2393, %v2396
        %v2415 = vsel %vm2409, %v2402, 920167782
        %v2416 = vsel %vm2408, %v2399, %v2415
        %v2417 = vsel %vm2407, %v2414, %v2416
        %v2418 = vsel %vm2406, %v2396, %v2399
        %v2419 = vsel %vm2409, %v2405, 1326507024
        %v2420 = vsel %vm2408, %v2402, %v2419
        %v2421 = vsel %vm2407, %v2418, %v2420
        %v2422 = vshll.u32 %v2382, 8
        %v2423 = vmul.u32.u64.compose %v2422, %v2421
        %v2424 = vextract.low.u32 %v2423
        %v2425 = vextract.high.u32 %v2423
        %v2426 = vmul.u32.u64.compose %v2422, %v2417
        %v2427 = vextract.low.u32 %v2426
        %v2428 = vextract.high.u32 %v2426
        %v2429 = vmul.u32 %v2422, %v2413
        %v2430 = vadd.s32 %v2425, %v2427
        %vm2431 = vc.u32 %v2425, %v2427
        %v2432 = vadd.s32 %v2428, 1
        %v2433 = vsel %vm2431, %v2432, %v2428
        %v2434 = vadd.s32 %v2429, %v2433
        %v2435 = vadd.s32 %v2434, 536870912
        %v2436 = vshrl.u32 %v2435, 30
        %v2437 = vshll.u32 %v2436, 30
        %v2438 = vsub.s32 %v2434, %v2437
        %vm2439 = vcmp.lt.s32.totalorder %v2438, 0
        %v2440 = vsub.s32 0, %v2438
        %v2441 = vsel %vm2439, %v2440, %v2438
        %v2442 = vclz %v2441
        %v2443 = vsub.s32 %v2442, 2
        %vm2444 = vcmp.gt.s32.totalorder 0, %v2443
        %v2445 = vsel %vm2444, 0, %v2443
        %v2446 = vsub.s32 32, %v2445
        %v2447 = vshll.u32 %v2438, %v2445
        %v2448 = vshrl.u32 %v2430, %v2446
        %v2449 = vor.u32 %v2447, %v2448
        %v2450 = vsub.s32 4294967266, %v2445
        %v2451 = vadd.s32 %v2450, 127
        %v2452 = vshll.u32 %v2451, 23
        %v2453 = vor.u32 4788187, %v2452
        %v2454 = vand.u32 2147483647, %v2453
        %v2456 = vcvt.s32.f32 %v2449
        %v2457 = vmul.f32 %v2456, %v2454
        %v2458 = vxor.u32 %v2457, 2147483648
        %v2459 = vsel %vm2376, %v2458, %v2457
        %v2460 = vsub.s32 4, %v2436
        %v2461 = vsel %vm2376, %v2460, %v2436
        %v2462 = vsel %vm2375, %v533, %v2459
        %v2463 = vsel %vm2375, 0, %v2461
        %v2464 = vcosq.f32.pop %v2462
        %v2465 = vsinq.f32.pop %v2462
        %vm2466 = vweird.f32 %v533
        %v2467 = vadd.s32 %v2463, 3
        %v2468 = vand.u32 %v2467, 3
        %vm2469 = vcmp.lt.s32.totalorder %v2468, 2
        %vm2470 = vcmp.eq.s32.totalorder %v2468, 0
        %v2471 = vxor.u32 %v2465, 2147483648
        %v2472 = vsel %vm2470, %v2464, %v2471
        %vm2473 = vcmp.eq.s32.totalorder %v2468, 2
        %v2474 = vxor.u32 %v2464, 2147483648
        %v2475 = vsel %vm2473, %v2474, %v2465
        %v2476 = vsel %vm2469, %v2472, %v2475
        %v2477 = vsel %vm2466, nan, %v2476
        %v2478 = vand.u32 2147483647, %v538
        %vm2479 = vcmp.le.f32.partialorder %v2478, 0.7853982
        %vm2480 = vcmp.lt.s32.totalorder %v538, 0
        %v2481 = vand.u32 %v538, 2139095040
        %v2482 = vshrl.u32 %v2481, 23
        %v2483 = vsub.s32 %v2482, 127
        %v2484 = vand.u32 2147483647, %v538
        %v2485 = vand.u32 %v2484, 8388607
        %v2486 = vor.u32 %v2485, 8388608
        %v2487 = vsub.s32 0, %v2486
        %v2488 = vadd.s32 %v2483, 1
        %vm2489 = vcmp.gt.s32.totalorder %v2488, 0
        %v2490 = vsel %vm2489, %v2488, 0
        %v2491 = vshrl.u32 %v2490, 5
        %v2492 = vand.u32 %v2490, 31
        %v2493 = vsub.s32 32, %v2492
        %v2494 = vshrl.u32 683565275, %v2493
        %v2495 = vshll.u32 683565275, %v2492
        %v2496 = vshrl.u32 2475754826, %v2493
        %v2497 = vor.u32 %v2495, %v2496
        %v2498 = vshll.u32 2475754826, %v2492
        %v2499 = vshrl.u32 2131351028, %v2493
        %v2500 = vor.u32 %v2498, %v2499
        %v2501 = vshll.u32 2131351028, %v2492
        %v2502 = vshrl.u32 2102212464, %v2493
        %v2503 = vor.u32 %v2501, %v2502
        %v2504 = vshll.u32 2102212464, %v2492
        %v2505 = vshrl.u32 920167782, %v2493
        %v2506 = vor.u32 %v2504, %v2505
        %v2507 = vshll.u32 920167782, %v2492
        %v2508 = vshrl.u32 1326507024, %v2493
        %v2509 = vor.u32 %v2507, %v2508
        %vm2510 = vcmp.lt.s32.totalorder %v2491, 1
        %vm2511 = vcmp.lt.s32.totalorder %v2491, 2
        %vm2512 = vcmp.lt.s32.totalorder %v2491, 3
        %vm2513 = vcmp.lt.s32.totalorder %v2491, 4
        %v2514 = vsel %vm2510, %v2494, %v2497
        %v2515 = vsel %vm2513, %v2503, 2102212464
        %v2516 = vsel %vm2512, %v2500, %v2515
        %v2517 = vsel %vm2511, %v2514, %v2516
        %v2518 = vsel %vm2510, %v2497, %v2500
        %v2519 = vsel %vm2513, %v2506, 920167782
        %v2520 = vsel %vm2512, %v2503, %v2519
        %v2521 = vsel %vm2511, %v2518, %v2520
        %v2522 = vsel %vm2510, %v2500, %v2503
        %v2523 = vsel %vm2513, %v2509, 1326507024
        %v2524 = vsel %vm2512, %v2506, %v2523
        %v2525 = vsel %vm2511, %v2522, %v2524
        %v2526 = vshll.u32 %v2486, 8
        %v2527 = vmul.u32.u64.compose %v2526, %v2525
        %v2528 = vextract.low.u32 %v2527
        %v2529 = vextract.high.u32 %v2527
        %v2530 = vmul.u32.u64.compose %v2526, %v2521
        %v2531 = vextract.low.u32 %v2530
        %v2532 = vextract.high.u32 %v2530
        %v2533 = vmul.u32 %v2526, %v2517
        %v2534 = vadd.s32 %v2529, %v2531
        %vm2535 = vc.u32 %v2529, %v2531
        %v2536 = vadd.s32 %v2532, 1
        %v2537 = vsel %vm2535, %v2536, %v2532
        %v2538 = vadd.s32 %v2533, %v2537
        %v2539 = vadd.s32 %v2538, 536870912
        %v2540 = vshrl.u32 %v2539, 30
        %v2541 = vshll.u32 %v2540, 30
        %v2542 = vsub.s32 %v2538, %v2541
        %vm2543 = vcmp.lt.s32.totalorder %v2542, 0
        %v2544 = vsub.s32 0, %v2542
        %v2545 = vsel %vm2543, %v2544, %v2542
        %v2546 = vclz %v2545
        %v2547 = vsub.s32 %v2546, 2
        %vm2548 = vcmp.gt.s32.totalorder 0, %v2547
        %v2549 = vsel %vm2548, 0, %v2547
        %v2550 = vsub.s32 32, %v2549
        %v2551 = vshll.u32 %v2542, %v2549
        %v2552 = vshrl.u32 %v2534, %v2550
        %v2553 = vor.u32 %v2551, %v2552
        %v2554 = vsub.s32 4294967266, %v2549
        %v2555 = vadd.s32 %v2554, 127
        %v2556 = vshll.u32 %v2555, 23
        %v2557 = vor.u32 4788187, %v2556
        %v2558 = vand.u32 2147483647, %v2557
        %v2560 = vcvt.s32.f32 %v2553
        %v2561 = vmul.f32 %v2560, %v2558
        %v2562 = vxor.u32 %v2561, 2147483648
        %v2563 = vsel %vm2480, %v2562, %v2561
        %v2564 = vsub.s32 4, %v2540
        %v2565 = vsel %vm2480, %v2564, %v2540
        %v2566 = vsel %vm2479, %v538, %v2563
        %v2567 = vsel %vm2479, 0, %v2565
        %v2568 = vcosq.f32.pop %v2566
        %v2569 = vsinq.f32.pop %v2566
        %vm2570 = vweird.f32 %v538
        %v2571 = vadd.s32 %v2567, 3
        %v2572 = vand.u32 %v2571, 3
        %vm2573 = vcmp.lt.s32.totalorder %v2572, 2
        %vm2574 = vcmp.eq.s32.totalorder %v2572, 0
        %v2575 = vxor.u32 %v2569, 2147483648
        %v2576 = vsel %vm2574, %v2568, %v2575
        %vm2577 = vcmp.eq.s32.totalorder %v2572, 2
        %v2578 = vxor.u32 %v2568, 2147483648
        %v2579 = vsel %vm2577, %v2578, %v2569
        %v2580 = vsel %vm2573, %v2576, %v2579
        %v2581 = vsel %vm2570, nan, %v2580
        %v2582 = vand.u32 2147483647, %v543
        %vm2583 = vcmp.le.f32.partialorder %v2582, 0.7853982
        %vm2584 = vcmp.lt.s32.totalorder %v543, 0
        %v2585 = vand.u32 %v543, 2139095040
        %v2586 = vshrl.u32 %v2585, 23
        %v2587 = vsub.s32 %v2586, 127
        %v2588 = vand.u32 2147483647, %v543
        %v2589 = vand.u32 %v2588, 8388607
        %v2590 = vor.u32 %v2589, 8388608
        %v2591 = vsub.s32 0, %v2590
        %v2592 = vadd.s32 %v2587, 1
        %vm2593 = vcmp.gt.s32.totalorder %v2592, 0
        %v2594 = vsel %vm2593, %v2592, 0
        %v2595 = vshrl.u32 %v2594, 5
        %v2596 = vand.u32 %v2594, 31
        %v2597 = vsub.s32 32, %v2596
        %v2598 = vshrl.u32 683565275, %v2597
        %v2599 = vshll.u32 683565275, %v2596
        %v2600 = vshrl.u32 2475754826, %v2597
        %v2601 = vor.u32 %v2599, %v2600
        %v2602 = vshll.u32 2475754826, %v2596
        %v2603 = vshrl.u32 2131351028, %v2597
        %v2604 = vor.u32 %v2602, %v2603
        %v2605 = vshll.u32 2131351028, %v2596
        %v2606 = vshrl.u32 2102212464, %v2597
        %v2607 = vor.u32 %v2605, %v2606
        %v2608 = vshll.u32 2102212464, %v2596
        %v2609 = vshrl.u32 920167782, %v2597
        %v2610 = vor.u32 %v2608, %v2609
        %v2611 = vshll.u32 920167782, %v2596
        %v2612 = vshrl.u32 1326507024, %v2597
        %v2613 = vor.u32 %v2611, %v2612
        %vm2614 = vcmp.lt.s32.totalorder %v2595, 1
        %vm2615 = vcmp.lt.s32.totalorder %v2595, 2
        %vm2616 = vcmp.lt.s32.totalorder %v2595, 3
        %vm2617 = vcmp.lt.s32.totalorder %v2595, 4
        %v2618 = vsel %vm2614, %v2598, %v2601
        %v2619 = vsel %vm2617, %v2607, 2102212464
        %v2620 = vsel %vm2616, %v2604, %v2619
        %v2621 = vsel %vm2615, %v2618, %v2620
        %v2622 = vsel %vm2614, %v2601, %v2604
        %v2623 = vsel %vm2617, %v2610, 920167782
        %v2624 = vsel %vm2616, %v2607, %v2623
        %v2625 = vsel %vm2615, %v2622, %v2624
        %v2626 = vsel %vm2614, %v2604, %v2607
        %v2627 = vsel %vm2617, %v2613, 1326507024
        %v2628 = vsel %vm2616, %v2610, %v2627
        %v2629 = vsel %vm2615, %v2626, %v2628
        %v2630 = vshll.u32 %v2590, 8
        %v2631 = vmul.u32.u64.compose %v2630, %v2629
        %v2632 = vextract.low.u32 %v2631
        %v2633 = vextract.high.u32 %v2631
        %v2634 = vmul.u32.u64.compose %v2630, %v2625
        %v2635 = vextract.low.u32 %v2634
        %v2636 = vextract.high.u32 %v2634
        %v2637 = vmul.u32 %v2630, %v2621
        %v2638 = vadd.s32 %v2633, %v2635
        %vm2639 = vc.u32 %v2633, %v2635
        %v2640 = vadd.s32 %v2636, 1
        %v2641 = vsel %vm2639, %v2640, %v2636
        %v2642 = vadd.s32 %v2637, %v2641
        %v2643 = vadd.s32 %v2642, 536870912
        %v2644 = vshrl.u32 %v2643, 30
        %v2645 = vshll.u32 %v2644, 30
        %v2646 = vsub.s32 %v2642, %v2645
        %vm2647 = vcmp.lt.s32.totalorder %v2646, 0
        %v2648 = vsub.s32 0, %v2646
        %v2649 = vsel %vm2647, %v2648, %v2646
        %v2650 = vclz %v2649
        %v2651 = vsub.s32 %v2650, 2
        %vm2652 = vcmp.gt.s32.totalorder 0, %v2651
        %v2653 = vsel %vm2652, 0, %v2651
        %v2654 = vsub.s32 32, %v2653
        %v2655 = vshll.u32 %v2646, %v2653
        %v2656 = vshrl.u32 %v2638, %v2654
        %v2657 = vor.u32 %v2655, %v2656
        %v2658 = vsub.s32 4294967266, %v2653
        %v2659 = vadd.s32 %v2658, 127
        %v2660 = vshll.u32 %v2659, 23
        %v2661 = vor.u32 4788187, %v2660
        %v2662 = vand.u32 2147483647, %v2661
        %v2664 = vcvt.s32.f32 %v2657
        %v2665 = vmul.f32 %v2664, %v2662
        %v2666 = vxor.u32 %v2665, 2147483648
        %v2667 = vsel %vm2584, %v2666, %v2665
        %v2668 = vsub.s32 4, %v2644
        %v2669 = vsel %vm2584, %v2668, %v2644
        %v2670 = vsel %vm2583, %v543, %v2667
        %v2671 = vsel %vm2583, 0, %v2669
        %v2672 = vcosq.f32.pop %v2670
        %v2673 = vsinq.f32.pop %v2670
        %vm2674 = vweird.f32 %v543
        %v2675 = vadd.s32 %v2671, 3
        %v2676 = vand.u32 %v2675, 3
        %vm2677 = vcmp.lt.s32.totalorder %v2676, 2
        %vm2678 = vcmp.eq.s32.totalorder %v2676, 0
        %v2679 = vxor.u32 %v2673, 2147483648
        %v2680 = vsel %vm2678, %v2672, %v2679
        %vm2681 = vcmp.eq.s32.totalorder %v2676, 2
        %v2682 = vxor.u32 %v2672, 2147483648
        %v2683 = vsel %vm2681, %v2682, %v2673
        %v2684 = vsel %vm2677, %v2680, %v2683
        %v2685 = vsel %vm2674, nan, %v2684
        %v2686 = vand.u32 2147483647, %v548
        %vm2687 = vcmp.le.f32.partialorder %v2686, 0.7853982
        %vm2688 = vcmp.lt.s32.totalorder %v548, 0
        %v2689 = vand.u32 %v548, 2139095040
        %v2690 = vshrl.u32 %v2689, 23
        %v2691 = vsub.s32 %v2690, 127
        %v2692 = vand.u32 2147483647, %v548
        %v2693 = vand.u32 %v2692, 8388607
        %v2694 = vor.u32 %v2693, 8388608
        %v2695 = vsub.s32 0, %v2694
        %v2696 = vadd.s32 %v2691, 1
        %vm2697 = vcmp.gt.s32.totalorder %v2696, 0
        %v2698 = vsel %vm2697, %v2696, 0
        %v2699 = vshrl.u32 %v2698, 5
        %v2700 = vand.u32 %v2698, 31
        %v2701 = vsub.s32 32, %v2700
        %v2702 = vshrl.u32 683565275, %v2701
        %v2703 = vshll.u32 683565275, %v2700
        %v2704 = vshrl.u32 2475754826, %v2701
        %v2705 = vor.u32 %v2703, %v2704
        %v2706 = vshll.u32 2475754826, %v2700
        %v2707 = vshrl.u32 2131351028, %v2701
        %v2708 = vor.u32 %v2706, %v2707
        %v2709 = vshll.u32 2131351028, %v2700
        %v2710 = vshrl.u32 2102212464, %v2701
        %v2711 = vor.u32 %v2709, %v2710
        %v2712 = vshll.u32 2102212464, %v2700
        %v2713 = vshrl.u32 920167782, %v2701
        %v2714 = vor.u32 %v2712, %v2713
        %v2715 = vshll.u32 920167782, %v2700
        %v2716 = vshrl.u32 1326507024, %v2701
        %v2717 = vor.u32 %v2715, %v2716
        %vm2718 = vcmp.lt.s32.totalorder %v2699, 1
        %vm2719 = vcmp.lt.s32.totalorder %v2699, 2
        %vm2720 = vcmp.lt.s32.totalorder %v2699, 3
        %vm2721 = vcmp.lt.s32.totalorder %v2699, 4
        %v2722 = vsel %vm2718, %v2702, %v2705
        %v2723 = vsel %vm2721, %v2711, 2102212464
        %v2724 = vsel %vm2720, %v2708, %v2723
        %v2725 = vsel %vm2719, %v2722, %v2724
        %v2726 = vsel %vm2718, %v2705, %v2708
        %v2727 = vsel %vm2721, %v2714, 920167782
        %v2728 = vsel %vm2720, %v2711, %v2727
        %v2729 = vsel %vm2719, %v2726, %v2728
        %v2730 = vsel %vm2718, %v2708, %v2711
        %v2731 = vsel %vm2721, %v2717, 1326507024
        %v2732 = vsel %vm2720, %v2714, %v2731
        %v2733 = vsel %vm2719, %v2730, %v2732
        %v2734 = vshll.u32 %v2694, 8
        %v2735 = vmul.u32.u64.compose %v2734, %v2733
        %v2736 = vextract.low.u32 %v2735
        %v2737 = vextract.high.u32 %v2735
        %v2738 = vmul.u32.u64.compose %v2734, %v2729
        %v2739 = vextract.low.u32 %v2738
        %v2740 = vextract.high.u32 %v2738
        %v2741 = vmul.u32 %v2734, %v2725
        %v2742 = vadd.s32 %v2737, %v2739
        %vm2743 = vc.u32 %v2737, %v2739
        %v2744 = vadd.s32 %v2740, 1
        %v2745 = vsel %vm2743, %v2744, %v2740
        %v2746 = vadd.s32 %v2741, %v2745
        %v2747 = vadd.s32 %v2746, 536870912
        %v2748 = vshrl.u32 %v2747, 30
        %v2749 = vshll.u32 %v2748, 30
        %v2750 = vsub.s32 %v2746, %v2749
        %vm2751 = vcmp.lt.s32.totalorder %v2750, 0
        %v2752 = vsub.s32 0, %v2750
        %v2753 = vsel %vm2751, %v2752, %v2750
        %v2754 = vclz %v2753
        %v2755 = vsub.s32 %v2754, 2
        %vm2756 = vcmp.gt.s32.totalorder 0, %v2755
        %v2757 = vsel %vm2756, 0, %v2755
        %v2758 = vsub.s32 32, %v2757
        %v2759 = vshll.u32 %v2750, %v2757
        %v2760 = vshrl.u32 %v2742, %v2758
        %v2761 = vor.u32 %v2759, %v2760
        %v2762 = vsub.s32 4294967266, %v2757
        %v2763 = vadd.s32 %v2762, 127
        %v2764 = vshll.u32 %v2763, 23
        %v2765 = vor.u32 4788187, %v2764
        %v2766 = vand.u32 2147483647, %v2765
        %v2768 = vcvt.s32.f32 %v2761
        %v2769 = vmul.f32 %v2768, %v2766
        %v2770 = vxor.u32 %v2769, 2147483648
        %v2771 = vsel %vm2688, %v2770, %v2769
        %v2772 = vsub.s32 4, %v2748
        %v2773 = vsel %vm2688, %v2772, %v2748
        %v2774 = vsel %vm2687, %v548, %v2771
        %v2775 = vsel %vm2687, 0, %v2773
        %v2776 = vcosq.f32.pop %v2774
        %v2777 = vsinq.f32.pop %v2774
        %vm2778 = vweird.f32 %v548
        %v2779 = vadd.s32 %v2775, 3
        %v2780 = vand.u32 %v2779, 3
        %vm2781 = vcmp.lt.s32.totalorder %v2780, 2
        %vm2782 = vcmp.eq.s32.totalorder %v2780, 0
        %v2783 = vxor.u32 %v2777, 2147483648
        %v2784 = vsel %vm2782, %v2776, %v2783
        %vm2785 = vcmp.eq.s32.totalorder %v2780, 2
        %v2786 = vxor.u32 %v2776, 2147483648
        %v2787 = vsel %vm2785, %v2786, %v2777
        %v2788 = vsel %vm2781, %v2784, %v2787
        %v2789 = vsel %vm2778, nan, %v2788
        %v2790 = vand.u32 2147483647, %v553
        %vm2791 = vcmp.le.f32.partialorder %v2790, 0.7853982
        %vm2792 = vcmp.lt.s32.totalorder %v553, 0
        %v2793 = vand.u32 %v553, 2139095040
        %v2794 = vshrl.u32 %v2793, 23
        %v2795 = vsub.s32 %v2794, 127
        %v2796 = vand.u32 2147483647, %v553
        %v2797 = vand.u32 %v2796, 8388607
        %v2798 = vor.u32 %v2797, 8388608
        %v2799 = vsub.s32 0, %v2798
        %v2800 = vadd.s32 %v2795, 1
        %vm2801 = vcmp.gt.s32.totalorder %v2800, 0
        %v2802 = vsel %vm2801, %v2800, 0
        %v2803 = vshrl.u32 %v2802, 5
        %v2804 = vand.u32 %v2802, 31
        %v2805 = vsub.s32 32, %v2804
        %v2806 = vshrl.u32 683565275, %v2805
        %v2807 = vshll.u32 683565275, %v2804
        %v2808 = vshrl.u32 2475754826, %v2805
        %v2809 = vor.u32 %v2807, %v2808
        %v2810 = vshll.u32 2475754826, %v2804
        %v2811 = vshrl.u32 2131351028, %v2805
        %v2812 = vor.u32 %v2810, %v2811
        %v2813 = vshll.u32 2131351028, %v2804
        %v2814 = vshrl.u32 2102212464, %v2805
        %v2815 = vor.u32 %v2813, %v2814
        %v2816 = vshll.u32 2102212464, %v2804
        %v2817 = vshrl.u32 920167782, %v2805
        %v2818 = vor.u32 %v2816, %v2817
        %v2819 = vshll.u32 920167782, %v2804
        %v2820 = vshrl.u32 1326507024, %v2805
        %v2821 = vor.u32 %v2819, %v2820
        %vm2822 = vcmp.lt.s32.totalorder %v2803, 1
        %vm2823 = vcmp.lt.s32.totalorder %v2803, 2
        %vm2824 = vcmp.lt.s32.totalorder %v2803, 3
        %vm2825 = vcmp.lt.s32.totalorder %v2803, 4
        %v2826 = vsel %vm2822, %v2806, %v2809
        %v2827 = vsel %vm2825, %v2815, 2102212464
        %v2828 = vsel %vm2824, %v2812, %v2827
        %v2829 = vsel %vm2823, %v2826, %v2828
        %v2830 = vsel %vm2822, %v2809, %v2812
        %v2831 = vsel %vm2825, %v2818, 920167782
        %v2832 = vsel %vm2824, %v2815, %v2831
        %v2833 = vsel %vm2823, %v2830, %v2832
        %v2834 = vsel %vm2822, %v2812, %v2815
        %v2835 = vsel %vm2825, %v2821, 1326507024
        %v2836 = vsel %vm2824, %v2818, %v2835
        %v2837 = vsel %vm2823, %v2834, %v2836
        %v2838 = vshll.u32 %v2798, 8
        %v2839 = vmul.u32.u64.compose %v2838, %v2837
        %v2840 = vextract.low.u32 %v2839
        %v2841 = vextract.high.u32 %v2839
        %v2842 = vmul.u32.u64.compose %v2838, %v2833
        %v2843 = vextract.low.u32 %v2842
        %v2844 = vextract.high.u32 %v2842
        %v2845 = vmul.u32 %v2838, %v2829
        %v2846 = vadd.s32 %v2841, %v2843
        %vm2847 = vc.u32 %v2841, %v2843
        %v2848 = vadd.s32 %v2844, 1
        %v2849 = vsel %vm2847, %v2848, %v2844
        %v2850 = vadd.s32 %v2845, %v2849
        %v2851 = vadd.s32 %v2850, 536870912
        %v2852 = vshrl.u32 %v2851, 30
        %v2853 = vshll.u32 %v2852, 30
        %v2854 = vsub.s32 %v2850, %v2853
        %vm2855 = vcmp.lt.s32.totalorder %v2854, 0
        %v2856 = vsub.s32 0, %v2854
        %v2857 = vsel %vm2855, %v2856, %v2854
        %v2858 = vclz %v2857
        %v2859 = vsub.s32 %v2858, 2
        %vm2860 = vcmp.gt.s32.totalorder 0, %v2859
        %v2861 = vsel %vm2860, 0, %v2859
        %v2862 = vsub.s32 32, %v2861
        %v2863 = vshll.u32 %v2854, %v2861
        %v2864 = vshrl.u32 %v2846, %v2862
        %v2865 = vor.u32 %v2863, %v2864
        %v2866 = vsub.s32 4294967266, %v2861
        %v2867 = vadd.s32 %v2866, 127
        %v2868 = vshll.u32 %v2867, 23
        %v2869 = vor.u32 4788187, %v2868
        %v2870 = vand.u32 2147483647, %v2869
        %v2872 = vcvt.s32.f32 %v2865
        %v2873 = vmul.f32 %v2872, %v2870
        %v2874 = vxor.u32 %v2873, 2147483648
        %v2875 = vsel %vm2792, %v2874, %v2873
        %v2876 = vsub.s32 4, %v2852
        %v2877 = vsel %vm2792, %v2876, %v2852
        %v2878 = vsel %vm2791, %v553, %v2875
        %v2879 = vsel %vm2791, 0, %v2877
        %v2880 = vcosq.f32.pop %v2878
        %v2881 = vsinq.f32.pop %v2878
        %vm2882 = vweird.f32 %v553
        %v2883 = vadd.s32 %v2879, 3
        %v2884 = vand.u32 %v2883, 3
        %vm2885 = vcmp.lt.s32.totalorder %v2884, 2
        %vm2886 = vcmp.eq.s32.totalorder %v2884, 0
        %v2887 = vxor.u32 %v2881, 2147483648
        %v2888 = vsel %vm2886, %v2880, %v2887
        %vm2889 = vcmp.eq.s32.totalorder %v2884, 2
        %v2890 = vxor.u32 %v2880, 2147483648
        %v2891 = vsel %vm2889, %v2890, %v2881
        %v2892 = vsel %vm2885, %v2888, %v2891
        %v2893 = vsel %vm2882, nan, %v2892
        %v2894 = vand.u32 2147483647, %v558
        %vm2895 = vcmp.le.f32.partialorder %v2894, 0.7853982
        %vm2896 = vcmp.lt.s32.totalorder %v558, 0
        %v2897 = vand.u32 %v558, 2139095040
        %v2898 = vshrl.u32 %v2897, 23
        %v2899 = vsub.s32 %v2898, 127
        %v2900 = vand.u32 2147483647, %v558
        %v2901 = vand.u32 %v2900, 8388607
        %v2902 = vor.u32 %v2901, 8388608
        %v2903 = vsub.s32 0, %v2902
        %v2904 = vadd.s32 %v2899, 1
        %vm2905 = vcmp.gt.s32.totalorder %v2904, 0
        %v2906 = vsel %vm2905, %v2904, 0
        %v2907 = vshrl.u32 %v2906, 5
        %v2908 = vand.u32 %v2906, 31
        %v2909 = vsub.s32 32, %v2908
        %v2910 = vshrl.u32 683565275, %v2909
        %v2911 = vshll.u32 683565275, %v2908
        %v2912 = vshrl.u32 2475754826, %v2909
        %v2913 = vor.u32 %v2911, %v2912
        %v2914 = vshll.u32 2475754826, %v2908
        %v2915 = vshrl.u32 2131351028, %v2909
        %v2916 = vor.u32 %v2914, %v2915
        %v2917 = vshll.u32 2131351028, %v2908
        %v2918 = vshrl.u32 2102212464, %v2909
        %v2919 = vor.u32 %v2917, %v2918
        %v2920 = vshll.u32 2102212464, %v2908
        %v2921 = vshrl.u32 920167782, %v2909
        %v2922 = vor.u32 %v2920, %v2921
        %v2923 = vshll.u32 920167782, %v2908
        %v2924 = vshrl.u32 1326507024, %v2909
        %v2925 = vor.u32 %v2923, %v2924
        %vm2926 = vcmp.lt.s32.totalorder %v2907, 1
        %vm2927 = vcmp.lt.s32.totalorder %v2907, 2
        %vm2928 = vcmp.lt.s32.totalorder %v2907, 3
        %vm2929 = vcmp.lt.s32.totalorder %v2907, 4
        %v2930 = vsel %vm2926, %v2910, %v2913
        %v2931 = vsel %vm2929, %v2919, 2102212464
        %v2932 = vsel %vm2928, %v2916, %v2931
        %v2933 = vsel %vm2927, %v2930, %v2932
        %v2934 = vsel %vm2926, %v2913, %v2916
        %v2935 = vsel %vm2929, %v2922, 920167782
        %v2936 = vsel %vm2928, %v2919, %v2935
        %v2937 = vsel %vm2927, %v2934, %v2936
        %v2938 = vsel %vm2926, %v2916, %v2919
        %v2939 = vsel %vm2929, %v2925, 1326507024
        %v2940 = vsel %vm2928, %v2922, %v2939
        %v2941 = vsel %vm2927, %v2938, %v2940
        %v2942 = vshll.u32 %v2902, 8
        %v2943 = vmul.u32.u64.compose %v2942, %v2941
        %v2944 = vextract.low.u32 %v2943
        %v2945 = vextract.high.u32 %v2943
        %v2946 = vmul.u32.u64.compose %v2942, %v2937
        %v2947 = vextract.low.u32 %v2946
        %v2948 = vextract.high.u32 %v2946
        %v2949 = vmul.u32 %v2942, %v2933
        %v2950 = vadd.s32 %v2945, %v2947
        %vm2951 = vc.u32 %v2945, %v2947
        %v2952 = vadd.s32 %v2948, 1
        %v2953 = vsel %vm2951, %v2952, %v2948
        %v2954 = vadd.s32 %v2949, %v2953
        %v2955 = vadd.s32 %v2954, 536870912
        %v2956 = vshrl.u32 %v2955, 30
        %v2957 = vshll.u32 %v2956, 30
        %v2958 = vsub.s32 %v2954, %v2957
        %vm2959 = vcmp.lt.s32.totalorder %v2958, 0
        %v2960 = vsub.s32 0, %v2958
        %v2961 = vsel %vm2959, %v2960, %v2958
        %v2962 = vclz %v2961
        %v2963 = vsub.s32 %v2962, 2
        %vm2964 = vcmp.gt.s32.totalorder 0, %v2963
        %v2965 = vsel %vm2964, 0, %v2963
        %v2966 = vsub.s32 32, %v2965
        %v2967 = vshll.u32 %v2958, %v2965
        %v2968 = vshrl.u32 %v2950, %v2966
        %v2969 = vor.u32 %v2967, %v2968
        %v2970 = vsub.s32 4294967266, %v2965
        %v2971 = vadd.s32 %v2970, 127
        %v2972 = vshll.u32 %v2971, 23
        %v2973 = vor.u32 4788187, %v2972
        %v2974 = vand.u32 2147483647, %v2973
        %v2976 = vcvt.s32.f32 %v2969
        %v2977 = vmul.f32 %v2976, %v2974
        %v2978 = vxor.u32 %v2977, 2147483648
        %v2979 = vsel %vm2896, %v2978, %v2977
        %v2980 = vsub.s32 4, %v2956
        %v2981 = vsel %vm2896, %v2980, %v2956
        %v2982 = vsel %vm2895, %v558, %v2979
        %v2983 = vsel %vm2895, 0, %v2981
        %v2984 = vcosq.f32.pop %v2982
        %v2985 = vsinq.f32.pop %v2982
        %vm2986 = vweird.f32 %v558
        %v2987 = vadd.s32 %v2983, 3
        %v2988 = vand.u32 %v2987, 3
        %vm2989 = vcmp.lt.s32.totalorder %v2988, 2
        %vm2990 = vcmp.eq.s32.totalorder %v2988, 0
        %v2991 = vxor.u32 %v2985, 2147483648
        %v2992 = vsel %vm2990, %v2984, %v2991
        %vm2993 = vcmp.eq.s32.totalorder %v2988, 2
        %v2994 = vxor.u32 %v2984, 2147483648
        %v2995 = vsel %vm2993, %v2994, %v2985
        %v2996 = vsel %vm2989, %v2992, %v2995
        %v2997 = vsel %vm2986, nan, %v2996
        %v2998 = vand.u32 2147483647, %v563
        %vm2999 = vcmp.le.f32.partialorder %v2998, 0.7853982
        %vm3000 = vcmp.lt.s32.totalorder %v563, 0
        %v3001 = vand.u32 %v563, 2139095040
        %v3002 = vshrl.u32 %v3001, 23
        %v3003 = vsub.s32 %v3002, 127
        %v3004 = vand.u32 2147483647, %v563
        %v3005 = vand.u32 %v3004, 8388607
        %v3006 = vor.u32 %v3005, 8388608
        %v3007 = vsub.s32 0, %v3006
        %v3008 = vadd.s32 %v3003, 1
        %vm3009 = vcmp.gt.s32.totalorder %v3008, 0
        %v3010 = vsel %vm3009, %v3008, 0
        %v3011 = vshrl.u32 %v3010, 5
        %v3012 = vand.u32 %v3010, 31
        %v3013 = vsub.s32 32, %v3012
        %v3014 = vshrl.u32 683565275, %v3013
        %v3015 = vshll.u32 683565275, %v3012
        %v3016 = vshrl.u32 2475754826, %v3013
        %v3017 = vor.u32 %v3015, %v3016
        %v3018 = vshll.u32 2475754826, %v3012
        %v3019 = vshrl.u32 2131351028, %v3013
        %v3020 = vor.u32 %v3018, %v3019
        %v3021 = vshll.u32 2131351028, %v3012
        %v3022 = vshrl.u32 2102212464, %v3013
        %v3023 = vor.u32 %v3021, %v3022
        %v3024 = vshll.u32 2102212464, %v3012
        %v3025 = vshrl.u32 920167782, %v3013
        %v3026 = vor.u32 %v3024, %v3025
        %v3027 = vshll.u32 920167782, %v3012
        %v3028 = vshrl.u32 1326507024, %v3013
        %v3029 = vor.u32 %v3027, %v3028
        %vm3030 = vcmp.lt.s32.totalorder %v3011, 1
        %vm3031 = vcmp.lt.s32.totalorder %v3011, 2
        %vm3032 = vcmp.lt.s32.totalorder %v3011, 3
        %vm3033 = vcmp.lt.s32.totalorder %v3011, 4
        %v3034 = vsel %vm3030, %v3014, %v3017
        %v3035 = vsel %vm3033, %v3023, 2102212464
        %v3036 = vsel %vm3032, %v3020, %v3035
        %v3037 = vsel %vm3031, %v3034, %v3036
        %v3038 = vsel %vm3030, %v3017, %v3020
        %v3039 = vsel %vm3033, %v3026, 920167782
        %v3040 = vsel %vm3032, %v3023, %v3039
        %v3041 = vsel %vm3031, %v3038, %v3040
        %v3042 = vsel %vm3030, %v3020, %v3023
        %v3043 = vsel %vm3033, %v3029, 1326507024
        %v3044 = vsel %vm3032, %v3026, %v3043
        %v3045 = vsel %vm3031, %v3042, %v3044
        %v3046 = vshll.u32 %v3006, 8
        %v3047 = vmul.u32.u64.compose %v3046, %v3045
        %v3048 = vextract.low.u32 %v3047
        %v3049 = vextract.high.u32 %v3047
        %v3050 = vmul.u32.u64.compose %v3046, %v3041
        %v3051 = vextract.low.u32 %v3050
        %v3052 = vextract.high.u32 %v3050
        %v3053 = vmul.u32 %v3046, %v3037
        %v3054 = vadd.s32 %v3049, %v3051
        %vm3055 = vc.u32 %v3049, %v3051
        %v3056 = vadd.s32 %v3052, 1
        %v3057 = vsel %vm3055, %v3056, %v3052
        %v3058 = vadd.s32 %v3053, %v3057
        %v3059 = vadd.s32 %v3058, 536870912
        %v3060 = vshrl.u32 %v3059, 30
        %v3061 = vshll.u32 %v3060, 30
        %v3062 = vsub.s32 %v3058, %v3061
        %vm3063 = vcmp.lt.s32.totalorder %v3062, 0
        %v3064 = vsub.s32 0, %v3062
        %v3065 = vsel %vm3063, %v3064, %v3062
        %v3066 = vclz %v3065
        %v3067 = vsub.s32 %v3066, 2
        %vm3068 = vcmp.gt.s32.totalorder 0, %v3067
        %v3069 = vsel %vm3068, 0, %v3067
        %v3070 = vsub.s32 32, %v3069
        %v3071 = vshll.u32 %v3062, %v3069
        %v3072 = vshrl.u32 %v3054, %v3070
        %v3073 = vor.u32 %v3071, %v3072
        %v3074 = vsub.s32 4294967266, %v3069
        %v3075 = vadd.s32 %v3074, 127
        %v3076 = vshll.u32 %v3075, 23
        %v3077 = vor.u32 4788187, %v3076
        %v3078 = vand.u32 2147483647, %v3077
        %v3080 = vcvt.s32.f32 %v3073
        %v3081 = vmul.f32 %v3080, %v3078
        %v3082 = vxor.u32 %v3081, 2147483648
        %v3083 = vsel %vm3000, %v3082, %v3081
        %v3084 = vsub.s32 4, %v3060
        %v3085 = vsel %vm3000, %v3084, %v3060
        %v3086 = vsel %vm2999, %v563, %v3083
        %v3087 = vsel %vm2999, 0, %v3085
        %v3088 = vcosq.f32.pop %v3086
        %v3089 = vsinq.f32.pop %v3086
        %vm3090 = vweird.f32 %v563
        %v3091 = vadd.s32 %v3087, 3
        %v3092 = vand.u32 %v3091, 3
        %vm3093 = vcmp.lt.s32.totalorder %v3092, 2
        %vm3094 = vcmp.eq.s32.totalorder %v3092, 0
        %v3095 = vxor.u32 %v3089, 2147483648
        %v3096 = vsel %vm3094, %v3088, %v3095
        %vm3097 = vcmp.eq.s32.totalorder %v3092, 2
        %v3098 = vxor.u32 %v3088, 2147483648
        %v3099 = vsel %vm3097, %v3098, %v3089
        %v3100 = vsel %vm3093, %v3096, %v3099
        %v3101 = vsel %vm3090, nan, %v3100
        %v3102 = vand.u32 2147483647, %v568
        %vm3103 = vcmp.le.f32.partialorder %v3102, 0.7853982
        %vm3104 = vcmp.lt.s32.totalorder %v568, 0
        %v3105 = vand.u32 %v568, 2139095040
        %v3106 = vshrl.u32 %v3105, 23
        %v3107 = vsub.s32 %v3106, 127
        %v3108 = vand.u32 2147483647, %v568
        %v3109 = vand.u32 %v3108, 8388607
        %v3110 = vor.u32 %v3109, 8388608
        %v3111 = vsub.s32 0, %v3110
        %v3112 = vadd.s32 %v3107, 1
        %vm3113 = vcmp.gt.s32.totalorder %v3112, 0
        %v3114 = vsel %vm3113, %v3112, 0
        %v3115 = vshrl.u32 %v3114, 5
        %v3116 = vand.u32 %v3114, 31
        %v3117 = vsub.s32 32, %v3116
        %v3118 = vshrl.u32 683565275, %v3117
        %v3119 = vshll.u32 683565275, %v3116
        %v3120 = vshrl.u32 2475754826, %v3117
        %v3121 = vor.u32 %v3119, %v3120
        %v3122 = vshll.u32 2475754826, %v3116
        %v3123 = vshrl.u32 2131351028, %v3117
        %v3124 = vor.u32 %v3122, %v3123
        %v3125 = vshll.u32 2131351028, %v3116
        %v3126 = vshrl.u32 2102212464, %v3117
        %v3127 = vor.u32 %v3125, %v3126
        %v3128 = vshll.u32 2102212464, %v3116
        %v3129 = vshrl.u32 920167782, %v3117
        %v3130 = vor.u32 %v3128, %v3129
        %v3131 = vshll.u32 920167782, %v3116
        %v3132 = vshrl.u32 1326507024, %v3117
        %v3133 = vor.u32 %v3131, %v3132
        %vm3134 = vcmp.lt.s32.totalorder %v3115, 1
        %vm3135 = vcmp.lt.s32.totalorder %v3115, 2
        %vm3136 = vcmp.lt.s32.totalorder %v3115, 3
        %vm3137 = vcmp.lt.s32.totalorder %v3115, 4
        %v3138 = vsel %vm3134, %v3118, %v3121
        %v3139 = vsel %vm3137, %v3127, 2102212464
        %v3140 = vsel %vm3136, %v3124, %v3139
        %v3141 = vsel %vm3135, %v3138, %v3140
        %v3142 = vsel %vm3134, %v3121, %v3124
        %v3143 = vsel %vm3137, %v3130, 920167782
        %v3144 = vsel %vm3136, %v3127, %v3143
        %v3145 = vsel %vm3135, %v3142, %v3144
        %v3146 = vsel %vm3134, %v3124, %v3127
        %v3147 = vsel %vm3137, %v3133, 1326507024
        %v3148 = vsel %vm3136, %v3130, %v3147
        %v3149 = vsel %vm3135, %v3146, %v3148
        %v3150 = vshll.u32 %v3110, 8
        %v3151 = vmul.u32.u64.compose %v3150, %v3149
        %v3152 = vextract.low.u32 %v3151
        %v3153 = vextract.high.u32 %v3151
        %v3154 = vmul.u32.u64.compose %v3150, %v3145
        %v3155 = vextract.low.u32 %v3154
        %v3156 = vextract.high.u32 %v3154
        %v3157 = vmul.u32 %v3150, %v3141
        %v3158 = vadd.s32 %v3153, %v3155
        %vm3159 = vc.u32 %v3153, %v3155
        %v3160 = vadd.s32 %v3156, 1
        %v3161 = vsel %vm3159, %v3160, %v3156
        %v3162 = vadd.s32 %v3157, %v3161
        %v3163 = vadd.s32 %v3162, 536870912
        %v3164 = vshrl.u32 %v3163, 30
        %v3165 = vshll.u32 %v3164, 30
        %v3166 = vsub.s32 %v3162, %v3165
        %vm3167 = vcmp.lt.s32.totalorder %v3166, 0
        %v3168 = vsub.s32 0, %v3166
        %v3169 = vsel %vm3167, %v3168, %v3166
        %v3170 = vclz %v3169
        %v3171 = vsub.s32 %v3170, 2
        %vm3172 = vcmp.gt.s32.totalorder 0, %v3171
        %v3173 = vsel %vm3172, 0, %v3171
        %v3174 = vsub.s32 32, %v3173
        %v3175 = vshll.u32 %v3166, %v3173
        %v3176 = vshrl.u32 %v3158, %v3174
        %v3177 = vor.u32 %v3175, %v3176
        %v3178 = vsub.s32 4294967266, %v3173
        %v3179 = vadd.s32 %v3178, 127
        %v3180 = vshll.u32 %v3179, 23
        %v3181 = vor.u32 4788187, %v3180
        %v3182 = vand.u32 2147483647, %v3181
        %v3184 = vcvt.s32.f32 %v3177
        %v3185 = vmul.f32 %v3184, %v3182
        %v3186 = vxor.u32 %v3185, 2147483648
        %v3187 = vsel %vm3104, %v3186, %v3185
        %v3188 = vsub.s32 4, %v3164
        %v3189 = vsel %vm3104, %v3188, %v3164
        %v3190 = vsel %vm3103, %v568, %v3187
        %v3191 = vsel %vm3103, 0, %v3189
        %v3192 = vcosq.f32.pop %v3190
        %v3193 = vsinq.f32.pop %v3190
        %vm3194 = vweird.f32 %v568
        %v3195 = vadd.s32 %v3191, 3
        %v3196 = vand.u32 %v3195, 3
        %vm3197 = vcmp.lt.s32.totalorder %v3196, 2
        %vm3198 = vcmp.eq.s32.totalorder %v3196, 0
        %v3199 = vxor.u32 %v3193, 2147483648
        %v3200 = vsel %vm3198, %v3192, %v3199
        %vm3201 = vcmp.eq.s32.totalorder %v3196, 2
        %v3202 = vxor.u32 %v3192, 2147483648
        %v3203 = vsel %vm3201, %v3202, %v3193
        %v3204 = vsel %vm3197, %v3200, %v3203
        %v3205 = vsel %vm3194, nan, %v3204
        %v3206 = vand.u32 2147483647, %v573
        %vm3207 = vcmp.le.f32.partialorder %v3206, 0.7853982
        %vm3208 = vcmp.lt.s32.totalorder %v573, 0
        %v3209 = vand.u32 %v573, 2139095040
        %v3210 = vshrl.u32 %v3209, 23
        %v3211 = vsub.s32 %v3210, 127
        %v3212 = vand.u32 2147483647, %v573
        %v3213 = vand.u32 %v3212, 8388607
        %v3214 = vor.u32 %v3213, 8388608
        %v3215 = vsub.s32 0, %v3214
        %v3216 = vadd.s32 %v3211, 1
        %vm3217 = vcmp.gt.s32.totalorder %v3216, 0
        %v3218 = vsel %vm3217, %v3216, 0
        %v3219 = vshrl.u32 %v3218, 5
        %v3220 = vand.u32 %v3218, 31
        %v3221 = vsub.s32 32, %v3220
        %v3222 = vshrl.u32 683565275, %v3221
        %v3223 = vshll.u32 683565275, %v3220
        %v3224 = vshrl.u32 2475754826, %v3221
        %v3225 = vor.u32 %v3223, %v3224
        %v3226 = vshll.u32 2475754826, %v3220
        %v3227 = vshrl.u32 2131351028, %v3221
        %v3228 = vor.u32 %v3226, %v3227
        %v3229 = vshll.u32 2131351028, %v3220
        %v3230 = vshrl.u32 2102212464, %v3221
        %v3231 = vor.u32 %v3229, %v3230
        %v3232 = vshll.u32 2102212464, %v3220
        %v3233 = vshrl.u32 920167782, %v3221
        %v3234 = vor.u32 %v3232, %v3233
        %v3235 = vshll.u32 920167782, %v3220
        %v3236 = vshrl.u32 1326507024, %v3221
        %v3237 = vor.u32 %v3235, %v3236
        %vm3238 = vcmp.lt.s32.totalorder %v3219, 1
        %vm3239 = vcmp.lt.s32.totalorder %v3219, 2
        %vm3240 = vcmp.lt.s32.totalorder %v3219, 3
        %vm3241 = vcmp.lt.s32.totalorder %v3219, 4
        %v3242 = vsel %vm3238, %v3222, %v3225
        %v3243 = vsel %vm3241, %v3231, 2102212464
        %v3244 = vsel %vm3240, %v3228, %v3243
        %v3245 = vsel %vm3239, %v3242, %v3244
        %v3246 = vsel %vm3238, %v3225, %v3228
        %v3247 = vsel %vm3241, %v3234, 920167782
        %v3248 = vsel %vm3240, %v3231, %v3247
        %v3249 = vsel %vm3239, %v3246, %v3248
        %v3250 = vsel %vm3238, %v3228, %v3231
        %v3251 = vsel %vm3241, %v3237, 1326507024
        %v3252 = vsel %vm3240, %v3234, %v3251
        %v3253 = vsel %vm3239, %v3250, %v3252
        %v3254 = vshll.u32 %v3214, 8
        %v3255 = vmul.u32.u64.compose %v3254, %v3253
        %v3256 = vextract.low.u32 %v3255
        %v3257 = vextract.high.u32 %v3255
        %v3258 = vmul.u32.u64.compose %v3254, %v3249
        %v3259 = vextract.low.u32 %v3258
        %v3260 = vextract.high.u32 %v3258
        %v3261 = vmul.u32 %v3254, %v3245
        %v3262 = vadd.s32 %v3257, %v3259
        %vm3263 = vc.u32 %v3257, %v3259
        %v3264 = vadd.s32 %v3260, 1
        %v3265 = vsel %vm3263, %v3264, %v3260
        %v3266 = vadd.s32 %v3261, %v3265
        %v3267 = vadd.s32 %v3266, 536870912
        %v3268 = vshrl.u32 %v3267, 30
        %v3269 = vshll.u32 %v3268, 30
        %v3270 = vsub.s32 %v3266, %v3269
        %vm3271 = vcmp.lt.s32.totalorder %v3270, 0
        %v3272 = vsub.s32 0, %v3270
        %v3273 = vsel %vm3271, %v3272, %v3270
        %v3274 = vclz %v3273
        %v3275 = vsub.s32 %v3274, 2
        %vm3276 = vcmp.gt.s32.totalorder 0, %v3275
        %v3277 = vsel %vm3276, 0, %v3275
        %v3278 = vsub.s32 32, %v3277
        %v3279 = vshll.u32 %v3270, %v3277
        %v3280 = vshrl.u32 %v3262, %v3278
        %v3281 = vor.u32 %v3279, %v3280
        %v3282 = vsub.s32 4294967266, %v3277
        %v3283 = vadd.s32 %v3282, 127
        %v3284 = vshll.u32 %v3283, 23
        %v3285 = vor.u32 4788187, %v3284
        %v3286 = vand.u32 2147483647, %v3285
        %v3288 = vcvt.s32.f32 %v3281
        %v3289 = vmul.f32 %v3288, %v3286
        %v3290 = vxor.u32 %v3289, 2147483648
        %v3291 = vsel %vm3208, %v3290, %v3289
        %v3292 = vsub.s32 4, %v3268
        %v3293 = vsel %vm3208, %v3292, %v3268
        %v3294 = vsel %vm3207, %v573, %v3291
        %v3295 = vsel %vm3207, 0, %v3293
        %v3296 = vcosq.f32.pop %v3294
        %v3297 = vsinq.f32.pop %v3294
        %vm3298 = vweird.f32 %v573
        %v3299 = vadd.s32 %v3295, 3
        %v3300 = vand.u32 %v3299, 3
        %vm3301 = vcmp.lt.s32.totalorder %v3300, 2
        %vm3302 = vcmp.eq.s32.totalorder %v3300, 0
        %v3303 = vxor.u32 %v3297, 2147483648
        %v3304 = vsel %vm3302, %v3296, %v3303
        %vm3305 = vcmp.eq.s32.totalorder %v3300, 2
        %v3306 = vxor.u32 %v3296, 2147483648
        %v3307 = vsel %vm3305, %v3306, %v3297
        %v3308 = vsel %vm3301, %v3304, %v3307
        %v3309 = vsel %vm3298, nan, %v3308
        %v3310 = vand.u32 2147483647, %v578
        %vm3311 = vcmp.le.f32.partialorder %v3310, 0.7853982
        %vm3312 = vcmp.lt.s32.totalorder %v578, 0
        %v3313 = vand.u32 %v578, 2139095040
        %v3314 = vshrl.u32 %v3313, 23
        %v3315 = vsub.s32 %v3314, 127
        %v3316 = vand.u32 2147483647, %v578
        %v3317 = vand.u32 %v3316, 8388607
        %v3318 = vor.u32 %v3317, 8388608
        %v3319 = vsub.s32 0, %v3318
        %v3320 = vadd.s32 %v3315, 1
        %vm3321 = vcmp.gt.s32.totalorder %v3320, 0
        %v3322 = vsel %vm3321, %v3320, 0
        %v3323 = vshrl.u32 %v3322, 5
        %v3324 = vand.u32 %v3322, 31
        %v3325 = vsub.s32 32, %v3324
        %v3326 = vshrl.u32 683565275, %v3325
        %v3327 = vshll.u32 683565275, %v3324
        %v3328 = vshrl.u32 2475754826, %v3325
        %v3329 = vor.u32 %v3327, %v3328
        %v3330 = vshll.u32 2475754826, %v3324
        %v3331 = vshrl.u32 2131351028, %v3325
        %v3332 = vor.u32 %v3330, %v3331
        %v3333 = vshll.u32 2131351028, %v3324
        %v3334 = vshrl.u32 2102212464, %v3325
        %v3335 = vor.u32 %v3333, %v3334
        %v3336 = vshll.u32 2102212464, %v3324
        %v3337 = vshrl.u32 920167782, %v3325
        %v3338 = vor.u32 %v3336, %v3337
        %v3339 = vshll.u32 920167782, %v3324
        %v3340 = vshrl.u32 1326507024, %v3325
        %v3341 = vor.u32 %v3339, %v3340
        %vm3342 = vcmp.lt.s32.totalorder %v3323, 1
        %vm3343 = vcmp.lt.s32.totalorder %v3323, 2
        %vm3344 = vcmp.lt.s32.totalorder %v3323, 3
        %vm3345 = vcmp.lt.s32.totalorder %v3323, 4
        %v3346 = vsel %vm3342, %v3326, %v3329
        %v3347 = vsel %vm3345, %v3335, 2102212464
        %v3348 = vsel %vm3344, %v3332, %v3347
        %v3349 = vsel %vm3343, %v3346, %v3348
        %v3350 = vsel %vm3342, %v3329, %v3332
        %v3351 = vsel %vm3345, %v3338, 920167782
        %v3352 = vsel %vm3344, %v3335, %v3351
        %v3353 = vsel %vm3343, %v3350, %v3352
        %v3354 = vsel %vm3342, %v3332, %v3335
        %v3355 = vsel %vm3345, %v3341, 1326507024
        %v3356 = vsel %vm3344, %v3338, %v3355
        %v3357 = vsel %vm3343, %v3354, %v3356
        %v3358 = vshll.u32 %v3318, 8
        %v3359 = vmul.u32.u64.compose %v3358, %v3357
        %v3360 = vextract.low.u32 %v3359
        %v3361 = vextract.high.u32 %v3359
        %v3362 = vmul.u32.u64.compose %v3358, %v3353
        %v3363 = vextract.low.u32 %v3362
        %v3364 = vextract.high.u32 %v3362
        %v3365 = vmul.u32 %v3358, %v3349
        %v3366 = vadd.s32 %v3361, %v3363
        %vm3367 = vc.u32 %v3361, %v3363
        %v3368 = vadd.s32 %v3364, 1
        %v3369 = vsel %vm3367, %v3368, %v3364
        %v3370 = vadd.s32 %v3365, %v3369
        %v3371 = vadd.s32 %v3370, 536870912
        %v3372 = vshrl.u32 %v3371, 30
        %v3373 = vshll.u32 %v3372, 30
        %v3374 = vsub.s32 %v3370, %v3373
        %vm3375 = vcmp.lt.s32.totalorder %v3374, 0
        %v3376 = vsub.s32 0, %v3374
        %v3377 = vsel %vm3375, %v3376, %v3374
        %v3378 = vclz %v3377
        %v3379 = vsub.s32 %v3378, 2
        %vm3380 = vcmp.gt.s32.totalorder 0, %v3379
        %v3381 = vsel %vm3380, 0, %v3379
        %v3382 = vsub.s32 32, %v3381
        %v3383 = vshll.u32 %v3374, %v3381
        %v3384 = vshrl.u32 %v3366, %v3382
        %v3385 = vor.u32 %v3383, %v3384
        %v3386 = vsub.s32 4294967266, %v3381
        %v3387 = vadd.s32 %v3386, 127
        %v3388 = vshll.u32 %v3387, 23
        %v3389 = vor.u32 4788187, %v3388
        %v3390 = vand.u32 2147483647, %v3389
        %v3392 = vcvt.s32.f32 %v3385
        %v3393 = vmul.f32 %v3392, %v3390
        %v3394 = vxor.u32 %v3393, 2147483648
        %v3395 = vsel %vm3312, %v3394, %v3393
        %v3396 = vsub.s32 4, %v3372
        %v3397 = vsel %vm3312, %v3396, %v3372
        %v3398 = vsel %vm3311, %v578, %v3395
        %v3399 = vsel %vm3311, 0, %v3397
        %v3400 = vcosq.f32.pop %v3398
        %v3401 = vsinq.f32.pop %v3398
        %vm3402 = vweird.f32 %v578
        %v3403 = vadd.s32 %v3399, 3
        %v3404 = vand.u32 %v3403, 3
        %vm3405 = vcmp.lt.s32.totalorder %v3404, 2
        %vm3406 = vcmp.eq.s32.totalorder %v3404, 0
        %v3407 = vxor.u32 %v3401, 2147483648
        %v3408 = vsel %vm3406, %v3400, %v3407
        %vm3409 = vcmp.eq.s32.totalorder %v3404, 2
        %v3410 = vxor.u32 %v3400, 2147483648
        %v3411 = vsel %vm3409, %v3410, %v3401
        %v3412 = vsel %vm3405, %v3408, %v3411
        %v3413 = vsel %vm3402, nan, %v3412
        %v3414 = vand.u32 2147483647, %v583
        %vm3415 = vcmp.le.f32.partialorder %v3414, 0.7853982
        %vm3416 = vcmp.lt.s32.totalorder %v583, 0
        %v3417 = vand.u32 %v583, 2139095040
        %v3418 = vshrl.u32 %v3417, 23
        %v3419 = vsub.s32 %v3418, 127
        %v3420 = vand.u32 2147483647, %v583
        %v3421 = vand.u32 %v3420, 8388607
        %v3422 = vor.u32 %v3421, 8388608
        %v3423 = vsub.s32 0, %v3422
        %v3424 = vadd.s32 %v3419, 1
        %vm3425 = vcmp.gt.s32.totalorder %v3424, 0
        %v3426 = vsel %vm3425, %v3424, 0
        %v3427 = vshrl.u32 %v3426, 5
        %v3428 = vand.u32 %v3426, 31
        %v3429 = vsub.s32 32, %v3428
        %v3430 = vshrl.u32 683565275, %v3429
        %v3431 = vshll.u32 683565275, %v3428
        %v3432 = vshrl.u32 2475754826, %v3429
        %v3433 = vor.u32 %v3431, %v3432
        %v3434 = vshll.u32 2475754826, %v3428
        %v3435 = vshrl.u32 2131351028, %v3429
        %v3436 = vor.u32 %v3434, %v3435
        %v3437 = vshll.u32 2131351028, %v3428
        %v3438 = vshrl.u32 2102212464, %v3429
        %v3439 = vor.u32 %v3437, %v3438
        %v3440 = vshll.u32 2102212464, %v3428
        %v3441 = vshrl.u32 920167782, %v3429
        %v3442 = vor.u32 %v3440, %v3441
        %v3443 = vshll.u32 920167782, %v3428
        %v3444 = vshrl.u32 1326507024, %v3429
        %v3445 = vor.u32 %v3443, %v3444
        %vm3446 = vcmp.lt.s32.totalorder %v3427, 1
        %vm3447 = vcmp.lt.s32.totalorder %v3427, 2
        %vm3448 = vcmp.lt.s32.totalorder %v3427, 3
        %vm3449 = vcmp.lt.s32.totalorder %v3427, 4
        %v3450 = vsel %vm3446, %v3430, %v3433
        %v3451 = vsel %vm3449, %v3439, 2102212464
        %v3452 = vsel %vm3448, %v3436, %v3451
        %v3453 = vsel %vm3447, %v3450, %v3452
        %v3454 = vsel %vm3446, %v3433, %v3436
        %v3455 = vsel %vm3449, %v3442, 920167782
        %v3456 = vsel %vm3448, %v3439, %v3455
        %v3457 = vsel %vm3447, %v3454, %v3456
        %v3458 = vsel %vm3446, %v3436, %v3439
        %v3459 = vsel %vm3449, %v3445, 1326507024
        %v3460 = vsel %vm3448, %v3442, %v3459
        %v3461 = vsel %vm3447, %v3458, %v3460
        %v3462 = vshll.u32 %v3422, 8
        %v3463 = vmul.u32.u64.compose %v3462, %v3461
        %v3464 = vextract.low.u32 %v3463
        %v3465 = vextract.high.u32 %v3463
        %v3466 = vmul.u32.u64.compose %v3462, %v3457
        %v3467 = vextract.low.u32 %v3466
        %v3468 = vextract.high.u32 %v3466
        %v3469 = vmul.u32 %v3462, %v3453
        %v3470 = vadd.s32 %v3465, %v3467
        %vm3471 = vc.u32 %v3465, %v3467
        %v3472 = vadd.s32 %v3468, 1
        %v3473 = vsel %vm3471, %v3472, %v3468
        %v3474 = vadd.s32 %v3469, %v3473
        %v3475 = vadd.s32 %v3474, 536870912
        %v3476 = vshrl.u32 %v3475, 30
        %v3477 = vshll.u32 %v3476, 30
        %v3478 = vsub.s32 %v3474, %v3477
        %vm3479 = vcmp.lt.s32.totalorder %v3478, 0
        %v3480 = vsub.s32 0, %v3478
        %v3481 = vsel %vm3479, %v3480, %v3478
        %v3482 = vclz %v3481
        %v3483 = vsub.s32 %v3482, 2
        %vm3484 = vcmp.gt.s32.totalorder 0, %v3483
        %v3485 = vsel %vm3484, 0, %v3483
        %v3486 = vsub.s32 32, %v3485
        %v3487 = vshll.u32 %v3478, %v3485
        %v3488 = vshrl.u32 %v3470, %v3486
        %v3489 = vor.u32 %v3487, %v3488
        %v3490 = vsub.s32 4294967266, %v3485
        %v3491 = vadd.s32 %v3490, 127
        %v3492 = vshll.u32 %v3491, 23
        %v3493 = vor.u32 4788187, %v3492
        %v3494 = vand.u32 2147483647, %v3493
        %v3496 = vcvt.s32.f32 %v3489
        %v3497 = vmul.f32 %v3496, %v3494
        %v3498 = vxor.u32 %v3497, 2147483648
        %v3499 = vsel %vm3416, %v3498, %v3497
        %v3500 = vsub.s32 4, %v3476
        %v3501 = vsel %vm3416, %v3500, %v3476
        %v3502 = vsel %vm3415, %v583, %v3499
        %v3503 = vsel %vm3415, 0, %v3501
        %v3504 = vcosq.f32.pop %v3502
        %v3505 = vsinq.f32.pop %v3502
        %vm3506 = vweird.f32 %v583
        %v3507 = vadd.s32 %v3503, 3
        %v3508 = vand.u32 %v3507, 3
        %vm3509 = vcmp.lt.s32.totalorder %v3508, 2
        %vm3510 = vcmp.eq.s32.totalorder %v3508, 0
        %v3511 = vxor.u32 %v3505, 2147483648
        %v3512 = vsel %vm3510, %v3504, %v3511
        %vm3513 = vcmp.eq.s32.totalorder %v3508, 2
        %v3514 = vxor.u32 %v3504, 2147483648
        %v3515 = vsel %vm3513, %v3514, %v3505
        %v3516 = vsel %vm3509, %v3512, %v3515
        %v3517 = vsel %vm3506, nan, %v3516
        %v3518 = vand.u32 2147483647, %v588
        %vm3519 = vcmp.le.f32.partialorder %v3518, 0.7853982
        %vm3520 = vcmp.lt.s32.totalorder %v588, 0
        %v3521 = vand.u32 %v588, 2139095040
        %v3522 = vshrl.u32 %v3521, 23
        %v3523 = vsub.s32 %v3522, 127
        %v3524 = vand.u32 2147483647, %v588
        %v3525 = vand.u32 %v3524, 8388607
        %v3526 = vor.u32 %v3525, 8388608
        %v3527 = vsub.s32 0, %v3526
        %v3528 = vadd.s32 %v3523, 1
        %vm3529 = vcmp.gt.s32.totalorder %v3528, 0
        %v3530 = vsel %vm3529, %v3528, 0
        %v3531 = vshrl.u32 %v3530, 5
        %v3532 = vand.u32 %v3530, 31
        %v3533 = vsub.s32 32, %v3532
        %v3534 = vshrl.u32 683565275, %v3533
        %v3535 = vshll.u32 683565275, %v3532
        %v3536 = vshrl.u32 2475754826, %v3533
        %v3537 = vor.u32 %v3535, %v3536
        %v3538 = vshll.u32 2475754826, %v3532
        %v3539 = vshrl.u32 2131351028, %v3533
        %v3540 = vor.u32 %v3538, %v3539
        %v3541 = vshll.u32 2131351028, %v3532
        %v3542 = vshrl.u32 2102212464, %v3533
        %v3543 = vor.u32 %v3541, %v3542
        %v3544 = vshll.u32 2102212464, %v3532
        %v3545 = vshrl.u32 920167782, %v3533
        %v3546 = vor.u32 %v3544, %v3545
        %v3547 = vshll.u32 920167782, %v3532
        %v3548 = vshrl.u32 1326507024, %v3533
        %v3549 = vor.u32 %v3547, %v3548
        %vm3550 = vcmp.lt.s32.totalorder %v3531, 1
        %vm3551 = vcmp.lt.s32.totalorder %v3531, 2
        %vm3552 = vcmp.lt.s32.totalorder %v3531, 3
        %vm3553 = vcmp.lt.s32.totalorder %v3531, 4
        %v3554 = vsel %vm3550, %v3534, %v3537
        %v3555 = vsel %vm3553, %v3543, 2102212464
        %v3556 = vsel %vm3552, %v3540, %v3555
        %v3557 = vsel %vm3551, %v3554, %v3556
        %v3558 = vsel %vm3550, %v3537, %v3540
        %v3559 = vsel %vm3553, %v3546, 920167782
        %v3560 = vsel %vm3552, %v3543, %v3559
        %v3561 = vsel %vm3551, %v3558, %v3560
        %v3562 = vsel %vm3550, %v3540, %v3543
        %v3563 = vsel %vm3553, %v3549, 1326507024
        %v3564 = vsel %vm3552, %v3546, %v3563
        %v3565 = vsel %vm3551, %v3562, %v3564
        %v3566 = vshll.u32 %v3526, 8
        %v3567 = vmul.u32.u64.compose %v3566, %v3565
        %v3568 = vextract.low.u32 %v3567
        %v3569 = vextract.high.u32 %v3567
        %v3570 = vmul.u32.u64.compose %v3566, %v3561
        %v3571 = vextract.low.u32 %v3570
        %v3572 = vextract.high.u32 %v3570
        %v3573 = vmul.u32 %v3566, %v3557
        %v3574 = vadd.s32 %v3569, %v3571
        %vm3575 = vc.u32 %v3569, %v3571
        %v3576 = vadd.s32 %v3572, 1
        %v3577 = vsel %vm3575, %v3576, %v3572
        %v3578 = vadd.s32 %v3573, %v3577
        %v3579 = vadd.s32 %v3578, 536870912
        %v3580 = vshrl.u32 %v3579, 30
        %v3581 = vshll.u32 %v3580, 30
        %v3582 = vsub.s32 %v3578, %v3581
        %vm3583 = vcmp.lt.s32.totalorder %v3582, 0
        %v3584 = vsub.s32 0, %v3582
        %v3585 = vsel %vm3583, %v3584, %v3582
        %v3586 = vclz %v3585
        %v3587 = vsub.s32 %v3586, 2
        %vm3588 = vcmp.gt.s32.totalorder 0, %v3587
        %v3589 = vsel %vm3588, 0, %v3587
        %v3590 = vsub.s32 32, %v3589
        %v3591 = vshll.u32 %v3582, %v3589
        %v3592 = vshrl.u32 %v3574, %v3590
        %v3593 = vor.u32 %v3591, %v3592
        %v3594 = vsub.s32 4294967266, %v3589
        %v3595 = vadd.s32 %v3594, 127
        %v3596 = vshll.u32 %v3595, 23
        %v3597 = vor.u32 4788187, %v3596
        %v3598 = vand.u32 2147483647, %v3597
        %v3600 = vcvt.s32.f32 %v3593
        %v3601 = vmul.f32 %v3600, %v3598
        %v3602 = vxor.u32 %v3601, 2147483648
        %v3603 = vsel %vm3520, %v3602, %v3601
        %v3604 = vsub.s32 4, %v3580
        %v3605 = vsel %vm3520, %v3604, %v3580
        %v3606 = vsel %vm3519, %v588, %v3603
        %v3607 = vsel %vm3519, 0, %v3605
        %v3608 = vcosq.f32.pop %v3606
        %v3609 = vsinq.f32.pop %v3606
        %vm3610 = vweird.f32 %v588
        %v3611 = vadd.s32 %v3607, 3
        %v3612 = vand.u32 %v3611, 3
        %vm3613 = vcmp.lt.s32.totalorder %v3612, 2
        %vm3614 = vcmp.eq.s32.totalorder %v3612, 0
        %v3615 = vxor.u32 %v3609, 2147483648
        %v3616 = vsel %vm3614, %v3608, %v3615
        %vm3617 = vcmp.eq.s32.totalorder %v3612, 2
        %v3618 = vxor.u32 %v3608, 2147483648
        %v3619 = vsel %vm3617, %v3618, %v3609
        %v3620 = vsel %vm3613, %v3616, %v3619
        %v3621 = vsel %vm3610, nan, %v3620
        %v3622 = vand.u32 2147483647, %v593
        %vm3623 = vcmp.le.f32.partialorder %v3622, 0.7853982
        %vm3624 = vcmp.lt.s32.totalorder %v593, 0
        %v3625 = vand.u32 %v593, 2139095040
        %v3626 = vshrl.u32 %v3625, 23
        %v3627 = vsub.s32 %v3626, 127
        %v3628 = vand.u32 2147483647, %v593
        %v3629 = vand.u32 %v3628, 8388607
        %v3630 = vor.u32 %v3629, 8388608
        %v3631 = vsub.s32 0, %v3630
        %v3632 = vadd.s32 %v3627, 1
        %vm3633 = vcmp.gt.s32.totalorder %v3632, 0
        %v3634 = vsel %vm3633, %v3632, 0
        %v3635 = vshrl.u32 %v3634, 5
        %v3636 = vand.u32 %v3634, 31
        %v3637 = vsub.s32 32, %v3636
        %v3638 = vshrl.u32 683565275, %v3637
        %v3639 = vshll.u32 683565275, %v3636
        %v3640 = vshrl.u32 2475754826, %v3637
        %v3641 = vor.u32 %v3639, %v3640
        %v3642 = vshll.u32 2475754826, %v3636
        %v3643 = vshrl.u32 2131351028, %v3637
        %v3644 = vor.u32 %v3642, %v3643
        %v3645 = vshll.u32 2131351028, %v3636
        %v3646 = vshrl.u32 2102212464, %v3637
        %v3647 = vor.u32 %v3645, %v3646
        %v3648 = vshll.u32 2102212464, %v3636
        %v3649 = vshrl.u32 920167782, %v3637
        %v3650 = vor.u32 %v3648, %v3649
        %v3651 = vshll.u32 920167782, %v3636
        %v3652 = vshrl.u32 1326507024, %v3637
        %v3653 = vor.u32 %v3651, %v3652
        %vm3654 = vcmp.lt.s32.totalorder %v3635, 1
        %vm3655 = vcmp.lt.s32.totalorder %v3635, 2
        %vm3656 = vcmp.lt.s32.totalorder %v3635, 3
        %vm3657 = vcmp.lt.s32.totalorder %v3635, 4
        %v3658 = vsel %vm3654, %v3638, %v3641
        %v3659 = vsel %vm3657, %v3647, 2102212464
        %v3660 = vsel %vm3656, %v3644, %v3659
        %v3661 = vsel %vm3655, %v3658, %v3660
        %v3662 = vsel %vm3654, %v3641, %v3644
        %v3663 = vsel %vm3657, %v3650, 920167782
        %v3664 = vsel %vm3656, %v3647, %v3663
        %v3665 = vsel %vm3655, %v3662, %v3664
        %v3666 = vsel %vm3654, %v3644, %v3647
        %v3667 = vsel %vm3657, %v3653, 1326507024
        %v3668 = vsel %vm3656, %v3650, %v3667
        %v3669 = vsel %vm3655, %v3666, %v3668
        %v3670 = vshll.u32 %v3630, 8
        %v3671 = vmul.u32.u64.compose %v3670, %v3669
        %v3672 = vextract.low.u32 %v3671
        %v3673 = vextract.high.u32 %v3671
        %v3674 = vmul.u32.u64.compose %v3670, %v3665
        %v3675 = vextract.low.u32 %v3674
        %v3676 = vextract.high.u32 %v3674
        %v3677 = vmul.u32 %v3670, %v3661
        %v3678 = vadd.s32 %v3673, %v3675
        %vm3679 = vc.u32 %v3673, %v3675
        %v3680 = vadd.s32 %v3676, 1
        %v3681 = vsel %vm3679, %v3680, %v3676
        %v3682 = vadd.s32 %v3677, %v3681
        %v3683 = vadd.s32 %v3682, 536870912
        %v3684 = vshrl.u32 %v3683, 30
        %v3685 = vshll.u32 %v3684, 30
        %v3686 = vsub.s32 %v3682, %v3685
        %vm3687 = vcmp.lt.s32.totalorder %v3686, 0
        %v3688 = vsub.s32 0, %v3686
        %v3689 = vsel %vm3687, %v3688, %v3686
        %v3690 = vclz %v3689
        %v3691 = vsub.s32 %v3690, 2
        %vm3692 = vcmp.gt.s32.totalorder 0, %v3691
        %v3693 = vsel %vm3692, 0, %v3691
        %v3694 = vsub.s32 32, %v3693
        %v3695 = vshll.u32 %v3686, %v3693
        %v3696 = vshrl.u32 %v3678, %v3694
        %v3697 = vor.u32 %v3695, %v3696
        %v3698 = vsub.s32 4294967266, %v3693
        %v3699 = vadd.s32 %v3698, 127
        %v3700 = vshll.u32 %v3699, 23
        %v3701 = vor.u32 4788187, %v3700
        %v3702 = vand.u32 2147483647, %v3701
        %v3704 = vcvt.s32.f32 %v3697
        %v3705 = vmul.f32 %v3704, %v3702
        %v3706 = vxor.u32 %v3705, 2147483648
        %v3707 = vsel %vm3624, %v3706, %v3705
        %v3708 = vsub.s32 4, %v3684
        %v3709 = vsel %vm3624, %v3708, %v3684
        %v3710 = vsel %vm3623, %v593, %v3707
        %v3711 = vsel %vm3623, 0, %v3709
        %v3712 = vcosq.f32.pop %v3710
        %v3713 = vsinq.f32.pop %v3710
        %vm3714 = vweird.f32 %v593
        %v3715 = vadd.s32 %v3711, 3
        %v3716 = vand.u32 %v3715, 3
        %vm3717 = vcmp.lt.s32.totalorder %v3716, 2
        %vm3718 = vcmp.eq.s32.totalorder %v3716, 0
        %v3719 = vxor.u32 %v3713, 2147483648
        %v3720 = vsel %vm3718, %v3712, %v3719
        %vm3721 = vcmp.eq.s32.totalorder %v3716, 2
        %v3722 = vxor.u32 %v3712, 2147483648
        %v3723 = vsel %vm3721, %v3722, %v3713
        %v3724 = vsel %vm3717, %v3720, %v3723
        %v3725 = vsel %vm3714, nan, %v3724
        %v3726 = vand.u32 2147483647, %v598
        %vm3727 = vcmp.le.f32.partialorder %v3726, 0.7853982
        %vm3728 = vcmp.lt.s32.totalorder %v598, 0
        %v3729 = vand.u32 %v598, 2139095040
        %v3730 = vshrl.u32 %v3729, 23
        %v3731 = vsub.s32 %v3730, 127
        %v3732 = vand.u32 2147483647, %v598
        %v3733 = vand.u32 %v3732, 8388607
        %v3734 = vor.u32 %v3733, 8388608
        %v3735 = vsub.s32 0, %v3734
        %v3736 = vadd.s32 %v3731, 1
        %vm3737 = vcmp.gt.s32.totalorder %v3736, 0
        %v3738 = vsel %vm3737, %v3736, 0
        %v3739 = vshrl.u32 %v3738, 5
        %v3740 = vand.u32 %v3738, 31
        %v3741 = vsub.s32 32, %v3740
        %v3742 = vshrl.u32 683565275, %v3741
        %v3743 = vshll.u32 683565275, %v3740
        %v3744 = vshrl.u32 2475754826, %v3741
        %v3745 = vor.u32 %v3743, %v3744
        %v3746 = vshll.u32 2475754826, %v3740
        %v3747 = vshrl.u32 2131351028, %v3741
        %v3748 = vor.u32 %v3746, %v3747
        %v3749 = vshll.u32 2131351028, %v3740
        %v3750 = vshrl.u32 2102212464, %v3741
        %v3751 = vor.u32 %v3749, %v3750
        %v3752 = vshll.u32 2102212464, %v3740
        %v3753 = vshrl.u32 920167782, %v3741
        %v3754 = vor.u32 %v3752, %v3753
        %v3755 = vshll.u32 920167782, %v3740
        %v3756 = vshrl.u32 1326507024, %v3741
        %v3757 = vor.u32 %v3755, %v3756
        %vm3758 = vcmp.lt.s32.totalorder %v3739, 1
        %vm3759 = vcmp.lt.s32.totalorder %v3739, 2
        %vm3760 = vcmp.lt.s32.totalorder %v3739, 3
        %vm3761 = vcmp.lt.s32.totalorder %v3739, 4
        %v3762 = vsel %vm3758, %v3742, %v3745
        %v3763 = vsel %vm3761, %v3751, 2102212464
        %v3764 = vsel %vm3760, %v3748, %v3763
        %v3765 = vsel %vm3759, %v3762, %v3764
        %v3766 = vsel %vm3758, %v3745, %v3748
        %v3767 = vsel %vm3761, %v3754, 920167782
        %v3768 = vsel %vm3760, %v3751, %v3767
        %v3769 = vsel %vm3759, %v3766, %v3768
        %v3770 = vsel %vm3758, %v3748, %v3751
        %v3771 = vsel %vm3761, %v3757, 1326507024
        %v3772 = vsel %vm3760, %v3754, %v3771
        %v3773 = vsel %vm3759, %v3770, %v3772
        %v3774 = vshll.u32 %v3734, 8
        %v3775 = vmul.u32.u64.compose %v3774, %v3773
        %v3776 = vextract.low.u32 %v3775
        %v3777 = vextract.high.u32 %v3775
        %v3778 = vmul.u32.u64.compose %v3774, %v3769
        %v3779 = vextract.low.u32 %v3778
        %v3780 = vextract.high.u32 %v3778
        %v3781 = vmul.u32 %v3774, %v3765
        %v3782 = vadd.s32 %v3777, %v3779
        %vm3783 = vc.u32 %v3777, %v3779
        %v3784 = vadd.s32 %v3780, 1
        %v3785 = vsel %vm3783, %v3784, %v3780
        %v3786 = vadd.s32 %v3781, %v3785
        %v3787 = vadd.s32 %v3786, 536870912
        %v3788 = vshrl.u32 %v3787, 30
        %v3789 = vshll.u32 %v3788, 30
        %v3790 = vsub.s32 %v3786, %v3789
        %vm3791 = vcmp.lt.s32.totalorder %v3790, 0
        %v3792 = vsub.s32 0, %v3790
        %v3793 = vsel %vm3791, %v3792, %v3790
        %v3794 = vclz %v3793
        %v3795 = vsub.s32 %v3794, 2
        %vm3796 = vcmp.gt.s32.totalorder 0, %v3795
        %v3797 = vsel %vm3796, 0, %v3795
        %v3798 = vsub.s32 32, %v3797
        %v3799 = vshll.u32 %v3790, %v3797
        %v3800 = vshrl.u32 %v3782, %v3798
        %v3801 = vor.u32 %v3799, %v3800
        %v3802 = vsub.s32 4294967266, %v3797
        %v3803 = vadd.s32 %v3802, 127
        %v3804 = vshll.u32 %v3803, 23
        %v3805 = vor.u32 4788187, %v3804
        %v3806 = vand.u32 2147483647, %v3805
        %v3808 = vcvt.s32.f32 %v3801
        %v3809 = vmul.f32 %v3808, %v3806
        %v3810 = vxor.u32 %v3809, 2147483648
        %v3811 = vsel %vm3728, %v3810, %v3809
        %v3812 = vsub.s32 4, %v3788
        %v3813 = vsel %vm3728, %v3812, %v3788
        %v3814 = vsel %vm3727, %v598, %v3811
        %v3815 = vsel %vm3727, 0, %v3813
        %v3816 = vcosq.f32.pop %v3814
        %v3817 = vsinq.f32.pop %v3814
        %vm3818 = vweird.f32 %v598
        %v3819 = vadd.s32 %v3815, 3
        %v3820 = vand.u32 %v3819, 3
        %vm3821 = vcmp.lt.s32.totalorder %v3820, 2
        %vm3822 = vcmp.eq.s32.totalorder %v3820, 0
        %v3823 = vxor.u32 %v3817, 2147483648
        %v3824 = vsel %vm3822, %v3816, %v3823
        %vm3825 = vcmp.eq.s32.totalorder %v3820, 2
        %v3826 = vxor.u32 %v3816, 2147483648
        %v3827 = vsel %vm3825, %v3826, %v3817
        %v3828 = vsel %vm3821, %v3824, %v3827
        %v3829 = vsel %vm3818, nan, %v3828
        %v3830 = vand.u32 2147483647, %v603
        %vm3831 = vcmp.le.f32.partialorder %v3830, 0.7853982
        %vm3832 = vcmp.lt.s32.totalorder %v603, 0
        %v3833 = vand.u32 %v603, 2139095040
        %v3834 = vshrl.u32 %v3833, 23
        %v3835 = vsub.s32 %v3834, 127
        %v3836 = vand.u32 2147483647, %v603
        %v3837 = vand.u32 %v3836, 8388607
        %v3838 = vor.u32 %v3837, 8388608
        %v3839 = vsub.s32 0, %v3838
        %v3840 = vadd.s32 %v3835, 1
        %vm3841 = vcmp.gt.s32.totalorder %v3840, 0
        %v3842 = vsel %vm3841, %v3840, 0
        %v3843 = vshrl.u32 %v3842, 5
        %v3844 = vand.u32 %v3842, 31
        %v3845 = vsub.s32 32, %v3844
        %v3846 = vshrl.u32 683565275, %v3845
        %v3847 = vshll.u32 683565275, %v3844
        %v3848 = vshrl.u32 2475754826, %v3845
        %v3849 = vor.u32 %v3847, %v3848
        %v3850 = vshll.u32 2475754826, %v3844
        %v3851 = vshrl.u32 2131351028, %v3845
        %v3852 = vor.u32 %v3850, %v3851
        %v3853 = vshll.u32 2131351028, %v3844
        %v3854 = vshrl.u32 2102212464, %v3845
        %v3855 = vor.u32 %v3853, %v3854
        %v3856 = vshll.u32 2102212464, %v3844
        %v3857 = vshrl.u32 920167782, %v3845
        %v3858 = vor.u32 %v3856, %v3857
        %v3859 = vshll.u32 920167782, %v3844
        %v3860 = vshrl.u32 1326507024, %v3845
        %v3861 = vor.u32 %v3859, %v3860
        %vm3862 = vcmp.lt.s32.totalorder %v3843, 1
        %vm3863 = vcmp.lt.s32.totalorder %v3843, 2
        %vm3864 = vcmp.lt.s32.totalorder %v3843, 3
        %vm3865 = vcmp.lt.s32.totalorder %v3843, 4
        %v3866 = vsel %vm3862, %v3846, %v3849
        %v3867 = vsel %vm3865, %v3855, 2102212464
        %v3868 = vsel %vm3864, %v3852, %v3867
        %v3869 = vsel %vm3863, %v3866, %v3868
        %v3870 = vsel %vm3862, %v3849, %v3852
        %v3871 = vsel %vm3865, %v3858, 920167782
        %v3872 = vsel %vm3864, %v3855, %v3871
        %v3873 = vsel %vm3863, %v3870, %v3872
        %v3874 = vsel %vm3862, %v3852, %v3855
        %v3875 = vsel %vm3865, %v3861, 1326507024
        %v3876 = vsel %vm3864, %v3858, %v3875
        %v3877 = vsel %vm3863, %v3874, %v3876
        %v3878 = vshll.u32 %v3838, 8
        %v3879 = vmul.u32.u64.compose %v3878, %v3877
        %v3880 = vextract.low.u32 %v3879
        %v3881 = vextract.high.u32 %v3879
        %v3882 = vmul.u32.u64.compose %v3878, %v3873
        %v3883 = vextract.low.u32 %v3882
        %v3884 = vextract.high.u32 %v3882
        %v3885 = vmul.u32 %v3878, %v3869
        %v3886 = vadd.s32 %v3881, %v3883
        %vm3887 = vc.u32 %v3881, %v3883
        %v3888 = vadd.s32 %v3884, 1
        %v3889 = vsel %vm3887, %v3888, %v3884
        %v3890 = vadd.s32 %v3885, %v3889
        %v3891 = vadd.s32 %v3890, 536870912
        %v3892 = vshrl.u32 %v3891, 30
        %v3893 = vshll.u32 %v3892, 30
        %v3894 = vsub.s32 %v3890, %v3893
        %vm3895 = vcmp.lt.s32.totalorder %v3894, 0
        %v3896 = vsub.s32 0, %v3894
        %v3897 = vsel %vm3895, %v3896, %v3894
        %v3898 = vclz %v3897
        %v3899 = vsub.s32 %v3898, 2
        %vm3900 = vcmp.gt.s32.totalorder 0, %v3899
        %v3901 = vsel %vm3900, 0, %v3899
        %v3902 = vsub.s32 32, %v3901
        %v3903 = vshll.u32 %v3894, %v3901
        %v3904 = vshrl.u32 %v3886, %v3902
        %v3905 = vor.u32 %v3903, %v3904
        %v3906 = vsub.s32 4294967266, %v3901
        %v3907 = vadd.s32 %v3906, 127
        %v3908 = vshll.u32 %v3907, 23
        %v3909 = vor.u32 4788187, %v3908
        %v3910 = vand.u32 2147483647, %v3909
        %v3912 = vcvt.s32.f32 %v3905
        %v3913 = vmul.f32 %v3912, %v3910
        %v3914 = vxor.u32 %v3913, 2147483648
        %v3915 = vsel %vm3832, %v3914, %v3913
        %v3916 = vsub.s32 4, %v3892
        %v3917 = vsel %vm3832, %v3916, %v3892
        %v3918 = vsel %vm3831, %v603, %v3915
        %v3919 = vsel %vm3831, 0, %v3917
        %v3920 = vcosq.f32.pop %v3918
        %v3921 = vsinq.f32.pop %v3918
        %vm3922 = vweird.f32 %v603
        %v3923 = vadd.s32 %v3919, 3
        %v3924 = vand.u32 %v3923, 3
        %vm3925 = vcmp.lt.s32.totalorder %v3924, 2
        %vm3926 = vcmp.eq.s32.totalorder %v3924, 0
        %v3927 = vxor.u32 %v3921, 2147483648
        %v3928 = vsel %vm3926, %v3920, %v3927
        %vm3929 = vcmp.eq.s32.totalorder %v3924, 2
        %v3930 = vxor.u32 %v3920, 2147483648
        %v3931 = vsel %vm3929, %v3930, %v3921
        %v3932 = vsel %vm3925, %v3928, %v3931
        %v3933 = vsel %vm3922, nan, %v3932
        %3934 = vst [vmem:[%s214] sm:$0xff] %v709
        %3935 = vst [vmem:[%s214 + $0x8] sm:$0xff] %v813
        %3936 = vst [vmem:[%s214 + $0x10] sm:$0xff] %v917
        %3937 = vst [vmem:[%s214 + $0x18] sm:$0xff] %v1021
        %3938 = vst [vmem:[%s214 + $0x20] sm:$0xff] %v1125
        %3939 = vst [vmem:[%s214 + $0x28] sm:$0xff] %v1229
        %3940 = vst [vmem:[%s214 + $0x30] sm:$0xff] %v1333
        %3941 = vst [vmem:[%s214 + $0x38] sm:$0xff] %v1437
        %3942 = vst [vmem:[%s214 + $0x40] sm:$0xff] %v1541
        %3943 = vst [vmem:[%s214 + $0x48] sm:$0xff] %v1645
        %3944 = vst [vmem:[%s214 + $0x50] sm:$0xff] %v1749
        %3945 = vst [vmem:[%s214 + $0x58] sm:$0xff] %v1853
        %3946 = vst [vmem:[%s214 + $0x60] sm:$0xff] %v1957
        %3947 = vst [vmem:[%s214 + $0x68] sm:$0xff] %v2061
        %3948 = vst [vmem:[%s214 + $0x70] sm:$0xff] %v2165
        %3949 = vst [vmem:[%s214 + $0x78] sm:$0xff] %v2269
        %3950 = vst [vmem:[%s214 + $0x80] sm:$0xff] %v2373
        %3951 = vst [vmem:[%s214 + $0x88] sm:$0xff] %v2477
        %3952 = vst [vmem:[%s214 + $0x90] sm:$0xff] %v2581
        %3953 = vst [vmem:[%s214 + $0x98] sm:$0xff] %v2685
        %3954 = vst [vmem:[%s214 + $0xa0] sm:$0xff] %v2789
        %3955 = vst [vmem:[%s214 + $0xa8] sm:$0xff] %v2893
        %3956 = vst [vmem:[%s214 + $0xb0] sm:$0xff] %v2997
        %3957 = vst [vmem:[%s214 + $0xb8] sm:$0xff] %v3101
        %3958 = vst [vmem:[%s214 + $0xc0] sm:$0xff] %v3205
        %3959 = vst [vmem:[%s214 + $0xc8] sm:$0xff] %v3309
        %3960 = vst [vmem:[%s214 + $0xd0] sm:$0xff] %v3413
        %3961 = vst [vmem:[%s214 + $0xd8] sm:$0xff] %v3517
        %3962 = vst [vmem:[%s214 + $0xe0] sm:$0xff] %v3621
        %3963 = vst [vmem:[%s214 + $0xe8] sm:$0xff] %v3725
        %3964 = vst [vmem:[%s214 + $0xf0] sm:$0xff] %v3829
        %3965 = vst [vmem:[%s214 + $0xf8] sm:$0xff] %v3933
        %s3966 = sand.u32 %s117, 1
        %s3967 = scalar_lea.sflag [#allocation3], %s3966
        %s3968 = sand.u32 %s117, 1
        %s3969 = smul.addr %s3968, 256
        %s3970 = scalar_lea.vmem [#allocation2], %s3969
        // Predicated region
        $region33: #{tpu_custom_call.1} parent=31 // pred_check
          %p3971 = pneg %p127
        $region34: #{tpu_custom_call.1} parent=31 // pred_check_branch
          %3973 = sbr.rel (%p3971) target = $region36
        $region35: #{tpu_custom_call.1} parent=31 // pred_region
          %s3974 = smul.u32 32, %s21
          %s3975 = ssub.s32 125, %s3974
          %p3976 = scmp.lt.s32.totalorder %s3975, 32
          %s3977 = scalar_select %p3976, %s3975, 32
          %s3978 = smul.u32 128, %s3977
          %s3980 = ssub.s32 4096, %s3978
          %3981 = vsyncadd %s3967, %s3980
          %p3982 = scmp.ne.s32.totalorder 0, %s3978
          %s3983 = sadd.s32 %s22, %s3974
          %s3984 = smul.addr %s3983, 128
          %s3985 = scalar_lea.hbm %s3, %s3984
          %s3986 = smul.u32 8, %s3977
          %s3987 = sshll.u32 %s3970, 4
          %s3988 = int_to_ptr.vmem [resolvable:$true] %s3987
          %s3989 = sshll.u32 %s3986, 4
          %3993 = dma.vmem_to_hbm [thread:$0]  (%p3982), %s3988, %s3989, %s3985, %s3967, 128, 128, 8
        $region36: #{tpu_custom_call.1} parent=31 // pred_fallthru
          _
      $region32: #{tpu_custom_call.1} parent=5 // pred_fallthru
        _
      %p3994 = scmp.le.s32.totalorder 2, %s12
      // Predicated region
      $region37: #{tpu_custom_call.1} parent=5 // pred_check
        %p3995 = pneg %p3994
      $region38: #{tpu_custom_call.1} parent=5 // pred_check_branch
        %3997 = sbr.rel (%p3995) target = $region40
      $region39: #{tpu_custom_call.1} parent=5 // pred_region
        %s3998 = ssub.s32 %s12, 2
        // Predicated region
        $region41: #{tpu_custom_call.1} parent=39 // pred_check
          %p3999 = pneg %p133
        $region42: #{tpu_custom_call.1} parent=39 // pred_check_branch
          %4001 = sbr.rel (%p3999) target = $region44
        $region43: #{tpu_custom_call.1} parent=39 // pred_region
          %s4002 = sand.u32 %s118, 1
          %s4003 = scalar_lea.sflag [#allocation3], %s4002
          %s4004 = sand.u32 %s118, 1
          %s4005 = smul.addr %s4004, 256
          %s4006 = scalar_lea.vmem [#allocation2], %s4005
          %4007 = dma.done %s4003, 4096
        $region44: #{tpu_custom_call.1} parent=39 // pred_fallthru
          _
      $region40: #{tpu_custom_call.1} parent=5 // pred_fallthru
        _
    $region6: #{tpu_custom_call.1} parent=1 // loop_footer
      %s16 = sadd.s32 1, %s12
    $region7: #{tpu_custom_call.1} parent=1 // loop_footer_branch
      %11 = sbr.rel target = $region3
    $region8: #{tpu_custom_call.1} parent=1 // loop_exit
      _
    %4008 = vsyncpa [#allocation3], 1
    %s4009 = scalar_lea.sflag [#allocation3], 1
    %4010 = vsyncpa %s4009, 1

</llo_original>
